<compile_context>
chip_gen: v6e
topology: v6e:2x2x1
jax: 0.10.0
libtpu: 0.0.40
codegen_flags: <defaults>
</compile_context>

<pallas_src>
import jax
import jax.numpy as jnp
from jax.experimental import pallas as pl
from jax.experimental.pallas import tpu as pltpu


def _round_up(n, m):
    return ((n + m - 1) // m) * m


def _linear_model_kernel(x_ref, *refs):
    """Fully fused LinearModel forward for one batch tile.

    refs = (w_in, shift_in,
            [w1_s, shift1_s, w2_s, shift2_s] * num_stage,
            w_out, b_out, o_ref)
    Weights are pre-transposed to (in, out), BN-folded and stored bf16;
    shifts/bias are f32. Input/output feature dims are pre-padded to 128.
    """
    o_ref = refs[-1]
    win_ref, shin_ref = refs[0], refs[1]
    wout_ref, bout_ref = refs[-3], refs[-2]
    stage_refs = refs[2:-3]
    num_stage = len(stage_refs) // 4

    # ---- input projection: Linear -> BN (folded) -> ReLU -> Dropout(eval: id)
    x = x_ref[...].astype(jnp.bfloat16)                              # (TB, in_pad)
    y = jnp.dot(x, win_ref[...], preferred_element_type=jnp.float32)
    y = jnp.maximum(y + shin_ref[...], 0.0)                          # f32
    # TODO(synk): training-mode dropout (stochastic mask) not implemented; eval => identity.

    # ---- residual stages (statically unrolled; num_stage is a Python constant)
    for s in range(num_stage):
        w1_ref, sh1_ref, w2_ref, sh2_ref = stage_refs[4 * s: 4 * s + 4]
        h = jnp.dot(y.astype(jnp.bfloat16), w1_ref[...],
                    preferred_element_type=jnp.float32)
        # h only feeds the next dot -> keep it bf16 to halve its vreg footprint.
        h = jnp.maximum(h + sh1_ref[...], 0.0).astype(jnp.bfloat16)
        h = jnp.dot(h, w2_ref[...], preferred_element_type=jnp.float32)
        h = jnp.maximum(h + sh2_ref[...], 0.0)                       # f32
        y = y + h                                                    # residual, f32

    # ---- output projection (plain Linear, no BN / ReLU); lane-dense padded cols
    out = jnp.dot(y.astype(jnp.bfloat16), wout_ref[...],
                  preferred_element_type=jnp.float32)
    o_ref[...] = (out + bout_ref[...]).astype(o_ref.dtype)


def linear_model_forward(x, params, *, tile_b=256, single_buffer_weights=True):
    """x: (B, input_size) float32. params: folded/padded parameters (init_params)."""
    B, in_size = x.shape
    in_pad, D = params["w_in"].shape
    out_pad = params["w_out"].shape[1]
    out_size = params["out_size"]

    # Pad ragged batches to a tile multiple and input features to the lane-dense
    # padded width (zero columns x zero weight rows contribute nothing).
    n_tiles = pl.cdiv(B, tile_b)
    pb = n_tiles * tile_b
    xp = jnp.pad(x, ((0, pb - B), (0, in_pad - in_size)))

    args = [xp, params["w_in"], params["shift_in"]]
    shapes = [(in_pad, D), (1, D)]
    for st in params["stages"]:
        args += [st["w1"], st["shift1"], st["w2"], st["shift2"]]
        shapes += [(D, D), (1, D), (D, D), (1, D)]
    args += [params["w_out"], params["b_out"]]
    shapes += [(D, out_pad), (1, out_pad)]

    # Tight VMEM budget (v7x: 64 MiB physical / 32 MiB scoped default per TC):
    # single-buffered weights/shifts + double-buffered x/out tiles + activation
    # headroom (y f32 + bf16 copies + h + temporaries), with a safety floor.
    weight_bytes = sum(int(a.size) * a.dtype.itemsize for a in args[1:])
    io_bytes = 2 * tile_b * (in_pad + out_pad) * 4
    act_bytes = 6 * tile_b * D * 4
    vmem_limit = int(min(max(weight_bytes + io_bytes + act_bytes + (2 << 20),
                             8 << 20), 32 << 20))

    def run(buffered):
        def const_spec(shape):
            # Weight / shift blocks: same full block at every grid step.
            if buffered:
                return pl.BlockSpec(shape, lambda i: (0, 0),
                                    pipeline_mode=pl.Buffered(1))
            return pl.BlockSpec(shape, lambda i: (0, 0))

        in_specs = [pl.BlockSpec((tile_b, in_pad), lambda i: (i, 0))]   # x tile
        in_specs += [const_spec(s) for s in shapes]

        return pl.pallas_call(
            _linear_model_kernel,
            out_shape=jax.ShapeDtypeStruct((pb, out_pad), x.dtype),
            grid_spec=pltpu.PrefetchScalarGridSpec(
                num_scalar_prefetch=0,
                grid=(n_tiles,),
                in_specs=in_specs,
                out_specs=pl.BlockSpec((tile_b, out_pad), lambda i: (i, 0)),
            ),
            compiler_params=pltpu.CompilerParams(
                dimension_semantics=("parallel",),   # batch tiles across TCs (v7x)
                vmem_limit_bytes=vmem_limit),
        )(*args)

    if single_buffer_weights:
        try:
            out = run(True)
        except Exception:
            # pipeline_mode=pl.Buffered(1) unsupported on this build -> default buffering.
            out = run(False)
    else:
        out = run(False)

    return out[:B, :out_size]


def init_params(key, *, linear_size=256, num_stage=2,
                input_size=32, output_size=48, eps=1e-5):
    """Mirror nn.Linear / nn.BatchNorm1d (eval) defaults, with bias+BN folded.

    nn.Linear: weight, bias ~ U(-1/sqrt(in), 1/sqrt(in)); weight stored (out, in),
    pre-transposed here to (in, out).
    nn.BatchNorm1d (eval): scale = gamma/sqrt(var+eps), shift = beta - mean*scale,
    folded as W' = W^T * scale (per output column), shift' = b*scale + shift.
    Weights are bf16 (MXU operands); shifts/bias stay f32.
    Input rows of w_in and output columns of w_out/b_out are zero-padded to a
    multiple of 128 for lane-dense tiles / unmasked stores.
    """
    in_pad = _round_up(input_size, 128)
    out_pad = _round_up(output_size, 128)

    def linear(k, fan_in, fan_out):
        kw, kb = jax.random.split(k)
        bound = 1.0 / jnp.sqrt(jnp.float32(fan_in))
        wt = jax.random.uniform(kw, (fan_out, fan_in), jnp.float32, -bound, bound).T
        b = jax.random.uniform(kb, (fan_out,), jnp.float32, -bound, bound)
        return wt, b                                               # (in, out), (out,)

    def bn(fan_out):
        gamma = jnp.ones((fan_out,), jnp.float32)
        beta = jnp.zeros((fan_out,), jnp.float32)
        mean = jnp.zeros((fan_out,), jnp.float32)
        var = jnp.ones((fan_out,), jnp.float32)
        scale = gamma / jnp.sqrt(var + eps)
        shift = beta - mean * scale
        return scale, shift

    def fold(wt, b, scale, shift):
        w_folded = (wt * scale[None, :]).astype(jnp.bfloat16)
        shift_folded = (b * scale + shift).reshape(1, -1).astype(jnp.float32)
        return w_folded, shift_folded

    keys = jax.random.split(key, 2 + 2 * num_stage)

    wt, b = linear(keys[0], input_size, linear_size)
    w_in, shift_in = fold(wt, b, *bn(linear_size))
    w_in = jnp.pad(w_in, ((0, in_pad - input_size), (0, 0)))       # lane-dense input

    stages = []
    for s in range(num_stage):
        wt1, b1 = linear(keys[1 + 2 * s], linear_size, linear_size)
        w1, sh1 = fold(wt1, b1, *bn(linear_size))
        wt2, b2 = linear(keys[2 + 2 * s], linear_size, linear_size)
        w2, sh2 = fold(wt2, b2, *bn(linear_size))
        stages.append({"w1": w1, "shift1": sh1, "w2": w2, "shift2": sh2})

    wto, bo = linear(keys[1 + 2 * num_stage], linear_size, output_size)
    w_out = jnp.pad(wto.astype(jnp.bfloat16),
                    ((0, 0), (0, out_pad - output_size)))          # lane-dense output
    b_out = jnp.pad(bo.reshape(1, -1).astype(jnp.float32),
                    ((0, 0), (0, out_pad - output_size)))

    return {"w_in": w_in, "shift_in": shift_in, "stages": stages,
            "w_out": w_out, "b_out": b_out, "out_size": output_size}


def _reference(x, params):
    """Pure-JAX reference with the same precision recipe (bf16 dots, f32 elementwise)."""
    in_pad = params["w_in"].shape[0]
    xp = jnp.pad(x, ((0, 0), (0, in_pad - x.shape[1])))

    def mm(a, w):
        return jnp.dot(a.astype(jnp.bfloat16), w, preferred_element_type=jnp.float32)

    y = jnp.maximum(mm(xp, params["w_in"]) + params["shift_in"], 0.0)
    for st in params["stages"]:
        h = jnp.maximum(mm(y, st["w1"]) + st["shift1"], 0.0).astype(jnp.bfloat16)
        h = jnp.maximum(jnp.dot(h, st["w2"], preferred_element_type=jnp.float32)
                        + st["shift2"], 0.0)
        y = y + h
    out = mm(y, params["w_out"]) + params["b_out"]
    return out[:, :params["out_size"]]


if __name__ == "__main__":
    B = 512            # 2 batch tiles of 256 -> grid length 2 (both TCs busy on v7x)
    D = 256            # linear_size: multiple of 256 to fill the v6e/v7x MXU N dim
    IN, OUT = 32, 48   # fixed by the model (16*2 in, 16*3 out)

    key = jax.random.PRNGKey(0)
    kx, kp = jax.random.split(key)
    x = jax.random.normal(kx, (B, IN), jnp.float32)
    params = init_params(kp, linear_size=D, num_stage=2,
                         input_size=IN, output_size=OUT)

    out = jax.block_until_ready(linear_model_forward(x, params, tile_b=256))

    ref = _reference(x, params)
    assert out.shape == (B, OUT)
    assert jnp.allclose(out, ref, atol=2e-3, rtol=2e-3), "mismatch vs reference"
    print("KERNEL_OK")
</pallas_src>

<mosaic_0001>
module attributes {stable_mosaic.version = 11 : i64} {
  func.func @_linear_model_kernel(%arg0: i32, %arg1: memref<256x128xf32, #tpu.memory_space<vmem>>, %arg2: memref<128x256xbf16, #tpu.memory_space<vmem>>, %arg3: memref<1x256xf32, #tpu.memory_space<vmem>>, %arg4: memref<256x256xbf16, #tpu.memory_space<vmem>>, %arg5: memref<1x256xf32, #tpu.memory_space<vmem>>, %arg6: memref<256x256xbf16, #tpu.memory_space<vmem>>, %arg7: memref<1x256xf32, #tpu.memory_space<vmem>>, %arg8: memref<256x256xbf16, #tpu.memory_space<vmem>>, %arg9: memref<1x256xf32, #tpu.memory_space<vmem>>, %arg10: memref<256x256xbf16, #tpu.memory_space<vmem>>, %arg11: memref<1x256xf32, #tpu.memory_space<vmem>>, %arg12: memref<256x128xbf16, #tpu.memory_space<vmem>>, %arg13: memref<1x128xf32, #tpu.memory_space<vmem>>, %arg14: memref<256x128xf32, #tpu.memory_space<vmem>>) attributes {dimension_semantics = [#tpu.dimension_semantics<parallel>], iteration_bounds = array<i64: 2>, scalar_prefetch = 0 : i64, scratch_operands = 0 : i64, tpu.core_type = #tpu.core_type<tc>, window_params = [{transform_indices = @transform_0, window_bounds = array<i64: 256, 128>}, {pipeline_mode = #tpu.pipeline_mode<synchronous>, transform_indices = @transform_1, window_bounds = array<i64: 128, 256>}, {pipeline_mode = #tpu.pipeline_mode<synchronous>, transform_indices = @transform_2, window_bounds = array<i64: 1, 256>}, {pipeline_mode = #tpu.pipeline_mode<synchronous>, transform_indices = @transform_3, window_bounds = array<i64: 256, 256>}, {pipeline_mode = #tpu.pipeline_mode<synchronous>, transform_indices = @transform_4, window_bounds = array<i64: 1, 256>}, {pipeline_mode = #tpu.pipeline_mode<synchronous>, transform_indices = @transform_5, window_bounds = array<i64: 256, 256>}, {pipeline_mode = #tpu.pipeline_mode<synchronous>, transform_indices = @transform_6, window_bounds = array<i64: 1, 256>}, {pipeline_mode = #tpu.pipeline_mode<synchronous>, transform_indices = @transform_7, window_bounds = array<i64: 256, 256>}, {pipeline_mode = #tpu.pipeline_mode<synchronous>, transform_indices = @transform_8, window_bounds = array<i64: 1, 256>}, {pipeline_mode = #tpu.pipeline_mode<synchronous>, transform_indices = @transform_9, window_bounds = array<i64: 256, 256>}, {pipeline_mode = #tpu.pipeline_mode<synchronous>, transform_indices = @transform_10, window_bounds = array<i64: 1, 256>}, {pipeline_mode = #tpu.pipeline_mode<synchronous>, transform_indices = @transform_11, window_bounds = array<i64: 256, 128>}, {pipeline_mode = #tpu.pipeline_mode<synchronous>, transform_indices = @transform_12, window_bounds = array<i64: 1, 128>}, {transform_indices = @transform_13, window_bounds = array<i64: 256, 128>}]} {
    %c0 = arith.constant 0 : index
    %c0_0 = arith.constant 0 : index
    %0 = vector.load %arg1[%c0, %c0_0] : memref<256x128xf32, #tpu.memory_space<vmem>>, vector<256x128xf32>
    %1 = arith.truncf %0 : vector<256x128xf32> to vector<256x128xbf16>
    %c0_1 = arith.constant 0 : index
    %c0_2 = arith.constant 0 : index
    %2 = vector.load %arg2[%c0_1, %c0_2] : memref<128x256xbf16, #tpu.memory_space<vmem>>, vector<128x256xbf16>
    %cst = arith.constant dense<0.000000e+00> : vector<256x256xf32>
    %3 = tpu.matmul %1, %2, %cst {dimension_numbers = #tpu.dot_dimension_numbers<[1], [0], [0], [1], [0, 0, 1, 1], [], []>} : vector<256x128xbf16>, vector<128x256xbf16>, vector<256x256xf32> -> vector<256x256xf32>
    %c0_3 = arith.constant 0 : index
    %c0_4 = arith.constant 0 : index
    %4 = vector.load %arg3[%c0_3, %c0_4] : memref<1x256xf32, #tpu.memory_space<vmem>>, vector<1x256xf32>
    %5 = vector.broadcast %4 : vector<1x256xf32> to vector<256x256xf32>
    %6 = arith.addf %3, %5 : vector<256x256xf32>
    %cst_5 = arith.constant 0.000000e+00 : f32
    %7 = vector.broadcast %cst_5 : f32 to vector<256x256xf32>
    %8 = arith.maximumf %6, %7 : vector<256x256xf32>
    %9 = arith.truncf %8 : vector<256x256xf32> to vector<256x256xbf16>
    %c0_6 = arith.constant 0 : index
    %c0_7 = arith.constant 0 : index
    %10 = vector.load %arg4[%c0_6, %c0_7] : memref<256x256xbf16, #tpu.memory_space<vmem>>, vector<256x256xbf16>
    %cst_8 = arith.constant dense<0.000000e+00> : vector<256x256xf32>
    %11 = tpu.matmul %9, %10, %cst_8 {dimension_numbers = #tpu.dot_dimension_numbers<[1], [0], [0], [1], [0, 0, 1, 1], [], []>} : vector<256x256xbf16>, vector<256x256xbf16>, vector<256x256xf32> -> vector<256x256xf32>
    %c0_9 = arith.constant 0 : index
    %c0_10 = arith.constant 0 : index
    %12 = vector.load %arg5[%c0_9, %c0_10] : memref<1x256xf32, #tpu.memory_space<vmem>>, vector<1x256xf32>
    %13 = vector.broadcast %12 : vector<1x256xf32> to vector<256x256xf32>
    %14 = arith.addf %11, %13 : vector<256x256xf32>
    %cst_11 = arith.constant 0.000000e+00 : f32
    %15 = vector.broadcast %cst_11 : f32 to vector<256x256xf32>
    %16 = arith.maximumf %14, %15 : vector<256x256xf32>
    %17 = arith.truncf %16 : vector<256x256xf32> to vector<256x256xbf16>
    %c0_12 = arith.constant 0 : index
    %c0_13 = arith.constant 0 : index
    %18 = vector.load %arg6[%c0_12, %c0_13] : memref<256x256xbf16, #tpu.memory_space<vmem>>, vector<256x256xbf16>
    %cst_14 = arith.constant dense<0.000000e+00> : vector<256x256xf32>
    %19 = tpu.matmul %17, %18, %cst_14 {dimension_numbers = #tpu.dot_dimension_numbers<[1], [0], [0], [1], [0, 0, 1, 1], [], []>} : vector<256x256xbf16>, vector<256x256xbf16>, vector<256x256xf32> -> vector<256x256xf32>
    %c0_15 = arith.constant 0 : index
    %c0_16 = arith.constant 0 : index
    %20 = vector.load %arg7[%c0_15, %c0_16] : memref<1x256xf32, #tpu.memory_space<vmem>>, vector<1x256xf32>
    %21 = vector.broadcast %20 : vector<1x256xf32> to vector<256x256xf32>
    %22 = arith.addf %19, %21 : vector<256x256xf32>
    %cst_17 = arith.constant 0.000000e+00 : f32
    %23 = vector.broadcast %cst_17 : f32 to vector<256x256xf32>
    %24 = arith.maximumf %22, %23 : vector<256x256xf32>
    %25 = arith.addf %8, %24 : vector<256x256xf32>
    %26 = arith.truncf %25 : vector<256x256xf32> to vector<256x256xbf16>
    %c0_18 = arith.constant 0 : index
    %c0_19 = arith.constant 0 : index
    %27 = vector.load %arg8[%c0_18, %c0_19] : memref<256x256xbf16, #tpu.memory_space<vmem>>, vector<256x256xbf16>
    %cst_20 = arith.constant dense<0.000000e+00> : vector<256x256xf32>
    %28 = tpu.matmul %26, %27, %cst_20 {dimension_numbers = #tpu.dot_dimension_numbers<[1], [0], [0], [1], [0, 0, 1, 1], [], []>} : vector<256x256xbf16>, vector<256x256xbf16>, vector<256x256xf32> -> vector<256x256xf32>
    %c0_21 = arith.constant 0 : index
    %c0_22 = arith.constant 0 : index
    %29 = vector.load %arg9[%c0_21, %c0_22] : memref<1x256xf32, #tpu.memory_space<vmem>>, vector<1x256xf32>
    %30 = vector.broadcast %29 : vector<1x256xf32> to vector<256x256xf32>
    %31 = arith.addf %28, %30 : vector<256x256xf32>
    %cst_23 = arith.constant 0.000000e+00 : f32
    %32 = vector.broadcast %cst_23 : f32 to vector<256x256xf32>
    %33 = arith.maximumf %31, %32 : vector<256x256xf32>
    %34 = arith.truncf %33 : vector<256x256xf32> to vector<256x256xbf16>
    %c0_24 = arith.constant 0 : index
    %c0_25 = arith.constant 0 : index
    %35 = vector.load %arg10[%c0_24, %c0_25] : memref<256x256xbf16, #tpu.memory_space<vmem>>, vector<256x256xbf16>
    %cst_26 = arith.constant dense<0.000000e+00> : vector<256x256xf32>
    %36 = tpu.matmul %34, %35, %cst_26 {dimension_numbers = #tpu.dot_dimension_numbers<[1], [0], [0], [1], [0, 0, 1, 1], [], []>} : vector<256x256xbf16>, vector<256x256xbf16>, vector<256x256xf32> -> vector<256x256xf32>
    %c0_27 = arith.constant 0 : index
    %c0_28 = arith.constant 0 : index
    %37 = vector.load %arg11[%c0_27, %c0_28] : memref<1x256xf32, #tpu.memory_space<vmem>>, vector<1x256xf32>
    %38 = vector.broadcast %37 : vector<1x256xf32> to vector<256x256xf32>
    %39 = arith.addf %36, %38 : vector<256x256xf32>
    %cst_29 = arith.constant 0.000000e+00 : f32
    %40 = vector.broadcast %cst_29 : f32 to vector<256x256xf32>
    %41 = arith.maximumf %39, %40 : vector<256x256xf32>
    %42 = arith.addf %25, %41 : vector<256x256xf32>
    %43 = arith.truncf %42 : vector<256x256xf32> to vector<256x256xbf16>
    %c0_30 = arith.constant 0 : index
    %c0_31 = arith.constant 0 : index
    %44 = vector.load %arg12[%c0_30, %c0_31] : memref<256x128xbf16, #tpu.memory_space<vmem>>, vector<256x128xbf16>
    %cst_32 = arith.constant dense<0.000000e+00> : vector<256x128xf32>
    %45 = tpu.matmul %43, %44, %cst_32 {dimension_numbers = #tpu.dot_dimension_numbers<[1], [0], [0], [1], [0, 0, 1, 1], [], []>} : vector<256x256xbf16>, vector<256x128xbf16>, vector<256x128xf32> -> vector<256x128xf32>
    %c0_33 = arith.constant 0 : index
    %c0_34 = arith.constant 0 : index
    %46 = vector.load %arg13[%c0_33, %c0_34] : memref<1x128xf32, #tpu.memory_space<vmem>>, vector<1x128xf32>
    %47 = vector.broadcast %46 : vector<1x128xf32> to vector<256x128xf32>
    %48 = arith.addf %45, %47 : vector<256x128xf32>
    %c0_35 = arith.constant 0 : index
    %c0_36 = arith.constant 0 : index
    %49 = vector.load %arg14[%c0_35, %c0_36] : memref<256x128xf32, #tpu.memory_space<vmem>>, vector<256x128xf32>
    tpu.vector_store %arg14[%c0_35, %c0_36], %48 {strides = array<i32>} : memref<256x128xf32, #tpu.memory_space<vmem>>, vector<256x128xf32>,
    return
  }
  func.func @transform_0(%arg0: i32) -> (i32, i32) {
    %c0_i32 = arith.constant 0 : i32
    %c0_i32_0 = arith.constant 0 : i32
    return %arg0, %c0_i32 : i32, i32
  }
  func.func @transform_1(%arg0: i32) -> (i32, i32) {
    %c0_i32 = arith.constant 0 : i32
    %c0_i32_0 = arith.constant 0 : i32
    %c0_i32_1 = arith.constant 0 : i32
    return %c0_i32, %c0_i32_0 : i32, i32
  }
  func.func @transform_2(%arg0: i32) -> (i32, i32) {
    %c0_i32 = arith.constant 0 : i32
    %c0_i32_0 = arith.constant 0 : i32
    %c0_i32_1 = arith.constant 0 : i32
    return %c0_i32, %c0_i32_0 : i32, i32
  }
  func.func @transform_3(%arg0: i32) -> (i32, i32) {
    %c0_i32 = arith.constant 0 : i32
    %c0_i32_0 = arith.constant 0 : i32
    %c0_i32_1 = arith.constant 0 : i32
    return %c0_i32, %c0_i32_0 : i32, i32
  }
  func.func @transform_4(%arg0: i32) -> (i32, i32) {
    %c0_i32 = arith.constant 0 : i32
    %c0_i32_0 = arith.constant 0 : i32
    %c0_i32_1 = arith.constant 0 : i32
    return %c0_i32, %c0_i32_0 : i32, i32
  }
  func.func @transform_5(%arg0: i32) -> (i32, i32) {
    %c0_i32 = arith.constant 0 : i32
    %c0_i32_0 = arith.constant 0 : i32
    %c0_i32_1 = arith.constant 0 : i32
    return %c0_i32, %c0_i32_0 : i32, i32
  }
  func.func @transform_6(%arg0: i32) -> (i32, i32) {
    %c0_i32 = arith.constant 0 : i32
    %c0_i32_0 = arith.constant 0 : i32
    %c0_i32_1 = arith.constant 0 : i32
    return %c0_i32, %c0_i32_0 : i32, i32
  }
  func.func @transform_7(%arg0: i32) -> (i32, i32) {
    %c0_i32 = arith.constant 0 : i32
    %c0_i32_0 = arith.constant 0 : i32
    %c0_i32_1 = arith.constant 0 : i32
    return %c0_i32, %c0_i32_0 : i32, i32
  }
  func.func @transform_8(%arg0: i32) -> (i32, i32) {
    %c0_i32 = arith.constant 0 : i32
    %c0_i32_0 = arith.constant 0 : i32
    %c0_i32_1 = arith.constant 0 : i32
    return %c0_i32, %c0_i32_0 : i32, i32
  }
  func.func @transform_9(%arg0: i32) -> (i32, i32) {
    %c0_i32 = arith.constant 0 : i32
    %c0_i32_0 = arith.constant 0 : i32
    %c0_i32_1 = arith.constant 0 : i32
    return %c0_i32, %c0_i32_0 : i32, i32
  }
  func.func @transform_10(%arg0: i32) -> (i32, i32) {
    %c0_i32 = arith.constant 0 : i32
    %c0_i32_0 = arith.constant 0 : i32
    %c0_i32_1 = arith.constant 0 : i32
    return %c0_i32, %c0_i32_0 : i32, i32
  }
  func.func @transform_11(%arg0: i32) -> (i32, i32) {
    %c0_i32 = arith.constant 0 : i32
    %c0_i32_0 = arith.constant 0 : i32
    %c0_i32_1 = arith.constant 0 : i32
    return %c0_i32, %c0_i32_0 : i32, i32
  }
  func.func @transform_12(%arg0: i32) -> (i32, i32) {
    %c0_i32 = arith.constant 0 : i32
    %c0_i32_0 = arith.constant 0 : i32
    %c0_i32_1 = arith.constant 0 : i32
    return %c0_i32, %c0_i32_0 : i32, i32
  }
  func.func @transform_13(%arg0: i32) -> (i32, i32) {
    %c0_i32 = arith.constant 0 : i32
    %c0_i32_0 = arith.constant 0 : i32
    return %arg0, %c0_i32 : i32, i32
  }
}

module attributes {stable_mosaic.version = 11 : i64} {
  func.func @_linear_model_kernel(%arg0: i32, %arg1: memref<256x128xf32, #tpu.memory_space<vmem>>, %arg2: memref<128x256xbf16, #tpu.memory_space<vmem>>, %arg3: memref<1x256xf32, #tpu.memory_space<vmem>>, %arg4: memref<256x256xbf16, #tpu.memory_space<vmem>>, %arg5: memref<1x256xf32, #tpu.memory_space<vmem>>, %arg6: memref<256x256xbf16, #tpu.memory_space<vmem>>, %arg7: memref<1x256xf32, #tpu.memory_space<vmem>>, %arg8: memref<256x256xbf16, #tpu.memory_space<vmem>>, %arg9: memref<1x256xf32, #tpu.memory_space<vmem>>, %arg10: memref<256x256xbf16, #tpu.memory_space<vmem>>, %arg11: memref<1x256xf32, #tpu.memory_space<vmem>>, %arg12: memref<256x128xbf16, #tpu.memory_space<vmem>>, %arg13: memref<1x128xf32, #tpu.memory_space<vmem>>, %arg14: memref<256x128xf32, #tpu.memory_space<vmem>>) attributes {dimension_semantics = [#tpu.dimension_semantics<parallel>], iteration_bounds = array<i64: 2>, scalar_prefetch = 0 : i64, scratch_operands = 0 : i64, tpu.core_type = #tpu.core_type<tc>, window_params = [{transform_indices = @transform_0, window_bounds = array<i64: 256, 128>}, {pipeline_mode = #tpu.pipeline_mode<synchronous>, transform_indices = @transform_1, window_bounds = array<i64: 128, 256>}, {pipeline_mode = #tpu.pipeline_mode<synchronous>, transform_indices = @transform_2, window_bounds = array<i64: 1, 256>}, {pipeline_mode = #tpu.pipeline_mode<synchronous>, transform_indices = @transform_3, window_bounds = array<i64: 256, 256>}, {pipeline_mode = #tpu.pipeline_mode<synchronous>, transform_indices = @transform_4, window_bounds = array<i64: 1, 256>}, {pipeline_mode = #tpu.pipeline_mode<synchronous>, transform_indices = @transform_5, window_bounds = array<i64: 256, 256>}, {pipeline_mode = #tpu.pipeline_mode<synchronous>, transform_indices = @transform_6, window_bounds = array<i64: 1, 256>}, {pipeline_mode = #tpu.pipeline_mode<synchronous>, transform_indices = @transform_7, window_bounds = array<i64: 256, 256>}, {pipeline_mode = #tpu.pipeline_mode<synchronous>, transform_indices = @transform_8, window_bounds = array<i64: 1, 256>}, {pipeline_mode = #tpu.pipeline_mode<synchronous>, transform_indices = @transform_9, window_bounds = array<i64: 256, 256>}, {pipeline_mode = #tpu.pipeline_mode<synchronous>, transform_indices = @transform_10, window_bounds = array<i64: 1, 256>}, {pipeline_mode = #tpu.pipeline_mode<synchronous>, transform_indices = @transform_11, window_bounds = array<i64: 256, 128>}, {pipeline_mode = #tpu.pipeline_mode<synchronous>, transform_indices = @transform_12, window_bounds = array<i64: 1, 128>}, {transform_indices = @transform_13, window_bounds = array<i64: 256, 128>}]} {
    %c0 = arith.constant 0 : index
    %c0_0 = arith.constant 0 : index
    %0 = vector.load %arg1[%c0, %c0_0] : memref<256x128xf32, #tpu.memory_space<vmem>>, vector<256x128xf32>
    %1 = arith.truncf %0 : vector<256x128xf32> to vector<256x128xbf16>
    %c0_1 = arith.constant 0 : index
    %c0_2 = arith.constant 0 : index
    %2 = vector.load %arg2[%c0_1, %c0_2] : memref<128x256xbf16, #tpu.memory_space<vmem>>, vector<128x256xbf16>
    %cst = arith.constant dense<0.000000e+00> : vector<256x256xf32>
    %3 = tpu.matmul %1, %2, %cst {dimension_numbers = #tpu.dot_dimension_numbers<[1], [0], [0], [1], [0, 0, 1, 1], [], []>} : vector<256x128xbf16>, vector<128x256xbf16>, vector<256x256xf32> -> vector<256x256xf32>
    %c0_3 = arith.constant 0 : index
    %c0_4 = arith.constant 0 : index
    %4 = vector.load %arg3[%c0_3, %c0_4] : memref<1x256xf32, #tpu.memory_space<vmem>>, vector<1x256xf32>
    %5 = vector.broadcast %4 : vector<1x256xf32> to vector<256x256xf32>
    %6 = arith.addf %3, %5 : vector<256x256xf32>
    %cst_5 = arith.constant 0.000000e+00 : f32
    %7 = vector.broadcast %cst_5 : f32 to vector<256x256xf32>
    %8 = arith.maximumf %6, %7 : vector<256x256xf32>
    %9 = arith.truncf %8 : vector<256x256xf32> to vector<256x256xbf16>
    %c0_6 = arith.constant 0 : index
    %c0_7 = arith.constant 0 : index
    %10 = vector.load %arg4[%c0_6, %c0_7] : memref<256x256xbf16, #tpu.memory_space<vmem>>, vector<256x256xbf16>
    %cst_8 = arith.constant dense<0.000000e+00> : vector<256x256xf32>
    %11 = tpu.matmul %9, %10, %cst_8 {dimension_numbers = #tpu.dot_dimension_numbers<[1], [0], [0], [1], [0, 0, 1, 1], [], []>} : vector<256x256xbf16>, vector<256x256xbf16>, vector<256x256xf32> -> vector<256x256xf32>
    %c0_9 = arith.constant 0 : index
    %c0_10 = arith.constant 0 : index
    %12 = vector.load %arg5[%c0_9, %c0_10] : memref<1x256xf32, #tpu.memory_space<vmem>>, vector<1x256xf32>
    %13 = vector.broadcast %12 : vector<1x256xf32> to vector<256x256xf32>
    %14 = arith.addf %11, %13 : vector<256x256xf32>
    %cst_11 = arith.constant 0.000000e+00 : f32
    %15 = vector.broadcast %cst_11 : f32 to vector<256x256xf32>
    %16 = arith.maximumf %14, %15 : vector<256x256xf32>
    %17 = arith.truncf %16 : vector<256x256xf32> to vector<256x256xbf16>
    %c0_12 = arith.constant 0 : index
    %c0_13 = arith.constant 0 : index
    %18 = vector.load %arg6[%c0_12, %c0_13] : memref<256x256xbf16, #tpu.memory_space<vmem>>, vector<256x256xbf16>
    %cst_14 = arith.constant dense<0.000000e+00> : vector<256x256xf32>
    %19 = tpu.matmul %17, %18, %cst_14 {dimension_numbers = #tpu.dot_dimension_numbers<[1], [0], [0], [1], [0, 0, 1, 1], [], []>} : vector<256x256xbf16>, vector<256x256xbf16>, vector<256x256xf32> -> vector<256x256xf32>
    %c0_15 = arith.constant 0 : index
    %c0_16 = arith.constant 0 : index
    %20 = vector.load %arg7[%c0_15, %c0_16] : memref<1x256xf32, #tpu.memory_space<vmem>>, vector<1x256xf32>
    %21 = vector.broadcast %20 : vector<1x256xf32> to vector<256x256xf32>
    %22 = arith.addf %19, %21 : vector<256x256xf32>
    %cst_17 = arith.constant 0.000000e+00 : f32
    %23 = vector.broadcast %cst_17 : f32 to vector<256x256xf32>
    %24 = arith.maximumf %22, %23 : vector<256x256xf32>
    %25 = arith.addf %8, %24 : vector<256x256xf32>
    %26 = arith.truncf %25 : vector<256x256xf32> to vector<256x256xbf16>
    %c0_18 = arith.constant 0 : index
    %c0_19 = arith.constant 0 : index
    %27 = vector.load %arg8[%c0_18, %c0_19] : memref<256x256xbf16, #tpu.memory_space<vmem>>, vector<256x256xbf16>
    %cst_20 = arith.constant dense<0.000000e+00> : vector<256x256xf32>
    %28 = tpu.matmul %26, %27, %cst_20 {dimension_numbers = #tpu.dot_dimension_numbers<[1], [0], [0], [1], [0, 0, 1, 1], [], []>} : vector<256x256xbf16>, vector<256x256xbf16>, vector<256x256xf32> -> vector<256x256xf32>
    %c0_21 = arith.constant 0 : index
    %c0_22 = arith.constant 0 : index
    %29 = vector.load %arg9[%c0_21, %c0_22] : memref<1x256xf32, #tpu.memory_space<vmem>>, vector<1x256xf32>
    %30 = vector.broadcast %29 : vector<1x256xf32> to vector<256x256xf32>
    %31 = arith.addf %28, %30 : vector<256x256xf32>
    %cst_23 = arith.constant 0.000000e+00 : f32
    %32 = vector.broadcast %cst_23 : f32 to vector<256x256xf32>
    %33 = arith.maximumf %31, %32 : vector<256x256xf32>
    %34 = arith.truncf %33 : vector<256x256xf32> to vector<256x256xbf16>
    %c0_24 = arith.constant 0 : index
    %c0_25 = arith.constant 0 : index
    %35 = vector.load %arg10[%c0_24, %c0_25] : memref<256x256xbf16, #tpu.memory_space<vmem>>, vector<256x256xbf16>
    %cst_26 = arith.constant dense<0.000000e+00> : vector<256x256xf32>
    %36 = tpu.matmul %34, %35, %cst_26 {dimension_numbers = #tpu.dot_dimension_numbers<[1], [0], [0], [1], [0, 0, 1, 1], [], []>} : vector<256x256xbf16>, vector<256x256xbf16>, vector<256x256xf32> -> vector<256x256xf32>
    %c0_27 = arith.constant 0 : index
    %c0_28 = arith.constant 0 : index
    %37 = vector.load %arg11[%c0_27, %c0_28] : memref<1x256xf32, #tpu.memory_space<vmem>>, vector<1x256xf32>
    %38 = vector.broadcast %37 : vector<1x256xf32> to vector<256x256xf32>
    %39 = arith.addf %36, %38 : vector<256x256xf32>
    %cst_29 = arith.constant 0.000000e+00 : f32
    %40 = vector.broadcast %cst_29 : f32 to vector<256x256xf32>
    %41 = arith.maximumf %39, %40 : vector<256x256xf32>
    %42 = arith.addf %25, %41 : vector<256x256xf32>
    %43 = arith.truncf %42 : vector<256x256xf32> to vector<256x256xbf16>
    %c0_30 = arith.constant 0 : index
    %c0_31 = arith.constant 0 : index
    %44 = vector.load %arg12[%c0_30, %c0_31] : memref<256x128xbf16, #tpu.memory_space<vmem>>, vector<256x128xbf16>
    %cst_32 = arith.constant dense<0.000000e+00> : vector<256x128xf32>
    %45 = tpu.matmul %43, %44, %cst_32 {dimension_numbers = #tpu.dot_dimension_numbers<[1], [0], [0], [1], [0, 0, 1, 1], [], []>} : vector<256x256xbf16>, vector<256x128xbf16>, vector<256x128xf32> -> vector<256x128xf32>
    %c0_33 = arith.constant 0 : index
    %c0_34 = arith.constant 0 : index
    %46 = vector.load %arg13[%c0_33, %c0_34] : memref<1x128xf32, #tpu.memory_space<vmem>>, vector<1x128xf32>
    %47 = vector.broadcast %46 : vector<1x128xf32> to vector<256x128xf32>
    %48 = arith.addf %45, %47 : vector<256x128xf32>
    %c0_35 = arith.constant 0 : index
    %c0_36 = arith.constant 0 : index
    %49 = vector.load %arg14[%c0_35, %c0_36] : memref<256x128xf32, #tpu.memory_space<vmem>>, vector<256x128xf32>
    tpu.vector_store %arg14[%c0_35, %c0_36], %48 {strides = array<i32>} : memref<256x128xf32, #tpu.memory_space<vmem>>, vector<256x128xf32>,
    return
  }
  func.func @transform_0(%arg0: i32) -> (i32, i32) {
    %c0_i32 = arith.constant 0 : i32
    %c0_i32_0 = arith.constant 0 : i32
    return %arg0, %c0_i32 : i32, i32
  }
  func.func @transform_1(%arg0: i32) -> (i32, i32) {
    %c0_i32 = arith.constant 0 : i32
    %c0_i32_0 = arith.constant 0 : i32
    %c0_i32_1 = arith.constant 0 : i32
    return %c0_i32, %c0_i32_0 : i32, i32
  }
  func.func @transform_2(%arg0: i32) -> (i32, i32) {
    %c0_i32 = arith.constant 0 : i32
    %c0_i32_0 = arith.constant 0 : i32
    %c0_i32_1 = arith.constant 0 : i32
    return %c0_i32, %c0_i32_0 : i32, i32
  }
  func.func @transform_3(%arg0: i32) -> (i32, i32) {
    %c0_i32 = arith.constant 0 : i32
    %c0_i32_0 = arith.constant 0 : i32
    %c0_i32_1 = arith.constant 0 : i32
    return %c0_i32, %c0_i32_0 : i32, i32
  }
  func.func @transform_4(%arg0: i32) -> (i32, i32) {
    %c0_i32 = arith.constant 0 : i32
    %c0_i32_0 = arith.constant 0 : i32
    %c0_i32_1 = arith.constant 0 : i32
    return %c0_i32, %c0_i32_0 : i32, i32
  }
  func.func @transform_5(%arg0: i32) -> (i32, i32) {
    %c0_i32 = arith.constant 0 : i32
    %c0_i32_0 = arith.constant 0 : i32
    %c0_i32_1 = arith.constant 0 : i32
    return %c0_i32, %c0_i32_0 : i32, i32
  }
  func.func @transform_6(%arg0: i32) -> (i32, i32) {
    %c0_i32 = arith.constant 0 : i32
    %c0_i32_0 = arith.constant 0 : i32
    %c0_i32_1 = arith.constant 0 : i32
    return %c0_i32, %c0_i32_0 : i32, i32
  }
  func.func @transform_7(%arg0: i32) -> (i32, i32) {
    %c0_i32 = arith.constant 0 : i32
    %c0_i32_0 = arith.constant 0 : i32
    %c0_i32_1 = arith.constant 0 : i32
    return %c0_i32, %c0_i32_0 : i32, i32
  }
  func.func @transform_8(%arg0: i32) -> (i32, i32) {
    %c0_i32 = arith.constant 0 : i32
    %c0_i32_0 = arith.constant 0 : i32
    %c0_i32_1 = arith.constant 0 : i32
    return %c0_i32, %c0_i32_0 : i32, i32
  }
  func.func @transform_9(%arg0: i32) -> (i32, i32) {
    %c0_i32 = arith.constant 0 : i32
    %c0_i32_0 = arith.constant 0 : i32
    %c0_i32_1 = arith.constant 0 : i32
    return %c0_i32, %c0_i32_0 : i32, i32
  }
  func.func @transform_10(%arg0: i32) -> (i32, i32) {
    %c0_i32 = arith.constant 0 : i32
    %c0_i32_0 = arith.constant 0 : i32
    %c0_i32_1 = arith.constant 0 : i32
    return %c0_i32, %c0_i32_0 : i32, i32
  }
  func.func @transform_11(%arg0: i32) -> (i32, i32) {
    %c0_i32 = arith.constant 0 : i32
    %c0_i32_0 = arith.constant 0 : i32
    %c0_i32_1 = arith.constant 0 : i32
    return %c0_i32, %c0_i32_0 : i32, i32
  }
  func.func @transform_12(%arg0: i32) -> (i32, i32) {
    %c0_i32 = arith.constant 0 : i32
    %c0_i32_0 = arith.constant 0 : i32
    %c0_i32_1 = arith.constant 0 : i32
    return %c0_i32, %c0_i32_0 : i32, i32
  }
  func.func @transform_13(%arg0: i32) -> (i32, i32) {
    %c0_i32 = arith.constant 0 : i32
    %c0_i32_0 = arith.constant 0 : i32
    return %arg0, %c0_i32 : i32, i32
  }
}

</mosaic_0001>

<llo_original>
// kernel: tpu_custom_call.1
$region0: #{tpu_custom_call.1}
  #allocation0 [shape = 'u32[]', space=smem, size = 0x4, offset = 0x4, fixed_abs, tag = 'smem constant byte address 0x4 - core index']
  #allocation1 [shape = 'u32[144,128]{1,0:T(1,128)}', space=vmem, size = 0x12000, scoped, tag = 'internal scratch']
  %s0 = inlined_call_operand.hbm [shape: f32[512,128], index: 0, kind: input, shape index: {}]
  %s1 = inlined_call_operand.hbm [shape: bf16[128,256], index: 1, kind: input, shape index: {}]
  %s2 = inlined_call_operand.vmem [shape: f32[1,256], index: 2, kind: input, shape index: {}]
  %s3 = inlined_call_operand.hbm [shape: bf16[256,256], index: 3, kind: input, shape index: {}]
  %s4 = inlined_call_operand.vmem [shape: f32[1,256], index: 4, kind: input, shape index: {}]
  %s5 = inlined_call_operand.hbm [shape: bf16[256,256], index: 5, kind: input, shape index: {}]
  %s6 = inlined_call_operand.vmem [shape: f32[1,256], index: 6, kind: input, shape index: {}]
  %s7 = inlined_call_operand.hbm [shape: bf16[256,256], index: 7, kind: input, shape index: {}]
  %s8 = inlined_call_operand.vmem [shape: f32[1,256], index: 8, kind: input, shape index: {}]
  %s9 = inlined_call_operand.hbm [shape: bf16[256,256], index: 9, kind: input, shape index: {}]
  %s10 = inlined_call_operand.vmem [shape: f32[1,256], index: 10, kind: input, shape index: {}]
  %s11 = inlined_call_operand.hbm [shape: bf16[256,128], index: 11, kind: input, shape index: {}]
  %s12 = inlined_call_operand.vmem [shape: f32[1,128], index: 12, kind: input, shape index: {}]
  %s13 = inlined_call_operand.hbm [shape: f32[512,128], index: 13, kind: output, shape index: {}]
  %s14 = sld [smem:[#allocation0]]
  $region113: #{tpu_custom_call.1} parent=0
    _
  %s16 = ssub.s32 1, %s14
  %s17 = scalar_select 0, %s16, %s14
  $region1: #{tpu_custom_call.1} parent=0
    #allocation2 [shape = 'u8[262144]{0}', space=vmem, size = 0x40000, scoped, tag = 'input window, operand 0']
    #allocation3 [shape = 's32[2]{0}', space=sflag, size = 0x8, scoped, tag = 'scoped memory for tpu_custom_call.1']
    #allocation4 [shape = 's32[2]{0}', space=sflag, size = 0x8, scoped, tag = 'scoped memory for tpu_custom_call.1']
    #allocation5 [shape = 'u8[65536]{0}', space=vmem, size = 0x10000, scoped, tag = 'input window, operand 1, single buffered']
    #allocation6 [shape = 's32[1]{0}', space=sflag, size = 0x4, scoped, tag = 'scoped memory for tpu_custom_call.1']
    #allocation7 [shape = 'u8[131072]{0}', space=vmem, size = 0x20000, scoped, tag = 'input window, operand 3, single buffered']
    #allocation8 [shape = 'u8[131072]{0}', space=vmem, size = 0x20000, scoped, tag = 'input window, operand 5, single buffered']
    #allocation9 [shape = 's32[1]{0}', space=sflag, size = 0x4, scoped, tag = 'scoped memory for tpu_custom_call.1']
    #allocation10 [shape = 'u8[131072]{0}', space=vmem, size = 0x20000, scoped, tag = 'input window, operand 7, single buffered']
    #allocation11 [shape = 'u8[131072]{0}', space=vmem, size = 0x20000, scoped, tag = 'input window, operand 9, single buffered']
    #allocation12 [shape = 's32[1]{0}', space=sflag, size = 0x4, scoped, tag = 'scoped memory for tpu_custom_call.1']
    #allocation13 [shape = 'u8[65536]{0}', space=vmem, size = 0x10000, scoped, tag = 'input window, operand 11, single buffered']
    #allocation14 [shape = 'u8[262144]{0}', space=vmem, size = 0x40000, scoped, tag = 'output window, operand 0']
    %18 = vsyncpa [#allocation3], 0
    %s19 = scalar_lea.sflag [#allocation3], 1
    %20 = vsyncpa %s19, 0
    %21 = vsyncpa [#allocation6], 0
    %22 = vsyncpa [#allocation9], 0
    %23 = vsyncpa [#allocation12], 0
    %24 = vsyncpa [#allocation4], 0
    %s25 = scalar_lea.sflag [#allocation4], 1
    %26 = vsyncpa %s25, 0
    loop: start=0, step=1, limit=4
    $region2: #{tpu_custom_call.1} parent=1 // loop_pre_header
      _
    $region3: #{tpu_custom_call.1} parent=1 // loop_header
      %s28 = sphi 0, %s32
      %p29 = scmp.ge.s32.totalorder %s28, 4
      %s38 = sphi 0, %s40
      %s41 = sphi 0, %s38
      %s42 = sphi 0, %s41
      %s58 = sphi 0, %s42
      %s62 = sphi 0, %s62
      %s64 = sphi 0, %s62
      %s65 = sphi 0, %s64
      %s79 = sphi 0, %s65
      %s83 = sphi 0, %s83
      %s85 = sphi 0, %s83
      %s86 = sphi 0, %s85
      %s100 = sphi 0, %s86
      %s104 = sphi 0, %s104
      %s106 = sphi 0, %s104
      %s107 = sphi 0, %s106
      %s121 = sphi 0, %s107
      %s125 = sphi 0, %s125
      %s127 = sphi 0, %s125
      %s128 = sphi 0, %s127
      %s142 = sphi 0, %s128
      %s146 = sphi 0, %s146
      %s148 = sphi 0, %s146
      %s149 = sphi 0, %s148
      %s163 = sphi 0, %s149
      %s167 = sphi 0, %s167
      %s169 = sphi 0, %s167
      %s170 = sphi 0, %s169
      %s184 = sphi 0, %s170
      %s188 = sphi 0, %s188
      %s190 = sphi 0, %s188
      %s191 = sphi 0, %s190
      %s205 = sphi 0, %s191
      %s209 = sphi 0, %s209
      %s211 = sphi 0, %s209
      %s212 = sphi 0, %s211
      %s226 = sphi 0, %s212
      %s230 = sphi 0, %s230
      %s232 = sphi 0, %s230
      %s233 = sphi 0, %s232
      %s247 = sphi 0, %s233
      %s251 = sphi 0, %s251
      %s253 = sphi 0, %s251
      %s254 = sphi 0, %s253
      %s268 = sphi 0, %s254
      %s272 = sphi 0, %s272
      %s274 = sphi 0, %s272
      %s275 = sphi 0, %s274
      %s289 = sphi 0, %s275
      %s293 = sphi 0, %s293
      %s295 = sphi 0, %s293
      %s296 = sphi 0, %s295
      %s310 = sphi 0, %s296
      %s316 = sphi 0, %s318
      %s319 = sphi 0, %s316
      %s320 = sphi 0, %s319
      %s336 = sphi 0, %s320
    $region4: #{tpu_custom_call.1} parent=1 // loop_header_branch
      %31 = sbr.rel (%p29) target = $region8
    $region5: #{tpu_custom_call.1} parent=1 // loop_body
      %s33 = ssub.s32 %s28, 1
      %s34 = ssub.s32 %s28, 2
      %s35 = sadd.s32 %s28, 1
      %s36 = ssub.s32 %s28, %s35
      %p37 = scmp.eq.s32.totalorder %s36, 0
      %s39 = sadd.s32 %s38, 1
      %s40 = scalar_select %p37, %s38, %s39
      %p43 = pneg %p37
      %p44 = scmp.eq.s32.totalorder %s28, 1
      %p45 = por %p43, %p44
      %p46 = scmp.ne.s32.totalorder %s38, %s41
      %p47 = scmp.eq.s32.totalorder %s28, 0
      %p48 = por %p46, %p47
      %p49 = scmp.ne.s32.totalorder %s38, %s41
      %p50 = scmp.eq.s32.totalorder %s33, 1
      %p51 = por %p49, %p50
      %p52 = scmp.ne.s32.totalorder %s41, %s42
      %p53 = scmp.eq.s32.totalorder %s33, 0
      %p54 = por %p52, %p53
      %p55 = scmp.ne.s32.totalorder %s41, %s42
      %p56 = scmp.eq.s32.totalorder %s34, 1
      %p57 = por %p55, %p56
      %p59 = scmp.ne.s32.totalorder %s42, %s58
      %p60 = scmp.eq.s32.totalorder %s34, 0
      %p61 = por %p59, %p60
      %s63 = sadd.s32 %s62, 1
      %p66 = scmp.eq.s32.totalorder %s28, 1
      %p67 = scmp.ne.s32.totalorder %s62, %s64
      %p68 = scmp.eq.s32.totalorder %s28, 0
      %p69 = por %p67, %p68
      %p70 = scmp.ne.s32.totalorder %s62, %s64
      %p71 = scmp.eq.s32.totalorder %s33, 1
      %p72 = por %p70, %p71
      %p73 = scmp.ne.s32.totalorder %s64, %s65
      %p74 = scmp.eq.s32.totalorder %s33, 0
      %p75 = por %p73, %p74
      %p76 = scmp.ne.s32.totalorder %s64, %s65
      %p77 = scmp.eq.s32.totalorder %s34, 1
      %p78 = por %p76, %p77
      %p80 = scmp.ne.s32.totalorder %s65, %s79
      %p81 = scmp.eq.s32.totalorder %s34, 0
      %p82 = por %p80, %p81
      %s84 = sadd.s32 %s83, 1
      %p87 = scmp.eq.s32.totalorder %s28, 1
      %p88 = scmp.ne.s32.totalorder %s83, %s85
      %p89 = scmp.eq.s32.totalorder %s28, 0
      %p90 = por %p88, %p89
      %p91 = scmp.ne.s32.totalorder %s83, %s85
      %p92 = scmp.eq.s32.totalorder %s33, 1
      %p93 = por %p91, %p92
      %p94 = scmp.ne.s32.totalorder %s85, %s86
      %p95 = scmp.eq.s32.totalorder %s33, 0
      %p96 = por %p94, %p95
      %p97 = scmp.ne.s32.totalorder %s85, %s86
      %p98 = scmp.eq.s32.totalorder %s34, 1
      %p99 = por %p97, %p98
      %p101 = scmp.ne.s32.totalorder %s86, %s100
      %p102 = scmp.eq.s32.totalorder %s34, 0
      %p103 = por %p101, %p102
      %s105 = sadd.s32 %s104, 1
      %p108 = scmp.eq.s32.totalorder %s28, 1
      %p109 = scmp.ne.s32.totalorder %s104, %s106
      %p110 = scmp.eq.s32.totalorder %s28, 0
      %p111 = por %p109, %p110
      %p112 = scmp.ne.s32.totalorder %s104, %s106
      %p113 = scmp.eq.s32.totalorder %s33, 1
      %p114 = por %p112, %p113
      %p115 = scmp.ne.s32.totalorder %s106, %s107
      %p116 = scmp.eq.s32.totalorder %s33, 0
      %p117 = por %p115, %p116
      %p118 = scmp.ne.s32.totalorder %s106, %s107
      %p119 = scmp.eq.s32.totalorder %s34, 1
      %p120 = por %p118, %p119
      %p122 = scmp.ne.s32.totalorder %s107, %s121
      %p123 = scmp.eq.s32.totalorder %s34, 0
      %p124 = por %p122, %p123
      %s126 = sadd.s32 %s125, 1
      %p129 = scmp.eq.s32.totalorder %s28, 1
      %p130 = scmp.ne.s32.totalorder %s125, %s127
      %p131 = scmp.eq.s32.totalorder %s28, 0
      %p132 = por %p130, %p131
      %p133 = scmp.ne.s32.totalorder %s125, %s127
      %p134 = scmp.eq.s32.totalorder %s33, 1
      %p135 = por %p133, %p134
      %p136 = scmp.ne.s32.totalorder %s127, %s128
      %p137 = scmp.eq.s32.totalorder %s33, 0
      %p138 = por %p136, %p137
      %p139 = scmp.ne.s32.totalorder %s127, %s128
      %p140 = scmp.eq.s32.totalorder %s34, 1
      %p141 = por %p139, %p140
      %p143 = scmp.ne.s32.totalorder %s128, %s142
      %p144 = scmp.eq.s32.totalorder %s34, 0
      %p145 = por %p143, %p144
      %s147 = sadd.s32 %s146, 1
      %p150 = scmp.eq.s32.totalorder %s28, 1
      %p151 = scmp.ne.s32.totalorder %s146, %s148
      %p152 = scmp.eq.s32.totalorder %s28, 0
      %p153 = por %p151, %p152
      %p154 = scmp.ne.s32.totalorder %s146, %s148
      %p155 = scmp.eq.s32.totalorder %s33, 1
      %p156 = por %p154, %p155
      %p157 = scmp.ne.s32.totalorder %s148, %s149
      %p158 = scmp.eq.s32.totalorder %s33, 0
      %p159 = por %p157, %p158
      %p160 = scmp.ne.s32.totalorder %s148, %s149
      %p161 = scmp.eq.s32.totalorder %s34, 1
      %p162 = por %p160, %p161
      %p164 = scmp.ne.s32.totalorder %s149, %s163
      %p165 = scmp.eq.s32.totalorder %s34, 0
      %p166 = por %p164, %p165
      %s168 = sadd.s32 %s167, 1
      %p171 = scmp.eq.s32.totalorder %s28, 1
      %p172 = scmp.ne.s32.totalorder %s167, %s169
      %p173 = scmp.eq.s32.totalorder %s28, 0
      %p174 = por %p172, %p173
      %p175 = scmp.ne.s32.totalorder %s167, %s169
      %p176 = scmp.eq.s32.totalorder %s33, 1
      %p177 = por %p175, %p176
      %p178 = scmp.ne.s32.totalorder %s169, %s170
      %p179 = scmp.eq.s32.totalorder %s33, 0
      %p180 = por %p178, %p179
      %p181 = scmp.ne.s32.totalorder %s169, %s170
      %p182 = scmp.eq.s32.totalorder %s34, 1
      %p183 = por %p181, %p182
      %p185 = scmp.ne.s32.totalorder %s170, %s184
      %p186 = scmp.eq.s32.totalorder %s34, 0
      %p187 = por %p185, %p186
      %s189 = sadd.s32 %s188, 1
      %p192 = scmp.eq.s32.totalorder %s28, 1
      %p193 = scmp.ne.s32.totalorder %s188, %s190
      %p194 = scmp.eq.s32.totalorder %s28, 0
      %p195 = por %p193, %p194
      %p196 = scmp.ne.s32.totalorder %s188, %s190
      %p197 = scmp.eq.s32.totalorder %s33, 1
      %p198 = por %p196, %p197
      %p199 = scmp.ne.s32.totalorder %s190, %s191
      %p200 = scmp.eq.s32.totalorder %s33, 0
      %p201 = por %p199, %p200
      %p202 = scmp.ne.s32.totalorder %s190, %s191
      %p203 = scmp.eq.s32.totalorder %s34, 1
      %p204 = por %p202, %p203
      %p206 = scmp.ne.s32.totalorder %s191, %s205
      %p207 = scmp.eq.s32.totalorder %s34, 0
      %p208 = por %p206, %p207
      %s210 = sadd.s32 %s209, 1
      %p213 = scmp.eq.s32.totalorder %s28, 1
      %p214 = scmp.ne.s32.totalorder %s209, %s211
      %p215 = scmp.eq.s32.totalorder %s28, 0
      %p216 = por %p214, %p215
      %p217 = scmp.ne.s32.totalorder %s209, %s211
      %p218 = scmp.eq.s32.totalorder %s33, 1
      %p219 = por %p217, %p218
      %p220 = scmp.ne.s32.totalorder %s211, %s212
      %p221 = scmp.eq.s32.totalorder %s33, 0
      %p222 = por %p220, %p221
      %p223 = scmp.ne.s32.totalorder %s211, %s212
      %p224 = scmp.eq.s32.totalorder %s34, 1
      %p225 = por %p223, %p224
      %p227 = scmp.ne.s32.totalorder %s212, %s226
      %p228 = scmp.eq.s32.totalorder %s34, 0
      %p229 = por %p227, %p228
      %s231 = sadd.s32 %s230, 1
      %p234 = scmp.eq.s32.totalorder %s28, 1
      %p235 = scmp.ne.s32.totalorder %s230, %s232
      %p236 = scmp.eq.s32.totalorder %s28, 0
      %p237 = por %p235, %p236
      %p238 = scmp.ne.s32.totalorder %s230, %s232
      %p239 = scmp.eq.s32.totalorder %s33, 1
      %p240 = por %p238, %p239
      %p241 = scmp.ne.s32.totalorder %s232, %s233
      %p242 = scmp.eq.s32.totalorder %s33, 0
      %p243 = por %p241, %p242
      %p244 = scmp.ne.s32.totalorder %s232, %s233
      %p245 = scmp.eq.s32.totalorder %s34, 1
      %p246 = por %p244, %p245
      %p248 = scmp.ne.s32.totalorder %s233, %s247
      %p249 = scmp.eq.s32.totalorder %s34, 0
      %p250 = por %p248, %p249
      %s252 = sadd.s32 %s251, 1
      %p255 = scmp.eq.s32.totalorder %s28, 1
      %p256 = scmp.ne.s32.totalorder %s251, %s253
      %p257 = scmp.eq.s32.totalorder %s28, 0
      %p258 = por %p256, %p257
      %p259 = scmp.ne.s32.totalorder %s251, %s253
      %p260 = scmp.eq.s32.totalorder %s33, 1
      %p261 = por %p259, %p260
      %p262 = scmp.ne.s32.totalorder %s253, %s254
      %p263 = scmp.eq.s32.totalorder %s33, 0
      %p264 = por %p262, %p263
      %p265 = scmp.ne.s32.totalorder %s253, %s254
      %p266 = scmp.eq.s32.totalorder %s34, 1
      %p267 = por %p265, %p266
      %p269 = scmp.ne.s32.totalorder %s254, %s268
      %p270 = scmp.eq.s32.totalorder %s34, 0
      %p271 = por %p269, %p270
      %s273 = sadd.s32 %s272, 1
      %p276 = scmp.eq.s32.totalorder %s28, 1
      %p277 = scmp.ne.s32.totalorder %s272, %s274
      %p278 = scmp.eq.s32.totalorder %s28, 0
      %p279 = por %p277, %p278
      %p280 = scmp.ne.s32.totalorder %s272, %s274
      %p281 = scmp.eq.s32.totalorder %s33, 1
      %p282 = por %p280, %p281
      %p283 = scmp.ne.s32.totalorder %s274, %s275
      %p284 = scmp.eq.s32.totalorder %s33, 0
      %p285 = por %p283, %p284
      %p286 = scmp.ne.s32.totalorder %s274, %s275
      %p287 = scmp.eq.s32.totalorder %s34, 1
      %p288 = por %p286, %p287
      %p290 = scmp.ne.s32.totalorder %s275, %s289
      %p291 = scmp.eq.s32.totalorder %s34, 0
      %p292 = por %p290, %p291
      %s294 = sadd.s32 %s293, 1
      %p297 = scmp.eq.s32.totalorder %s28, 1
      %p298 = scmp.ne.s32.totalorder %s293, %s295
      %p299 = scmp.eq.s32.totalorder %s28, 0
      %p300 = por %p298, %p299
      %p301 = scmp.ne.s32.totalorder %s293, %s295
      %p302 = scmp.eq.s32.totalorder %s33, 1
      %p303 = por %p301, %p302
      %p304 = scmp.ne.s32.totalorder %s295, %s296
      %p305 = scmp.eq.s32.totalorder %s33, 0
      %p306 = por %p304, %p305
      %p307 = scmp.ne.s32.totalorder %s295, %s296
      %p308 = scmp.eq.s32.totalorder %s34, 1
      %p309 = por %p307, %p308
      %p311 = scmp.ne.s32.totalorder %s296, %s310
      %p312 = scmp.eq.s32.totalorder %s34, 0
      %p313 = por %p311, %p312
      %s314 = ssub.s32 %s28, %s35
      %p315 = scmp.eq.s32.totalorder %s314, 0
      %s317 = sadd.s32 %s316, 1
      %s318 = scalar_select %p315, %s316, %s317
      %p321 = pneg %p315
      %p322 = scmp.eq.s32.totalorder %s28, 1
      %p323 = por %p321, %p322
      %p324 = scmp.ne.s32.totalorder %s316, %s319
      %p325 = scmp.eq.s32.totalorder %s28, 0
      %p326 = por %p324, %p325
      %p327 = scmp.ne.s32.totalorder %s316, %s319
      %p328 = scmp.eq.s32.totalorder %s33, 1
      %p329 = por %p327, %p328
      %p330 = scmp.ne.s32.totalorder %s319, %s320
      %p331 = scmp.eq.s32.totalorder %s33, 0
      %p332 = por %p330, %p331
      %p333 = scmp.ne.s32.totalorder %s319, %s320
      %p334 = scmp.eq.s32.totalorder %s34, 1
      %p335 = por %p333, %p334
      %p337 = scmp.ne.s32.totalorder %s320, %s336
      %p338 = scmp.eq.s32.totalorder %s34, 0
      %p339 = por %p337, %p338
      %p340 = scmp.le.s32.totalorder 1, %s28
      %p341 = scmp.lt.s32.totalorder %s28, 3
      %p342 = pnand %p340, %p341
      %p343 = pneg %p342
      // Predicated region
      $region9: #{tpu_custom_call.1} parent=5 // pred_check
        _
      $region10: #{tpu_custom_call.1} parent=5 // pred_check_branch
        %345 = sbr.rel (%p342) target = $region12
      $region11: #{tpu_custom_call.1} parent=5 // pred_region
        %s346 = ssub.s32 %s28, 1
        // Predicated region
        $region13: #{tpu_custom_call.1} parent=11 // pred_check
          %p347 = pneg %p75
        $region14: #{tpu_custom_call.1} parent=11 // pred_check_branch
          %349 = sbr.rel (%p347) target = $region16
        $region15: #{tpu_custom_call.1} parent=11 // pred_region
          %s351 = ssub.s32 2048, 2048
          %352 = vsyncadd [#allocation6], %s351
          %s353 = sshll.u32 [#allocation5], 4
          %s354 = int_to_ptr.vmem [resolvable:$true] %s353
          %359 = dma.hbm_to_vmem [thread:$0]  %s1, 2048, %s354, [#allocation6], 128, 128, 8
        $region16: #{tpu_custom_call.1} parent=11 // pred_fallthru
          _
        // Predicated region
        $region17: #{tpu_custom_call.1} parent=11 // pred_check
          %p360 = pneg %p96
        $region18: #{tpu_custom_call.1} parent=11 // pred_check_branch
          %362 = sbr.rel (%p360) target = $region20
        $region19: #{tpu_custom_call.1} parent=11 // pred_region
          _
        $region20: #{tpu_custom_call.1} parent=11 // pred_fallthru
          _
        // Predicated region
        $region21: #{tpu_custom_call.1} parent=11 // pred_check
          %p363 = pneg %p117
        $region22: #{tpu_custom_call.1} parent=11 // pred_check_branch
          %365 = sbr.rel (%p363) target = $region24
        $region23: #{tpu_custom_call.1} parent=11 // pred_region
          %s367 = ssub.s32 4096, 4096
          %368 = vsyncadd [#allocation6], %s367
          %s369 = sshll.u32 [#allocation7], 4
          %s370 = int_to_ptr.vmem [resolvable:$true] %s369
          %375 = dma.hbm_to_vmem [thread:$0]  %s3, 4096, %s370, [#allocation6], 128, 128, 8
        $region24: #{tpu_custom_call.1} parent=11 // pred_fallthru
          _
        // Predicated region
        $region25: #{tpu_custom_call.1} parent=11 // pred_check
          %p376 = pneg %p138
        $region26: #{tpu_custom_call.1} parent=11 // pred_check_branch
          %378 = sbr.rel (%p376) target = $region28
        $region27: #{tpu_custom_call.1} parent=11 // pred_region
          _
        $region28: #{tpu_custom_call.1} parent=11 // pred_fallthru
          _
        // Predicated region
        $region29: #{tpu_custom_call.1} parent=11 // pred_check
          %p379 = pneg %p159
        $region30: #{tpu_custom_call.1} parent=11 // pred_check_branch
          %381 = sbr.rel (%p379) target = $region32
        $region31: #{tpu_custom_call.1} parent=11 // pred_region
          %s383 = ssub.s32 4096, 4096
          %384 = vsyncadd [#allocation9], %s383
          %s385 = sshll.u32 [#allocation8], 4
          %s386 = int_to_ptr.vmem [resolvable:$true] %s385
          %391 = dma.hbm_to_vmem [thread:$0]  %s5, 4096, %s386, [#allocation9], 128, 128, 8
        $region32: #{tpu_custom_call.1} parent=11 // pred_fallthru
          _
        // Predicated region
        $region33: #{tpu_custom_call.1} parent=11 // pred_check
          %p392 = pneg %p180
        $region34: #{tpu_custom_call.1} parent=11 // pred_check_branch
          %394 = sbr.rel (%p392) target = $region36
        $region35: #{tpu_custom_call.1} parent=11 // pred_region
          _
        $region36: #{tpu_custom_call.1} parent=11 // pred_fallthru
          _
        // Predicated region
        $region37: #{tpu_custom_call.1} parent=11 // pred_check
          %p395 = pneg %p201
        $region38: #{tpu_custom_call.1} parent=11 // pred_check_branch
          %397 = sbr.rel (%p395) target = $region40
        $region39: #{tpu_custom_call.1} parent=11 // pred_region
          %s399 = ssub.s32 4096, 4096
          %400 = vsyncadd [#allocation9], %s399
          %s401 = sshll.u32 [#allocation10], 4
          %s402 = int_to_ptr.vmem [resolvable:$true] %s401
          %407 = dma.hbm_to_vmem [thread:$0]  %s7, 4096, %s402, [#allocation9], 128, 128, 8
        $region40: #{tpu_custom_call.1} parent=11 // pred_fallthru
          _
        // Predicated region
        $region41: #{tpu_custom_call.1} parent=11 // pred_check
          %p408 = pneg %p222
        $region42: #{tpu_custom_call.1} parent=11 // pred_check_branch
          %410 = sbr.rel (%p408) target = $region44
        $region43: #{tpu_custom_call.1} parent=11 // pred_region
          _
        $region44: #{tpu_custom_call.1} parent=11 // pred_fallthru
          _
        // Predicated region
        $region45: #{tpu_custom_call.1} parent=11 // pred_check
          %p411 = pneg %p243
        $region46: #{tpu_custom_call.1} parent=11 // pred_check_branch
          %413 = sbr.rel (%p411) target = $region48
        $region47: #{tpu_custom_call.1} parent=11 // pred_region
          %s415 = ssub.s32 4096, 4096
          %416 = vsyncadd [#allocation12], %s415
          %s417 = sshll.u32 [#allocation11], 4
          %s418 = int_to_ptr.vmem [resolvable:$true] %s417
          %423 = dma.hbm_to_vmem [thread:$0]  %s9, 4096, %s418, [#allocation12], 128, 128, 8
        $region48: #{tpu_custom_call.1} parent=11 // pred_fallthru
          _
        // Predicated region
        $region49: #{tpu_custom_call.1} parent=11 // pred_check
          %p424 = pneg %p264
        $region50: #{tpu_custom_call.1} parent=11 // pred_check_branch
          %426 = sbr.rel (%p424) target = $region52
        $region51: #{tpu_custom_call.1} parent=11 // pred_region
          _
        $region52: #{tpu_custom_call.1} parent=11 // pred_fallthru
          _
        // Predicated region
        $region53: #{tpu_custom_call.1} parent=11 // pred_check
          %p427 = pneg %p285
        $region54: #{tpu_custom_call.1} parent=11 // pred_check_branch
          %429 = sbr.rel (%p427) target = $region56
        $region55: #{tpu_custom_call.1} parent=11 // pred_region
          %s431 = ssub.s32 2048, 2048
          %432 = vsyncadd [#allocation12], %s431
          %s433 = sshll.u32 [#allocation13], 4
          %s434 = int_to_ptr.vmem [resolvable:$true] %s433
          %439 = dma.hbm_to_vmem [thread:$0]  %s11, 2048, %s434, [#allocation12], 64, 64, 4
        $region56: #{tpu_custom_call.1} parent=11 // pred_fallthru
          _
        // Predicated region
        $region57: #{tpu_custom_call.1} parent=11 // pred_check
          %p440 = pneg %p306
        $region58: #{tpu_custom_call.1} parent=11 // pred_check_branch
          %442 = sbr.rel (%p440) target = $region60
        $region59: #{tpu_custom_call.1} parent=11 // pred_region
          _
        $region60: #{tpu_custom_call.1} parent=11 // pred_fallthru
          _
      $region12: #{tpu_custom_call.1} parent=5 // pred_fallthru
        _
      %p443 = scmp.lt.s32.totalorder %s28, 2
      // Predicated region
      $region61: #{tpu_custom_call.1} parent=5 // pred_check
        %p444 = pneg %p443
      $region62: #{tpu_custom_call.1} parent=5 // pred_check_branch
        %446 = sbr.rel (%p444) target = $region64
      $region63: #{tpu_custom_call.1} parent=5 // pred_region
        // Predicated region
        $region65: #{tpu_custom_call.1} parent=63 // pred_check
          %p447 = pneg %p48
        $region66: #{tpu_custom_call.1} parent=63 // pred_check_branch
          %449 = sbr.rel (%p447) target = $region68
        $region67: #{tpu_custom_call.1} parent=63 // pred_region
          %s450 = sand.u32 %s38, 1
          %s451 = scalar_lea.sflag [#allocation3], %s450
          %s452 = sand.u32 %s38, 1
          %s453 = smul.addr %s452, 256
          %s454 = scalar_lea.vmem [#allocation2], %s453
          %s455 = smul.u32 32, %s28
          %s457 = ssub.s32 4096, 4096
          %458 = vsyncadd %s451, %s457
          %s459 = smul.addr %s455, 128
          %s460 = scalar_lea.hbm %s0, %s459
          %s461 = sshll.u32 %s454, 4
          %s462 = int_to_ptr.vmem [resolvable:$true] %s461
          %467 = dma.hbm_to_vmem [thread:$0]  %s460, 4096, %s462, %s451, 128, 128, 8
        $region68: #{tpu_custom_call.1} parent=63 // pred_fallthru
          _
      $region64: #{tpu_custom_call.1} parent=5 // pred_fallthru
        _
      %p468 = scmp.le.s32.totalorder 1, %s28
      %p469 = scmp.lt.s32.totalorder %s28, 3
      %p470 = pnand %p468, %p469
      %p471 = pneg %p470
      // Predicated region
      $region69: #{tpu_custom_call.1} parent=5 // pred_check
        _
      $region70: #{tpu_custom_call.1} parent=5 // pred_check_branch
        %473 = sbr.rel (%p470) target = $region72
      $region71: #{tpu_custom_call.1} parent=5 // pred_region
        %s474 = ssub.s32 %s28, 1
        %s475 = sand.u32 %s41, 1
        %s476 = scalar_lea.sflag [#allocation3], %s475
        %s477 = sand.u32 %s41, 1
        %s478 = smul.addr %s477, 256
        %s479 = scalar_lea.vmem [#allocation2], %s478
        // Predicated region
        $region73: #{tpu_custom_call.1} parent=71 // pred_check
          %p480 = pneg %p54
        $region74: #{tpu_custom_call.1} parent=71 // pred_check_branch
          %482 = sbr.rel (%p480) target = $region76
        $region75: #{tpu_custom_call.1} parent=71 // pred_region
          %483 = dma.done %s476, 4096
        $region76: #{tpu_custom_call.1} parent=71 // pred_fallthru
          _
        // Predicated region
        $region77: #{tpu_custom_call.1} parent=71 // pred_check
          %p484 = pneg %p75
        $region78: #{tpu_custom_call.1} parent=71 // pred_check_branch
          %486 = sbr.rel (%p484) target = $region80
        $region79: #{tpu_custom_call.1} parent=71 // pred_region
          %487 = dma.done [#allocation6], 2048
        $region80: #{tpu_custom_call.1} parent=71 // pred_fallthru
          _
        // Predicated region
        $region81: #{tpu_custom_call.1} parent=71 // pred_check
          %p488 = pneg %p117
        $region82: #{tpu_custom_call.1} parent=71 // pred_check_branch
          %490 = sbr.rel (%p488) target = $region84
        $region83: #{tpu_custom_call.1} parent=71 // pred_region
          %491 = dma.done [#allocation6], 4096
        $region84: #{tpu_custom_call.1} parent=71 // pred_fallthru
          _
        // Predicated region
        $region85: #{tpu_custom_call.1} parent=71 // pred_check
          %p492 = pneg %p159
        $region86: #{tpu_custom_call.1} parent=71 // pred_check_branch
          %494 = sbr.rel (%p492) target = $region88
        $region87: #{tpu_custom_call.1} parent=71 // pred_region
          %495 = dma.done [#allocation9], 4096
        $region88: #{tpu_custom_call.1} parent=71 // pred_fallthru
          _
        // Predicated region
        $region89: #{tpu_custom_call.1} parent=71 // pred_check
          %p496 = pneg %p201
        $region90: #{tpu_custom_call.1} parent=71 // pred_check_branch
          %498 = sbr.rel (%p496) target = $region92
        $region91: #{tpu_custom_call.1} parent=71 // pred_region
          %499 = dma.done [#allocation9], 4096
        $region92: #{tpu_custom_call.1} parent=71 // pred_fallthru
          _
        // Predicated region
        $region93: #{tpu_custom_call.1} parent=71 // pred_check
          %p500 = pneg %p243
        $region94: #{tpu_custom_call.1} parent=71 // pred_check_branch
          %502 = sbr.rel (%p500) target = $region96
        $region95: #{tpu_custom_call.1} parent=71 // pred_region
          %503 = dma.done [#allocation12], 4096
        $region96: #{tpu_custom_call.1} parent=71 // pred_fallthru
          _
        // Predicated region
        $region97: #{tpu_custom_call.1} parent=71 // pred_check
          %p504 = pneg %p285
        $region98: #{tpu_custom_call.1} parent=71 // pred_check_branch
          %506 = sbr.rel (%p504) target = $region100
        $region99: #{tpu_custom_call.1} parent=71 // pred_region
          %507 = dma.done [#allocation12], 2048
        $region100: #{tpu_custom_call.1} parent=71 // pred_fallthru
          _
        %s508 = sand.u32 %s41, 1
        %s509 = scalar_lea.sflag [#allocation3], %s508
        %s510 = sand.u32 %s41, 1
        %s511 = smul.addr %s510, 256
        %s512 = scalar_lea.vmem [#allocation2], %s511
        %p513 = pneg %p54
        %p514 = pneg %p51
        %p515 = pneg %p75
        %p516 = pneg %p72
        %p517 = pneg %p96
        %p518 = pneg %p93
        %p519 = pneg %p117
        %p520 = pneg %p114
        %p521 = pneg %p138
        %p522 = pneg %p135
        %p523 = pneg %p159
        %p524 = pneg %p156
        %p525 = pneg %p180
        %p526 = pneg %p177
        %p527 = pneg %p201
        %p528 = pneg %p198
        %p529 = pneg %p222
        %p530 = pneg %p219
        %p531 = pneg %p243
        %p532 = pneg %p240
        %p533 = pneg %p264
        %p534 = pneg %p261
        %p535 = pneg %p285
        %p536 = pneg %p282
        %p537 = pneg %p306
        %p538 = pneg %p303
        %p539 = pneg %p332
        %p540 = pneg %p329
        %s541 = sand.u32 %s319, 1
        %s542 = scalar_lea.sflag [#allocation4], %s541
        %s543 = sand.u32 %s319, 1
        %s544 = smul.addr %s543, 256
        %s545 = scalar_lea.vmem [#allocation14], %s544
        %s546 = smul.u32 32, %s33
        %s547 = smul.u32 32, %s33
        %v549 = vld [vmem:[%s479] sm:$0xff]
        %v550 = vld [vmem:[%s479 + $0x8] sm:$0xff]
        %v551 = vld [vmem:[%s479 + $0x10] sm:$0xff]
        %v552 = vld [vmem:[%s479 + $0x18] sm:$0xff]
        %v553 = vld [vmem:[%s479 + $0x20] sm:$0xff]
        %v554 = vld [vmem:[%s479 + $0x28] sm:$0xff]
        %v555 = vld [vmem:[%s479 + $0x30] sm:$0xff]
        %v556 = vld [vmem:[%s479 + $0x38] sm:$0xff]
        %v557 = vld [vmem:[%s479 + $0x40] sm:$0xff]
        %v558 = vld [vmem:[%s479 + $0x48] sm:$0xff]
        %v559 = vld [vmem:[%s479 + $0x50] sm:$0xff]
        %v560 = vld [vmem:[%s479 + $0x58] sm:$0xff]
        %v561 = vld [vmem:[%s479 + $0x60] sm:$0xff]
        %v562 = vld [vmem:[%s479 + $0x68] sm:$0xff]
        %v563 = vld [vmem:[%s479 + $0x70] sm:$0xff]
        %v564 = vld [vmem:[%s479 + $0x78] sm:$0xff]
        %v565 = vld [vmem:[%s479 + $0x80] sm:$0xff]
        %v566 = vld [vmem:[%s479 + $0x88] sm:$0xff]
        %v567 = vld [vmem:[%s479 + $0x90] sm:$0xff]
        %v568 = vld [vmem:[%s479 + $0x98] sm:$0xff]
        %v569 = vld [vmem:[%s479 + $0xa0] sm:$0xff]
        %v570 = vld [vmem:[%s479 + $0xa8] sm:$0xff]
        %v571 = vld [vmem:[%s479 + $0xb0] sm:$0xff]
        %v572 = vld [vmem:[%s479 + $0xb8] sm:$0xff]
        %v573 = vld [vmem:[%s479 + $0xc0] sm:$0xff]
        %v574 = vld [vmem:[%s479 + $0xc8] sm:$0xff]
        %v575 = vld [vmem:[%s479 + $0xd0] sm:$0xff]
        %v576 = vld [vmem:[%s479 + $0xd8] sm:$0xff]
        %v577 = vld [vmem:[%s479 + $0xe0] sm:$0xff]
        %v578 = vld [vmem:[%s479 + $0xe8] sm:$0xff]
        %v579 = vld [vmem:[%s479 + $0xf0] sm:$0xff]
        %v580 = vld [vmem:[%s479 + $0xf8] sm:$0xff]
        %v581 = vpack.c.bf16 %v550, %v549
        %v582 = vpack.c.bf16 %v552, %v551
        %v583 = vpack.c.bf16 %v554, %v553
        %v584 = vpack.c.bf16 %v556, %v555
        %v585 = vpack.c.bf16 %v558, %v557
        %v586 = vpack.c.bf16 %v560, %v559
        %v587 = vpack.c.bf16 %v562, %v561
        %v588 = vpack.c.bf16 %v564, %v563
        %v589 = vpack.c.bf16 %v566, %v565
        %v590 = vpack.c.bf16 %v568, %v567
        %v591 = vpack.c.bf16 %v570, %v569
        %v592 = vpack.c.bf16 %v572, %v571
        %v593 = vpack.c.bf16 %v574, %v573
        %v594 = vpack.c.bf16 %v576, %v575
        %v595 = vpack.c.bf16 %v578, %v577
        %v596 = vpack.c.bf16 %v580, %v579
        %v597 = vld [vmem:[#allocation5] sm:$0xff]
        %v598 = vld [vmem:[#allocation5 + $0x8] sm:$0xff]
        %v599 = vld [vmem:[#allocation5 + $0x10] sm:$0xff]
        %v600 = vld [vmem:[#allocation5 + $0x18] sm:$0xff]
        %v601 = vld [vmem:[#allocation5 + $0x20] sm:$0xff]
        %v602 = vld [vmem:[#allocation5 + $0x28] sm:$0xff]
        %v603 = vld [vmem:[#allocation5 + $0x30] sm:$0xff]
        %v604 = vld [vmem:[#allocation5 + $0x38] sm:$0xff]
        %v605 = vld [vmem:[#allocation5 + $0x40] sm:$0xff]
        %v606 = vld [vmem:[#allocation5 + $0x48] sm:$0xff]
        %v607 = vld [vmem:[#allocation5 + $0x50] sm:$0xff]
        %v608 = vld [vmem:[#allocation5 + $0x58] sm:$0xff]
        %v609 = vld [vmem:[#allocation5 + $0x60] sm:$0xff]
        %v610 = vld [vmem:[#allocation5 + $0x68] sm:$0xff]
        %v611 = vld [vmem:[#allocation5 + $0x70] sm:$0xff]
        %v612 = vld [vmem:[#allocation5 + $0x78] sm:$0xff]
        %v613 = vld [vmem:[%s2] sm:$0x3]
        %v615 = vlaneseq
        %v616 = vshrl.u32 %v615, 7
        %v617 = vsub.s32 0, %v616
        %v618 = vrot.slane %v613, %v617
        %v619 = vlaneseq
        %v620 = vshrl.u32 %v619, 7
        %v621 = vsub.s32 1, %v620
        %v622 = vrot.slane %v613, %v621
        %v641 = vunpack.c.l.b16 %v597
        %v642 = vunpack.c.h.b16 %v597
        %v643 = vunpack.c.l.b16 %v598
        %v644 = vunpack.c.h.b16 %v598
        %v645 = vunpack.c.l.b16 %v599
        %v646 = vunpack.c.h.b16 %v599
        %v647 = vunpack.c.l.b16 %v600
        %v648 = vunpack.c.h.b16 %v600
        %v649 = vunpack.c.l.b16 %v601
        %v650 = vunpack.c.h.b16 %v601
        %v651 = vunpack.c.l.b16 %v602
        %v652 = vunpack.c.h.b16 %v602
        %v653 = vunpack.c.l.b16 %v603
        %v654 = vunpack.c.h.b16 %v603
        %v655 = vunpack.c.l.b16 %v604
        %v656 = vunpack.c.h.b16 %v604
        %v657 = vunpack.c.l.b16 %v605
        %v658 = vunpack.c.h.b16 %v605
        %v659 = vunpack.c.l.b16 %v606
        %v660 = vunpack.c.h.b16 %v606
        %v661 = vunpack.c.l.b16 %v607
        %v662 = vunpack.c.h.b16 %v607
        %v663 = vunpack.c.l.b16 %v608
        %v664 = vunpack.c.h.b16 %v608
        %v665 = vunpack.c.l.b16 %v609
        %v666 = vunpack.c.h.b16 %v609
        %v667 = vunpack.c.l.b16 %v610
        %v668 = vunpack.c.h.b16 %v610
        %v669 = vunpack.c.l.b16 %v611
        %v670 = vunpack.c.h.b16 %v611
        %v671 = vunpack.c.l.b16 %v612
        %v672 = vunpack.c.h.b16 %v612
        %v673 = vpack.c.b16 %v643, %v641
        %v674 = vpack.c.b16 %v644, %v642
        %v675 = vpack.c.b16 %v647, %v645
        %v676 = vpack.c.b16 %v648, %v646
        %v677 = vpack.c.b16 %v651, %v649
        %v678 = vpack.c.b16 %v652, %v650
        %v679 = vpack.c.b16 %v655, %v653
        %v680 = vpack.c.b16 %v656, %v654
        %v681 = vpack.c.b16 %v659, %v657
        %v682 = vpack.c.b16 %v660, %v658
        %v683 = vpack.c.b16 %v663, %v661
        %v684 = vpack.c.b16 %v664, %v662
        %v685 = vpack.c.b16 %v667, %v665
        %v686 = vpack.c.b16 %v668, %v666
        %v687 = vpack.c.b16 %v671, %v669
        %v688 = vpack.c.b16 %v672, %v670
        %705 = vmatprep.subr.bf16.mxu0 %v688
        %706 = vmatpush1.bf16.msra.mxu0 %v687
        %707 = vmatprep.subr.bf16.mxu0 %v686
        %708 = vmatpush1.bf16.msra.mxu0 %v685
        %709 = vmatprep.subr.bf16.mxu0 %v684
        %710 = vmatpush1.bf16.msra.mxu0 %v683
        %711 = vmatprep.subr.bf16.mxu0 %v682
        %712 = vmatpush1.bf16.msra.mxu0 %v681
        %713 = vmatprep.subr.bf16.mxu0 %v680
        %714 = vmatpush1.bf16.msra.mxu0 %v679
        %715 = vmatprep.subr.bf16.mxu0 %v678
        %716 = vmatpush1.bf16.msra.mxu0 %v677
        %717 = vmatprep.subr.bf16.mxu0 %v676
        %718 = vmatpush1.bf16.msra.mxu0 %v675
        %719 = vmatprep.subr.bf16.mxu0 %v674
        %720 = vmatpush1.bf16.msra.mxu0 %v673
        %721 = vmatprep.subr.bf16.mxu0 0
        %722 = vmatpush2.bf16.msra.mxu0 0
        %723 = vmatprep.subr.bf16.mxu0 0
        %724 = vmatpush2.bf16.msra.mxu0 0
        %725 = vmatprep.subr.bf16.mxu0 0
        %726 = vmatpush2.bf16.msra.mxu0 0
        %727 = vmatprep.subr.bf16.mxu0 0
        %728 = vmatpush2.bf16.msra.mxu0 0
        %729 = vmatprep.subr.bf16.mxu0 0
        %730 = vmatpush2.bf16.msra.mxu0 0
        %731 = vmatprep.subr.bf16.mxu0 0
        %732 = vmatpush2.bf16.msra.mxu0 0
        %733 = vmatprep.subr.bf16.mxu0 0
        %734 = vmatpush2.bf16.msra.mxu0 0
        %735 = vmatprep.subr.bf16.mxu0 0
        %736 = vmatpush2.bf16.msra.mxu0 0
        %737 = vmatprep.mubr.bf16.mxu0 0
        %738 = vmatmul.mubr.bf16.gmra.mxu0 %v581
        %v739 = vpop.f32.mrf.mxu0
        %v740 = vadd.f32 %v618, %v739
        %v741 = vpop.f32.mrf.mxu0
        %v742 = vadd.f32 %v622, %v741
        %v743 = vpop.f32.mrf.mxu0
        %v744 = vadd.f32 %v618, %v743
        %v745 = vpop.f32.mrf.mxu0
        %v746 = vadd.f32 %v622, %v745
        %747 = vmatprep.mubr.bf16.mxu0 0
        %748 = vmatmul.mubr.bf16.gmra.mxu0 %v582
        %v749 = vpop.f32.mrf.mxu0
        %v750 = vadd.f32 %v618, %v749
        %v751 = vpop.f32.mrf.mxu0
        %v752 = vadd.f32 %v622, %v751
        %v753 = vpop.f32.mrf.mxu0
        %v754 = vadd.f32 %v618, %v753
        %v755 = vpop.f32.mrf.mxu0
        %v756 = vadd.f32 %v622, %v755
        %757 = vmatprep.mubr.bf16.mxu0 0
        %758 = vmatmul.mubr.bf16.gmra.mxu0 %v583
        %v759 = vpop.f32.mrf.mxu0
        %v760 = vadd.f32 %v618, %v759
        %v761 = vpop.f32.mrf.mxu0
        %v762 = vadd.f32 %v622, %v761
        %v763 = vpop.f32.mrf.mxu0
        %v764 = vadd.f32 %v618, %v763
        %v765 = vpop.f32.mrf.mxu0
        %v766 = vadd.f32 %v622, %v765
        %767 = vmatprep.mubr.bf16.mxu0 0
        %768 = vmatmul.mubr.bf16.gmra.mxu0 %v584
        %v769 = vpop.f32.mrf.mxu0
        %v770 = vadd.f32 %v618, %v769
        %v771 = vpop.f32.mrf.mxu0
        %v772 = vadd.f32 %v622, %v771
        %v773 = vpop.f32.mrf.mxu0
        %v774 = vadd.f32 %v618, %v773
        %v775 = vpop.f32.mrf.mxu0
        %v776 = vadd.f32 %v622, %v775
        %777 = vmatprep.mubr.bf16.mxu0 0
        %778 = vmatmul.mubr.bf16.gmra.mxu0 %v585
        %v779 = vpop.f32.mrf.mxu0
        %v780 = vadd.f32 %v618, %v779
        %v781 = vpop.f32.mrf.mxu0
        %v782 = vadd.f32 %v622, %v781
        %v783 = vpop.f32.mrf.mxu0
        %v784 = vadd.f32 %v618, %v783
        %v785 = vpop.f32.mrf.mxu0
        %v786 = vadd.f32 %v622, %v785
        %787 = vmatprep.mubr.bf16.mxu0 0
        %788 = vmatmul.mubr.bf16.gmra.mxu0 %v586
        %v789 = vpop.f32.mrf.mxu0
        %v790 = vadd.f32 %v618, %v789
        %v791 = vpop.f32.mrf.mxu0
        %v792 = vadd.f32 %v622, %v791
        %v793 = vpop.f32.mrf.mxu0
        %v794 = vadd.f32 %v618, %v793
        %v795 = vpop.f32.mrf.mxu0
        %v796 = vadd.f32 %v622, %v795
        %797 = vmatprep.mubr.bf16.mxu0 0
        %798 = vmatmul.mubr.bf16.gmra.mxu0 %v587
        %v799 = vpop.f32.mrf.mxu0
        %v800 = vadd.f32 %v618, %v799
        %v801 = vpop.f32.mrf.mxu0
        %v802 = vadd.f32 %v622, %v801
        %v803 = vpop.f32.mrf.mxu0
        %v804 = vadd.f32 %v618, %v803
        %v805 = vpop.f32.mrf.mxu0
        %v806 = vadd.f32 %v622, %v805
        %807 = vmatprep.mubr.bf16.mxu0 0
        %808 = vmatmul.mubr.bf16.gmra.mxu0 %v588
        %v809 = vpop.f32.mrf.mxu0
        %v810 = vadd.f32 %v618, %v809
        %v811 = vpop.f32.mrf.mxu0
        %v812 = vadd.f32 %v622, %v811
        %v813 = vpop.f32.mrf.mxu0
        %v814 = vadd.f32 %v618, %v813
        %v815 = vpop.f32.mrf.mxu0
        %v816 = vadd.f32 %v622, %v815
        %817 = vmatprep.mubr.bf16.mxu0 0
        %818 = vmatmul.mubr.bf16.gmra.mxu0 %v589
        %v819 = vpop.f32.mrf.mxu0
        %v820 = vadd.f32 %v618, %v819
        %v821 = vpop.f32.mrf.mxu0
        %v822 = vadd.f32 %v622, %v821
        %v823 = vpop.f32.mrf.mxu0
        %v824 = vadd.f32 %v618, %v823
        %v825 = vpop.f32.mrf.mxu0
        %v826 = vadd.f32 %v622, %v825
        %827 = vmatprep.mubr.bf16.mxu0 0
        %828 = vmatmul.mubr.bf16.gmra.mxu0 %v590
        %v829 = vpop.f32.mrf.mxu0
        %v830 = vadd.f32 %v618, %v829
        %v831 = vpop.f32.mrf.mxu0
        %v832 = vadd.f32 %v622, %v831
        %v833 = vpop.f32.mrf.mxu0
        %v834 = vadd.f32 %v618, %v833
        %v835 = vpop.f32.mrf.mxu0
        %v836 = vadd.f32 %v622, %v835
        %837 = vmatprep.mubr.bf16.mxu0 0
        %838 = vmatmul.mubr.bf16.gmra.mxu0 %v591
        %v839 = vpop.f32.mrf.mxu0
        %v840 = vadd.f32 %v618, %v839
        %v841 = vpop.f32.mrf.mxu0
        %v842 = vadd.f32 %v622, %v841
        %v843 = vpop.f32.mrf.mxu0
        %v844 = vadd.f32 %v618, %v843
        %v845 = vpop.f32.mrf.mxu0
        %v846 = vadd.f32 %v622, %v845
        %847 = vmatprep.mubr.bf16.mxu0 0
        %848 = vmatmul.mubr.bf16.gmra.mxu0 %v592
        %v849 = vpop.f32.mrf.mxu0
        %v850 = vadd.f32 %v618, %v849
        %v851 = vpop.f32.mrf.mxu0
        %v852 = vadd.f32 %v622, %v851
        %v853 = vpop.f32.mrf.mxu0
        %v854 = vadd.f32 %v618, %v853
        %v855 = vpop.f32.mrf.mxu0
        %v856 = vadd.f32 %v622, %v855
        %857 = vmatprep.mubr.bf16.mxu0 0
        %858 = vmatmul.mubr.bf16.gmra.mxu0 %v593
        %v859 = vpop.f32.mrf.mxu0
        %v860 = vadd.f32 %v618, %v859
        %v861 = vpop.f32.mrf.mxu0
        %v862 = vadd.f32 %v622, %v861
        %v863 = vpop.f32.mrf.mxu0
        %v864 = vadd.f32 %v618, %v863
        %v865 = vpop.f32.mrf.mxu0
        %v866 = vadd.f32 %v622, %v865
        %867 = vmatprep.mubr.bf16.mxu0 0
        %868 = vmatmul.mubr.bf16.gmra.mxu0 %v594
        %v869 = vpop.f32.mrf.mxu0
        %v870 = vadd.f32 %v618, %v869
        %v871 = vpop.f32.mrf.mxu0
        %v872 = vadd.f32 %v622, %v871
        %v873 = vpop.f32.mrf.mxu0
        %v874 = vadd.f32 %v618, %v873
        %v875 = vpop.f32.mrf.mxu0
        %v876 = vadd.f32 %v622, %v875
        %877 = vmatprep.mubr.bf16.mxu0 0
        %878 = vmatmul.mubr.bf16.gmra.mxu0 %v595
        %v879 = vpop.f32.mrf.mxu0
        %v880 = vadd.f32 %v618, %v879
        %v881 = vpop.f32.mrf.mxu0
        %v882 = vadd.f32 %v622, %v881
        %v883 = vpop.f32.mrf.mxu0
        %v884 = vadd.f32 %v618, %v883
        %v885 = vpop.f32.mrf.mxu0
        %v886 = vadd.f32 %v622, %v885
        %887 = vmatprep.mubr.bf16.mxu0 0
        %888 = vmatmul.mubr.bf16.gmra.mxu0 %v596
        %v889 = vpop.f32.mrf.mxu0
        %v890 = vadd.f32 %v618, %v889
        %v891 = vpop.f32.mrf.mxu0
        %v892 = vadd.f32 %v622, %v891
        %v893 = vpop.f32.mrf.mxu0
        %v894 = vadd.f32 %v618, %v893
        %v895 = vpop.f32.mrf.mxu0
        %v896 = vadd.f32 %v622, %v895
        %897 = vdwg.mxu0
        %v898 = vmax.f32 %v740, 0.0
        %v899 = vmax.f32 %v742, 0.0
        %v900 = vmax.f32 %v744, 0.0
        %v901 = vmax.f32 %v746, 0.0
        %v902 = vmax.f32 %v750, 0.0
        %v903 = vmax.f32 %v752, 0.0
        %v904 = vmax.f32 %v754, 0.0
        %v905 = vmax.f32 %v756, 0.0
        %v906 = vmax.f32 %v760, 0.0
        %v907 = vmax.f32 %v762, 0.0
        %v908 = vmax.f32 %v764, 0.0
        %v909 = vmax.f32 %v766, 0.0
        %v910 = vmax.f32 %v770, 0.0
        %v911 = vmax.f32 %v772, 0.0
        %v912 = vmax.f32 %v774, 0.0
        %v913 = vmax.f32 %v776, 0.0
        %v914 = vmax.f32 %v780, 0.0
        %v915 = vmax.f32 %v782, 0.0
        %v916 = vmax.f32 %v784, 0.0
        %v917 = vmax.f32 %v786, 0.0
        %v918 = vmax.f32 %v790, 0.0
        %v919 = vmax.f32 %v792, 0.0
        %v920 = vmax.f32 %v794, 0.0
        %v921 = vmax.f32 %v796, 0.0
        %v922 = vmax.f32 %v800, 0.0
        %v923 = vmax.f32 %v802, 0.0
        %v924 = vmax.f32 %v804, 0.0
        %v925 = vmax.f32 %v806, 0.0
        %v926 = vmax.f32 %v810, 0.0
        %v927 = vmax.f32 %v812, 0.0
        %v928 = vmax.f32 %v814, 0.0
        %v929 = vmax.f32 %v816, 0.0
        %v930 = vmax.f32 %v820, 0.0
        %v931 = vmax.f32 %v822, 0.0
        %v932 = vmax.f32 %v824, 0.0
        %v933 = vmax.f32 %v826, 0.0
        %v934 = vmax.f32 %v830, 0.0
        %v935 = vmax.f32 %v832, 0.0
        %v936 = vmax.f32 %v834, 0.0
        %v937 = vmax.f32 %v836, 0.0
        %v938 = vmax.f32 %v840, 0.0
        %v939 = vmax.f32 %v842, 0.0
        %v940 = vmax.f32 %v844, 0.0
        %v941 = vmax.f32 %v846, 0.0
        %v942 = vmax.f32 %v850, 0.0
        %v943 = vmax.f32 %v852, 0.0
        %v944 = vmax.f32 %v854, 0.0
        %v945 = vmax.f32 %v856, 0.0
        %v946 = vmax.f32 %v860, 0.0
        %v947 = vmax.f32 %v862, 0.0
        %v948 = vmax.f32 %v864, 0.0
        %v949 = vmax.f32 %v866, 0.0
        %v950 = vmax.f32 %v870, 0.0
        %v951 = vmax.f32 %v872, 0.0
        %v952 = vmax.f32 %v874, 0.0
        %v953 = vmax.f32 %v876, 0.0
        %v954 = vmax.f32 %v880, 0.0
        %v955 = vmax.f32 %v882, 0.0
        %v956 = vmax.f32 %v884, 0.0
        %v957 = vmax.f32 %v886, 0.0
        %v958 = vmax.f32 %v890, 0.0
        %v959 = vmax.f32 %v892, 0.0
        %v960 = vmax.f32 %v894, 0.0
        %v961 = vmax.f32 %v896, 0.0
        %v962 = vpack.c.bf16 %v900, %v898
        %v963 = vpack.c.bf16 %v901, %v899
        %v964 = vpack.c.bf16 %v904, %v902
        %v965 = vpack.c.bf16 %v905, %v903
        %v966 = vpack.c.bf16 %v908, %v906
        %v967 = vpack.c.bf16 %v909, %v907
        %v968 = vpack.c.bf16 %v912, %v910
        %v969 = vpack.c.bf16 %v913, %v911
        %v970 = vpack.c.bf16 %v916, %v914
        %v971 = vpack.c.bf16 %v917, %v915
        %v972 = vpack.c.bf16 %v920, %v918
        %v973 = vpack.c.bf16 %v921, %v919
        %v974 = vpack.c.bf16 %v924, %v922
        %v975 = vpack.c.bf16 %v925, %v923
        %v976 = vpack.c.bf16 %v928, %v926
        %v977 = vpack.c.bf16 %v929, %v927
        %v978 = vpack.c.bf16 %v932, %v930
        %v979 = vpack.c.bf16 %v933, %v931
        %v980 = vpack.c.bf16 %v936, %v934
        %v981 = vpack.c.bf16 %v937, %v935
        %v982 = vpack.c.bf16 %v940, %v938
        %v983 = vpack.c.bf16 %v941, %v939
        %v984 = vpack.c.bf16 %v944, %v942
        %v985 = vpack.c.bf16 %v945, %v943
        %v986 = vpack.c.bf16 %v948, %v946
        %v987 = vpack.c.bf16 %v949, %v947
        %v988 = vpack.c.bf16 %v952, %v950
        %v989 = vpack.c.bf16 %v953, %v951
        %v990 = vpack.c.bf16 %v956, %v954
        %v991 = vpack.c.bf16 %v957, %v955
        %v992 = vpack.c.bf16 %v960, %v958
        %v993 = vpack.c.bf16 %v961, %v959
        %v994 = vld [vmem:[#allocation7] sm:$0xff]
        %v995 = vld [vmem:[#allocation7 + $0x8] sm:$0xff]
        %v996 = vld [vmem:[#allocation7 + $0x10] sm:$0xff]
        %v997 = vld [vmem:[#allocation7 + $0x18] sm:$0xff]
        %v998 = vld [vmem:[#allocation7 + $0x20] sm:$0xff]
        %v999 = vld [vmem:[#allocation7 + $0x28] sm:$0xff]
        %v1000 = vld [vmem:[#allocation7 + $0x30] sm:$0xff]
        %v1001 = vld [vmem:[#allocation7 + $0x38] sm:$0xff]
        %v1002 = vld [vmem:[#allocation7 + $0x40] sm:$0xff]
        %v1003 = vld [vmem:[#allocation7 + $0x48] sm:$0xff]
        %v1004 = vld [vmem:[#allocation7 + $0x50] sm:$0xff]
        %v1005 = vld [vmem:[#allocation7 + $0x58] sm:$0xff]
        %v1006 = vld [vmem:[#allocation7 + $0x60] sm:$0xff]
        %v1007 = vld [vmem:[#allocation7 + $0x68] sm:$0xff]
        %v1008 = vld [vmem:[#allocation7 + $0x70] sm:$0xff]
        %v1009 = vld [vmem:[#allocation7 + $0x78] sm:$0xff]
        %v1010 = vld [vmem:[#allocation7 + $0x80] sm:$0xff]
        %v1011 = vld [vmem:[#allocation7 + $0x88] sm:$0xff]
        %v1012 = vld [vmem:[#allocation7 + $0x90] sm:$0xff]
        %v1013 = vld [vmem:[#allocation7 + $0x98] sm:$0xff]
        %v1014 = vld [vmem:[#allocation7 + $0xa0] sm:$0xff]
        %v1015 = vld [vmem:[#allocation7 + $0xa8] sm:$0xff]
        %v1016 = vld [vmem:[#allocation7 + $0xb0] sm:$0xff]
        %v1017 = vld [vmem:[#allocation7 + $0xb8] sm:$0xff]
        %v1018 = vld [vmem:[#allocation7 + $0xc0] sm:$0xff]
        %v1019 = vld [vmem:[#allocation7 + $0xc8] sm:$0xff]
        %v1020 = vld [vmem:[#allocation7 + $0xd0] sm:$0xff]
        %v1021 = vld [vmem:[#allocation7 + $0xd8] sm:$0xff]
        %v1022 = vld [vmem:[#allocation7 + $0xe0] sm:$0xff]
        %v1023 = vld [vmem:[#allocation7 + $0xe8] sm:$0xff]
        %v1024 = vld [vmem:[#allocation7 + $0xf0] sm:$0xff]
        %v1025 = vld [vmem:[#allocation7 + $0xf8] sm:$0xff]
        %v1026 = vld [vmem:[%s4] sm:$0x3]
        %v1028 = vlaneseq
        %v1029 = vshrl.u32 %v1028, 7
        %v1030 = vsub.s32 0, %v1029
        %v1031 = vrot.slane %v1026, %v1030
        %v1032 = vlaneseq
        %v1033 = vshrl.u32 %v1032, 7
        %v1034 = vsub.s32 1, %v1033
        %v1035 = vrot.slane %v1026, %v1034
        %v1070 = vunpack.c.l.b16 %v994
        %v1071 = vunpack.c.h.b16 %v994
        %v1072 = vunpack.c.l.b16 %v995
        %v1073 = vunpack.c.h.b16 %v995
        %v1074 = vunpack.c.l.b16 %v996
        %v1075 = vunpack.c.h.b16 %v996
        %v1076 = vunpack.c.l.b16 %v997
        %v1077 = vunpack.c.h.b16 %v997
        %v1078 = vunpack.c.l.b16 %v998
        %v1079 = vunpack.c.h.b16 %v998
        %v1080 = vunpack.c.l.b16 %v999
        %v1081 = vunpack.c.h.b16 %v999
        %v1082 = vunpack.c.l.b16 %v1000
        %v1083 = vunpack.c.h.b16 %v1000
        %v1084 = vunpack.c.l.b16 %v1001
        %v1085 = vunpack.c.h.b16 %v1001
        %v1086 = vunpack.c.l.b16 %v1002
        %v1087 = vunpack.c.h.b16 %v1002
        %v1088 = vunpack.c.l.b16 %v1003
        %v1089 = vunpack.c.h.b16 %v1003
        %v1090 = vunpack.c.l.b16 %v1004
        %v1091 = vunpack.c.h.b16 %v1004
        %v1092 = vunpack.c.l.b16 %v1005
        %v1093 = vunpack.c.h.b16 %v1005
        %v1094 = vunpack.c.l.b16 %v1006
        %v1095 = vunpack.c.h.b16 %v1006
        %v1096 = vunpack.c.l.b16 %v1007
        %v1097 = vunpack.c.h.b16 %v1007
        %v1098 = vunpack.c.l.b16 %v1008
        %v1099 = vunpack.c.h.b16 %v1008
        %v1100 = vunpack.c.l.b16 %v1009
        %v1101 = vunpack.c.h.b16 %v1009
        %v1102 = vunpack.c.l.b16 %v1010
        %v1103 = vunpack.c.h.b16 %v1010
        %v1104 = vunpack.c.l.b16 %v1011
        %v1105 = vunpack.c.h.b16 %v1011
        %v1106 = vunpack.c.l.b16 %v1012
        %v1107 = vunpack.c.h.b16 %v1012
        %v1108 = vunpack.c.l.b16 %v1013
        %v1109 = vunpack.c.h.b16 %v1013
        %v1110 = vunpack.c.l.b16 %v1014
        %v1111 = vunpack.c.h.b16 %v1014
        %v1112 = vunpack.c.l.b16 %v1015
        %v1113 = vunpack.c.h.b16 %v1015
        %v1114 = vunpack.c.l.b16 %v1016
        %v1115 = vunpack.c.h.b16 %v1016
        %v1116 = vunpack.c.l.b16 %v1017
        %v1117 = vunpack.c.h.b16 %v1017
        %v1118 = vunpack.c.l.b16 %v1018
        %v1119 = vunpack.c.h.b16 %v1018
        %v1120 = vunpack.c.l.b16 %v1019
        %v1121 = vunpack.c.h.b16 %v1019
        %v1122 = vunpack.c.l.b16 %v1020
        %v1123 = vunpack.c.h.b16 %v1020
        %v1124 = vunpack.c.l.b16 %v1021
        %v1125 = vunpack.c.h.b16 %v1021
        %v1126 = vunpack.c.l.b16 %v1022
        %v1127 = vunpack.c.h.b16 %v1022
        %v1128 = vunpack.c.l.b16 %v1023
        %v1129 = vunpack.c.h.b16 %v1023
        %v1130 = vunpack.c.l.b16 %v1024
        %v1131 = vunpack.c.h.b16 %v1024
        %v1132 = vunpack.c.l.b16 %v1025
        %v1133 = vunpack.c.h.b16 %v1025
        %v1134 = vpack.c.b16 %v1072, %v1070
        %v1135 = vpack.c.b16 %v1073, %v1071
        %v1136 = vpack.c.b16 %v1076, %v1074
        %v1137 = vpack.c.b16 %v1077, %v1075
        %v1138 = vpack.c.b16 %v1080, %v1078
        %v1139 = vpack.c.b16 %v1081, %v1079
        %v1140 = vpack.c.b16 %v1084, %v1082
        %v1141 = vpack.c.b16 %v1085, %v1083
        %v1142 = vpack.c.b16 %v1088, %v1086
        %v1143 = vpack.c.b16 %v1089, %v1087
        %v1144 = vpack.c.b16 %v1092, %v1090
        %v1145 = vpack.c.b16 %v1093, %v1091
        %v1146 = vpack.c.b16 %v1096, %v1094
        %v1147 = vpack.c.b16 %v1097, %v1095
        %v1148 = vpack.c.b16 %v1100, %v1098
        %v1149 = vpack.c.b16 %v1101, %v1099
        %v1150 = vpack.c.b16 %v1104, %v1102
        %v1151 = vpack.c.b16 %v1105, %v1103
        %v1152 = vpack.c.b16 %v1108, %v1106
        %v1153 = vpack.c.b16 %v1109, %v1107
        %v1154 = vpack.c.b16 %v1112, %v1110
        %v1155 = vpack.c.b16 %v1113, %v1111
        %v1156 = vpack.c.b16 %v1116, %v1114
        %v1157 = vpack.c.b16 %v1117, %v1115
        %v1158 = vpack.c.b16 %v1120, %v1118
        %v1159 = vpack.c.b16 %v1121, %v1119
        %v1160 = vpack.c.b16 %v1124, %v1122
        %v1161 = vpack.c.b16 %v1125, %v1123
        %v1162 = vpack.c.b16 %v1128, %v1126
        %v1163 = vpack.c.b16 %v1129, %v1127
        %v1164 = vpack.c.b16 %v1132, %v1130
        %v1165 = vpack.c.b16 %v1133, %v1131
        %1198 = vmatprep.subr.bf16.mxu0 %v1149
        %1199 = vmatpush1.bf16.msra.mxu0 %v1148
        %1200 = vmatprep.subr.bf16.mxu0 %v1147
        %1201 = vmatpush1.bf16.msra.mxu0 %v1146
        %1202 = vmatprep.subr.bf16.mxu0 %v1145
        %1203 = vmatpush1.bf16.msra.mxu0 %v1144
        %1204 = vmatprep.subr.bf16.mxu0 %v1143
        %1205 = vmatpush1.bf16.msra.mxu0 %v1142
        %1206 = vmatprep.subr.bf16.mxu0 %v1141
        %1207 = vmatpush1.bf16.msra.mxu0 %v1140
        %1208 = vmatprep.subr.bf16.mxu0 %v1139
        %1209 = vmatpush1.bf16.msra.mxu0 %v1138
        %1210 = vmatprep.subr.bf16.mxu0 %v1137
        %1211 = vmatpush1.bf16.msra.mxu0 %v1136
        %1212 = vmatprep.subr.bf16.mxu0 %v1135
        %1213 = vmatpush1.bf16.msra.mxu0 %v1134
        %1214 = vmatprep.subr.bf16.mxu0 %v1165
        %1215 = vmatpush2.bf16.msra.mxu0 %v1164
        %1216 = vmatprep.subr.bf16.mxu0 %v1163
        %1217 = vmatpush2.bf16.msra.mxu0 %v1162
        %1218 = vmatprep.subr.bf16.mxu0 %v1161
        %1219 = vmatpush2.bf16.msra.mxu0 %v1160
        %1220 = vmatprep.subr.bf16.mxu0 %v1159
        %1221 = vmatpush2.bf16.msra.mxu0 %v1158
        %1222 = vmatprep.subr.bf16.mxu0 %v1157
        %1223 = vmatpush2.bf16.msra.mxu0 %v1156
        %1224 = vmatprep.subr.bf16.mxu0 %v1155
        %1225 = vmatpush2.bf16.msra.mxu0 %v1154
        %1226 = vmatprep.subr.bf16.mxu0 %v1153
        %1227 = vmatpush2.bf16.msra.mxu0 %v1152
        %1228 = vmatprep.subr.bf16.mxu0 %v1151
        %1229 = vmatpush2.bf16.msra.mxu0 %v1150
        %1230 = vmatprep.mubr.bf16.mxu0 %v963
        %1231 = vmatmul.mubr.bf16.gmra.mxu0 %v962
        %v1232 = vpop.f32.mrf.mxu0
        %v1233 = vadd.f32 %v1031, %v1232
        %v1234 = vpop.f32.mrf.mxu0
        %v1235 = vadd.f32 %v1035, %v1234
        %v1236 = vpop.f32.mrf.mxu0
        %v1237 = vadd.f32 %v1031, %v1236
        %v1238 = vpop.f32.mrf.mxu0
        %v1239 = vadd.f32 %v1035, %v1238
        %1240 = vmatprep.mubr.bf16.mxu0 %v965
        %1241 = vmatmul.mubr.bf16.gmra.mxu0 %v964
        %v1242 = vpop.f32.mrf.mxu0
        %v1243 = vadd.f32 %v1031, %v1242
        %v1244 = vpop.f32.mrf.mxu0
        %v1245 = vadd.f32 %v1035, %v1244
        %v1246 = vpop.f32.mrf.mxu0
        %v1247 = vadd.f32 %v1031, %v1246
        %v1248 = vpop.f32.mrf.mxu0
        %v1249 = vadd.f32 %v1035, %v1248
        %1250 = vmatprep.mubr.bf16.mxu0 %v967
        %1251 = vmatmul.mubr.bf16.gmra.mxu0 %v966
        %v1252 = vpop.f32.mrf.mxu0
        %v1253 = vadd.f32 %v1031, %v1252
        %v1254 = vpop.f32.mrf.mxu0
        %v1255 = vadd.f32 %v1035, %v1254
        %v1256 = vpop.f32.mrf.mxu0
        %v1257 = vadd.f32 %v1031, %v1256
        %v1258 = vpop.f32.mrf.mxu0
        %v1259 = vadd.f32 %v1035, %v1258
        %1260 = vmatprep.mubr.bf16.mxu0 %v969
        %1261 = vmatmul.mubr.bf16.gmra.mxu0 %v968
        %v1262 = vpop.f32.mrf.mxu0
        %v1263 = vadd.f32 %v1031, %v1262
        %v1264 = vpop.f32.mrf.mxu0
        %v1265 = vadd.f32 %v1035, %v1264
        %v1266 = vpop.f32.mrf.mxu0
        %v1267 = vadd.f32 %v1031, %v1266
        %v1268 = vpop.f32.mrf.mxu0
        %v1269 = vadd.f32 %v1035, %v1268
        %1270 = vmatprep.mubr.bf16.mxu0 %v971
        %1271 = vmatmul.mubr.bf16.gmra.mxu0 %v970
        %v1272 = vpop.f32.mrf.mxu0
        %v1273 = vadd.f32 %v1031, %v1272
        %v1274 = vpop.f32.mrf.mxu0
        %v1275 = vadd.f32 %v1035, %v1274
        %v1276 = vpop.f32.mrf.mxu0
        %v1277 = vadd.f32 %v1031, %v1276
        %v1278 = vpop.f32.mrf.mxu0
        %v1279 = vadd.f32 %v1035, %v1278
        %1280 = vmatprep.mubr.bf16.mxu0 %v973
        %1281 = vmatmul.mubr.bf16.gmra.mxu0 %v972
        %v1282 = vpop.f32.mrf.mxu0
        %v1283 = vadd.f32 %v1031, %v1282
        %v1284 = vpop.f32.mrf.mxu0
        %v1285 = vadd.f32 %v1035, %v1284
        %v1286 = vpop.f32.mrf.mxu0
        %v1287 = vadd.f32 %v1031, %v1286
        %v1288 = vpop.f32.mrf.mxu0
        %v1289 = vadd.f32 %v1035, %v1288
        %1290 = vmatprep.mubr.bf16.mxu0 %v975
        %1291 = vmatmul.mubr.bf16.gmra.mxu0 %v974
        %v1292 = vpop.f32.mrf.mxu0
        %v1293 = vadd.f32 %v1031, %v1292
        %v1294 = vpop.f32.mrf.mxu0
        %v1295 = vadd.f32 %v1035, %v1294
        %v1296 = vpop.f32.mrf.mxu0
        %v1297 = vadd.f32 %v1031, %v1296
        %v1298 = vpop.f32.mrf.mxu0
        %v1299 = vadd.f32 %v1035, %v1298
        %1300 = vmatprep.mubr.bf16.mxu0 %v977
        %1301 = vmatmul.mubr.bf16.gmra.mxu0 %v976
        %v1302 = vpop.f32.mrf.mxu0
        %v1303 = vadd.f32 %v1031, %v1302
        %v1304 = vpop.f32.mrf.mxu0
        %v1305 = vadd.f32 %v1035, %v1304
        %v1306 = vpop.f32.mrf.mxu0
        %v1307 = vadd.f32 %v1031, %v1306
        %v1308 = vpop.f32.mrf.mxu0
        %v1309 = vadd.f32 %v1035, %v1308
        %1310 = vmatprep.mubr.bf16.mxu0 %v979
        %1311 = vmatmul.mubr.bf16.gmra.mxu0 %v978
        %v1312 = vpop.f32.mrf.mxu0
        %v1313 = vadd.f32 %v1031, %v1312
        %v1314 = vpop.f32.mrf.mxu0
        %v1315 = vadd.f32 %v1035, %v1314
        %v1316 = vpop.f32.mrf.mxu0
        %v1317 = vadd.f32 %v1031, %v1316
        %v1318 = vpop.f32.mrf.mxu0
        %v1319 = vadd.f32 %v1035, %v1318
        %1320 = vmatprep.mubr.bf16.mxu0 %v981
        %1321 = vmatmul.mubr.bf16.gmra.mxu0 %v980
        %v1322 = vpop.f32.mrf.mxu0
        %v1323 = vadd.f32 %v1031, %v1322
        %v1324 = vpop.f32.mrf.mxu0
        %v1325 = vadd.f32 %v1035, %v1324
        %v1326 = vpop.f32.mrf.mxu0
        %v1327 = vadd.f32 %v1031, %v1326
        %v1328 = vpop.f32.mrf.mxu0
        %v1329 = vadd.f32 %v1035, %v1328
        %1330 = vmatprep.mubr.bf16.mxu0 %v983
        %1331 = vmatmul.mubr.bf16.gmra.mxu0 %v982
        %v1332 = vpop.f32.mrf.mxu0
        %v1333 = vadd.f32 %v1031, %v1332
        %v1334 = vpop.f32.mrf.mxu0
        %v1335 = vadd.f32 %v1035, %v1334
        %v1336 = vpop.f32.mrf.mxu0
        %v1337 = vadd.f32 %v1031, %v1336
        %v1338 = vpop.f32.mrf.mxu0
        %v1339 = vadd.f32 %v1035, %v1338
        %1340 = vmatprep.mubr.bf16.mxu0 %v985
        %1341 = vmatmul.mubr.bf16.gmra.mxu0 %v984
        %v1342 = vpop.f32.mrf.mxu0
        %v1343 = vadd.f32 %v1031, %v1342
        %v1344 = vpop.f32.mrf.mxu0
        %v1345 = vadd.f32 %v1035, %v1344
        %v1346 = vpop.f32.mrf.mxu0
        %v1347 = vadd.f32 %v1031, %v1346
        %v1348 = vpop.f32.mrf.mxu0
        %v1349 = vadd.f32 %v1035, %v1348
        %1350 = vmatprep.mubr.bf16.mxu0 %v987
        %1351 = vmatmul.mubr.bf16.gmra.mxu0 %v986
        %v1352 = vpop.f32.mrf.mxu0
        %v1353 = vadd.f32 %v1031, %v1352
        %v1354 = vpop.f32.mrf.mxu0
        %v1355 = vadd.f32 %v1035, %v1354
        %v1356 = vpop.f32.mrf.mxu0
        %v1357 = vadd.f32 %v1031, %v1356
        %v1358 = vpop.f32.mrf.mxu0
        %v1359 = vadd.f32 %v1035, %v1358
        %1360 = vmatprep.mubr.bf16.mxu0 %v989
        %1361 = vmatmul.mubr.bf16.gmra.mxu0 %v988
        %v1362 = vpop.f32.mrf.mxu0
        %v1363 = vadd.f32 %v1031, %v1362
        %v1364 = vpop.f32.mrf.mxu0
        %v1365 = vadd.f32 %v1035, %v1364
        %v1366 = vpop.f32.mrf.mxu0
        %v1367 = vadd.f32 %v1031, %v1366
        %v1368 = vpop.f32.mrf.mxu0
        %v1369 = vadd.f32 %v1035, %v1368
        %1370 = vmatprep.mubr.bf16.mxu0 %v991
        %1371 = vmatmul.mubr.bf16.gmra.mxu0 %v990
        %v1372 = vpop.f32.mrf.mxu0
        %v1373 = vadd.f32 %v1031, %v1372
        %v1374 = vpop.f32.mrf.mxu0
        %v1375 = vadd.f32 %v1035, %v1374
        %v1376 = vpop.f32.mrf.mxu0
        %v1377 = vadd.f32 %v1031, %v1376
        %v1378 = vpop.f32.mrf.mxu0
        %v1379 = vadd.f32 %v1035, %v1378
        %1380 = vmatprep.mubr.bf16.mxu0 %v993
        %1381 = vmatmul.mubr.bf16.gmra.mxu0 %v992
        %v1382 = vpop.f32.mrf.mxu0
        %v1383 = vadd.f32 %v1031, %v1382
        %v1384 = vpop.f32.mrf.mxu0
        %v1385 = vadd.f32 %v1035, %v1384
        %v1386 = vpop.f32.mrf.mxu0
        %v1387 = vadd.f32 %v1031, %v1386
        %v1388 = vpop.f32.mrf.mxu0
        %v1389 = vadd.f32 %v1035, %v1388
        %1390 = vdwg.mxu0
        %v1391 = vmax.f32 %v1233, 0.0
        %v1392 = vmax.f32 %v1235, 0.0
        %v1393 = vmax.f32 %v1237, 0.0
        %v1394 = vmax.f32 %v1239, 0.0
        %v1395 = vmax.f32 %v1243, 0.0
        %v1396 = vmax.f32 %v1245, 0.0
        %v1397 = vmax.f32 %v1247, 0.0
        %v1398 = vmax.f32 %v1249, 0.0
        %v1399 = vmax.f32 %v1253, 0.0
        %v1400 = vmax.f32 %v1255, 0.0
        %v1401 = vmax.f32 %v1257, 0.0
        %v1402 = vmax.f32 %v1259, 0.0
        %v1403 = vmax.f32 %v1263, 0.0
        %v1404 = vmax.f32 %v1265, 0.0
        %v1405 = vmax.f32 %v1267, 0.0
        %v1406 = vmax.f32 %v1269, 0.0
        %v1407 = vmax.f32 %v1273, 0.0
        %v1408 = vmax.f32 %v1275, 0.0
        %v1409 = vmax.f32 %v1277, 0.0
        %v1410 = vmax.f32 %v1279, 0.0
        %v1411 = vmax.f32 %v1283, 0.0
        %v1412 = vmax.f32 %v1285, 0.0
        %v1413 = vmax.f32 %v1287, 0.0
        %v1414 = vmax.f32 %v1289, 0.0
        %v1415 = vmax.f32 %v1293, 0.0
        %v1416 = vmax.f32 %v1295, 0.0
        %v1417 = vmax.f32 %v1297, 0.0
        %v1418 = vmax.f32 %v1299, 0.0
        %v1419 = vmax.f32 %v1303, 0.0
        %v1420 = vmax.f32 %v1305, 0.0
        %v1421 = vmax.f32 %v1307, 0.0
        %v1422 = vmax.f32 %v1309, 0.0
        %v1423 = vmax.f32 %v1313, 0.0
        %v1424 = vmax.f32 %v1315, 0.0
        %v1425 = vmax.f32 %v1317, 0.0
        %v1426 = vmax.f32 %v1319, 0.0
        %v1427 = vmax.f32 %v1323, 0.0
        %v1428 = vmax.f32 %v1325, 0.0
        %v1429 = vmax.f32 %v1327, 0.0
        %v1430 = vmax.f32 %v1329, 0.0
        %v1431 = vmax.f32 %v1333, 0.0
        %v1432 = vmax.f32 %v1335, 0.0
        %v1433 = vmax.f32 %v1337, 0.0
        %v1434 = vmax.f32 %v1339, 0.0
        %v1435 = vmax.f32 %v1343, 0.0
        %v1436 = vmax.f32 %v1345, 0.0
        %v1437 = vmax.f32 %v1347, 0.0
        %v1438 = vmax.f32 %v1349, 0.0
        %v1439 = vmax.f32 %v1353, 0.0
        %v1440 = vmax.f32 %v1355, 0.0
        %v1441 = vmax.f32 %v1357, 0.0
        %v1442 = vmax.f32 %v1359, 0.0
        %v1443 = vmax.f32 %v1363, 0.0
        %v1444 = vmax.f32 %v1365, 0.0
        %v1445 = vmax.f32 %v1367, 0.0
        %v1446 = vmax.f32 %v1369, 0.0
        %v1447 = vmax.f32 %v1373, 0.0
        %v1448 = vmax.f32 %v1375, 0.0
        %v1449 = vmax.f32 %v1377, 0.0
        %v1450 = vmax.f32 %v1379, 0.0
        %v1451 = vmax.f32 %v1383, 0.0
        %v1452 = vmax.f32 %v1385, 0.0
        %v1453 = vmax.f32 %v1387, 0.0
        %v1454 = vmax.f32 %v1389, 0.0
        %v1455 = vpack.c.bf16 %v1393, %v1391
        %v1456 = vpack.c.bf16 %v1394, %v1392
        %v1457 = vpack.c.bf16 %v1397, %v1395
        %v1458 = vpack.c.bf16 %v1398, %v1396
        %v1459 = vpack.c.bf16 %v1401, %v1399
        %v1460 = vpack.c.bf16 %v1402, %v1400
        %v1461 = vpack.c.bf16 %v1405, %v1403
        %v1462 = vpack.c.bf16 %v1406, %v1404
        %v1463 = vpack.c.bf16 %v1409, %v1407
        %v1464 = vpack.c.bf16 %v1410, %v1408
        %v1465 = vpack.c.bf16 %v1413, %v1411
        %v1466 = vpack.c.bf16 %v1414, %v1412
        %v1467 = vpack.c.bf16 %v1417, %v1415
        %v1468 = vpack.c.bf16 %v1418, %v1416
        %v1469 = vpack.c.bf16 %v1421, %v1419
        %v1470 = vpack.c.bf16 %v1422, %v1420
        %v1471 = vpack.c.bf16 %v1425, %v1423
        %v1472 = vpack.c.bf16 %v1426, %v1424
        %v1473 = vpack.c.bf16 %v1429, %v1427
        %v1474 = vpack.c.bf16 %v1430, %v1428
        %v1475 = vpack.c.bf16 %v1433, %v1431
        %v1476 = vpack.c.bf16 %v1434, %v1432
        %v1477 = vpack.c.bf16 %v1437, %v1435
        %v1478 = vpack.c.bf16 %v1438, %v1436
        %v1479 = vpack.c.bf16 %v1441, %v1439
        %v1480 = vpack.c.bf16 %v1442, %v1440
        %v1481 = vpack.c.bf16 %v1445, %v1443
        %v1482 = vpack.c.bf16 %v1446, %v1444
        %v1483 = vpack.c.bf16 %v1449, %v1447
        %v1484 = vpack.c.bf16 %v1450, %v1448
        %v1485 = vpack.c.bf16 %v1453, %v1451
        %v1486 = vpack.c.bf16 %v1454, %v1452
        %v1487 = vld [vmem:[#allocation8] sm:$0xff]
        %v1488 = vld [vmem:[#allocation8 + $0x8] sm:$0xff]
        %v1489 = vld [vmem:[#allocation8 + $0x10] sm:$0xff]
        %v1490 = vld [vmem:[#allocation8 + $0x18] sm:$0xff]
        %v1491 = vld [vmem:[#allocation8 + $0x20] sm:$0xff]
        %v1492 = vld [vmem:[#allocation8 + $0x28] sm:$0xff]
        %v1493 = vld [vmem:[#allocation8 + $0x30] sm:$0xff]
        %v1494 = vld [vmem:[#allocation8 + $0x38] sm:$0xff]
        %v1495 = vld [vmem:[#allocation8 + $0x40] sm:$0xff]
        %v1496 = vld [vmem:[#allocation8 + $0x48] sm:$0xff]
        %v1497 = vld [vmem:[#allocation8 + $0x50] sm:$0xff]
        %v1498 = vld [vmem:[#allocation8 + $0x58] sm:$0xff]
        %v1499 = vld [vmem:[#allocation8 + $0x60] sm:$0xff]
        %v1500 = vld [vmem:[#allocation8 + $0x68] sm:$0xff]
        %v1501 = vld [vmem:[#allocation8 + $0x70] sm:$0xff]
        %v1502 = vld [vmem:[#allocation8 + $0x78] sm:$0xff]
        %v1503 = vld [vmem:[#allocation8 + $0x80] sm:$0xff]
        %v1504 = vld [vmem:[#allocation8 + $0x88] sm:$0xff]
        %v1505 = vld [vmem:[#allocation8 + $0x90] sm:$0xff]
        %v1506 = vld [vmem:[#allocation8 + $0x98] sm:$0xff]
        %v1507 = vld [vmem:[#allocation8 + $0xa0] sm:$0xff]
        %v1508 = vld [vmem:[#allocation8 + $0xa8] sm:$0xff]
        %v1509 = vld [vmem:[#allocation8 + $0xb0] sm:$0xff]
        %v1510 = vld [vmem:[#allocation8 + $0xb8] sm:$0xff]
        %v1511 = vld [vmem:[#allocation8 + $0xc0] sm:$0xff]
        %v1512 = vld [vmem:[#allocation8 + $0xc8] sm:$0xff]
        %v1513 = vld [vmem:[#allocation8 + $0xd0] sm:$0xff]
        %v1514 = vld [vmem:[#allocation8 + $0xd8] sm:$0xff]
        %v1515 = vld [vmem:[#allocation8 + $0xe0] sm:$0xff]
        %v1516 = vld [vmem:[#allocation8 + $0xe8] sm:$0xff]
        %v1517 = vld [vmem:[#allocation8 + $0xf0] sm:$0xff]
        %v1518 = vld [vmem:[#allocation8 + $0xf8] sm:$0xff]
        %v1519 = vld [vmem:[%s6] sm:$0x3]
        %v1521 = vlaneseq
        %v1522 = vshrl.u32 %v1521, 7
        %v1523 = vsub.s32 0, %v1522
        %v1524 = vrot.slane %v1519, %v1523
        %v1525 = vlaneseq
        %v1526 = vshrl.u32 %v1525, 7
        %v1527 = vsub.s32 1, %v1526
        %v1528 = vrot.slane %v1519, %v1527
        %v1563 = vunpack.c.l.b16 %v1487
        %v1564 = vunpack.c.h.b16 %v1487
        %v1565 = vunpack.c.l.b16 %v1488
        %v1566 = vunpack.c.h.b16 %v1488
        %v1567 = vunpack.c.l.b16 %v1489
        %v1568 = vunpack.c.h.b16 %v1489
        %v1569 = vunpack.c.l.b16 %v1490
        %v1570 = vunpack.c.h.b16 %v1490
        %v1571 = vunpack.c.l.b16 %v1491
        %v1572 = vunpack.c.h.b16 %v1491
        %v1573 = vunpack.c.l.b16 %v1492
        %v1574 = vunpack.c.h.b16 %v1492
        %v1575 = vunpack.c.l.b16 %v1493
        %v1576 = vunpack.c.h.b16 %v1493
        %v1577 = vunpack.c.l.b16 %v1494
        %v1578 = vunpack.c.h.b16 %v1494
        %v1579 = vunpack.c.l.b16 %v1495
        %v1580 = vunpack.c.h.b16 %v1495
        %v1581 = vunpack.c.l.b16 %v1496
        %v1582 = vunpack.c.h.b16 %v1496
        %v1583 = vunpack.c.l.b16 %v1497
        %v1584 = vunpack.c.h.b16 %v1497
        %v1585 = vunpack.c.l.b16 %v1498
        %v1586 = vunpack.c.h.b16 %v1498
        %v1587 = vunpack.c.l.b16 %v1499
        %v1588 = vunpack.c.h.b16 %v1499
        %v1589 = vunpack.c.l.b16 %v1500
        %v1590 = vunpack.c.h.b16 %v1500
        %v1591 = vunpack.c.l.b16 %v1501
        %v1592 = vunpack.c.h.b16 %v1501
        %v1593 = vunpack.c.l.b16 %v1502
        %v1594 = vunpack.c.h.b16 %v1502
        %v1595 = vunpack.c.l.b16 %v1503
        %v1596 = vunpack.c.h.b16 %v1503
        %v1597 = vunpack.c.l.b16 %v1504
        %v1598 = vunpack.c.h.b16 %v1504
        %v1599 = vunpack.c.l.b16 %v1505
        %v1600 = vunpack.c.h.b16 %v1505
        %v1601 = vunpack.c.l.b16 %v1506
        %v1602 = vunpack.c.h.b16 %v1506
        %v1603 = vunpack.c.l.b16 %v1507
        %v1604 = vunpack.c.h.b16 %v1507
        %v1605 = vunpack.c.l.b16 %v1508
        %v1606 = vunpack.c.h.b16 %v1508
        %v1607 = vunpack.c.l.b16 %v1509
        %v1608 = vunpack.c.h.b16 %v1509
        %v1609 = vunpack.c.l.b16 %v1510
        %v1610 = vunpack.c.h.b16 %v1510
        %v1611 = vunpack.c.l.b16 %v1511
        %v1612 = vunpack.c.h.b16 %v1511
        %v1613 = vunpack.c.l.b16 %v1512
        %v1614 = vunpack.c.h.b16 %v1512
        %v1615 = vunpack.c.l.b16 %v1513
        %v1616 = vunpack.c.h.b16 %v1513
        %v1617 = vunpack.c.l.b16 %v1514
        %v1618 = vunpack.c.h.b16 %v1514
        %v1619 = vunpack.c.l.b16 %v1515
        %v1620 = vunpack.c.h.b16 %v1515
        %v1621 = vunpack.c.l.b16 %v1516
        %v1622 = vunpack.c.h.b16 %v1516
        %v1623 = vunpack.c.l.b16 %v1517
        %v1624 = vunpack.c.h.b16 %v1517
        %v1625 = vunpack.c.l.b16 %v1518
        %v1626 = vunpack.c.h.b16 %v1518
        %v1627 = vpack.c.b16 %v1565, %v1563
        %v1628 = vpack.c.b16 %v1566, %v1564
        %v1629 = vpack.c.b16 %v1569, %v1567
        %v1630 = vpack.c.b16 %v1570, %v1568
        %v1631 = vpack.c.b16 %v1573, %v1571
        %v1632 = vpack.c.b16 %v1574, %v1572
        %v1633 = vpack.c.b16 %v1577, %v1575
        %v1634 = vpack.c.b16 %v1578, %v1576
        %v1635 = vpack.c.b16 %v1581, %v1579
        %v1636 = vpack.c.b16 %v1582, %v1580
        %v1637 = vpack.c.b16 %v1585, %v1583
        %v1638 = vpack.c.b16 %v1586, %v1584
        %v1639 = vpack.c.b16 %v1589, %v1587
        %v1640 = vpack.c.b16 %v1590, %v1588
        %v1641 = vpack.c.b16 %v1593, %v1591
        %v1642 = vpack.c.b16 %v1594, %v1592
        %v1643 = vpack.c.b16 %v1597, %v1595
        %v1644 = vpack.c.b16 %v1598, %v1596
        %v1645 = vpack.c.b16 %v1601, %v1599
        %v1646 = vpack.c.b16 %v1602, %v1600
        %v1647 = vpack.c.b16 %v1605, %v1603
        %v1648 = vpack.c.b16 %v1606, %v1604
        %v1649 = vpack.c.b16 %v1609, %v1607
        %v1650 = vpack.c.b16 %v1610, %v1608
        %v1651 = vpack.c.b16 %v1613, %v1611
        %v1652 = vpack.c.b16 %v1614, %v1612
        %v1653 = vpack.c.b16 %v1617, %v1615
        %v1654 = vpack.c.b16 %v1618, %v1616
        %v1655 = vpack.c.b16 %v1621, %v1619
        %v1656 = vpack.c.b16 %v1622, %v1620
        %v1657 = vpack.c.b16 %v1625, %v1623
        %v1658 = vpack.c.b16 %v1626, %v1624
        %1691 = vmatprep.subr.bf16.mxu0 %v1642
        %1692 = vmatpush1.bf16.msra.mxu0 %v1641
        %1693 = vmatprep.subr.bf16.mxu0 %v1640
        %1694 = vmatpush1.bf16.msra.mxu0 %v1639
        %1695 = vmatprep.subr.bf16.mxu0 %v1638
        %1696 = vmatpush1.bf16.msra.mxu0 %v1637
        %1697 = vmatprep.subr.bf16.mxu0 %v1636
        %1698 = vmatpush1.bf16.msra.mxu0 %v1635
        %1699 = vmatprep.subr.bf16.mxu0 %v1634
        %1700 = vmatpush1.bf16.msra.mxu0 %v1633
        %1701 = vmatprep.subr.bf16.mxu0 %v1632
        %1702 = vmatpush1.bf16.msra.mxu0 %v1631
        %1703 = vmatprep.subr.bf16.mxu0 %v1630
        %1704 = vmatpush1.bf16.msra.mxu0 %v1629
        %1705 = vmatprep.subr.bf16.mxu0 %v1628
        %1706 = vmatpush1.bf16.msra.mxu0 %v1627
        %1707 = vmatprep.subr.bf16.mxu0 %v1658
        %1708 = vmatpush2.bf16.msra.mxu0 %v1657
        %1709 = vmatprep.subr.bf16.mxu0 %v1656
        %1710 = vmatpush2.bf16.msra.mxu0 %v1655
        %1711 = vmatprep.subr.bf16.mxu0 %v1654
        %1712 = vmatpush2.bf16.msra.mxu0 %v1653
        %1713 = vmatprep.subr.bf16.mxu0 %v1652
        %1714 = vmatpush2.bf16.msra.mxu0 %v1651
        %1715 = vmatprep.subr.bf16.mxu0 %v1650
        %1716 = vmatpush2.bf16.msra.mxu0 %v1649
        %1717 = vmatprep.subr.bf16.mxu0 %v1648
        %1718 = vmatpush2.bf16.msra.mxu0 %v1647
        %1719 = vmatprep.subr.bf16.mxu0 %v1646
        %1720 = vmatpush2.bf16.msra.mxu0 %v1645
        %1721 = vmatprep.subr.bf16.mxu0 %v1644
        %1722 = vmatpush2.bf16.msra.mxu0 %v1643
        %1723 = vmatprep.mubr.bf16.mxu0 %v1456
        %1724 = vmatmul.mubr.bf16.gmra.mxu0 %v1455
        %v1725 = vpop.f32.mrf.mxu0
        %v1726 = vadd.f32 %v1524, %v1725
        %v1727 = vpop.f32.mrf.mxu0
        %v1728 = vadd.f32 %v1528, %v1727
        %v1729 = vpop.f32.mrf.mxu0
        %v1730 = vadd.f32 %v1524, %v1729
        %v1731 = vpop.f32.mrf.mxu0
        %v1732 = vadd.f32 %v1528, %v1731
        %1733 = vmatprep.mubr.bf16.mxu0 %v1458
        %1734 = vmatmul.mubr.bf16.gmra.mxu0 %v1457
        %v1735 = vpop.f32.mrf.mxu0
        %v1736 = vadd.f32 %v1524, %v1735
        %v1737 = vpop.f32.mrf.mxu0
        %v1738 = vadd.f32 %v1528, %v1737
        %v1739 = vpop.f32.mrf.mxu0
        %v1740 = vadd.f32 %v1524, %v1739
        %v1741 = vpop.f32.mrf.mxu0
        %v1742 = vadd.f32 %v1528, %v1741
        %1743 = vmatprep.mubr.bf16.mxu0 %v1460
        %1744 = vmatmul.mubr.bf16.gmra.mxu0 %v1459
        %v1745 = vpop.f32.mrf.mxu0
        %v1746 = vadd.f32 %v1524, %v1745
        %v1747 = vpop.f32.mrf.mxu0
        %v1748 = vadd.f32 %v1528, %v1747
        %v1749 = vpop.f32.mrf.mxu0
        %v1750 = vadd.f32 %v1524, %v1749
        %v1751 = vpop.f32.mrf.mxu0
        %v1752 = vadd.f32 %v1528, %v1751
        %1753 = vmatprep.mubr.bf16.mxu0 %v1462
        %1754 = vmatmul.mubr.bf16.gmra.mxu0 %v1461
        %v1755 = vpop.f32.mrf.mxu0
        %v1756 = vadd.f32 %v1524, %v1755
        %v1757 = vpop.f32.mrf.mxu0
        %v1758 = vadd.f32 %v1528, %v1757
        %v1759 = vpop.f32.mrf.mxu0
        %v1760 = vadd.f32 %v1524, %v1759
        %v1761 = vpop.f32.mrf.mxu0
        %v1762 = vadd.f32 %v1528, %v1761
        %1763 = vmatprep.mubr.bf16.mxu0 %v1464
        %1764 = vmatmul.mubr.bf16.gmra.mxu0 %v1463
        %v1765 = vpop.f32.mrf.mxu0
        %v1766 = vadd.f32 %v1524, %v1765
        %v1767 = vpop.f32.mrf.mxu0
        %v1768 = vadd.f32 %v1528, %v1767
        %v1769 = vpop.f32.mrf.mxu0
        %v1770 = vadd.f32 %v1524, %v1769
        %v1771 = vpop.f32.mrf.mxu0
        %v1772 = vadd.f32 %v1528, %v1771
        %1773 = vmatprep.mubr.bf16.mxu0 %v1466
        %1774 = vmatmul.mubr.bf16.gmra.mxu0 %v1465
        %v1775 = vpop.f32.mrf.mxu0
        %v1776 = vadd.f32 %v1524, %v1775
        %v1777 = vpop.f32.mrf.mxu0
        %v1778 = vadd.f32 %v1528, %v1777
        %v1779 = vpop.f32.mrf.mxu0
        %v1780 = vadd.f32 %v1524, %v1779
        %v1781 = vpop.f32.mrf.mxu0
        %v1782 = vadd.f32 %v1528, %v1781
        %1783 = vmatprep.mubr.bf16.mxu0 %v1468
        %1784 = vmatmul.mubr.bf16.gmra.mxu0 %v1467
        %v1785 = vpop.f32.mrf.mxu0
        %v1786 = vadd.f32 %v1524, %v1785
        %v1787 = vpop.f32.mrf.mxu0
        %v1788 = vadd.f32 %v1528, %v1787
        %v1789 = vpop.f32.mrf.mxu0
        %v1790 = vadd.f32 %v1524, %v1789
        %v1791 = vpop.f32.mrf.mxu0
        %v1792 = vadd.f32 %v1528, %v1791
        %1793 = vmatprep.mubr.bf16.mxu0 %v1470
        %1794 = vmatmul.mubr.bf16.gmra.mxu0 %v1469
        %v1795 = vpop.f32.mrf.mxu0
        %v1796 = vadd.f32 %v1524, %v1795
        %v1797 = vpop.f32.mrf.mxu0
        %v1798 = vadd.f32 %v1528, %v1797
        %v1799 = vpop.f32.mrf.mxu0
        %v1800 = vadd.f32 %v1524, %v1799
        %v1801 = vpop.f32.mrf.mxu0
        %v1802 = vadd.f32 %v1528, %v1801
        %1803 = vmatprep.mubr.bf16.mxu0 %v1472
        %1804 = vmatmul.mubr.bf16.gmra.mxu0 %v1471
        %v1805 = vpop.f32.mrf.mxu0
        %v1806 = vadd.f32 %v1524, %v1805
        %v1807 = vpop.f32.mrf.mxu0
        %v1808 = vadd.f32 %v1528, %v1807
        %v1809 = vpop.f32.mrf.mxu0
        %v1810 = vadd.f32 %v1524, %v1809
        %v1811 = vpop.f32.mrf.mxu0
        %v1812 = vadd.f32 %v1528, %v1811
        %1813 = vmatprep.mubr.bf16.mxu0 %v1474
        %1814 = vmatmul.mubr.bf16.gmra.mxu0 %v1473
        %v1815 = vpop.f32.mrf.mxu0
        %v1816 = vadd.f32 %v1524, %v1815
        %v1817 = vpop.f32.mrf.mxu0
        %v1818 = vadd.f32 %v1528, %v1817
        %v1819 = vpop.f32.mrf.mxu0
        %v1820 = vadd.f32 %v1524, %v1819
        %v1821 = vpop.f32.mrf.mxu0
        %v1822 = vadd.f32 %v1528, %v1821
        %1823 = vmatprep.mubr.bf16.mxu0 %v1476
        %1824 = vmatmul.mubr.bf16.gmra.mxu0 %v1475
        %v1825 = vpop.f32.mrf.mxu0
        %v1826 = vadd.f32 %v1524, %v1825
        %v1827 = vpop.f32.mrf.mxu0
        %v1828 = vadd.f32 %v1528, %v1827
        %v1829 = vpop.f32.mrf.mxu0
        %v1830 = vadd.f32 %v1524, %v1829
        %v1831 = vpop.f32.mrf.mxu0
        %v1832 = vadd.f32 %v1528, %v1831
        %1833 = vmatprep.mubr.bf16.mxu0 %v1478
        %1834 = vmatmul.mubr.bf16.gmra.mxu0 %v1477
        %v1835 = vpop.f32.mrf.mxu0
        %v1836 = vadd.f32 %v1524, %v1835
        %v1837 = vpop.f32.mrf.mxu0
        %v1838 = vadd.f32 %v1528, %v1837
        %v1839 = vpop.f32.mrf.mxu0
        %v1840 = vadd.f32 %v1524, %v1839
        %v1841 = vpop.f32.mrf.mxu0
        %v1842 = vadd.f32 %v1528, %v1841
        %1843 = vmatprep.mubr.bf16.mxu0 %v1480
        %1844 = vmatmul.mubr.bf16.gmra.mxu0 %v1479
        %v1845 = vpop.f32.mrf.mxu0
        %v1846 = vadd.f32 %v1524, %v1845
        %v1847 = vpop.f32.mrf.mxu0
        %v1848 = vadd.f32 %v1528, %v1847
        %v1849 = vpop.f32.mrf.mxu0
        %v1850 = vadd.f32 %v1524, %v1849
        %v1851 = vpop.f32.mrf.mxu0
        %v1852 = vadd.f32 %v1528, %v1851
        %1853 = vmatprep.mubr.bf16.mxu0 %v1482
        %1854 = vmatmul.mubr.bf16.gmra.mxu0 %v1481
        %v1855 = vpop.f32.mrf.mxu0
        %v1856 = vadd.f32 %v1524, %v1855
        %v1857 = vpop.f32.mrf.mxu0
        %v1858 = vadd.f32 %v1528, %v1857
        %v1859 = vpop.f32.mrf.mxu0
        %v1860 = vadd.f32 %v1524, %v1859
        %v1861 = vpop.f32.mrf.mxu0
        %v1862 = vadd.f32 %v1528, %v1861
        %1863 = vmatprep.mubr.bf16.mxu0 %v1484
        %1864 = vmatmul.mubr.bf16.gmra.mxu0 %v1483
        %v1865 = vpop.f32.mrf.mxu0
        %v1866 = vadd.f32 %v1524, %v1865
        %v1867 = vpop.f32.mrf.mxu0
        %v1868 = vadd.f32 %v1528, %v1867
        %v1869 = vpop.f32.mrf.mxu0
        %v1870 = vadd.f32 %v1524, %v1869
        %v1871 = vpop.f32.mrf.mxu0
        %v1872 = vadd.f32 %v1528, %v1871
        %1873 = vmatprep.mubr.bf16.mxu0 %v1486
        %1874 = vmatmul.mubr.bf16.gmra.mxu0 %v1485
        %v1875 = vpop.f32.mrf.mxu0
        %v1876 = vadd.f32 %v1524, %v1875
        %v1877 = vpop.f32.mrf.mxu0
        %v1878 = vadd.f32 %v1528, %v1877
        %v1879 = vpop.f32.mrf.mxu0
        %v1880 = vadd.f32 %v1524, %v1879
        %v1881 = vpop.f32.mrf.mxu0
        %v1882 = vadd.f32 %v1528, %v1881
        %1883 = vdwg.mxu0
        %v1884 = vmax.f32 %v1726, 0.0
        %v1885 = vmax.f32 %v1728, 0.0
        %v1886 = vmax.f32 %v1730, 0.0
        %v1887 = vmax.f32 %v1732, 0.0
        %v1888 = vmax.f32 %v1736, 0.0
        %v1889 = vmax.f32 %v1738, 0.0
        %v1890 = vmax.f32 %v1740, 0.0
        %v1891 = vmax.f32 %v1742, 0.0
        %v1892 = vmax.f32 %v1746, 0.0
        %v1893 = vmax.f32 %v1748, 0.0
        %v1894 = vmax.f32 %v1750, 0.0
        %v1895 = vmax.f32 %v1752, 0.0
        %v1896 = vmax.f32 %v1756, 0.0
        %v1897 = vmax.f32 %v1758, 0.0
        %v1898 = vmax.f32 %v1760, 0.0
        %v1899 = vmax.f32 %v1762, 0.0
        %v1900 = vmax.f32 %v1766, 0.0
        %v1901 = vmax.f32 %v1768, 0.0
        %v1902 = vmax.f32 %v1770, 0.0
        %v1903 = vmax.f32 %v1772, 0.0
        %v1904 = vmax.f32 %v1776, 0.0
        %v1905 = vmax.f32 %v1778, 0.0
        %v1906 = vmax.f32 %v1780, 0.0
        %v1907 = vmax.f32 %v1782, 0.0
        %v1908 = vmax.f32 %v1786, 0.0
        %v1909 = vmax.f32 %v1788, 0.0
        %v1910 = vmax.f32 %v1790, 0.0
        %v1911 = vmax.f32 %v1792, 0.0
        %v1912 = vmax.f32 %v1796, 0.0
        %v1913 = vmax.f32 %v1798, 0.0
        %v1914 = vmax.f32 %v1800, 0.0
        %v1915 = vmax.f32 %v1802, 0.0
        %v1916 = vmax.f32 %v1806, 0.0
        %v1917 = vmax.f32 %v1808, 0.0
        %v1918 = vmax.f32 %v1810, 0.0
        %v1919 = vmax.f32 %v1812, 0.0
        %v1920 = vmax.f32 %v1816, 0.0
        %v1921 = vmax.f32 %v1818, 0.0
        %v1922 = vmax.f32 %v1820, 0.0
        %v1923 = vmax.f32 %v1822, 0.0
        %v1924 = vmax.f32 %v1826, 0.0
        %v1925 = vmax.f32 %v1828, 0.0
        %v1926 = vmax.f32 %v1830, 0.0
        %v1927 = vmax.f32 %v1832, 0.0
        %v1928 = vmax.f32 %v1836, 0.0
        %v1929 = vmax.f32 %v1838, 0.0
        %v1930 = vmax.f32 %v1840, 0.0
        %v1931 = vmax.f32 %v1842, 0.0
        %v1932 = vmax.f32 %v1846, 0.0
        %v1933 = vmax.f32 %v1848, 0.0
        %v1934 = vmax.f32 %v1850, 0.0
        %v1935 = vmax.f32 %v1852, 0.0
        %v1936 = vmax.f32 %v1856, 0.0
        %v1937 = vmax.f32 %v1858, 0.0
        %v1938 = vmax.f32 %v1860, 0.0
        %v1939 = vmax.f32 %v1862, 0.0
        %v1940 = vmax.f32 %v1866, 0.0
        %v1941 = vmax.f32 %v1868, 0.0
        %v1942 = vmax.f32 %v1870, 0.0
        %v1943 = vmax.f32 %v1872, 0.0
        %v1944 = vmax.f32 %v1876, 0.0
        %v1945 = vmax.f32 %v1878, 0.0
        %v1946 = vmax.f32 %v1880, 0.0
        %v1947 = vmax.f32 %v1882, 0.0
        %v1948 = vadd.f32 %v898, %v1884
        %v1949 = vadd.f32 %v899, %v1885
        %v1950 = vadd.f32 %v900, %v1886
        %v1951 = vadd.f32 %v901, %v1887
        %v1952 = vadd.f32 %v902, %v1888
        %v1953 = vadd.f32 %v903, %v1889
        %v1954 = vadd.f32 %v904, %v1890
        %v1955 = vadd.f32 %v905, %v1891
        %v1956 = vadd.f32 %v906, %v1892
        %v1957 = vadd.f32 %v907, %v1893
        %v1958 = vadd.f32 %v908, %v1894
        %v1959 = vadd.f32 %v909, %v1895
        %v1960 = vadd.f32 %v910, %v1896
        %v1961 = vadd.f32 %v911, %v1897
        %v1962 = vadd.f32 %v912, %v1898
        %v1963 = vadd.f32 %v913, %v1899
        %v1964 = vadd.f32 %v914, %v1900
        %v1965 = vadd.f32 %v915, %v1901
        %v1966 = vadd.f32 %v916, %v1902
        %v1967 = vadd.f32 %v917, %v1903
        %v1968 = vadd.f32 %v918, %v1904
        %v1969 = vadd.f32 %v919, %v1905
        %v1970 = vadd.f32 %v920, %v1906
        %v1971 = vadd.f32 %v921, %v1907
        %v1972 = vadd.f32 %v922, %v1908
        %v1973 = vadd.f32 %v923, %v1909
        %v1974 = vadd.f32 %v924, %v1910
        %v1975 = vadd.f32 %v925, %v1911
        %v1976 = vadd.f32 %v926, %v1912
        %v1977 = vadd.f32 %v927, %v1913
        %v1978 = vadd.f32 %v928, %v1914
        %v1979 = vadd.f32 %v929, %v1915
        %v1980 = vadd.f32 %v930, %v1916
        %v1981 = vadd.f32 %v931, %v1917
        %v1982 = vadd.f32 %v932, %v1918
        %v1983 = vadd.f32 %v933, %v1919
        %v1984 = vadd.f32 %v934, %v1920
        %v1985 = vadd.f32 %v935, %v1921
        %v1986 = vadd.f32 %v936, %v1922
        %v1987 = vadd.f32 %v937, %v1923
        %v1988 = vadd.f32 %v938, %v1924
        %v1989 = vadd.f32 %v939, %v1925
        %v1990 = vadd.f32 %v940, %v1926
        %v1991 = vadd.f32 %v941, %v1927
        %v1992 = vadd.f32 %v942, %v1928
        %v1993 = vadd.f32 %v943, %v1929
        %v1994 = vadd.f32 %v944, %v1930
        %v1995 = vadd.f32 %v945, %v1931
        %v1996 = vadd.f32 %v946, %v1932
        %v1997 = vadd.f32 %v947, %v1933
        %v1998 = vadd.f32 %v948, %v1934
        %v1999 = vadd.f32 %v949, %v1935
        %v2000 = vadd.f32 %v950, %v1936
        %v2001 = vadd.f32 %v951, %v1937
        %v2002 = vadd.f32 %v952, %v1938
        %v2003 = vadd.f32 %v953, %v1939
        %v2004 = vadd.f32 %v954, %v1940
        %v2005 = vadd.f32 %v955, %v1941
        %v2006 = vadd.f32 %v956, %v1942
        %v2007 = vadd.f32 %v957, %v1943
        %v2008 = vadd.f32 %v958, %v1944
        %v2009 = vadd.f32 %v959, %v1945
        %v2010 = vadd.f32 %v960, %v1946
        %v2011 = vadd.f32 %v961, %v1947
        %v2012 = vpack.c.bf16 %v1950, %v1948
        %v2013 = vpack.c.bf16 %v1951, %v1949
        %v2014 = vpack.c.bf16 %v1954, %v1952
        %v2015 = vpack.c.bf16 %v1955, %v1953
        %v2016 = vpack.c.bf16 %v1958, %v1956
        %v2017 = vpack.c.bf16 %v1959, %v1957
        %v2018 = vpack.c.bf16 %v1962, %v1960
        %v2019 = vpack.c.bf16 %v1963, %v1961
        %v2020 = vpack.c.bf16 %v1966, %v1964
        %v2021 = vpack.c.bf16 %v1967, %v1965
        %v2022 = vpack.c.bf16 %v1970, %v1968
        %v2023 = vpack.c.bf16 %v1971, %v1969
        %v2024 = vpack.c.bf16 %v1974, %v1972
        %v2025 = vpack.c.bf16 %v1975, %v1973
        %v2026 = vpack.c.bf16 %v1978, %v1976
        %v2027 = vpack.c.bf16 %v1979, %v1977
        %v2028 = vpack.c.bf16 %v1982, %v1980
        %v2029 = vpack.c.bf16 %v1983, %v1981
        %v2030 = vpack.c.bf16 %v1986, %v1984
        %v2031 = vpack.c.bf16 %v1987, %v1985
        %v2032 = vpack.c.bf16 %v1990, %v1988
        %v2033 = vpack.c.bf16 %v1991, %v1989
        %v2034 = vpack.c.bf16 %v1994, %v1992
        %v2035 = vpack.c.bf16 %v1995, %v1993
        %v2036 = vpack.c.bf16 %v1998, %v1996
        %v2037 = vpack.c.bf16 %v1999, %v1997
        %v2038 = vpack.c.bf16 %v2002, %v2000
        %v2039 = vpack.c.bf16 %v2003, %v2001
        %v2040 = vpack.c.bf16 %v2006, %v2004
        %v2041 = vpack.c.bf16 %v2007, %v2005
        %v2042 = vpack.c.bf16 %v2010, %v2008
        %v2043 = vpack.c.bf16 %v2011, %v2009
        %v2044 = vld [vmem:[#allocation10] sm:$0xff]
        %v2045 = vld [vmem:[#allocation10 + $0x8] sm:$0xff]
        %v2046 = vld [vmem:[#allocation10 + $0x10] sm:$0xff]
        %v2047 = vld [vmem:[#allocation10 + $0x18] sm:$0xff]
        %v2048 = vld [vmem:[#allocation10 + $0x20] sm:$0xff]
        %v2049 = vld [vmem:[#allocation10 + $0x28] sm:$0xff]
        %v2050 = vld [vmem:[#allocation10 + $0x30] sm:$0xff]
        %v2051 = vld [vmem:[#allocation10 + $0x38] sm:$0xff]
        %v2052 = vld [vmem:[#allocation10 + $0x40] sm:$0xff]
        %v2053 = vld [vmem:[#allocation10 + $0x48] sm:$0xff]
        %v2054 = vld [vmem:[#allocation10 + $0x50] sm:$0xff]
        %v2055 = vld [vmem:[#allocation10 + $0x58] sm:$0xff]
        %v2056 = vld [vmem:[#allocation10 + $0x60] sm:$0xff]
        %v2057 = vld [vmem:[#allocation10 + $0x68] sm:$0xff]
        %v2058 = vld [vmem:[#allocation10 + $0x70] sm:$0xff]
        %v2059 = vld [vmem:[#allocation10 + $0x78] sm:$0xff]
        %v2060 = vld [vmem:[#allocation10 + $0x80] sm:$0xff]
        %v2061 = vld [vmem:[#allocation10 + $0x88] sm:$0xff]
        %v2062 = vld [vmem:[#allocation10 + $0x90] sm:$0xff]
        %v2063 = vld [vmem:[#allocation10 + $0x98] sm:$0xff]
        %v2064 = vld [vmem:[#allocation10 + $0xa0] sm:$0xff]
        %v2065 = vld [vmem:[#allocation10 + $0xa8] sm:$0xff]
        %v2066 = vld [vmem:[#allocation10 + $0xb0] sm:$0xff]
        %v2067 = vld [vmem:[#allocation10 + $0xb8] sm:$0xff]
        %v2068 = vld [vmem:[#allocation10 + $0xc0] sm:$0xff]
        %v2069 = vld [vmem:[#allocation10 + $0xc8] sm:$0xff]
        %v2070 = vld [vmem:[#allocation10 + $0xd0] sm:$0xff]
        %v2071 = vld [vmem:[#allocation10 + $0xd8] sm:$0xff]
        %v2072 = vld [vmem:[#allocation10 + $0xe0] sm:$0xff]
        %v2073 = vld [vmem:[#allocation10 + $0xe8] sm:$0xff]
        %v2074 = vld [vmem:[#allocation10 + $0xf0] sm:$0xff]
        %v2075 = vld [vmem:[#allocation10 + $0xf8] sm:$0xff]
        %v2076 = vld [vmem:[%s8] sm:$0x3]
        %v2078 = vlaneseq
        %v2079 = vshrl.u32 %v2078, 7
        %v2080 = vsub.s32 0, %v2079
        %v2081 = vrot.slane %v2076, %v2080
        %v2082 = vlaneseq
        %v2083 = vshrl.u32 %v2082, 7
        %v2084 = vsub.s32 1, %v2083
        %v2085 = vrot.slane %v2076, %v2084
        %v2120 = vunpack.c.l.b16 %v2044
        %v2121 = vunpack.c.h.b16 %v2044
        %v2122 = vunpack.c.l.b16 %v2045
        %v2123 = vunpack.c.h.b16 %v2045
        %v2124 = vunpack.c.l.b16 %v2046
        %v2125 = vunpack.c.h.b16 %v2046
        %v2126 = vunpack.c.l.b16 %v2047
        %v2127 = vunpack.c.h.b16 %v2047
        %v2128 = vunpack.c.l.b16 %v2048
        %v2129 = vunpack.c.h.b16 %v2048
        %v2130 = vunpack.c.l.b16 %v2049
        %v2131 = vunpack.c.h.b16 %v2049
        %v2132 = vunpack.c.l.b16 %v2050
        %v2133 = vunpack.c.h.b16 %v2050
        %v2134 = vunpack.c.l.b16 %v2051
        %v2135 = vunpack.c.h.b16 %v2051
        %v2136 = vunpack.c.l.b16 %v2052
        %v2137 = vunpack.c.h.b16 %v2052
        %v2138 = vunpack.c.l.b16 %v2053
        %v2139 = vunpack.c.h.b16 %v2053
        %v2140 = vunpack.c.l.b16 %v2054
        %v2141 = vunpack.c.h.b16 %v2054
        %v2142 = vunpack.c.l.b16 %v2055
        %v2143 = vunpack.c.h.b16 %v2055
        %v2144 = vunpack.c.l.b16 %v2056
        %v2145 = vunpack.c.h.b16 %v2056
        %v2146 = vunpack.c.l.b16 %v2057
        %v2147 = vunpack.c.h.b16 %v2057
        %v2148 = vunpack.c.l.b16 %v2058
        %v2149 = vunpack.c.h.b16 %v2058
        %v2150 = vunpack.c.l.b16 %v2059
        %v2151 = vunpack.c.h.b16 %v2059
        %v2152 = vunpack.c.l.b16 %v2060
        %v2153 = vunpack.c.h.b16 %v2060
        %v2154 = vunpack.c.l.b16 %v2061
        %v2155 = vunpack.c.h.b16 %v2061
        %v2156 = vunpack.c.l.b16 %v2062
        %v2157 = vunpack.c.h.b16 %v2062
        %v2158 = vunpack.c.l.b16 %v2063
        %v2159 = vunpack.c.h.b16 %v2063
        %v2160 = vunpack.c.l.b16 %v2064
        %v2161 = vunpack.c.h.b16 %v2064
        %v2162 = vunpack.c.l.b16 %v2065
        %v2163 = vunpack.c.h.b16 %v2065
        %v2164 = vunpack.c.l.b16 %v2066
        %v2165 = vunpack.c.h.b16 %v2066
        %v2166 = vunpack.c.l.b16 %v2067
        %v2167 = vunpack.c.h.b16 %v2067
        %v2168 = vunpack.c.l.b16 %v2068
        %v2169 = vunpack.c.h.b16 %v2068
        %v2170 = vunpack.c.l.b16 %v2069
        %v2171 = vunpack.c.h.b16 %v2069
        %v2172 = vunpack.c.l.b16 %v2070
        %v2173 = vunpack.c.h.b16 %v2070
        %v2174 = vunpack.c.l.b16 %v2071
        %v2175 = vunpack.c.h.b16 %v2071
        %v2176 = vunpack.c.l.b16 %v2072
        %v2177 = vunpack.c.h.b16 %v2072
        %v2178 = vunpack.c.l.b16 %v2073
        %v2179 = vunpack.c.h.b16 %v2073
        %v2180 = vunpack.c.l.b16 %v2074
        %v2181 = vunpack.c.h.b16 %v2074
        %v2182 = vunpack.c.l.b16 %v2075
        %v2183 = vunpack.c.h.b16 %v2075
        %v2184 = vpack.c.b16 %v2122, %v2120
        %v2185 = vpack.c.b16 %v2123, %v2121
        %v2186 = vpack.c.b16 %v2126, %v2124
        %v2187 = vpack.c.b16 %v2127, %v2125
        %v2188 = vpack.c.b16 %v2130, %v2128
        %v2189 = vpack.c.b16 %v2131, %v2129
        %v2190 = vpack.c.b16 %v2134, %v2132
        %v2191 = vpack.c.b16 %v2135, %v2133
        %v2192 = vpack.c.b16 %v2138, %v2136
        %v2193 = vpack.c.b16 %v2139, %v2137
        %v2194 = vpack.c.b16 %v2142, %v2140
        %v2195 = vpack.c.b16 %v2143, %v2141
        %v2196 = vpack.c.b16 %v2146, %v2144
        %v2197 = vpack.c.b16 %v2147, %v2145
        %v2198 = vpack.c.b16 %v2150, %v2148
        %v2199 = vpack.c.b16 %v2151, %v2149
        %v2200 = vpack.c.b16 %v2154, %v2152
        %v2201 = vpack.c.b16 %v2155, %v2153
        %v2202 = vpack.c.b16 %v2158, %v2156
        %v2203 = vpack.c.b16 %v2159, %v2157
        %v2204 = vpack.c.b16 %v2162, %v2160
        %v2205 = vpack.c.b16 %v2163, %v2161
        %v2206 = vpack.c.b16 %v2166, %v2164
        %v2207 = vpack.c.b16 %v2167, %v2165
        %v2208 = vpack.c.b16 %v2170, %v2168
        %v2209 = vpack.c.b16 %v2171, %v2169
        %v2210 = vpack.c.b16 %v2174, %v2172
        %v2211 = vpack.c.b16 %v2175, %v2173
        %v2212 = vpack.c.b16 %v2178, %v2176
        %v2213 = vpack.c.b16 %v2179, %v2177
        %v2214 = vpack.c.b16 %v2182, %v2180
        %v2215 = vpack.c.b16 %v2183, %v2181
        %2248 = vmatprep.subr.bf16.mxu0 %v2199
        %2249 = vmatpush1.bf16.msra.mxu0 %v2198
        %2250 = vmatprep.subr.bf16.mxu0 %v2197
        %2251 = vmatpush1.bf16.msra.mxu0 %v2196
        %2252 = vmatprep.subr.bf16.mxu0 %v2195
        %2253 = vmatpush1.bf16.msra.mxu0 %v2194
        %2254 = vmatprep.subr.bf16.mxu0 %v2193
        %2255 = vmatpush1.bf16.msra.mxu0 %v2192
        %2256 = vmatprep.subr.bf16.mxu0 %v2191
        %2257 = vmatpush1.bf16.msra.mxu0 %v2190
        %2258 = vmatprep.subr.bf16.mxu0 %v2189
        %2259 = vmatpush1.bf16.msra.mxu0 %v2188
        %2260 = vmatprep.subr.bf16.mxu0 %v2187
        %2261 = vmatpush1.bf16.msra.mxu0 %v2186
        %2262 = vmatprep.subr.bf16.mxu0 %v2185
        %2263 = vmatpush1.bf16.msra.mxu0 %v2184
        %2264 = vmatprep.subr.bf16.mxu0 %v2215
        %2265 = vmatpush2.bf16.msra.mxu0 %v2214
        %2266 = vmatprep.subr.bf16.mxu0 %v2213
        %2267 = vmatpush2.bf16.msra.mxu0 %v2212
        %2268 = vmatprep.subr.bf16.mxu0 %v2211
        %2269 = vmatpush2.bf16.msra.mxu0 %v2210
        %2270 = vmatprep.subr.bf16.mxu0 %v2209
        %2271 = vmatpush2.bf16.msra.mxu0 %v2208
        %2272 = vmatprep.subr.bf16.mxu0 %v2207
        %2273 = vmatpush2.bf16.msra.mxu0 %v2206
        %2274 = vmatprep.subr.bf16.mxu0 %v2205
        %2275 = vmatpush2.bf16.msra.mxu0 %v2204
        %2276 = vmatprep.subr.bf16.mxu0 %v2203
        %2277 = vmatpush2.bf16.msra.mxu0 %v2202
        %2278 = vmatprep.subr.bf16.mxu0 %v2201
        %2279 = vmatpush2.bf16.msra.mxu0 %v2200
        %2280 = vmatprep.mubr.bf16.mxu0 %v2013
        %2281 = vmatmul.mubr.bf16.gmra.mxu0 %v2012
        %v2282 = vpop.f32.mrf.mxu0
        %v2283 = vadd.f32 %v2081, %v2282
        %v2284 = vpop.f32.mrf.mxu0
        %v2285 = vadd.f32 %v2085, %v2284
        %v2286 = vpop.f32.mrf.mxu0
        %v2287 = vadd.f32 %v2081, %v2286
        %v2288 = vpop.f32.mrf.mxu0
        %v2289 = vadd.f32 %v2085, %v2288
        %2290 = vmatprep.mubr.bf16.mxu0 %v2015
        %2291 = vmatmul.mubr.bf16.gmra.mxu0 %v2014
        %v2292 = vpop.f32.mrf.mxu0
        %v2293 = vadd.f32 %v2081, %v2292
        %v2294 = vpop.f32.mrf.mxu0
        %v2295 = vadd.f32 %v2085, %v2294
        %v2296 = vpop.f32.mrf.mxu0
        %v2297 = vadd.f32 %v2081, %v2296
        %v2298 = vpop.f32.mrf.mxu0
        %v2299 = vadd.f32 %v2085, %v2298
        %2300 = vmatprep.mubr.bf16.mxu0 %v2017
        %2301 = vmatmul.mubr.bf16.gmra.mxu0 %v2016
        %v2302 = vpop.f32.mrf.mxu0
        %v2303 = vadd.f32 %v2081, %v2302
        %v2304 = vpop.f32.mrf.mxu0
        %v2305 = vadd.f32 %v2085, %v2304
        %v2306 = vpop.f32.mrf.mxu0
        %v2307 = vadd.f32 %v2081, %v2306
        %v2308 = vpop.f32.mrf.mxu0
        %v2309 = vadd.f32 %v2085, %v2308
        %2310 = vmatprep.mubr.bf16.mxu0 %v2019
        %2311 = vmatmul.mubr.bf16.gmra.mxu0 %v2018
        %v2312 = vpop.f32.mrf.mxu0
        %v2313 = vadd.f32 %v2081, %v2312
        %v2314 = vpop.f32.mrf.mxu0
        %v2315 = vadd.f32 %v2085, %v2314
        %v2316 = vpop.f32.mrf.mxu0
        %v2317 = vadd.f32 %v2081, %v2316
        %v2318 = vpop.f32.mrf.mxu0
        %v2319 = vadd.f32 %v2085, %v2318
        %2320 = vmatprep.mubr.bf16.mxu0 %v2021
        %2321 = vmatmul.mubr.bf16.gmra.mxu0 %v2020
        %v2322 = vpop.f32.mrf.mxu0
        %v2323 = vadd.f32 %v2081, %v2322
        %v2324 = vpop.f32.mrf.mxu0
        %v2325 = vadd.f32 %v2085, %v2324
        %v2326 = vpop.f32.mrf.mxu0
        %v2327 = vadd.f32 %v2081, %v2326
        %v2328 = vpop.f32.mrf.mxu0
        %v2329 = vadd.f32 %v2085, %v2328
        %2330 = vmatprep.mubr.bf16.mxu0 %v2023
        %2331 = vmatmul.mubr.bf16.gmra.mxu0 %v2022
        %v2332 = vpop.f32.mrf.mxu0
        %v2333 = vadd.f32 %v2081, %v2332
        %v2334 = vpop.f32.mrf.mxu0
        %v2335 = vadd.f32 %v2085, %v2334
        %v2336 = vpop.f32.mrf.mxu0
        %v2337 = vadd.f32 %v2081, %v2336
        %v2338 = vpop.f32.mrf.mxu0
        %v2339 = vadd.f32 %v2085, %v2338
        %2340 = vmatprep.mubr.bf16.mxu0 %v2025
        %2341 = vmatmul.mubr.bf16.gmra.mxu0 %v2024
        %v2342 = vpop.f32.mrf.mxu0
        %v2343 = vadd.f32 %v2081, %v2342
        %v2344 = vpop.f32.mrf.mxu0
        %v2345 = vadd.f32 %v2085, %v2344
        %v2346 = vpop.f32.mrf.mxu0
        %v2347 = vadd.f32 %v2081, %v2346
        %v2348 = vpop.f32.mrf.mxu0
        %v2349 = vadd.f32 %v2085, %v2348
        %2350 = vmatprep.mubr.bf16.mxu0 %v2027
        %2351 = vmatmul.mubr.bf16.gmra.mxu0 %v2026
        %v2352 = vpop.f32.mrf.mxu0
        %v2353 = vadd.f32 %v2081, %v2352
        %v2354 = vpop.f32.mrf.mxu0
        %v2355 = vadd.f32 %v2085, %v2354
        %v2356 = vpop.f32.mrf.mxu0
        %v2357 = vadd.f32 %v2081, %v2356
        %v2358 = vpop.f32.mrf.mxu0
        %v2359 = vadd.f32 %v2085, %v2358
        %2360 = vmatprep.mubr.bf16.mxu0 %v2029
        %2361 = vmatmul.mubr.bf16.gmra.mxu0 %v2028
        %v2362 = vpop.f32.mrf.mxu0
        %v2363 = vadd.f32 %v2081, %v2362
        %v2364 = vpop.f32.mrf.mxu0
        %v2365 = vadd.f32 %v2085, %v2364
        %v2366 = vpop.f32.mrf.mxu0
        %v2367 = vadd.f32 %v2081, %v2366
        %v2368 = vpop.f32.mrf.mxu0
        %v2369 = vadd.f32 %v2085, %v2368
        %2370 = vmatprep.mubr.bf16.mxu0 %v2031
        %2371 = vmatmul.mubr.bf16.gmra.mxu0 %v2030
        %v2372 = vpop.f32.mrf.mxu0
        %v2373 = vadd.f32 %v2081, %v2372
        %v2374 = vpop.f32.mrf.mxu0
        %v2375 = vadd.f32 %v2085, %v2374
        %v2376 = vpop.f32.mrf.mxu0
        %v2377 = vadd.f32 %v2081, %v2376
        %v2378 = vpop.f32.mrf.mxu0
        %v2379 = vadd.f32 %v2085, %v2378
        %2380 = vmatprep.mubr.bf16.mxu0 %v2033
        %2381 = vmatmul.mubr.bf16.gmra.mxu0 %v2032
        %v2382 = vpop.f32.mrf.mxu0
        %v2383 = vadd.f32 %v2081, %v2382
        %v2384 = vpop.f32.mrf.mxu0
        %v2385 = vadd.f32 %v2085, %v2384
        %v2386 = vpop.f32.mrf.mxu0
        %v2387 = vadd.f32 %v2081, %v2386
        %v2388 = vpop.f32.mrf.mxu0
        %v2389 = vadd.f32 %v2085, %v2388
        %2390 = vmatprep.mubr.bf16.mxu0 %v2035
        %2391 = vmatmul.mubr.bf16.gmra.mxu0 %v2034
        %v2392 = vpop.f32.mrf.mxu0
        %v2393 = vadd.f32 %v2081, %v2392
        %v2394 = vpop.f32.mrf.mxu0
        %v2395 = vadd.f32 %v2085, %v2394
        %v2396 = vpop.f32.mrf.mxu0
        %v2397 = vadd.f32 %v2081, %v2396
        %v2398 = vpop.f32.mrf.mxu0
        %v2399 = vadd.f32 %v2085, %v2398
        %2400 = vmatprep.mubr.bf16.mxu0 %v2037
        %2401 = vmatmul.mubr.bf16.gmra.mxu0 %v2036
        %v2402 = vpop.f32.mrf.mxu0
        %v2403 = vadd.f32 %v2081, %v2402
        %v2404 = vpop.f32.mrf.mxu0
        %v2405 = vadd.f32 %v2085, %v2404
        %v2406 = vpop.f32.mrf.mxu0
        %v2407 = vadd.f32 %v2081, %v2406
        %v2408 = vpop.f32.mrf.mxu0
        %v2409 = vadd.f32 %v2085, %v2408
        %2410 = vmatprep.mubr.bf16.mxu0 %v2039
        %2411 = vmatmul.mubr.bf16.gmra.mxu0 %v2038
        %v2412 = vpop.f32.mrf.mxu0
        %v2413 = vadd.f32 %v2081, %v2412
        %v2414 = vpop.f32.mrf.mxu0
        %v2415 = vadd.f32 %v2085, %v2414
        %v2416 = vpop.f32.mrf.mxu0
        %v2417 = vadd.f32 %v2081, %v2416
        %v2418 = vpop.f32.mrf.mxu0
        %v2419 = vadd.f32 %v2085, %v2418
        %2420 = vmatprep.mubr.bf16.mxu0 %v2041
        %2421 = vmatmul.mubr.bf16.gmra.mxu0 %v2040
        %v2422 = vpop.f32.mrf.mxu0
        %v2423 = vadd.f32 %v2081, %v2422
        %v2424 = vpop.f32.mrf.mxu0
        %v2425 = vadd.f32 %v2085, %v2424
        %v2426 = vpop.f32.mrf.mxu0
        %v2427 = vadd.f32 %v2081, %v2426
        %v2428 = vpop.f32.mrf.mxu0
        %v2429 = vadd.f32 %v2085, %v2428
        %2430 = vmatprep.mubr.bf16.mxu0 %v2043
        %2431 = vmatmul.mubr.bf16.gmra.mxu0 %v2042
        %v2432 = vpop.f32.mrf.mxu0
        %v2433 = vadd.f32 %v2081, %v2432
        %v2434 = vpop.f32.mrf.mxu0
        %v2435 = vadd.f32 %v2085, %v2434
        %v2436 = vpop.f32.mrf.mxu0
        %v2437 = vadd.f32 %v2081, %v2436
        %v2438 = vpop.f32.mrf.mxu0
        %v2439 = vadd.f32 %v2085, %v2438
        %2440 = vdwg.mxu0
        %v2441 = vmax.f32 %v2283, 0.0
        %v2442 = vmax.f32 %v2285, 0.0
        %v2443 = vmax.f32 %v2287, 0.0
        %v2444 = vmax.f32 %v2289, 0.0
        %v2445 = vmax.f32 %v2293, 0.0
        %v2446 = vmax.f32 %v2295, 0.0
        %v2447 = vmax.f32 %v2297, 0.0
        %v2448 = vmax.f32 %v2299, 0.0
        %v2449 = vmax.f32 %v2303, 0.0
        %v2450 = vmax.f32 %v2305, 0.0
        %v2451 = vmax.f32 %v2307, 0.0
        %v2452 = vmax.f32 %v2309, 0.0
        %v2453 = vmax.f32 %v2313, 0.0
        %v2454 = vmax.f32 %v2315, 0.0
        %v2455 = vmax.f32 %v2317, 0.0
        %v2456 = vmax.f32 %v2319, 0.0
        %v2457 = vmax.f32 %v2323, 0.0
        %v2458 = vmax.f32 %v2325, 0.0
        %v2459 = vmax.f32 %v2327, 0.0
        %v2460 = vmax.f32 %v2329, 0.0
        %v2461 = vmax.f32 %v2333, 0.0
        %v2462 = vmax.f32 %v2335, 0.0
        %v2463 = vmax.f32 %v2337, 0.0
        %v2464 = vmax.f32 %v2339, 0.0
        %v2465 = vmax.f32 %v2343, 0.0
        %v2466 = vmax.f32 %v2345, 0.0
        %v2467 = vmax.f32 %v2347, 0.0
        %v2468 = vmax.f32 %v2349, 0.0
        %v2469 = vmax.f32 %v2353, 0.0
        %v2470 = vmax.f32 %v2355, 0.0
        %v2471 = vmax.f32 %v2357, 0.0
        %v2472 = vmax.f32 %v2359, 0.0
        %v2473 = vmax.f32 %v2363, 0.0
        %v2474 = vmax.f32 %v2365, 0.0
        %v2475 = vmax.f32 %v2367, 0.0
        %v2476 = vmax.f32 %v2369, 0.0
        %v2477 = vmax.f32 %v2373, 0.0
        %v2478 = vmax.f32 %v2375, 0.0
        %v2479 = vmax.f32 %v2377, 0.0
        %v2480 = vmax.f32 %v2379, 0.0
        %v2481 = vmax.f32 %v2383, 0.0
        %v2482 = vmax.f32 %v2385, 0.0
        %v2483 = vmax.f32 %v2387, 0.0
        %v2484 = vmax.f32 %v2389, 0.0
        %v2485 = vmax.f32 %v2393, 0.0
        %v2486 = vmax.f32 %v2395, 0.0
        %v2487 = vmax.f32 %v2397, 0.0
        %v2488 = vmax.f32 %v2399, 0.0
        %v2489 = vmax.f32 %v2403, 0.0
        %v2490 = vmax.f32 %v2405, 0.0
        %v2491 = vmax.f32 %v2407, 0.0
        %v2492 = vmax.f32 %v2409, 0.0
        %v2493 = vmax.f32 %v2413, 0.0
        %v2494 = vmax.f32 %v2415, 0.0
        %v2495 = vmax.f32 %v2417, 0.0
        %v2496 = vmax.f32 %v2419, 0.0
        %v2497 = vmax.f32 %v2423, 0.0
        %v2498 = vmax.f32 %v2425, 0.0
        %v2499 = vmax.f32 %v2427, 0.0
        %v2500 = vmax.f32 %v2429, 0.0
        %v2501 = vmax.f32 %v2433, 0.0
        %v2502 = vmax.f32 %v2435, 0.0
        %v2503 = vmax.f32 %v2437, 0.0
        %v2504 = vmax.f32 %v2439, 0.0
        %v2505 = vpack.c.bf16 %v2443, %v2441
        %v2506 = vpack.c.bf16 %v2444, %v2442
        %v2507 = vpack.c.bf16 %v2447, %v2445
        %v2508 = vpack.c.bf16 %v2448, %v2446
        %v2509 = vpack.c.bf16 %v2451, %v2449
        %v2510 = vpack.c.bf16 %v2452, %v2450
        %v2511 = vpack.c.bf16 %v2455, %v2453
        %v2512 = vpack.c.bf16 %v2456, %v2454
        %v2513 = vpack.c.bf16 %v2459, %v2457
        %v2514 = vpack.c.bf16 %v2460, %v2458
        %v2515 = vpack.c.bf16 %v2463, %v2461
        %v2516 = vpack.c.bf16 %v2464, %v2462
        %v2517 = vpack.c.bf16 %v2467, %v2465
        %v2518 = vpack.c.bf16 %v2468, %v2466
        %v2519 = vpack.c.bf16 %v2471, %v2469
        %v2520 = vpack.c.bf16 %v2472, %v2470
        %v2521 = vpack.c.bf16 %v2475, %v2473
        %v2522 = vpack.c.bf16 %v2476, %v2474
        %v2523 = vpack.c.bf16 %v2479, %v2477
        %v2524 = vpack.c.bf16 %v2480, %v2478
        %v2525 = vpack.c.bf16 %v2483, %v2481
        %v2526 = vpack.c.bf16 %v2484, %v2482
        %v2527 = vpack.c.bf16 %v2487, %v2485
        %v2528 = vpack.c.bf16 %v2488, %v2486
        %v2529 = vpack.c.bf16 %v2491, %v2489
        %v2530 = vpack.c.bf16 %v2492, %v2490
        %v2531 = vpack.c.bf16 %v2495, %v2493
        %v2532 = vpack.c.bf16 %v2496, %v2494
        %v2533 = vpack.c.bf16 %v2499, %v2497
        %v2534 = vpack.c.bf16 %v2500, %v2498
        %v2535 = vpack.c.bf16 %v2503, %v2501
        %v2536 = vpack.c.bf16 %v2504, %v2502
        %v2537 = vld [vmem:[#allocation11] sm:$0xff]
        %v2538 = vld [vmem:[#allocation11 + $0x8] sm:$0xff]
        %v2539 = vld [vmem:[#allocation11 + $0x10] sm:$0xff]
        %v2540 = vld [vmem:[#allocation11 + $0x18] sm:$0xff]
        %v2541 = vld [vmem:[#allocation11 + $0x20] sm:$0xff]
        %v2542 = vld [vmem:[#allocation11 + $0x28] sm:$0xff]
        %v2543 = vld [vmem:[#allocation11 + $0x30] sm:$0xff]
        %v2544 = vld [vmem:[#allocation11 + $0x38] sm:$0xff]
        %v2545 = vld [vmem:[#allocation11 + $0x40] sm:$0xff]
        %v2546 = vld [vmem:[#allocation11 + $0x48] sm:$0xff]
        %v2547 = vld [vmem:[#allocation11 + $0x50] sm:$0xff]
        %v2548 = vld [vmem:[#allocation11 + $0x58] sm:$0xff]
        %v2549 = vld [vmem:[#allocation11 + $0x60] sm:$0xff]
        %v2550 = vld [vmem:[#allocation11 + $0x68] sm:$0xff]
        %v2551 = vld [vmem:[#allocation11 + $0x70] sm:$0xff]
        %v2552 = vld [vmem:[#allocation11 + $0x78] sm:$0xff]
        %v2553 = vld [vmem:[#allocation11 + $0x80] sm:$0xff]
        %v2554 = vld [vmem:[#allocation11 + $0x88] sm:$0xff]
        %v2555 = vld [vmem:[#allocation11 + $0x90] sm:$0xff]
        %v2556 = vld [vmem:[#allocation11 + $0x98] sm:$0xff]
        %v2557 = vld [vmem:[#allocation11 + $0xa0] sm:$0xff]
        %v2558 = vld [vmem:[#allocation11 + $0xa8] sm:$0xff]
        %v2559 = vld [vmem:[#allocation11 + $0xb0] sm:$0xff]
        %v2560 = vld [vmem:[#allocation11 + $0xb8] sm:$0xff]
        %v2561 = vld [vmem:[#allocation11 + $0xc0] sm:$0xff]
        %v2562 = vld [vmem:[#allocation11 + $0xc8] sm:$0xff]
        %v2563 = vld [vmem:[#allocation11 + $0xd0] sm:$0xff]
        %v2564 = vld [vmem:[#allocation11 + $0xd8] sm:$0xff]
        %v2565 = vld [vmem:[#allocation11 + $0xe0] sm:$0xff]
        %v2566 = vld [vmem:[#allocation11 + $0xe8] sm:$0xff]
        %v2567 = vld [vmem:[#allocation11 + $0xf0] sm:$0xff]
        %v2568 = vld [vmem:[#allocation11 + $0xf8] sm:$0xff]
        %v2569 = vld [vmem:[%s10] sm:$0x3]
        %v2571 = vlaneseq
        %v2572 = vshrl.u32 %v2571, 7
        %v2573 = vsub.s32 0, %v2572
        %v2574 = vrot.slane %v2569, %v2573
        %v2575 = vlaneseq
        %v2576 = vshrl.u32 %v2575, 7
        %v2577 = vsub.s32 1, %v2576
        %v2578 = vrot.slane %v2569, %v2577
        %v2613 = vunpack.c.l.b16 %v2537
        %v2614 = vunpack.c.h.b16 %v2537
        %v2615 = vunpack.c.l.b16 %v2538
        %v2616 = vunpack.c.h.b16 %v2538
        %v2617 = vunpack.c.l.b16 %v2539
        %v2618 = vunpack.c.h.b16 %v2539
        %v2619 = vunpack.c.l.b16 %v2540
        %v2620 = vunpack.c.h.b16 %v2540
        %v2621 = vunpack.c.l.b16 %v2541
        %v2622 = vunpack.c.h.b16 %v2541
        %v2623 = vunpack.c.l.b16 %v2542
        %v2624 = vunpack.c.h.b16 %v2542
        %v2625 = vunpack.c.l.b16 %v2543
        %v2626 = vunpack.c.h.b16 %v2543
        %v2627 = vunpack.c.l.b16 %v2544
        %v2628 = vunpack.c.h.b16 %v2544
        %v2629 = vunpack.c.l.b16 %v2545
        %v2630 = vunpack.c.h.b16 %v2545
        %v2631 = vunpack.c.l.b16 %v2546
        %v2632 = vunpack.c.h.b16 %v2546
        %v2633 = vunpack.c.l.b16 %v2547
        %v2634 = vunpack.c.h.b16 %v2547
        %v2635 = vunpack.c.l.b16 %v2548
        %v2636 = vunpack.c.h.b16 %v2548
        %v2637 = vunpack.c.l.b16 %v2549
        %v2638 = vunpack.c.h.b16 %v2549
        %v2639 = vunpack.c.l.b16 %v2550
        %v2640 = vunpack.c.h.b16 %v2550
        %v2641 = vunpack.c.l.b16 %v2551
        %v2642 = vunpack.c.h.b16 %v2551
        %v2643 = vunpack.c.l.b16 %v2552
        %v2644 = vunpack.c.h.b16 %v2552
        %v2645 = vunpack.c.l.b16 %v2553
        %v2646 = vunpack.c.h.b16 %v2553
        %v2647 = vunpack.c.l.b16 %v2554
        %v2648 = vunpack.c.h.b16 %v2554
        %v2649 = vunpack.c.l.b16 %v2555
        %v2650 = vunpack.c.h.b16 %v2555
        %v2651 = vunpack.c.l.b16 %v2556
        %v2652 = vunpack.c.h.b16 %v2556
        %v2653 = vunpack.c.l.b16 %v2557
        %v2654 = vunpack.c.h.b16 %v2557
        %v2655 = vunpack.c.l.b16 %v2558
        %v2656 = vunpack.c.h.b16 %v2558
        %v2657 = vunpack.c.l.b16 %v2559
        %v2658 = vunpack.c.h.b16 %v2559
        %v2659 = vunpack.c.l.b16 %v2560
        %v2660 = vunpack.c.h.b16 %v2560
        %v2661 = vunpack.c.l.b16 %v2561
        %v2662 = vunpack.c.h.b16 %v2561
        %v2663 = vunpack.c.l.b16 %v2562
        %v2664 = vunpack.c.h.b16 %v2562
        %v2665 = vunpack.c.l.b16 %v2563
        %v2666 = vunpack.c.h.b16 %v2563
        %v2667 = vunpack.c.l.b16 %v2564
        %v2668 = vunpack.c.h.b16 %v2564
        %v2669 = vunpack.c.l.b16 %v2565
        %v2670 = vunpack.c.h.b16 %v2565
        %v2671 = vunpack.c.l.b16 %v2566
        %v2672 = vunpack.c.h.b16 %v2566
        %v2673 = vunpack.c.l.b16 %v2567
        %v2674 = vunpack.c.h.b16 %v2567
        %v2675 = vunpack.c.l.b16 %v2568
        %v2676 = vunpack.c.h.b16 %v2568
        %v2677 = vpack.c.b16 %v2615, %v2613
        %v2678 = vpack.c.b16 %v2616, %v2614
        %v2679 = vpack.c.b16 %v2619, %v2617
        %v2680 = vpack.c.b16 %v2620, %v2618
        %v2681 = vpack.c.b16 %v2623, %v2621
        %v2682 = vpack.c.b16 %v2624, %v2622
        %v2683 = vpack.c.b16 %v2627, %v2625
        %v2684 = vpack.c.b16 %v2628, %v2626
        %v2685 = vpack.c.b16 %v2631, %v2629
        %v2686 = vpack.c.b16 %v2632, %v2630
        %v2687 = vpack.c.b16 %v2635, %v2633
        %v2688 = vpack.c.b16 %v2636, %v2634
        %v2689 = vpack.c.b16 %v2639, %v2637
        %v2690 = vpack.c.b16 %v2640, %v2638
        %v2691 = vpack.c.b16 %v2643, %v2641
        %v2692 = vpack.c.b16 %v2644, %v2642
        %v2693 = vpack.c.b16 %v2647, %v2645
        %v2694 = vpack.c.b16 %v2648, %v2646
        %v2695 = vpack.c.b16 %v2651, %v2649
        %v2696 = vpack.c.b16 %v2652, %v2650
        %v2697 = vpack.c.b16 %v2655, %v2653
        %v2698 = vpack.c.b16 %v2656, %v2654
        %v2699 = vpack.c.b16 %v2659, %v2657
        %v2700 = vpack.c.b16 %v2660, %v2658
        %v2701 = vpack.c.b16 %v2663, %v2661
        %v2702 = vpack.c.b16 %v2664, %v2662
        %v2703 = vpack.c.b16 %v2667, %v2665
        %v2704 = vpack.c.b16 %v2668, %v2666
        %v2705 = vpack.c.b16 %v2671, %v2669
        %v2706 = vpack.c.b16 %v2672, %v2670
        %v2707 = vpack.c.b16 %v2675, %v2673
        %v2708 = vpack.c.b16 %v2676, %v2674
        %2741 = vmatprep.subr.bf16.mxu0 %v2692
        %2742 = vmatpush1.bf16.msra.mxu0 %v2691
        %2743 = vmatprep.subr.bf16.mxu0 %v2690
        %2744 = vmatpush1.bf16.msra.mxu0 %v2689
        %2745 = vmatprep.subr.bf16.mxu0 %v2688
        %2746 = vmatpush1.bf16.msra.mxu0 %v2687
        %2747 = vmatprep.subr.bf16.mxu0 %v2686
        %2748 = vmatpush1.bf16.msra.mxu0 %v2685
        %2749 = vmatprep.subr.bf16.mxu0 %v2684
        %2750 = vmatpush1.bf16.msra.mxu0 %v2683
        %2751 = vmatprep.subr.bf16.mxu0 %v2682
        %2752 = vmatpush1.bf16.msra.mxu0 %v2681
        %2753 = vmatprep.subr.bf16.mxu0 %v2680
        %2754 = vmatpush1.bf16.msra.mxu0 %v2679
        %2755 = vmatprep.subr.bf16.mxu0 %v2678
        %2756 = vmatpush1.bf16.msra.mxu0 %v2677
        %2757 = vmatprep.subr.bf16.mxu0 %v2708
        %2758 = vmatpush2.bf16.msra.mxu0 %v2707
        %2759 = vmatprep.subr.bf16.mxu0 %v2706
        %2760 = vmatpush2.bf16.msra.mxu0 %v2705
        %2761 = vmatprep.subr.bf16.mxu0 %v2704
        %2762 = vmatpush2.bf16.msra.mxu0 %v2703
        %2763 = vmatprep.subr.bf16.mxu0 %v2702
        %2764 = vmatpush2.bf16.msra.mxu0 %v2701
        %2765 = vmatprep.subr.bf16.mxu0 %v2700
        %2766 = vmatpush2.bf16.msra.mxu0 %v2699
        %2767 = vmatprep.subr.bf16.mxu0 %v2698
        %2768 = vmatpush2.bf16.msra.mxu0 %v2697
        %2769 = vmatprep.subr.bf16.mxu0 %v2696
        %2770 = vmatpush2.bf16.msra.mxu0 %v2695
        %2771 = vmatprep.subr.bf16.mxu0 %v2694
        %2772 = vmatpush2.bf16.msra.mxu0 %v2693
        %2773 = vmatprep.mubr.bf16.mxu0 %v2506
        %2774 = vmatmul.mubr.bf16.gmra.mxu0 %v2505
        %v2775 = vpop.f32.mrf.mxu0
        %v2776 = vadd.f32 %v2574, %v2775
        %v2777 = vpop.f32.mrf.mxu0
        %v2778 = vadd.f32 %v2578, %v2777
        %v2779 = vpop.f32.mrf.mxu0
        %v2780 = vadd.f32 %v2574, %v2779
        %v2781 = vpop.f32.mrf.mxu0
        %v2782 = vadd.f32 %v2578, %v2781
        %2783 = vmatprep.mubr.bf16.mxu0 %v2508
        %2784 = vmatmul.mubr.bf16.gmra.mxu0 %v2507
        %v2785 = vpop.f32.mrf.mxu0
        %v2786 = vadd.f32 %v2574, %v2785
        %v2787 = vpop.f32.mrf.mxu0
        %v2788 = vadd.f32 %v2578, %v2787
        %v2789 = vpop.f32.mrf.mxu0
        %v2790 = vadd.f32 %v2574, %v2789
        %v2791 = vpop.f32.mrf.mxu0
        %v2792 = vadd.f32 %v2578, %v2791
        %2793 = vmatprep.mubr.bf16.mxu0 %v2510
        %2794 = vmatmul.mubr.bf16.gmra.mxu0 %v2509
        %v2795 = vpop.f32.mrf.mxu0
        %v2796 = vadd.f32 %v2574, %v2795
        %v2797 = vpop.f32.mrf.mxu0
        %v2798 = vadd.f32 %v2578, %v2797
        %v2799 = vpop.f32.mrf.mxu0
        %v2800 = vadd.f32 %v2574, %v2799
        %v2801 = vpop.f32.mrf.mxu0
        %v2802 = vadd.f32 %v2578, %v2801
        %2803 = vmatprep.mubr.bf16.mxu0 %v2512
        %2804 = vmatmul.mubr.bf16.gmra.mxu0 %v2511
        %v2805 = vpop.f32.mrf.mxu0
        %v2806 = vadd.f32 %v2574, %v2805
        %v2807 = vpop.f32.mrf.mxu0
        %v2808 = vadd.f32 %v2578, %v2807
        %v2809 = vpop.f32.mrf.mxu0
        %v2810 = vadd.f32 %v2574, %v2809
        %v2811 = vpop.f32.mrf.mxu0
        %v2812 = vadd.f32 %v2578, %v2811
        %2813 = vmatprep.mubr.bf16.mxu0 %v2514
        %2814 = vmatmul.mubr.bf16.gmra.mxu0 %v2513
        %v2815 = vpop.f32.mrf.mxu0
        %v2816 = vadd.f32 %v2574, %v2815
        %v2817 = vpop.f32.mrf.mxu0
        %v2818 = vadd.f32 %v2578, %v2817
        %v2819 = vpop.f32.mrf.mxu0
        %v2820 = vadd.f32 %v2574, %v2819
        %v2821 = vpop.f32.mrf.mxu0
        %v2822 = vadd.f32 %v2578, %v2821
        %2823 = vmatprep.mubr.bf16.mxu0 %v2516
        %2824 = vmatmul.mubr.bf16.gmra.mxu0 %v2515
        %v2825 = vpop.f32.mrf.mxu0
        %v2826 = vadd.f32 %v2574, %v2825
        %v2827 = vpop.f32.mrf.mxu0
        %v2828 = vadd.f32 %v2578, %v2827
        %v2829 = vpop.f32.mrf.mxu0
        %v2830 = vadd.f32 %v2574, %v2829
        %v2831 = vpop.f32.mrf.mxu0
        %v2832 = vadd.f32 %v2578, %v2831
        %2833 = vmatprep.mubr.bf16.mxu0 %v2518
        %2834 = vmatmul.mubr.bf16.gmra.mxu0 %v2517
        %v2835 = vpop.f32.mrf.mxu0
        %v2836 = vadd.f32 %v2574, %v2835
        %v2837 = vpop.f32.mrf.mxu0
        %v2838 = vadd.f32 %v2578, %v2837
        %v2839 = vpop.f32.mrf.mxu0
        %v2840 = vadd.f32 %v2574, %v2839
        %v2841 = vpop.f32.mrf.mxu0
        %v2842 = vadd.f32 %v2578, %v2841
        %2843 = vmatprep.mubr.bf16.mxu0 %v2520
        %2844 = vmatmul.mubr.bf16.gmra.mxu0 %v2519
        %v2845 = vpop.f32.mrf.mxu0
        %v2846 = vadd.f32 %v2574, %v2845
        %v2847 = vpop.f32.mrf.mxu0
        %v2848 = vadd.f32 %v2578, %v2847
        %v2849 = vpop.f32.mrf.mxu0
        %v2850 = vadd.f32 %v2574, %v2849
        %v2851 = vpop.f32.mrf.mxu0
        %v2852 = vadd.f32 %v2578, %v2851
        %2853 = vmatprep.mubr.bf16.mxu0 %v2522
        %2854 = vmatmul.mubr.bf16.gmra.mxu0 %v2521
        %v2855 = vpop.f32.mrf.mxu0
        %v2856 = vadd.f32 %v2574, %v2855
        %v2857 = vpop.f32.mrf.mxu0
        %v2858 = vadd.f32 %v2578, %v2857
        %v2859 = vpop.f32.mrf.mxu0
        %v2860 = vadd.f32 %v2574, %v2859
        %v2861 = vpop.f32.mrf.mxu0
        %v2862 = vadd.f32 %v2578, %v2861
        %2863 = vmatprep.mubr.bf16.mxu0 %v2524
        %2864 = vmatmul.mubr.bf16.gmra.mxu0 %v2523
        %v2865 = vpop.f32.mrf.mxu0
        %v2866 = vadd.f32 %v2574, %v2865
        %v2867 = vpop.f32.mrf.mxu0
        %v2868 = vadd.f32 %v2578, %v2867
        %v2869 = vpop.f32.mrf.mxu0
        %v2870 = vadd.f32 %v2574, %v2869
        %v2871 = vpop.f32.mrf.mxu0
        %v2872 = vadd.f32 %v2578, %v2871
        %2873 = vmatprep.mubr.bf16.mxu0 %v2526
        %2874 = vmatmul.mubr.bf16.gmra.mxu0 %v2525
        %v2875 = vpop.f32.mrf.mxu0
        %v2876 = vadd.f32 %v2574, %v2875
        %v2877 = vpop.f32.mrf.mxu0
        %v2878 = vadd.f32 %v2578, %v2877
        %v2879 = vpop.f32.mrf.mxu0
        %v2880 = vadd.f32 %v2574, %v2879
        %v2881 = vpop.f32.mrf.mxu0
        %v2882 = vadd.f32 %v2578, %v2881
        %2883 = vmatprep.mubr.bf16.mxu0 %v2528
        %2884 = vmatmul.mubr.bf16.gmra.mxu0 %v2527
        %v2885 = vpop.f32.mrf.mxu0
        %v2886 = vadd.f32 %v2574, %v2885
        %v2887 = vpop.f32.mrf.mxu0
        %v2888 = vadd.f32 %v2578, %v2887
        %v2889 = vpop.f32.mrf.mxu0
        %v2890 = vadd.f32 %v2574, %v2889
        %v2891 = vpop.f32.mrf.mxu0
        %v2892 = vadd.f32 %v2578, %v2891
        %2893 = vmatprep.mubr.bf16.mxu0 %v2530
        %2894 = vmatmul.mubr.bf16.gmra.mxu0 %v2529
        %v2895 = vpop.f32.mrf.mxu0
        %v2896 = vadd.f32 %v2574, %v2895
        %v2897 = vpop.f32.mrf.mxu0
        %v2898 = vadd.f32 %v2578, %v2897
        %v2899 = vpop.f32.mrf.mxu0
        %v2900 = vadd.f32 %v2574, %v2899
        %v2901 = vpop.f32.mrf.mxu0
        %v2902 = vadd.f32 %v2578, %v2901
        %2903 = vmatprep.mubr.bf16.mxu0 %v2532
        %2904 = vmatmul.mubr.bf16.gmra.mxu0 %v2531
        %v2905 = vpop.f32.mrf.mxu0
        %v2906 = vadd.f32 %v2574, %v2905
        %v2907 = vpop.f32.mrf.mxu0
        %v2908 = vadd.f32 %v2578, %v2907
        %v2909 = vpop.f32.mrf.mxu0
        %v2910 = vadd.f32 %v2574, %v2909
        %v2911 = vpop.f32.mrf.mxu0
        %v2912 = vadd.f32 %v2578, %v2911
        %2913 = vmatprep.mubr.bf16.mxu0 %v2534
        %2914 = vmatmul.mubr.bf16.gmra.mxu0 %v2533
        %v2915 = vpop.f32.mrf.mxu0
        %v2916 = vadd.f32 %v2574, %v2915
        %v2917 = vpop.f32.mrf.mxu0
        %v2918 = vadd.f32 %v2578, %v2917
        %v2919 = vpop.f32.mrf.mxu0
        %v2920 = vadd.f32 %v2574, %v2919
        %v2921 = vpop.f32.mrf.mxu0
        %v2922 = vadd.f32 %v2578, %v2921
        %2923 = vmatprep.mubr.bf16.mxu0 %v2536
        %2924 = vmatmul.mubr.bf16.gmra.mxu0 %v2535
        %v2925 = vpop.f32.mrf.mxu0
        %v2926 = vadd.f32 %v2574, %v2925
        %v2927 = vpop.f32.mrf.mxu0
        %v2928 = vadd.f32 %v2578, %v2927
        %v2929 = vpop.f32.mrf.mxu0
        %v2930 = vadd.f32 %v2574, %v2929
        %v2931 = vpop.f32.mrf.mxu0
        %v2932 = vadd.f32 %v2578, %v2931
        %2933 = vdwg.mxu0
        %v2934 = vmax.f32 %v2776, 0.0
        %v2935 = vmax.f32 %v2778, 0.0
        %v2936 = vmax.f32 %v2780, 0.0
        %v2937 = vmax.f32 %v2782, 0.0
        %v2938 = vmax.f32 %v2786, 0.0
        %v2939 = vmax.f32 %v2788, 0.0
        %v2940 = vmax.f32 %v2790, 0.0
        %v2941 = vmax.f32 %v2792, 0.0
        %v2942 = vmax.f32 %v2796, 0.0
        %v2943 = vmax.f32 %v2798, 0.0
        %v2944 = vmax.f32 %v2800, 0.0
        %v2945 = vmax.f32 %v2802, 0.0
        %v2946 = vmax.f32 %v2806, 0.0
        %v2947 = vmax.f32 %v2808, 0.0
        %v2948 = vmax.f32 %v2810, 0.0
        %v2949 = vmax.f32 %v2812, 0.0
        %v2950 = vmax.f32 %v2816, 0.0
        %v2951 = vmax.f32 %v2818, 0.0
        %v2952 = vmax.f32 %v2820, 0.0
        %v2953 = vmax.f32 %v2822, 0.0
        %v2954 = vmax.f32 %v2826, 0.0
        %v2955 = vmax.f32 %v2828, 0.0
        %v2956 = vmax.f32 %v2830, 0.0
        %v2957 = vmax.f32 %v2832, 0.0
        %v2958 = vmax.f32 %v2836, 0.0
        %v2959 = vmax.f32 %v2838, 0.0
        %v2960 = vmax.f32 %v2840, 0.0
        %v2961 = vmax.f32 %v2842, 0.0
        %v2962 = vmax.f32 %v2846, 0.0
        %v2963 = vmax.f32 %v2848, 0.0
        %v2964 = vmax.f32 %v2850, 0.0
        %v2965 = vmax.f32 %v2852, 0.0
        %v2966 = vmax.f32 %v2856, 0.0
        %v2967 = vmax.f32 %v2858, 0.0
        %v2968 = vmax.f32 %v2860, 0.0
        %v2969 = vmax.f32 %v2862, 0.0
        %v2970 = vmax.f32 %v2866, 0.0
        %v2971 = vmax.f32 %v2868, 0.0
        %v2972 = vmax.f32 %v2870, 0.0
        %v2973 = vmax.f32 %v2872, 0.0
        %v2974 = vmax.f32 %v2876, 0.0
        %v2975 = vmax.f32 %v2878, 0.0
        %v2976 = vmax.f32 %v2880, 0.0
        %v2977 = vmax.f32 %v2882, 0.0
        %v2978 = vmax.f32 %v2886, 0.0
        %v2979 = vmax.f32 %v2888, 0.0
        %v2980 = vmax.f32 %v2890, 0.0
        %v2981 = vmax.f32 %v2892, 0.0
        %v2982 = vmax.f32 %v2896, 0.0
        %v2983 = vmax.f32 %v2898, 0.0
        %v2984 = vmax.f32 %v2900, 0.0
        %v2985 = vmax.f32 %v2902, 0.0
        %v2986 = vmax.f32 %v2906, 0.0
        %v2987 = vmax.f32 %v2908, 0.0
        %v2988 = vmax.f32 %v2910, 0.0
        %v2989 = vmax.f32 %v2912, 0.0
        %v2990 = vmax.f32 %v2916, 0.0
        %v2991 = vmax.f32 %v2918, 0.0
        %v2992 = vmax.f32 %v2920, 0.0
        %v2993 = vmax.f32 %v2922, 0.0
        %v2994 = vmax.f32 %v2926, 0.0
        %v2995 = vmax.f32 %v2928, 0.0
        %v2996 = vmax.f32 %v2930, 0.0
        %v2997 = vmax.f32 %v2932, 0.0
        %v2998 = vadd.f32 %v1948, %v2934
        %v2999 = vadd.f32 %v1949, %v2935
        %v3000 = vadd.f32 %v1950, %v2936
        %v3001 = vadd.f32 %v1951, %v2937
        %v3002 = vadd.f32 %v1952, %v2938
        %v3003 = vadd.f32 %v1953, %v2939
        %v3004 = vadd.f32 %v1954, %v2940
        %v3005 = vadd.f32 %v1955, %v2941
        %v3006 = vadd.f32 %v1956, %v2942
        %v3007 = vadd.f32 %v1957, %v2943
        %v3008 = vadd.f32 %v1958, %v2944
        %v3009 = vadd.f32 %v1959, %v2945
        %v3010 = vadd.f32 %v1960, %v2946
        %v3011 = vadd.f32 %v1961, %v2947
        %v3012 = vadd.f32 %v1962, %v2948
        %v3013 = vadd.f32 %v1963, %v2949
        %v3014 = vadd.f32 %v1964, %v2950
        %v3015 = vadd.f32 %v1965, %v2951
        %v3016 = vadd.f32 %v1966, %v2952
        %v3017 = vadd.f32 %v1967, %v2953
        %v3018 = vadd.f32 %v1968, %v2954
        %v3019 = vadd.f32 %v1969, %v2955
        %v3020 = vadd.f32 %v1970, %v2956
        %v3021 = vadd.f32 %v1971, %v2957
        %v3022 = vadd.f32 %v1972, %v2958
        %v3023 = vadd.f32 %v1973, %v2959
        %v3024 = vadd.f32 %v1974, %v2960
        %v3025 = vadd.f32 %v1975, %v2961
        %v3026 = vadd.f32 %v1976, %v2962
        %v3027 = vadd.f32 %v1977, %v2963
        %v3028 = vadd.f32 %v1978, %v2964
        %v3029 = vadd.f32 %v1979, %v2965
        %v3030 = vadd.f32 %v1980, %v2966
        %v3031 = vadd.f32 %v1981, %v2967
        %v3032 = vadd.f32 %v1982, %v2968
        %v3033 = vadd.f32 %v1983, %v2969
        %v3034 = vadd.f32 %v1984, %v2970
        %v3035 = vadd.f32 %v1985, %v2971
        %v3036 = vadd.f32 %v1986, %v2972
        %v3037 = vadd.f32 %v1987, %v2973
        %v3038 = vadd.f32 %v1988, %v2974
        %v3039 = vadd.f32 %v1989, %v2975
        %v3040 = vadd.f32 %v1990, %v2976
        %v3041 = vadd.f32 %v1991, %v2977
        %v3042 = vadd.f32 %v1992, %v2978
        %v3043 = vadd.f32 %v1993, %v2979
        %v3044 = vadd.f32 %v1994, %v2980
        %v3045 = vadd.f32 %v1995, %v2981
        %v3046 = vadd.f32 %v1996, %v2982
        %v3047 = vadd.f32 %v1997, %v2983
        %v3048 = vadd.f32 %v1998, %v2984
        %v3049 = vadd.f32 %v1999, %v2985
        %v3050 = vadd.f32 %v2000, %v2986
        %v3051 = vadd.f32 %v2001, %v2987
        %v3052 = vadd.f32 %v2002, %v2988
        %v3053 = vadd.f32 %v2003, %v2989
        %v3054 = vadd.f32 %v2004, %v2990
        %v3055 = vadd.f32 %v2005, %v2991
        %v3056 = vadd.f32 %v2006, %v2992
        %v3057 = vadd.f32 %v2007, %v2993
        %v3058 = vadd.f32 %v2008, %v2994
        %v3059 = vadd.f32 %v2009, %v2995
        %v3060 = vadd.f32 %v2010, %v2996
        %v3061 = vadd.f32 %v2011, %v2997
        %v3062 = vpack.c.bf16 %v3000, %v2998
        %v3063 = vpack.c.bf16 %v3001, %v2999
        %v3064 = vpack.c.bf16 %v3004, %v3002
        %v3065 = vpack.c.bf16 %v3005, %v3003
        %v3066 = vpack.c.bf16 %v3008, %v3006
        %v3067 = vpack.c.bf16 %v3009, %v3007
        %v3068 = vpack.c.bf16 %v3012, %v3010
        %v3069 = vpack.c.bf16 %v3013, %v3011
        %v3070 = vpack.c.bf16 %v3016, %v3014
        %v3071 = vpack.c.bf16 %v3017, %v3015
        %v3072 = vpack.c.bf16 %v3020, %v3018
        %v3073 = vpack.c.bf16 %v3021, %v3019
        %v3074 = vpack.c.bf16 %v3024, %v3022
        %v3075 = vpack.c.bf16 %v3025, %v3023
        %v3076 = vpack.c.bf16 %v3028, %v3026
        %v3077 = vpack.c.bf16 %v3029, %v3027
        %v3078 = vpack.c.bf16 %v3032, %v3030
        %v3079 = vpack.c.bf16 %v3033, %v3031
        %v3080 = vpack.c.bf16 %v3036, %v3034
        %v3081 = vpack.c.bf16 %v3037, %v3035
        %v3082 = vpack.c.bf16 %v3040, %v3038
        %v3083 = vpack.c.bf16 %v3041, %v3039
        %v3084 = vpack.c.bf16 %v3044, %v3042
        %v3085 = vpack.c.bf16 %v3045, %v3043
        %v3086 = vpack.c.bf16 %v3048, %v3046
        %v3087 = vpack.c.bf16 %v3049, %v3047
        %v3088 = vpack.c.bf16 %v3052, %v3050
        %v3089 = vpack.c.bf16 %v3053, %v3051
        %v3090 = vpack.c.bf16 %v3056, %v3054
        %v3091 = vpack.c.bf16 %v3057, %v3055
        %v3092 = vpack.c.bf16 %v3060, %v3058
        %v3093 = vpack.c.bf16 %v3061, %v3059
        %v3094 = vld [vmem:[#allocation13] sm:$0xf]
        %v3095 = vld [vmem:[#allocation13 + $0x4] sm:$0xf]
        %v3096 = vld [vmem:[#allocation13 + $0x8] sm:$0xf]
        %v3097 = vld [vmem:[#allocation13 + $0xc] sm:$0xf]
        %v3098 = vld [vmem:[#allocation13 + $0x10] sm:$0xf]
        %v3099 = vld [vmem:[#allocation13 + $0x14] sm:$0xf]
        %v3100 = vld [vmem:[#allocation13 + $0x18] sm:$0xf]
        %v3101 = vld [vmem:[#allocation13 + $0x1c] sm:$0xf]
        %v3102 = vld [vmem:[#allocation13 + $0x20] sm:$0xf]
        %v3103 = vld [vmem:[#allocation13 + $0x24] sm:$0xf]
        %v3104 = vld [vmem:[#allocation13 + $0x28] sm:$0xf]
        %v3105 = vld [vmem:[#allocation13 + $0x2c] sm:$0xf]
        %v3106 = vld [vmem:[#allocation13 + $0x30] sm:$0xf]
        %v3107 = vld [vmem:[#allocation13 + $0x34] sm:$0xf]
        %v3108 = vld [vmem:[#allocation13 + $0x38] sm:$0xf]
        %v3109 = vld [vmem:[#allocation13 + $0x3c] sm:$0xf]
        %v3110 = vld [vmem:[#allocation13 + $0x40] sm:$0xf]
        %v3111 = vld [vmem:[#allocation13 + $0x44] sm:$0xf]
        %v3112 = vld [vmem:[#allocation13 + $0x48] sm:$0xf]
        %v3113 = vld [vmem:[#allocation13 + $0x4c] sm:$0xf]
        %v3114 = vld [vmem:[#allocation13 + $0x50] sm:$0xf]
        %v3115 = vld [vmem:[#allocation13 + $0x54] sm:$0xf]
        %v3116 = vld [vmem:[#allocation13 + $0x58] sm:$0xf]
        %v3117 = vld [vmem:[#allocation13 + $0x5c] sm:$0xf]
        %v3118 = vld [vmem:[#allocation13 + $0x60] sm:$0xf]
        %v3119 = vld [vmem:[#allocation13 + $0x64] sm:$0xf]
        %v3120 = vld [vmem:[#allocation13 + $0x68] sm:$0xf]
        %v3121 = vld [vmem:[#allocation13 + $0x6c] sm:$0xf]
        %v3122 = vld [vmem:[#allocation13 + $0x70] sm:$0xf]
        %v3123 = vld [vmem:[#allocation13 + $0x74] sm:$0xf]
        %v3124 = vld [vmem:[#allocation13 + $0x78] sm:$0xf]
        %v3125 = vld [vmem:[#allocation13 + $0x7c] sm:$0xf]
        %v3126 = vld [vmem:[%s12] sm:$0x1]
        %v3128 = vlaneseq
        %v3129 = vshrl.u32 %v3128, 7
        %v3130 = vsub.s32 0, %v3129
        %v3131 = vrot.slane %v3126, %v3130
        %v3165 = vunpack.c.l.b16 %v3094
        %v3166 = vunpack.c.l.b16 %v3095
        %v3167 = vunpack.c.l.b16 %v3096
        %v3168 = vunpack.c.l.b16 %v3097
        %v3169 = vunpack.c.l.b16 %v3098
        %v3170 = vunpack.c.l.b16 %v3099
        %v3171 = vunpack.c.l.b16 %v3100
        %v3172 = vunpack.c.l.b16 %v3101
        %v3173 = vunpack.c.l.b16 %v3102
        %v3174 = vunpack.c.l.b16 %v3103
        %v3175 = vunpack.c.l.b16 %v3104
        %v3176 = vunpack.c.l.b16 %v3105
        %v3177 = vunpack.c.l.b16 %v3106
        %v3178 = vunpack.c.l.b16 %v3107
        %v3179 = vunpack.c.l.b16 %v3108
        %v3180 = vunpack.c.l.b16 %v3109
        %v3181 = vunpack.c.l.b16 %v3110
        %v3182 = vunpack.c.l.b16 %v3111
        %v3183 = vunpack.c.l.b16 %v3112
        %v3184 = vunpack.c.l.b16 %v3113
        %v3185 = vunpack.c.l.b16 %v3114
        %v3186 = vunpack.c.l.b16 %v3115
        %v3187 = vunpack.c.l.b16 %v3116
        %v3188 = vunpack.c.l.b16 %v3117
        %v3189 = vunpack.c.l.b16 %v3118
        %v3190 = vunpack.c.l.b16 %v3119
        %v3191 = vunpack.c.l.b16 %v3120
        %v3192 = vunpack.c.l.b16 %v3121
        %v3193 = vunpack.c.l.b16 %v3122
        %v3194 = vunpack.c.l.b16 %v3123
        %v3195 = vunpack.c.l.b16 %v3124
        %v3196 = vunpack.c.l.b16 %v3125
        %v3197 = vpack.c.b16 %v3166, %v3165
        %v3198 = vpack.c.b16 %v3168, %v3167
        %v3199 = vpack.c.b16 %v3170, %v3169
        %v3200 = vpack.c.b16 %v3172, %v3171
        %v3201 = vpack.c.b16 %v3174, %v3173
        %v3202 = vpack.c.b16 %v3176, %v3175
        %v3203 = vpack.c.b16 %v3178, %v3177
        %v3204 = vpack.c.b16 %v3180, %v3179
        %v3205 = vpack.c.b16 %v3182, %v3181
        %v3206 = vpack.c.b16 %v3184, %v3183
        %v3207 = vpack.c.b16 %v3186, %v3185
        %v3208 = vpack.c.b16 %v3188, %v3187
        %v3209 = vpack.c.b16 %v3190, %v3189
        %v3210 = vpack.c.b16 %v3192, %v3191
        %v3211 = vpack.c.b16 %v3194, %v3193
        %v3212 = vpack.c.b16 %v3196, %v3195
        %3229 = vmatprep.subr.bf16.mxu0 0
        %3230 = vmatpush1.bf16.msra.mxu0 %v3204
        %3231 = vmatprep.subr.bf16.mxu0 0
        %3232 = vmatpush1.bf16.msra.mxu0 %v3203
        %3233 = vmatprep.subr.bf16.mxu0 0
        %3234 = vmatpush1.bf16.msra.mxu0 %v3202
        %3235 = vmatprep.subr.bf16.mxu0 0
        %3236 = vmatpush1.bf16.msra.mxu0 %v3201
        %3237 = vmatprep.subr.bf16.mxu0 0
        %3238 = vmatpush1.bf16.msra.mxu0 %v3200
        %3239 = vmatprep.subr.bf16.mxu0 0
        %3240 = vmatpush1.bf16.msra.mxu0 %v3199
        %3241 = vmatprep.subr.bf16.mxu0 0
        %3242 = vmatpush1.bf16.msra.mxu0 %v3198
        %3243 = vmatprep.subr.bf16.mxu0 0
        %3244 = vmatpush1.bf16.msra.mxu0 %v3197
        %3245 = vmatprep.subr.bf16.mxu0 0
        %3246 = vmatpush2.bf16.msra.mxu0 %v3212
        %3247 = vmatprep.subr.bf16.mxu0 0
        %3248 = vmatpush2.bf16.msra.mxu0 %v3211
        %3249 = vmatprep.subr.bf16.mxu0 0
        %3250 = vmatpush2.bf16.msra.mxu0 %v3210
        %3251 = vmatprep.subr.bf16.mxu0 0
        %3252 = vmatpush2.bf16.msra.mxu0 %v3209
        %3253 = vmatprep.subr.bf16.mxu0 0
        %3254 = vmatpush2.bf16.msra.mxu0 %v3208
        %3255 = vmatprep.subr.bf16.mxu0 0
        %3256 = vmatpush2.bf16.msra.mxu0 %v3207
        %3257 = vmatprep.subr.bf16.mxu0 0
        %3258 = vmatpush2.bf16.msra.mxu0 %v3206
        %3259 = vmatprep.subr.bf16.mxu0 0
        %3260 = vmatpush2.bf16.msra.mxu0 %v3205
        %3261 = vmatprep.mubr.bf16.mxu0 %v3063
        %3262 = vmatmul.mubr.bf16.gmra.mxu0 %v3062
        %v3263 = vpop.f32.mrf.mxu0
        %v3264 = vadd.f32 %v3131, %v3263
        %v3265 = vpop.f32.mrf.mxu0
        %v3266 = vpop.f32.mrf.mxu0
        %v3267 = vadd.f32 %v3131, %v3266
        %v3268 = vpop.f32.mrf.mxu0
        %3269 = vmatprep.mubr.bf16.mxu0 %v3065
        %3270 = vmatmul.mubr.bf16.gmra.mxu0 %v3064
        %v3271 = vpop.f32.mrf.mxu0
        %v3272 = vadd.f32 %v3131, %v3271
        %v3273 = vpop.f32.mrf.mxu0
        %v3274 = vpop.f32.mrf.mxu0
        %v3275 = vadd.f32 %v3131, %v3274
        %v3276 = vpop.f32.mrf.mxu0
        %3277 = vmatprep.mubr.bf16.mxu0 %v3067
        %3278 = vmatmul.mubr.bf16.gmra.mxu0 %v3066
        %v3279 = vpop.f32.mrf.mxu0
        %v3280 = vadd.f32 %v3131, %v3279
        %v3281 = vpop.f32.mrf.mxu0
        %v3282 = vpop.f32.mrf.mxu0
        %v3283 = vadd.f32 %v3131, %v3282
        %v3284 = vpop.f32.mrf.mxu0
        %3285 = vmatprep.mubr.bf16.mxu0 %v3069
        %3286 = vmatmul.mubr.bf16.gmra.mxu0 %v3068
        %v3287 = vpop.f32.mrf.mxu0
        %v3288 = vadd.f32 %v3131, %v3287
        %v3289 = vpop.f32.mrf.mxu0
        %v3290 = vpop.f32.mrf.mxu0
        %v3291 = vadd.f32 %v3131, %v3290
        %v3292 = vpop.f32.mrf.mxu0
        %3293 = vmatprep.mubr.bf16.mxu0 %v3071
        %3294 = vmatmul.mubr.bf16.gmra.mxu0 %v3070
        %v3295 = vpop.f32.mrf.mxu0
        %v3296 = vadd.f32 %v3131, %v3295
        %v3297 = vpop.f32.mrf.mxu0
        %v3298 = vpop.f32.mrf.mxu0
        %v3299 = vadd.f32 %v3131, %v3298
        %v3300 = vpop.f32.mrf.mxu0
        %3301 = vmatprep.mubr.bf16.mxu0 %v3073
        %3302 = vmatmul.mubr.bf16.gmra.mxu0 %v3072
        %v3303 = vpop.f32.mrf.mxu0
        %v3304 = vadd.f32 %v3131, %v3303
        %v3305 = vpop.f32.mrf.mxu0
        %v3306 = vpop.f32.mrf.mxu0
        %v3307 = vadd.f32 %v3131, %v3306
        %v3308 = vpop.f32.mrf.mxu0
        %3309 = vmatprep.mubr.bf16.mxu0 %v3075
        %3310 = vmatmul.mubr.bf16.gmra.mxu0 %v3074
        %v3311 = vpop.f32.mrf.mxu0
        %v3312 = vadd.f32 %v3131, %v3311
        %v3313 = vpop.f32.mrf.mxu0
        %v3314 = vpop.f32.mrf.mxu0
        %v3315 = vadd.f32 %v3131, %v3314
        %v3316 = vpop.f32.mrf.mxu0
        %3317 = vmatprep.mubr.bf16.mxu0 %v3077
        %3318 = vmatmul.mubr.bf16.gmra.mxu0 %v3076
        %v3319 = vpop.f32.mrf.mxu0
        %v3320 = vadd.f32 %v3131, %v3319
        %v3321 = vpop.f32.mrf.mxu0
        %v3322 = vpop.f32.mrf.mxu0
        %v3323 = vadd.f32 %v3131, %v3322
        %v3324 = vpop.f32.mrf.mxu0
        %3325 = vmatprep.mubr.bf16.mxu0 %v3079
        %3326 = vmatmul.mubr.bf16.gmra.mxu0 %v3078
        %v3327 = vpop.f32.mrf.mxu0
        %v3328 = vadd.f32 %v3131, %v3327
        %v3329 = vpop.f32.mrf.mxu0
        %v3330 = vpop.f32.mrf.mxu0
        %v3331 = vadd.f32 %v3131, %v3330
        %v3332 = vpop.f32.mrf.mxu0
        %3333 = vmatprep.mubr.bf16.mxu0 %v3081
        %3334 = vmatmul.mubr.bf16.gmra.mxu0 %v3080
        %v3335 = vpop.f32.mrf.mxu0
        %v3336 = vadd.f32 %v3131, %v3335
        %v3337 = vpop.f32.mrf.mxu0
        %v3338 = vpop.f32.mrf.mxu0
        %v3339 = vadd.f32 %v3131, %v3338
        %v3340 = vpop.f32.mrf.mxu0
        %3341 = vmatprep.mubr.bf16.mxu0 %v3083
        %3342 = vmatmul.mubr.bf16.gmra.mxu0 %v3082
        %v3343 = vpop.f32.mrf.mxu0
        %v3344 = vadd.f32 %v3131, %v3343
        %v3345 = vpop.f32.mrf.mxu0
        %v3346 = vpop.f32.mrf.mxu0
        %v3347 = vadd.f32 %v3131, %v3346
        %v3348 = vpop.f32.mrf.mxu0
        %3349 = vmatprep.mubr.bf16.mxu0 %v3085
        %3350 = vmatmul.mubr.bf16.gmra.mxu0 %v3084
        %v3351 = vpop.f32.mrf.mxu0
        %v3352 = vadd.f32 %v3131, %v3351
        %v3353 = vpop.f32.mrf.mxu0
        %v3354 = vpop.f32.mrf.mxu0
        %v3355 = vadd.f32 %v3131, %v3354
        %v3356 = vpop.f32.mrf.mxu0
        %3357 = vmatprep.mubr.bf16.mxu0 %v3087
        %3358 = vmatmul.mubr.bf16.gmra.mxu0 %v3086
        %v3359 = vpop.f32.mrf.mxu0
        %v3360 = vadd.f32 %v3131, %v3359
        %v3361 = vpop.f32.mrf.mxu0
        %v3362 = vpop.f32.mrf.mxu0
        %v3363 = vadd.f32 %v3131, %v3362
        %v3364 = vpop.f32.mrf.mxu0
        %3365 = vmatprep.mubr.bf16.mxu0 %v3089
        %3366 = vmatmul.mubr.bf16.gmra.mxu0 %v3088
        %v3367 = vpop.f32.mrf.mxu0
        %v3368 = vadd.f32 %v3131, %v3367
        %v3369 = vpop.f32.mrf.mxu0
        %v3370 = vpop.f32.mrf.mxu0
        %v3371 = vadd.f32 %v3131, %v3370
        %v3372 = vpop.f32.mrf.mxu0
        %3373 = vmatprep.mubr.bf16.mxu0 %v3091
        %3374 = vmatmul.mubr.bf16.gmra.mxu0 %v3090
        %v3375 = vpop.f32.mrf.mxu0
        %v3376 = vadd.f32 %v3131, %v3375
        %v3377 = vpop.f32.mrf.mxu0
        %v3378 = vpop.f32.mrf.mxu0
        %v3379 = vadd.f32 %v3131, %v3378
        %v3380 = vpop.f32.mrf.mxu0
        %3381 = vmatprep.mubr.bf16.mxu0 %v3093
        %3382 = vmatmul.mubr.bf16.gmra.mxu0 %v3092
        %v3383 = vpop.f32.mrf.mxu0
        %v3384 = vadd.f32 %v3131, %v3383
        %v3385 = vpop.f32.mrf.mxu0
        %v3386 = vpop.f32.mrf.mxu0
        %v3387 = vadd.f32 %v3131, %v3386
        %v3388 = vpop.f32.mrf.mxu0
        %3389 = vdwg.mxu0
        %3390 = vst [vmem:[%s545] sm:$0xff] %v3264
        %3391 = vst [vmem:[%s545 + $0x8] sm:$0xff] %v3267
        %3392 = vst [vmem:[%s545 + $0x10] sm:$0xff] %v3272
        %3393 = vst [vmem:[%s545 + $0x18] sm:$0xff] %v3275
        %3394 = vst [vmem:[%s545 + $0x20] sm:$0xff] %v3280
        %3395 = vst [vmem:[%s545 + $0x28] sm:$0xff] %v3283
        %3396 = vst [vmem:[%s545 + $0x30] sm:$0xff] %v3288
        %3397 = vst [vmem:[%s545 + $0x38] sm:$0xff] %v3291
        %3398 = vst [vmem:[%s545 + $0x40] sm:$0xff] %v3296
        %3399 = vst [vmem:[%s545 + $0x48] sm:$0xff] %v3299
        %3400 = vst [vmem:[%s545 + $0x50] sm:$0xff] %v3304
        %3401 = vst [vmem:[%s545 + $0x58] sm:$0xff] %v3307
        %3402 = vst [vmem:[%s545 + $0x60] sm:$0xff] %v3312
        %3403 = vst [vmem:[%s545 + $0x68] sm:$0xff] %v3315
        %3404 = vst [vmem:[%s545 + $0x70] sm:$0xff] %v3320
        %3405 = vst [vmem:[%s545 + $0x78] sm:$0xff] %v3323
        %3406 = vst [vmem:[%s545 + $0x80] sm:$0xff] %v3328
        %3407 = vst [vmem:[%s545 + $0x88] sm:$0xff] %v3331
        %3408 = vst [vmem:[%s545 + $0x90] sm:$0xff] %v3336
        %3409 = vst [vmem:[%s545 + $0x98] sm:$0xff] %v3339
        %3410 = vst [vmem:[%s545 + $0xa0] sm:$0xff] %v3344
        %3411 = vst [vmem:[%s545 + $0xa8] sm:$0xff] %v3347
        %3412 = vst [vmem:[%s545 + $0xb0] sm:$0xff] %v3352
        %3413 = vst [vmem:[%s545 + $0xb8] sm:$0xff] %v3355
        %3414 = vst [vmem:[%s545 + $0xc0] sm:$0xff] %v3360
        %3415 = vst [vmem:[%s545 + $0xc8] sm:$0xff] %v3363
        %3416 = vst [vmem:[%s545 + $0xd0] sm:$0xff] %v3368
        %3417 = vst [vmem:[%s545 + $0xd8] sm:$0xff] %v3371
        %3418 = vst [vmem:[%s545 + $0xe0] sm:$0xff] %v3376
        %3419 = vst [vmem:[%s545 + $0xe8] sm:$0xff] %v3379
        %3420 = vst [vmem:[%s545 + $0xf0] sm:$0xff] %v3384
        %3421 = vst [vmem:[%s545 + $0xf8] sm:$0xff] %v3387
        %s3422 = sand.u32 %s319, 1
        %s3423 = scalar_lea.sflag [#allocation4], %s3422
        %s3424 = sand.u32 %s319, 1
        %s3425 = smul.addr %s3424, 256
        %s3426 = scalar_lea.vmem [#allocation14], %s3425
        // Predicated region
        $region101: #{tpu_custom_call.1} parent=71 // pred_check
          %p3427 = pneg %p329
        $region102: #{tpu_custom_call.1} parent=71 // pred_check_branch
          %3429 = sbr.rel (%p3427) target = $region104
        $region103: #{tpu_custom_call.1} parent=71 // pred_region
          %s3430 = smul.u32 32, %s33
          %s3432 = ssub.s32 4096, 4096
          %3433 = vsyncadd %s3423, %s3432
          %s3434 = smul.addr %s3430, 128
          %s3435 = scalar_lea.hbm %s13, %s3434
          %s3436 = sshll.u32 %s3426, 4
          %s3437 = int_to_ptr.vmem [resolvable:$true] %s3436
          %3442 = dma.vmem_to_hbm [thread:$0]  %s3437, 4096, %s3435, %s3423, 128, 128, 8
        $region104: #{tpu_custom_call.1} parent=71 // pred_fallthru
          _
      $region72: #{tpu_custom_call.1} parent=5 // pred_fallthru
        _
      %p3443 = scmp.le.s32.totalorder 2, %s28
      // Predicated region
      $region105: #{tpu_custom_call.1} parent=5 // pred_check
        %p3444 = pneg %p3443
      $region106: #{tpu_custom_call.1} parent=5 // pred_check_branch
        %3446 = sbr.rel (%p3444) target = $region108
      $region107: #{tpu_custom_call.1} parent=5 // pred_region
        %s3447 = ssub.s32 %s28, 2
        // Predicated region
        $region109: #{tpu_custom_call.1} parent=107 // pred_check
          %p3448 = pneg %p335
        $region110: #{tpu_custom_call.1} parent=107 // pred_check_branch
          %3450 = sbr.rel (%p3448) target = $region112
        $region111: #{tpu_custom_call.1} parent=107 // pred_region
          %s3451 = sand.u32 %s320, 1
          %s3452 = scalar_lea.sflag [#allocation4], %s3451
          %s3453 = sand.u32 %s320, 1
          %s3454 = smul.addr %s3453, 256
          %s3455 = scalar_lea.vmem [#allocation14], %s3454
          %3456 = dma.done %s3452, 4096
        $region112: #{tpu_custom_call.1} parent=107 // pred_fallthru
          _
      $region108: #{tpu_custom_call.1} parent=5 // pred_fallthru
        _
    $region6: #{tpu_custom_call.1} parent=1 // loop_footer
      %s32 = sadd.s32 1, %s28
    $region7: #{tpu_custom_call.1} parent=1 // loop_footer_branch
      %27 = sbr.rel target = $region3
    $region8: #{tpu_custom_call.1} parent=1 // loop_exit
      _
    %3457 = vsyncpa [#allocation3], 1
    %s3458 = scalar_lea.sflag [#allocation3], 1
    %3459 = vsyncpa %s3458, 1
    %3460 = vsyncpa [#allocation6], 1
    %3461 = vsyncpa [#allocation9], 1
    %3462 = vsyncpa [#allocation12], 1
    %3463 = vsyncpa [#allocation4], 1
    %s3464 = scalar_lea.sflag [#allocation4], 1
    %3465 = vsyncpa %s3464, 1

// kernel: tpu_custom_call.1
$region0: #{tpu_custom_call.1}
  #allocation0 [shape = 'u32[]', space=smem, size = 0x4, offset = 0x4, fixed_abs, tag = 'smem constant byte address 0x4 - core index']
  #allocation1 [shape = 'u32[144,128]{1,0:T(1,128)}', space=vmem, size = 0x12000, scoped, tag = 'internal scratch']
  %s0 = inlined_call_operand.hbm [shape: f32[512,128], index: 0, kind: input, shape index: {}]
  %s1 = inlined_call_operand.hbm [shape: bf16[128,256], index: 1, kind: input, shape index: {}]
  %s2 = inlined_call_operand.vmem [shape: f32[1,256], index: 2, kind: input, shape index: {}]
  %s3 = inlined_call_operand.hbm [shape: bf16[256,256], index: 3, kind: input, shape index: {}]
  %s4 = inlined_call_operand.vmem [shape: f32[1,256], index: 4, kind: input, shape index: {}]
  %s5 = inlined_call_operand.hbm [shape: bf16[256,256], index: 5, kind: input, shape index: {}]
  %s6 = inlined_call_operand.vmem [shape: f32[1,256], index: 6, kind: input, shape index: {}]
  %s7 = inlined_call_operand.hbm [shape: bf16[256,256], index: 7, kind: input, shape index: {}]
  %s8 = inlined_call_operand.vmem [shape: f32[1,256], index: 8, kind: input, shape index: {}]
  %s9 = inlined_call_operand.hbm [shape: bf16[256,256], index: 9, kind: input, shape index: {}]
  %s10 = inlined_call_operand.vmem [shape: f32[1,256], index: 10, kind: input, shape index: {}]
  %s11 = inlined_call_operand.hbm [shape: bf16[256,128], index: 11, kind: input, shape index: {}]
  %s12 = inlined_call_operand.vmem [shape: f32[1,128], index: 12, kind: input, shape index: {}]
  %s13 = inlined_call_operand.hbm [shape: f32[512,128], index: 13, kind: output, shape index: {}]
  %s14 = sld [smem:[#allocation0]]
  $region113: #{tpu_custom_call.1} parent=0
    _
  %s16 = ssub.s32 1, %s14
  %s17 = scalar_select 0, %s16, %s14
  $region1: #{tpu_custom_call.1} parent=0
    #allocation2 [shape = 'u8[262144]{0}', space=vmem, size = 0x40000, scoped, tag = 'input window, operand 0']
    #allocation3 [shape = 's32[2]{0}', space=sflag, size = 0x8, scoped, tag = 'scoped memory for tpu_custom_call.1']
    #allocation4 [shape = 's32[2]{0}', space=sflag, size = 0x8, scoped, tag = 'scoped memory for tpu_custom_call.1']
    #allocation5 [shape = 'u8[65536]{0}', space=vmem, size = 0x10000, scoped, tag = 'input window, operand 1, single buffered']
    #allocation6 [shape = 's32[1]{0}', space=sflag, size = 0x4, scoped, tag = 'scoped memory for tpu_custom_call.1']
    #allocation7 [shape = 'u8[131072]{0}', space=vmem, size = 0x20000, scoped, tag = 'input window, operand 3, single buffered']
    #allocation8 [shape = 'u8[131072]{0}', space=vmem, size = 0x20000, scoped, tag = 'input window, operand 5, single buffered']
    #allocation9 [shape = 's32[1]{0}', space=sflag, size = 0x4, scoped, tag = 'scoped memory for tpu_custom_call.1']
    #allocation10 [shape = 'u8[131072]{0}', space=vmem, size = 0x20000, scoped, tag = 'input window, operand 7, single buffered']
    #allocation11 [shape = 'u8[131072]{0}', space=vmem, size = 0x20000, scoped, tag = 'input window, operand 9, single buffered']
    #allocation12 [shape = 's32[1]{0}', space=sflag, size = 0x4, scoped, tag = 'scoped memory for tpu_custom_call.1']
    #allocation13 [shape = 'u8[65536]{0}', space=vmem, size = 0x10000, scoped, tag = 'input window, operand 11, single buffered']
    #allocation14 [shape = 'u8[262144]{0}', space=vmem, size = 0x40000, scoped, tag = 'output window, operand 0']
    %18 = vsyncpa [#allocation3], 0
    %s19 = scalar_lea.sflag [#allocation3], 1
    %20 = vsyncpa %s19, 0
    %21 = vsyncpa [#allocation6], 0
    %22 = vsyncpa [#allocation9], 0
    %23 = vsyncpa [#allocation12], 0
    %24 = vsyncpa [#allocation4], 0
    %s25 = scalar_lea.sflag [#allocation4], 1
    %26 = vsyncpa %s25, 0
    loop: start=0, step=1, limit=4
    $region2: #{tpu_custom_call.1} parent=1 // loop_pre_header
      _
    $region3: #{tpu_custom_call.1} parent=1 // loop_header
      %s28 = sphi 0, %s32
      %p29 = scmp.ge.s32.totalorder %s28, 4
      %s38 = sphi 0, %s40
      %s41 = sphi 0, %s38
      %s42 = sphi 0, %s41
      %s58 = sphi 0, %s42
      %s62 = sphi 0, %s62
      %s64 = sphi 0, %s62
      %s65 = sphi 0, %s64
      %s79 = sphi 0, %s65
      %s83 = sphi 0, %s83
      %s85 = sphi 0, %s83
      %s86 = sphi 0, %s85
      %s100 = sphi 0, %s86
      %s104 = sphi 0, %s104
      %s106 = sphi 0, %s104
      %s107 = sphi 0, %s106
      %s121 = sphi 0, %s107
      %s125 = sphi 0, %s125
      %s127 = sphi 0, %s125
      %s128 = sphi 0, %s127
      %s142 = sphi 0, %s128
      %s146 = sphi 0, %s146
      %s148 = sphi 0, %s146
      %s149 = sphi 0, %s148
      %s163 = sphi 0, %s149
      %s167 = sphi 0, %s167
      %s169 = sphi 0, %s167
      %s170 = sphi 0, %s169
      %s184 = sphi 0, %s170
      %s188 = sphi 0, %s188
      %s190 = sphi 0, %s188
      %s191 = sphi 0, %s190
      %s205 = sphi 0, %s191
      %s209 = sphi 0, %s209
      %s211 = sphi 0, %s209
      %s212 = sphi 0, %s211
      %s226 = sphi 0, %s212
      %s230 = sphi 0, %s230
      %s232 = sphi 0, %s230
      %s233 = sphi 0, %s232
      %s247 = sphi 0, %s233
      %s251 = sphi 0, %s251
      %s253 = sphi 0, %s251
      %s254 = sphi 0, %s253
      %s268 = sphi 0, %s254
      %s272 = sphi 0, %s272
      %s274 = sphi 0, %s272
      %s275 = sphi 0, %s274
      %s289 = sphi 0, %s275
      %s293 = sphi 0, %s293
      %s295 = sphi 0, %s293
      %s296 = sphi 0, %s295
      %s310 = sphi 0, %s296
      %s316 = sphi 0, %s318
      %s319 = sphi 0, %s316
      %s320 = sphi 0, %s319
      %s336 = sphi 0, %s320
    $region4: #{tpu_custom_call.1} parent=1 // loop_header_branch
      %31 = sbr.rel (%p29) target = $region8
    $region5: #{tpu_custom_call.1} parent=1 // loop_body
      %s33 = ssub.s32 %s28, 1
      %s34 = ssub.s32 %s28, 2
      %s35 = sadd.s32 %s28, 1
      %s36 = ssub.s32 %s28, %s35
      %p37 = scmp.eq.s32.totalorder %s36, 0
      %s39 = sadd.s32 %s38, 1
      %s40 = scalar_select %p37, %s38, %s39
      %p43 = pneg %p37
      %p44 = scmp.eq.s32.totalorder %s28, 1
      %p45 = por %p43, %p44
      %p46 = scmp.ne.s32.totalorder %s38, %s41
      %p47 = scmp.eq.s32.totalorder %s28, 0
      %p48 = por %p46, %p47
      %p49 = scmp.ne.s32.totalorder %s38, %s41
      %p50 = scmp.eq.s32.totalorder %s33, 1
      %p51 = por %p49, %p50
      %p52 = scmp.ne.s32.totalorder %s41, %s42
      %p53 = scmp.eq.s32.totalorder %s33, 0
      %p54 = por %p52, %p53
      %p55 = scmp.ne.s32.totalorder %s41, %s42
      %p56 = scmp.eq.s32.totalorder %s34, 1
      %p57 = por %p55, %p56
      %p59 = scmp.ne.s32.totalorder %s42, %s58
      %p60 = scmp.eq.s32.totalorder %s34, 0
      %p61 = por %p59, %p60
      %s63 = sadd.s32 %s62, 1
      %p66 = scmp.eq.s32.totalorder %s28, 1
      %p67 = scmp.ne.s32.totalorder %s62, %s64
      %p68 = scmp.eq.s32.totalorder %s28, 0
      %p69 = por %p67, %p68
      %p70 = scmp.ne.s32.totalorder %s62, %s64
      %p71 = scmp.eq.s32.totalorder %s33, 1
      %p72 = por %p70, %p71
      %p73 = scmp.ne.s32.totalorder %s64, %s65
      %p74 = scmp.eq.s32.totalorder %s33, 0
      %p75 = por %p73, %p74
      %p76 = scmp.ne.s32.totalorder %s64, %s65
      %p77 = scmp.eq.s32.totalorder %s34, 1
      %p78 = por %p76, %p77
      %p80 = scmp.ne.s32.totalorder %s65, %s79
      %p81 = scmp.eq.s32.totalorder %s34, 0
      %p82 = por %p80, %p81
      %s84 = sadd.s32 %s83, 1
      %p87 = scmp.eq.s32.totalorder %s28, 1
      %p88 = scmp.ne.s32.totalorder %s83, %s85
      %p89 = scmp.eq.s32.totalorder %s28, 0
      %p90 = por %p88, %p89
      %p91 = scmp.ne.s32.totalorder %s83, %s85
      %p92 = scmp.eq.s32.totalorder %s33, 1
      %p93 = por %p91, %p92
      %p94 = scmp.ne.s32.totalorder %s85, %s86
      %p95 = scmp.eq.s32.totalorder %s33, 0
      %p96 = por %p94, %p95
      %p97 = scmp.ne.s32.totalorder %s85, %s86
      %p98 = scmp.eq.s32.totalorder %s34, 1
      %p99 = por %p97, %p98
      %p101 = scmp.ne.s32.totalorder %s86, %s100
      %p102 = scmp.eq.s32.totalorder %s34, 0
      %p103 = por %p101, %p102
      %s105 = sadd.s32 %s104, 1
      %p108 = scmp.eq.s32.totalorder %s28, 1
      %p109 = scmp.ne.s32.totalorder %s104, %s106
      %p110 = scmp.eq.s32.totalorder %s28, 0
      %p111 = por %p109, %p110
      %p112 = scmp.ne.s32.totalorder %s104, %s106
      %p113 = scmp.eq.s32.totalorder %s33, 1
      %p114 = por %p112, %p113
      %p115 = scmp.ne.s32.totalorder %s106, %s107
      %p116 = scmp.eq.s32.totalorder %s33, 0
      %p117 = por %p115, %p116
      %p118 = scmp.ne.s32.totalorder %s106, %s107
      %p119 = scmp.eq.s32.totalorder %s34, 1
      %p120 = por %p118, %p119
      %p122 = scmp.ne.s32.totalorder %s107, %s121
      %p123 = scmp.eq.s32.totalorder %s34, 0
      %p124 = por %p122, %p123
      %s126 = sadd.s32 %s125, 1
      %p129 = scmp.eq.s32.totalorder %s28, 1
      %p130 = scmp.ne.s32.totalorder %s125, %s127
      %p131 = scmp.eq.s32.totalorder %s28, 0
      %p132 = por %p130, %p131
      %p133 = scmp.ne.s32.totalorder %s125, %s127
      %p134 = scmp.eq.s32.totalorder %s33, 1
      %p135 = por %p133, %p134
      %p136 = scmp.ne.s32.totalorder %s127, %s128
      %p137 = scmp.eq.s32.totalorder %s33, 0
      %p138 = por %p136, %p137
      %p139 = scmp.ne.s32.totalorder %s127, %s128
      %p140 = scmp.eq.s32.totalorder %s34, 1
      %p141 = por %p139, %p140
      %p143 = scmp.ne.s32.totalorder %s128, %s142
      %p144 = scmp.eq.s32.totalorder %s34, 0
      %p145 = por %p143, %p144
      %s147 = sadd.s32 %s146, 1
      %p150 = scmp.eq.s32.totalorder %s28, 1
      %p151 = scmp.ne.s32.totalorder %s146, %s148
      %p152 = scmp.eq.s32.totalorder %s28, 0
      %p153 = por %p151, %p152
      %p154 = scmp.ne.s32.totalorder %s146, %s148
      %p155 = scmp.eq.s32.totalorder %s33, 1
      %p156 = por %p154, %p155
      %p157 = scmp.ne.s32.totalorder %s148, %s149
      %p158 = scmp.eq.s32.totalorder %s33, 0
      %p159 = por %p157, %p158
      %p160 = scmp.ne.s32.totalorder %s148, %s149
      %p161 = scmp.eq.s32.totalorder %s34, 1
      %p162 = por %p160, %p161
      %p164 = scmp.ne.s32.totalorder %s149, %s163
      %p165 = scmp.eq.s32.totalorder %s34, 0
      %p166 = por %p164, %p165
      %s168 = sadd.s32 %s167, 1
      %p171 = scmp.eq.s32.totalorder %s28, 1
      %p172 = scmp.ne.s32.totalorder %s167, %s169
      %p173 = scmp.eq.s32.totalorder %s28, 0
      %p174 = por %p172, %p173
      %p175 = scmp.ne.s32.totalorder %s167, %s169
      %p176 = scmp.eq.s32.totalorder %s33, 1
      %p177 = por %p175, %p176
      %p178 = scmp.ne.s32.totalorder %s169, %s170
      %p179 = scmp.eq.s32.totalorder %s33, 0
      %p180 = por %p178, %p179
      %p181 = scmp.ne.s32.totalorder %s169, %s170
      %p182 = scmp.eq.s32.totalorder %s34, 1
      %p183 = por %p181, %p182
      %p185 = scmp.ne.s32.totalorder %s170, %s184
      %p186 = scmp.eq.s32.totalorder %s34, 0
      %p187 = por %p185, %p186
      %s189 = sadd.s32 %s188, 1
      %p192 = scmp.eq.s32.totalorder %s28, 1
      %p193 = scmp.ne.s32.totalorder %s188, %s190
      %p194 = scmp.eq.s32.totalorder %s28, 0
      %p195 = por %p193, %p194
      %p196 = scmp.ne.s32.totalorder %s188, %s190
      %p197 = scmp.eq.s32.totalorder %s33, 1
      %p198 = por %p196, %p197
      %p199 = scmp.ne.s32.totalorder %s190, %s191
      %p200 = scmp.eq.s32.totalorder %s33, 0
      %p201 = por %p199, %p200
      %p202 = scmp.ne.s32.totalorder %s190, %s191
      %p203 = scmp.eq.s32.totalorder %s34, 1
      %p204 = por %p202, %p203
      %p206 = scmp.ne.s32.totalorder %s191, %s205
      %p207 = scmp.eq.s32.totalorder %s34, 0
      %p208 = por %p206, %p207
      %s210 = sadd.s32 %s209, 1
      %p213 = scmp.eq.s32.totalorder %s28, 1
      %p214 = scmp.ne.s32.totalorder %s209, %s211
      %p215 = scmp.eq.s32.totalorder %s28, 0
      %p216 = por %p214, %p215
      %p217 = scmp.ne.s32.totalorder %s209, %s211
      %p218 = scmp.eq.s32.totalorder %s33, 1
      %p219 = por %p217, %p218
      %p220 = scmp.ne.s32.totalorder %s211, %s212
      %p221 = scmp.eq.s32.totalorder %s33, 0
      %p222 = por %p220, %p221
      %p223 = scmp.ne.s32.totalorder %s211, %s212
      %p224 = scmp.eq.s32.totalorder %s34, 1
      %p225 = por %p223, %p224
      %p227 = scmp.ne.s32.totalorder %s212, %s226
      %p228 = scmp.eq.s32.totalorder %s34, 0
      %p229 = por %p227, %p228
      %s231 = sadd.s32 %s230, 1
      %p234 = scmp.eq.s32.totalorder %s28, 1
      %p235 = scmp.ne.s32.totalorder %s230, %s232
      %p236 = scmp.eq.s32.totalorder %s28, 0
      %p237 = por %p235, %p236
      %p238 = scmp.ne.s32.totalorder %s230, %s232
      %p239 = scmp.eq.s32.totalorder %s33, 1
      %p240 = por %p238, %p239
      %p241 = scmp.ne.s32.totalorder %s232, %s233
      %p242 = scmp.eq.s32.totalorder %s33, 0
      %p243 = por %p241, %p242
      %p244 = scmp.ne.s32.totalorder %s232, %s233
      %p245 = scmp.eq.s32.totalorder %s34, 1
      %p246 = por %p244, %p245
      %p248 = scmp.ne.s32.totalorder %s233, %s247
      %p249 = scmp.eq.s32.totalorder %s34, 0
      %p250 = por %p248, %p249
      %s252 = sadd.s32 %s251, 1
      %p255 = scmp.eq.s32.totalorder %s28, 1
      %p256 = scmp.ne.s32.totalorder %s251, %s253
      %p257 = scmp.eq.s32.totalorder %s28, 0
      %p258 = por %p256, %p257
      %p259 = scmp.ne.s32.totalorder %s251, %s253
      %p260 = scmp.eq.s32.totalorder %s33, 1
      %p261 = por %p259, %p260
      %p262 = scmp.ne.s32.totalorder %s253, %s254
      %p263 = scmp.eq.s32.totalorder %s33, 0
      %p264 = por %p262, %p263
      %p265 = scmp.ne.s32.totalorder %s253, %s254
      %p266 = scmp.eq.s32.totalorder %s34, 1
      %p267 = por %p265, %p266
      %p269 = scmp.ne.s32.totalorder %s254, %s268
      %p270 = scmp.eq.s32.totalorder %s34, 0
      %p271 = por %p269, %p270
      %s273 = sadd.s32 %s272, 1
      %p276 = scmp.eq.s32.totalorder %s28, 1
      %p277 = scmp.ne.s32.totalorder %s272, %s274
      %p278 = scmp.eq.s32.totalorder %s28, 0
      %p279 = por %p277, %p278
      %p280 = scmp.ne.s32.totalorder %s272, %s274
      %p281 = scmp.eq.s32.totalorder %s33, 1
      %p282 = por %p280, %p281
      %p283 = scmp.ne.s32.totalorder %s274, %s275
      %p284 = scmp.eq.s32.totalorder %s33, 0
      %p285 = por %p283, %p284
      %p286 = scmp.ne.s32.totalorder %s274, %s275
      %p287 = scmp.eq.s32.totalorder %s34, 1
      %p288 = por %p286, %p287
      %p290 = scmp.ne.s32.totalorder %s275, %s289
      %p291 = scmp.eq.s32.totalorder %s34, 0
      %p292 = por %p290, %p291
      %s294 = sadd.s32 %s293, 1
      %p297 = scmp.eq.s32.totalorder %s28, 1
      %p298 = scmp.ne.s32.totalorder %s293, %s295
      %p299 = scmp.eq.s32.totalorder %s28, 0
      %p300 = por %p298, %p299
      %p301 = scmp.ne.s32.totalorder %s293, %s295
      %p302 = scmp.eq.s32.totalorder %s33, 1
      %p303 = por %p301, %p302
      %p304 = scmp.ne.s32.totalorder %s295, %s296
      %p305 = scmp.eq.s32.totalorder %s33, 0
      %p306 = por %p304, %p305
      %p307 = scmp.ne.s32.totalorder %s295, %s296
      %p308 = scmp.eq.s32.totalorder %s34, 1
      %p309 = por %p307, %p308
      %p311 = scmp.ne.s32.totalorder %s296, %s310
      %p312 = scmp.eq.s32.totalorder %s34, 0
      %p313 = por %p311, %p312
      %s314 = ssub.s32 %s28, %s35
      %p315 = scmp.eq.s32.totalorder %s314, 0
      %s317 = sadd.s32 %s316, 1
      %s318 = scalar_select %p315, %s316, %s317
      %p321 = pneg %p315
      %p322 = scmp.eq.s32.totalorder %s28, 1
      %p323 = por %p321, %p322
      %p324 = scmp.ne.s32.totalorder %s316, %s319
      %p325 = scmp.eq.s32.totalorder %s28, 0
      %p326 = por %p324, %p325
      %p327 = scmp.ne.s32.totalorder %s316, %s319
      %p328 = scmp.eq.s32.totalorder %s33, 1
      %p329 = por %p327, %p328
      %p330 = scmp.ne.s32.totalorder %s319, %s320
      %p331 = scmp.eq.s32.totalorder %s33, 0
      %p332 = por %p330, %p331
      %p333 = scmp.ne.s32.totalorder %s319, %s320
      %p334 = scmp.eq.s32.totalorder %s34, 1
      %p335 = por %p333, %p334
      %p337 = scmp.ne.s32.totalorder %s320, %s336
      %p338 = scmp.eq.s32.totalorder %s34, 0
      %p339 = por %p337, %p338
      %p340 = scmp.le.s32.totalorder 1, %s28
      %p341 = scmp.lt.s32.totalorder %s28, 3
      %p342 = pnand %p340, %p341
      %p343 = pneg %p342
      // Predicated region
      $region9: #{tpu_custom_call.1} parent=5 // pred_check
        _
      $region10: #{tpu_custom_call.1} parent=5 // pred_check_branch
        %345 = sbr.rel (%p342) target = $region12
      $region11: #{tpu_custom_call.1} parent=5 // pred_region
        %s346 = ssub.s32 %s28, 1
        // Predicated region
        $region13: #{tpu_custom_call.1} parent=11 // pred_check
          %p347 = pneg %p75
        $region14: #{tpu_custom_call.1} parent=11 // pred_check_branch
          %349 = sbr.rel (%p347) target = $region16
        $region15: #{tpu_custom_call.1} parent=11 // pred_region
          %s351 = ssub.s32 2048, 2048
          %352 = vsyncadd [#allocation6], %s351
          %s353 = sshll.u32 [#allocation5], 4
          %s354 = int_to_ptr.vmem [resolvable:$true] %s353
          %359 = dma.hbm_to_vmem [thread:$0]  %s1, 2048, %s354, [#allocation6], 128, 128, 8
        $region16: #{tpu_custom_call.1} parent=11 // pred_fallthru
          _
        // Predicated region
        $region17: #{tpu_custom_call.1} parent=11 // pred_check
          %p360 = pneg %p96
        $region18: #{tpu_custom_call.1} parent=11 // pred_check_branch
          %362 = sbr.rel (%p360) target = $region20
        $region19: #{tpu_custom_call.1} parent=11 // pred_region
          _
        $region20: #{tpu_custom_call.1} parent=11 // pred_fallthru
          _
        // Predicated region
        $region21: #{tpu_custom_call.1} parent=11 // pred_check
          %p363 = pneg %p117
        $region22: #{tpu_custom_call.1} parent=11 // pred_check_branch
          %365 = sbr.rel (%p363) target = $region24
        $region23: #{tpu_custom_call.1} parent=11 // pred_region
          %s367 = ssub.s32 4096, 4096
          %368 = vsyncadd [#allocation6], %s367
          %s369 = sshll.u32 [#allocation7], 4
          %s370 = int_to_ptr.vmem [resolvable:$true] %s369
          %375 = dma.hbm_to_vmem [thread:$0]  %s3, 4096, %s370, [#allocation6], 128, 128, 8
        $region24: #{tpu_custom_call.1} parent=11 // pred_fallthru
          _
        // Predicated region
        $region25: #{tpu_custom_call.1} parent=11 // pred_check
          %p376 = pneg %p138
        $region26: #{tpu_custom_call.1} parent=11 // pred_check_branch
          %378 = sbr.rel (%p376) target = $region28
        $region27: #{tpu_custom_call.1} parent=11 // pred_region
          _
        $region28: #{tpu_custom_call.1} parent=11 // pred_fallthru
          _
        // Predicated region
        $region29: #{tpu_custom_call.1} parent=11 // pred_check
          %p379 = pneg %p159
        $region30: #{tpu_custom_call.1} parent=11 // pred_check_branch
          %381 = sbr.rel (%p379) target = $region32
        $region31: #{tpu_custom_call.1} parent=11 // pred_region
          %s383 = ssub.s32 4096, 4096
          %384 = vsyncadd [#allocation9], %s383
          %s385 = sshll.u32 [#allocation8], 4
          %s386 = int_to_ptr.vmem [resolvable:$true] %s385
          %391 = dma.hbm_to_vmem [thread:$0]  %s5, 4096, %s386, [#allocation9], 128, 128, 8
        $region32: #{tpu_custom_call.1} parent=11 // pred_fallthru
          _
        // Predicated region
        $region33: #{tpu_custom_call.1} parent=11 // pred_check
          %p392 = pneg %p180
        $region34: #{tpu_custom_call.1} parent=11 // pred_check_branch
          %394 = sbr.rel (%p392) target = $region36
        $region35: #{tpu_custom_call.1} parent=11 // pred_region
          _
        $region36: #{tpu_custom_call.1} parent=11 // pred_fallthru
          _
        // Predicated region
        $region37: #{tpu_custom_call.1} parent=11 // pred_check
          %p395 = pneg %p201
        $region38: #{tpu_custom_call.1} parent=11 // pred_check_branch
          %397 = sbr.rel (%p395) target = $region40
        $region39: #{tpu_custom_call.1} parent=11 // pred_region
          %s399 = ssub.s32 4096, 4096
          %400 = vsyncadd [#allocation9], %s399
          %s401 = sshll.u32 [#allocation10], 4
          %s402 = int_to_ptr.vmem [resolvable:$true] %s401
          %407 = dma.hbm_to_vmem [thread:$0]  %s7, 4096, %s402, [#allocation9], 128, 128, 8
        $region40: #{tpu_custom_call.1} parent=11 // pred_fallthru
          _
        // Predicated region
        $region41: #{tpu_custom_call.1} parent=11 // pred_check
          %p408 = pneg %p222
        $region42: #{tpu_custom_call.1} parent=11 // pred_check_branch
          %410 = sbr.rel (%p408) target = $region44
        $region43: #{tpu_custom_call.1} parent=11 // pred_region
          _
        $region44: #{tpu_custom_call.1} parent=11 // pred_fallthru
          _
        // Predicated region
        $region45: #{tpu_custom_call.1} parent=11 // pred_check
          %p411 = pneg %p243
        $region46: #{tpu_custom_call.1} parent=11 // pred_check_branch
          %413 = sbr.rel (%p411) target = $region48
        $region47: #{tpu_custom_call.1} parent=11 // pred_region
          %s415 = ssub.s32 4096, 4096
          %416 = vsyncadd [#allocation12], %s415
          %s417 = sshll.u32 [#allocation11], 4
          %s418 = int_to_ptr.vmem [resolvable:$true] %s417
          %423 = dma.hbm_to_vmem [thread:$0]  %s9, 4096, %s418, [#allocation12], 128, 128, 8
        $region48: #{tpu_custom_call.1} parent=11 // pred_fallthru
          _
        // Predicated region
        $region49: #{tpu_custom_call.1} parent=11 // pred_check
          %p424 = pneg %p264
        $region50: #{tpu_custom_call.1} parent=11 // pred_check_branch
          %426 = sbr.rel (%p424) target = $region52
        $region51: #{tpu_custom_call.1} parent=11 // pred_region
          _
        $region52: #{tpu_custom_call.1} parent=11 // pred_fallthru
          _
        // Predicated region
        $region53: #{tpu_custom_call.1} parent=11 // pred_check
          %p427 = pneg %p285
        $region54: #{tpu_custom_call.1} parent=11 // pred_check_branch
          %429 = sbr.rel (%p427) target = $region56
        $region55: #{tpu_custom_call.1} parent=11 // pred_region
          %s431 = ssub.s32 2048, 2048
          %432 = vsyncadd [#allocation12], %s431
          %s433 = sshll.u32 [#allocation13], 4
          %s434 = int_to_ptr.vmem [resolvable:$true] %s433
          %439 = dma.hbm_to_vmem [thread:$0]  %s11, 2048, %s434, [#allocation12], 64, 64, 4
        $region56: #{tpu_custom_call.1} parent=11 // pred_fallthru
          _
        // Predicated region
        $region57: #{tpu_custom_call.1} parent=11 // pred_check
          %p440 = pneg %p306
        $region58: #{tpu_custom_call.1} parent=11 // pred_check_branch
          %442 = sbr.rel (%p440) target = $region60
        $region59: #{tpu_custom_call.1} parent=11 // pred_region
          _
        $region60: #{tpu_custom_call.1} parent=11 // pred_fallthru
          _
      $region12: #{tpu_custom_call.1} parent=5 // pred_fallthru
        _
      %p443 = scmp.lt.s32.totalorder %s28, 2
      // Predicated region
      $region61: #{tpu_custom_call.1} parent=5 // pred_check
        %p444 = pneg %p443
      $region62: #{tpu_custom_call.1} parent=5 // pred_check_branch
        %446 = sbr.rel (%p444) target = $region64
      $region63: #{tpu_custom_call.1} parent=5 // pred_region
        // Predicated region
        $region65: #{tpu_custom_call.1} parent=63 // pred_check
          %p447 = pneg %p48
        $region66: #{tpu_custom_call.1} parent=63 // pred_check_branch
          %449 = sbr.rel (%p447) target = $region68
        $region67: #{tpu_custom_call.1} parent=63 // pred_region
          %s450 = sand.u32 %s38, 1
          %s451 = scalar_lea.sflag [#allocation3], %s450
          %s452 = sand.u32 %s38, 1
          %s453 = smul.addr %s452, 256
          %s454 = scalar_lea.vmem [#allocation2], %s453
          %s455 = smul.u32 32, %s28
          %s457 = ssub.s32 4096, 4096
          %458 = vsyncadd %s451, %s457
          %s459 = smul.addr %s455, 128
          %s460 = scalar_lea.hbm %s0, %s459
          %s461 = sshll.u32 %s454, 4
          %s462 = int_to_ptr.vmem [resolvable:$true] %s461
          %467 = dma.hbm_to_vmem [thread:$0]  %s460, 4096, %s462, %s451, 128, 128, 8
        $region68: #{tpu_custom_call.1} parent=63 // pred_fallthru
          _
      $region64: #{tpu_custom_call.1} parent=5 // pred_fallthru
        _
      %p468 = scmp.le.s32.totalorder 1, %s28
      %p469 = scmp.lt.s32.totalorder %s28, 3
      %p470 = pnand %p468, %p469
      %p471 = pneg %p470
      // Predicated region
      $region69: #{tpu_custom_call.1} parent=5 // pred_check
        _
      $region70: #{tpu_custom_call.1} parent=5 // pred_check_branch
        %473 = sbr.rel (%p470) target = $region72
      $region71: #{tpu_custom_call.1} parent=5 // pred_region
        %s474 = ssub.s32 %s28, 1
        %s475 = sand.u32 %s41, 1
        %s476 = scalar_lea.sflag [#allocation3], %s475
        %s477 = sand.u32 %s41, 1
        %s478 = smul.addr %s477, 256
        %s479 = scalar_lea.vmem [#allocation2], %s478
        // Predicated region
        $region73: #{tpu_custom_call.1} parent=71 // pred_check
          %p480 = pneg %p54
        $region74: #{tpu_custom_call.1} parent=71 // pred_check_branch
          %482 = sbr.rel (%p480) target = $region76
        $region75: #{tpu_custom_call.1} parent=71 // pred_region
          %483 = dma.done %s476, 4096
        $region76: #{tpu_custom_call.1} parent=71 // pred_fallthru
          _
        // Predicated region
        $region77: #{tpu_custom_call.1} parent=71 // pred_check
          %p484 = pneg %p75
        $region78: #{tpu_custom_call.1} parent=71 // pred_check_branch
          %486 = sbr.rel (%p484) target = $region80
        $region79: #{tpu_custom_call.1} parent=71 // pred_region
          %487 = dma.done [#allocation6], 2048
        $region80: #{tpu_custom_call.1} parent=71 // pred_fallthru
          _
        // Predicated region
        $region81: #{tpu_custom_call.1} parent=71 // pred_check
          %p488 = pneg %p117
        $region82: #{tpu_custom_call.1} parent=71 // pred_check_branch
          %490 = sbr.rel (%p488) target = $region84
        $region83: #{tpu_custom_call.1} parent=71 // pred_region
          %491 = dma.done [#allocation6], 4096
        $region84: #{tpu_custom_call.1} parent=71 // pred_fallthru
          _
        // Predicated region
        $region85: #{tpu_custom_call.1} parent=71 // pred_check
          %p492 = pneg %p159
        $region86: #{tpu_custom_call.1} parent=71 // pred_check_branch
          %494 = sbr.rel (%p492) target = $region88
        $region87: #{tpu_custom_call.1} parent=71 // pred_region
          %495 = dma.done [#allocation9], 4096
        $region88: #{tpu_custom_call.1} parent=71 // pred_fallthru
          _
        // Predicated region
        $region89: #{tpu_custom_call.1} parent=71 // pred_check
          %p496 = pneg %p201
        $region90: #{tpu_custom_call.1} parent=71 // pred_check_branch
          %498 = sbr.rel (%p496) target = $region92
        $region91: #{tpu_custom_call.1} parent=71 // pred_region
          %499 = dma.done [#allocation9], 4096
        $region92: #{tpu_custom_call.1} parent=71 // pred_fallthru
          _
        // Predicated region
        $region93: #{tpu_custom_call.1} parent=71 // pred_check
          %p500 = pneg %p243
        $region94: #{tpu_custom_call.1} parent=71 // pred_check_branch
          %502 = sbr.rel (%p500) target = $region96
        $region95: #{tpu_custom_call.1} parent=71 // pred_region
          %503 = dma.done [#allocation12], 4096
        $region96: #{tpu_custom_call.1} parent=71 // pred_fallthru
          _
        // Predicated region
        $region97: #{tpu_custom_call.1} parent=71 // pred_check
          %p504 = pneg %p285
        $region98: #{tpu_custom_call.1} parent=71 // pred_check_branch
          %506 = sbr.rel (%p504) target = $region100
        $region99: #{tpu_custom_call.1} parent=71 // pred_region
          %507 = dma.done [#allocation12], 2048
        $region100: #{tpu_custom_call.1} parent=71 // pred_fallthru
          _
        %s508 = sand.u32 %s41, 1
        %s509 = scalar_lea.sflag [#allocation3], %s508
        %s510 = sand.u32 %s41, 1
        %s511 = smul.addr %s510, 256
        %s512 = scalar_lea.vmem [#allocation2], %s511
        %p513 = pneg %p54
        %p514 = pneg %p51
        %p515 = pneg %p75
        %p516 = pneg %p72
        %p517 = pneg %p96
        %p518 = pneg %p93
        %p519 = pneg %p117
        %p520 = pneg %p114
        %p521 = pneg %p138
        %p522 = pneg %p135
        %p523 = pneg %p159
        %p524 = pneg %p156
        %p525 = pneg %p180
        %p526 = pneg %p177
        %p527 = pneg %p201
        %p528 = pneg %p198
        %p529 = pneg %p222
        %p530 = pneg %p219
        %p531 = pneg %p243
        %p532 = pneg %p240
        %p533 = pneg %p264
        %p534 = pneg %p261
        %p535 = pneg %p285
        %p536 = pneg %p282
        %p537 = pneg %p306
        %p538 = pneg %p303
        %p539 = pneg %p332
        %p540 = pneg %p329
        %s541 = sand.u32 %s319, 1
        %s542 = scalar_lea.sflag [#allocation4], %s541
        %s543 = sand.u32 %s319, 1
        %s544 = smul.addr %s543, 256
        %s545 = scalar_lea.vmem [#allocation14], %s544
        %s546 = smul.u32 32, %s33
        %s547 = smul.u32 32, %s33
        %v549 = vld [vmem:[%s479] sm:$0xff]
        %v550 = vld [vmem:[%s479 + $0x8] sm:$0xff]
        %v551 = vld [vmem:[%s479 + $0x10] sm:$0xff]
        %v552 = vld [vmem:[%s479 + $0x18] sm:$0xff]
        %v553 = vld [vmem:[%s479 + $0x20] sm:$0xff]
        %v554 = vld [vmem:[%s479 + $0x28] sm:$0xff]
        %v555 = vld [vmem:[%s479 + $0x30] sm:$0xff]
        %v556 = vld [vmem:[%s479 + $0x38] sm:$0xff]
        %v557 = vld [vmem:[%s479 + $0x40] sm:$0xff]
        %v558 = vld [vmem:[%s479 + $0x48] sm:$0xff]
        %v559 = vld [vmem:[%s479 + $0x50] sm:$0xff]
        %v560 = vld [vmem:[%s479 + $0x58] sm:$0xff]
        %v561 = vld [vmem:[%s479 + $0x60] sm:$0xff]
        %v562 = vld [vmem:[%s479 + $0x68] sm:$0xff]
        %v563 = vld [vmem:[%s479 + $0x70] sm:$0xff]
        %v564 = vld [vmem:[%s479 + $0x78] sm:$0xff]
        %v565 = vld [vmem:[%s479 + $0x80] sm:$0xff]
        %v566 = vld [vmem:[%s479 + $0x88] sm:$0xff]
        %v567 = vld [vmem:[%s479 + $0x90] sm:$0xff]
        %v568 = vld [vmem:[%s479 + $0x98] sm:$0xff]
        %v569 = vld [vmem:[%s479 + $0xa0] sm:$0xff]
        %v570 = vld [vmem:[%s479 + $0xa8] sm:$0xff]
        %v571 = vld [vmem:[%s479 + $0xb0] sm:$0xff]
        %v572 = vld [vmem:[%s479 + $0xb8] sm:$0xff]
        %v573 = vld [vmem:[%s479 + $0xc0] sm:$0xff]
        %v574 = vld [vmem:[%s479 + $0xc8] sm:$0xff]
        %v575 = vld [vmem:[%s479 + $0xd0] sm:$0xff]
        %v576 = vld [vmem:[%s479 + $0xd8] sm:$0xff]
        %v577 = vld [vmem:[%s479 + $0xe0] sm:$0xff]
        %v578 = vld [vmem:[%s479 + $0xe8] sm:$0xff]
        %v579 = vld [vmem:[%s479 + $0xf0] sm:$0xff]
        %v580 = vld [vmem:[%s479 + $0xf8] sm:$0xff]
        %v581 = vpack.c.bf16 %v550, %v549
        %v582 = vpack.c.bf16 %v552, %v551
        %v583 = vpack.c.bf16 %v554, %v553
        %v584 = vpack.c.bf16 %v556, %v555
        %v585 = vpack.c.bf16 %v558, %v557
        %v586 = vpack.c.bf16 %v560, %v559
        %v587 = vpack.c.bf16 %v562, %v561
        %v588 = vpack.c.bf16 %v564, %v563
        %v589 = vpack.c.bf16 %v566, %v565
        %v590 = vpack.c.bf16 %v568, %v567
        %v591 = vpack.c.bf16 %v570, %v569
        %v592 = vpack.c.bf16 %v572, %v571
        %v593 = vpack.c.bf16 %v574, %v573
        %v594 = vpack.c.bf16 %v576, %v575
        %v595 = vpack.c.bf16 %v578, %v577
        %v596 = vpack.c.bf16 %v580, %v579
        %v597 = vld [vmem:[#allocation5] sm:$0xff]
        %v598 = vld [vmem:[#allocation5 + $0x8] sm:$0xff]
        %v599 = vld [vmem:[#allocation5 + $0x10] sm:$0xff]
        %v600 = vld [vmem:[#allocation5 + $0x18] sm:$0xff]
        %v601 = vld [vmem:[#allocation5 + $0x20] sm:$0xff]
        %v602 = vld [vmem:[#allocation5 + $0x28] sm:$0xff]
        %v603 = vld [vmem:[#allocation5 + $0x30] sm:$0xff]
        %v604 = vld [vmem:[#allocation5 + $0x38] sm:$0xff]
        %v605 = vld [vmem:[#allocation5 + $0x40] sm:$0xff]
        %v606 = vld [vmem:[#allocation5 + $0x48] sm:$0xff]
        %v607 = vld [vmem:[#allocation5 + $0x50] sm:$0xff]
        %v608 = vld [vmem:[#allocation5 + $0x58] sm:$0xff]
        %v609 = vld [vmem:[#allocation5 + $0x60] sm:$0xff]
        %v610 = vld [vmem:[#allocation5 + $0x68] sm:$0xff]
        %v611 = vld [vmem:[#allocation5 + $0x70] sm:$0xff]
        %v612 = vld [vmem:[#allocation5 + $0x78] sm:$0xff]
        %v613 = vld [vmem:[%s2] sm:$0x3]
        %v615 = vlaneseq
        %v616 = vshrl.u32 %v615, 7
        %v617 = vsub.s32 0, %v616
        %v618 = vrot.slane %v613, %v617
        %v619 = vlaneseq
        %v620 = vshrl.u32 %v619, 7
        %v621 = vsub.s32 1, %v620
        %v622 = vrot.slane %v613, %v621
        %v641 = vunpack.c.l.b16 %v597
        %v642 = vunpack.c.h.b16 %v597
        %v643 = vunpack.c.l.b16 %v598
        %v644 = vunpack.c.h.b16 %v598
        %v645 = vunpack.c.l.b16 %v599
        %v646 = vunpack.c.h.b16 %v599
        %v647 = vunpack.c.l.b16 %v600
        %v648 = vunpack.c.h.b16 %v600
        %v649 = vunpack.c.l.b16 %v601
        %v650 = vunpack.c.h.b16 %v601
        %v651 = vunpack.c.l.b16 %v602
        %v652 = vunpack.c.h.b16 %v602
        %v653 = vunpack.c.l.b16 %v603
        %v654 = vunpack.c.h.b16 %v603
        %v655 = vunpack.c.l.b16 %v604
        %v656 = vunpack.c.h.b16 %v604
        %v657 = vunpack.c.l.b16 %v605
        %v658 = vunpack.c.h.b16 %v605
        %v659 = vunpack.c.l.b16 %v606
        %v660 = vunpack.c.h.b16 %v606
        %v661 = vunpack.c.l.b16 %v607
        %v662 = vunpack.c.h.b16 %v607
        %v663 = vunpack.c.l.b16 %v608
        %v664 = vunpack.c.h.b16 %v608
        %v665 = vunpack.c.l.b16 %v609
        %v666 = vunpack.c.h.b16 %v609
        %v667 = vunpack.c.l.b16 %v610
        %v668 = vunpack.c.h.b16 %v610
        %v669 = vunpack.c.l.b16 %v611
        %v670 = vunpack.c.h.b16 %v611
        %v671 = vunpack.c.l.b16 %v612
        %v672 = vunpack.c.h.b16 %v612
        %v673 = vpack.c.b16 %v643, %v641
        %v674 = vpack.c.b16 %v644, %v642
        %v675 = vpack.c.b16 %v647, %v645
        %v676 = vpack.c.b16 %v648, %v646
        %v677 = vpack.c.b16 %v651, %v649
        %v678 = vpack.c.b16 %v652, %v650
        %v679 = vpack.c.b16 %v655, %v653
        %v680 = vpack.c.b16 %v656, %v654
        %v681 = vpack.c.b16 %v659, %v657
        %v682 = vpack.c.b16 %v660, %v658
        %v683 = vpack.c.b16 %v663, %v661
        %v684 = vpack.c.b16 %v664, %v662
        %v685 = vpack.c.b16 %v667, %v665
        %v686 = vpack.c.b16 %v668, %v666
        %v687 = vpack.c.b16 %v671, %v669
        %v688 = vpack.c.b16 %v672, %v670
        %705 = vmatprep.subr.bf16.mxu0 %v688
        %706 = vmatpush1.bf16.msra.mxu0 %v687
        %707 = vmatprep.subr.bf16.mxu0 %v686
        %708 = vmatpush1.bf16.msra.mxu0 %v685
        %709 = vmatprep.subr.bf16.mxu0 %v684
        %710 = vmatpush1.bf16.msra.mxu0 %v683
        %711 = vmatprep.subr.bf16.mxu0 %v682
        %712 = vmatpush1.bf16.msra.mxu0 %v681
        %713 = vmatprep.subr.bf16.mxu0 %v680
        %714 = vmatpush1.bf16.msra.mxu0 %v679
        %715 = vmatprep.subr.bf16.mxu0 %v678
        %716 = vmatpush1.bf16.msra.mxu0 %v677
        %717 = vmatprep.subr.bf16.mxu0 %v676
        %718 = vmatpush1.bf16.msra.mxu0 %v675
        %719 = vmatprep.subr.bf16.mxu0 %v674
        %720 = vmatpush1.bf16.msra.mxu0 %v673
        %721 = vmatprep.subr.bf16.mxu0 0
        %722 = vmatpush2.bf16.msra.mxu0 0
        %723 = vmatprep.subr.bf16.mxu0 0
        %724 = vmatpush2.bf16.msra.mxu0 0
        %725 = vmatprep.subr.bf16.mxu0 0
        %726 = vmatpush2.bf16.msra.mxu0 0
        %727 = vmatprep.subr.bf16.mxu0 0
        %728 = vmatpush2.bf16.msra.mxu0 0
        %729 = vmatprep.subr.bf16.mxu0 0
        %730 = vmatpush2.bf16.msra.mxu0 0
        %731 = vmatprep.subr.bf16.mxu0 0
        %732 = vmatpush2.bf16.msra.mxu0 0
        %733 = vmatprep.subr.bf16.mxu0 0
        %734 = vmatpush2.bf16.msra.mxu0 0
        %735 = vmatprep.subr.bf16.mxu0 0
        %736 = vmatpush2.bf16.msra.mxu0 0
        %737 = vmatprep.mubr.bf16.mxu0 0
        %738 = vmatmul.mubr.bf16.gmra.mxu0 %v581
        %v739 = vpop.f32.mrf.mxu0
        %v740 = vadd.f32 %v618, %v739
        %v741 = vpop.f32.mrf.mxu0
        %v742 = vadd.f32 %v622, %v741
        %v743 = vpop.f32.mrf.mxu0
        %v744 = vadd.f32 %v618, %v743
        %v745 = vpop.f32.mrf.mxu0
        %v746 = vadd.f32 %v622, %v745
        %747 = vmatprep.mubr.bf16.mxu0 0
        %748 = vmatmul.mubr.bf16.gmra.mxu0 %v582
        %v749 = vpop.f32.mrf.mxu0
        %v750 = vadd.f32 %v618, %v749
        %v751 = vpop.f32.mrf.mxu0
        %v752 = vadd.f32 %v622, %v751
        %v753 = vpop.f32.mrf.mxu0
        %v754 = vadd.f32 %v618, %v753
        %v755 = vpop.f32.mrf.mxu0
        %v756 = vadd.f32 %v622, %v755
        %757 = vmatprep.mubr.bf16.mxu0 0
        %758 = vmatmul.mubr.bf16.gmra.mxu0 %v583
        %v759 = vpop.f32.mrf.mxu0
        %v760 = vadd.f32 %v618, %v759
        %v761 = vpop.f32.mrf.mxu0
        %v762 = vadd.f32 %v622, %v761
        %v763 = vpop.f32.mrf.mxu0
        %v764 = vadd.f32 %v618, %v763
        %v765 = vpop.f32.mrf.mxu0
        %v766 = vadd.f32 %v622, %v765
        %767 = vmatprep.mubr.bf16.mxu0 0
        %768 = vmatmul.mubr.bf16.gmra.mxu0 %v584
        %v769 = vpop.f32.mrf.mxu0
        %v770 = vadd.f32 %v618, %v769
        %v771 = vpop.f32.mrf.mxu0
        %v772 = vadd.f32 %v622, %v771
        %v773 = vpop.f32.mrf.mxu0
        %v774 = vadd.f32 %v618, %v773
        %v775 = vpop.f32.mrf.mxu0
        %v776 = vadd.f32 %v622, %v775
        %777 = vmatprep.mubr.bf16.mxu0 0
        %778 = vmatmul.mubr.bf16.gmra.mxu0 %v585
        %v779 = vpop.f32.mrf.mxu0
        %v780 = vadd.f32 %v618, %v779
        %v781 = vpop.f32.mrf.mxu0
        %v782 = vadd.f32 %v622, %v781
        %v783 = vpop.f32.mrf.mxu0
        %v784 = vadd.f32 %v618, %v783
        %v785 = vpop.f32.mrf.mxu0
        %v786 = vadd.f32 %v622, %v785
        %787 = vmatprep.mubr.bf16.mxu0 0
        %788 = vmatmul.mubr.bf16.gmra.mxu0 %v586
        %v789 = vpop.f32.mrf.mxu0
        %v790 = vadd.f32 %v618, %v789
        %v791 = vpop.f32.mrf.mxu0
        %v792 = vadd.f32 %v622, %v791
        %v793 = vpop.f32.mrf.mxu0
        %v794 = vadd.f32 %v618, %v793
        %v795 = vpop.f32.mrf.mxu0
        %v796 = vadd.f32 %v622, %v795
        %797 = vmatprep.mubr.bf16.mxu0 0
        %798 = vmatmul.mubr.bf16.gmra.mxu0 %v587
        %v799 = vpop.f32.mrf.mxu0
        %v800 = vadd.f32 %v618, %v799
        %v801 = vpop.f32.mrf.mxu0
        %v802 = vadd.f32 %v622, %v801
        %v803 = vpop.f32.mrf.mxu0
        %v804 = vadd.f32 %v618, %v803
        %v805 = vpop.f32.mrf.mxu0
        %v806 = vadd.f32 %v622, %v805
        %807 = vmatprep.mubr.bf16.mxu0 0
        %808 = vmatmul.mubr.bf16.gmra.mxu0 %v588
        %v809 = vpop.f32.mrf.mxu0
        %v810 = vadd.f32 %v618, %v809
        %v811 = vpop.f32.mrf.mxu0
        %v812 = vadd.f32 %v622, %v811
        %v813 = vpop.f32.mrf.mxu0
        %v814 = vadd.f32 %v618, %v813
        %v815 = vpop.f32.mrf.mxu0
        %v816 = vadd.f32 %v622, %v815
        %817 = vmatprep.mubr.bf16.mxu0 0
        %818 = vmatmul.mubr.bf16.gmra.mxu0 %v589
        %v819 = vpop.f32.mrf.mxu0
        %v820 = vadd.f32 %v618, %v819
        %v821 = vpop.f32.mrf.mxu0
        %v822 = vadd.f32 %v622, %v821
        %v823 = vpop.f32.mrf.mxu0
        %v824 = vadd.f32 %v618, %v823
        %v825 = vpop.f32.mrf.mxu0
        %v826 = vadd.f32 %v622, %v825
        %827 = vmatprep.mubr.bf16.mxu0 0
        %828 = vmatmul.mubr.bf16.gmra.mxu0 %v590
        %v829 = vpop.f32.mrf.mxu0
        %v830 = vadd.f32 %v618, %v829
        %v831 = vpop.f32.mrf.mxu0
        %v832 = vadd.f32 %v622, %v831
        %v833 = vpop.f32.mrf.mxu0
        %v834 = vadd.f32 %v618, %v833
        %v835 = vpop.f32.mrf.mxu0
        %v836 = vadd.f32 %v622, %v835
        %837 = vmatprep.mubr.bf16.mxu0 0
        %838 = vmatmul.mubr.bf16.gmra.mxu0 %v591
        %v839 = vpop.f32.mrf.mxu0
        %v840 = vadd.f32 %v618, %v839
        %v841 = vpop.f32.mrf.mxu0
        %v842 = vadd.f32 %v622, %v841
        %v843 = vpop.f32.mrf.mxu0
        %v844 = vadd.f32 %v618, %v843
        %v845 = vpop.f32.mrf.mxu0
        %v846 = vadd.f32 %v622, %v845
        %847 = vmatprep.mubr.bf16.mxu0 0
        %848 = vmatmul.mubr.bf16.gmra.mxu0 %v592
        %v849 = vpop.f32.mrf.mxu0
        %v850 = vadd.f32 %v618, %v849
        %v851 = vpop.f32.mrf.mxu0
        %v852 = vadd.f32 %v622, %v851
        %v853 = vpop.f32.mrf.mxu0
        %v854 = vadd.f32 %v618, %v853
        %v855 = vpop.f32.mrf.mxu0
        %v856 = vadd.f32 %v622, %v855
        %857 = vmatprep.mubr.bf16.mxu0 0
        %858 = vmatmul.mubr.bf16.gmra.mxu0 %v593
        %v859 = vpop.f32.mrf.mxu0
        %v860 = vadd.f32 %v618, %v859
        %v861 = vpop.f32.mrf.mxu0
        %v862 = vadd.f32 %v622, %v861
        %v863 = vpop.f32.mrf.mxu0
        %v864 = vadd.f32 %v618, %v863
        %v865 = vpop.f32.mrf.mxu0
        %v866 = vadd.f32 %v622, %v865
        %867 = vmatprep.mubr.bf16.mxu0 0
        %868 = vmatmul.mubr.bf16.gmra.mxu0 %v594
        %v869 = vpop.f32.mrf.mxu0
        %v870 = vadd.f32 %v618, %v869
        %v871 = vpop.f32.mrf.mxu0
        %v872 = vadd.f32 %v622, %v871
        %v873 = vpop.f32.mrf.mxu0
        %v874 = vadd.f32 %v618, %v873
        %v875 = vpop.f32.mrf.mxu0
        %v876 = vadd.f32 %v622, %v875
        %877 = vmatprep.mubr.bf16.mxu0 0
        %878 = vmatmul.mubr.bf16.gmra.mxu0 %v595
        %v879 = vpop.f32.mrf.mxu0
        %v880 = vadd.f32 %v618, %v879
        %v881 = vpop.f32.mrf.mxu0
        %v882 = vadd.f32 %v622, %v881
        %v883 = vpop.f32.mrf.mxu0
        %v884 = vadd.f32 %v618, %v883
        %v885 = vpop.f32.mrf.mxu0
        %v886 = vadd.f32 %v622, %v885
        %887 = vmatprep.mubr.bf16.mxu0 0
        %888 = vmatmul.mubr.bf16.gmra.mxu0 %v596
        %v889 = vpop.f32.mrf.mxu0
        %v890 = vadd.f32 %v618, %v889
        %v891 = vpop.f32.mrf.mxu0
        %v892 = vadd.f32 %v622, %v891
        %v893 = vpop.f32.mrf.mxu0
        %v894 = vadd.f32 %v618, %v893
        %v895 = vpop.f32.mrf.mxu0
        %v896 = vadd.f32 %v622, %v895
        %897 = vdwg.mxu0
        %v898 = vmax.f32 %v740, 0.0
        %v899 = vmax.f32 %v742, 0.0
        %v900 = vmax.f32 %v744, 0.0
        %v901 = vmax.f32 %v746, 0.0
        %v902 = vmax.f32 %v750, 0.0
        %v903 = vmax.f32 %v752, 0.0
        %v904 = vmax.f32 %v754, 0.0
        %v905 = vmax.f32 %v756, 0.0
        %v906 = vmax.f32 %v760, 0.0
        %v907 = vmax.f32 %v762, 0.0
        %v908 = vmax.f32 %v764, 0.0
        %v909 = vmax.f32 %v766, 0.0
        %v910 = vmax.f32 %v770, 0.0
        %v911 = vmax.f32 %v772, 0.0
        %v912 = vmax.f32 %v774, 0.0
        %v913 = vmax.f32 %v776, 0.0
        %v914 = vmax.f32 %v780, 0.0
        %v915 = vmax.f32 %v782, 0.0
        %v916 = vmax.f32 %v784, 0.0
        %v917 = vmax.f32 %v786, 0.0
        %v918 = vmax.f32 %v790, 0.0
        %v919 = vmax.f32 %v792, 0.0
        %v920 = vmax.f32 %v794, 0.0
        %v921 = vmax.f32 %v796, 0.0
        %v922 = vmax.f32 %v800, 0.0
        %v923 = vmax.f32 %v802, 0.0
        %v924 = vmax.f32 %v804, 0.0
        %v925 = vmax.f32 %v806, 0.0
        %v926 = vmax.f32 %v810, 0.0
        %v927 = vmax.f32 %v812, 0.0
        %v928 = vmax.f32 %v814, 0.0
        %v929 = vmax.f32 %v816, 0.0
        %v930 = vmax.f32 %v820, 0.0
        %v931 = vmax.f32 %v822, 0.0
        %v932 = vmax.f32 %v824, 0.0
        %v933 = vmax.f32 %v826, 0.0
        %v934 = vmax.f32 %v830, 0.0
        %v935 = vmax.f32 %v832, 0.0
        %v936 = vmax.f32 %v834, 0.0
        %v937 = vmax.f32 %v836, 0.0
        %v938 = vmax.f32 %v840, 0.0
        %v939 = vmax.f32 %v842, 0.0
        %v940 = vmax.f32 %v844, 0.0
        %v941 = vmax.f32 %v846, 0.0
        %v942 = vmax.f32 %v850, 0.0
        %v943 = vmax.f32 %v852, 0.0
        %v944 = vmax.f32 %v854, 0.0
        %v945 = vmax.f32 %v856, 0.0
        %v946 = vmax.f32 %v860, 0.0
        %v947 = vmax.f32 %v862, 0.0
        %v948 = vmax.f32 %v864, 0.0
        %v949 = vmax.f32 %v866, 0.0
        %v950 = vmax.f32 %v870, 0.0
        %v951 = vmax.f32 %v872, 0.0
        %v952 = vmax.f32 %v874, 0.0
        %v953 = vmax.f32 %v876, 0.0
        %v954 = vmax.f32 %v880, 0.0
        %v955 = vmax.f32 %v882, 0.0
        %v956 = vmax.f32 %v884, 0.0
        %v957 = vmax.f32 %v886, 0.0
        %v958 = vmax.f32 %v890, 0.0
        %v959 = vmax.f32 %v892, 0.0
        %v960 = vmax.f32 %v894, 0.0
        %v961 = vmax.f32 %v896, 0.0
        %v962 = vpack.c.bf16 %v900, %v898
        %v963 = vpack.c.bf16 %v901, %v899
        %v964 = vpack.c.bf16 %v904, %v902
        %v965 = vpack.c.bf16 %v905, %v903
        %v966 = vpack.c.bf16 %v908, %v906
        %v967 = vpack.c.bf16 %v909, %v907
        %v968 = vpack.c.bf16 %v912, %v910
        %v969 = vpack.c.bf16 %v913, %v911
        %v970 = vpack.c.bf16 %v916, %v914
        %v971 = vpack.c.bf16 %v917, %v915
        %v972 = vpack.c.bf16 %v920, %v918
        %v973 = vpack.c.bf16 %v921, %v919
        %v974 = vpack.c.bf16 %v924, %v922
        %v975 = vpack.c.bf16 %v925, %v923
        %v976 = vpack.c.bf16 %v928, %v926
        %v977 = vpack.c.bf16 %v929, %v927
        %v978 = vpack.c.bf16 %v932, %v930
        %v979 = vpack.c.bf16 %v933, %v931
        %v980 = vpack.c.bf16 %v936, %v934
        %v981 = vpack.c.bf16 %v937, %v935
        %v982 = vpack.c.bf16 %v940, %v938
        %v983 = vpack.c.bf16 %v941, %v939
        %v984 = vpack.c.bf16 %v944, %v942
        %v985 = vpack.c.bf16 %v945, %v943
        %v986 = vpack.c.bf16 %v948, %v946
        %v987 = vpack.c.bf16 %v949, %v947
        %v988 = vpack.c.bf16 %v952, %v950
        %v989 = vpack.c.bf16 %v953, %v951
        %v990 = vpack.c.bf16 %v956, %v954
        %v991 = vpack.c.bf16 %v957, %v955
        %v992 = vpack.c.bf16 %v960, %v958
        %v993 = vpack.c.bf16 %v961, %v959
        %v994 = vld [vmem:[#allocation7] sm:$0xff]
        %v995 = vld [vmem:[#allocation7 + $0x8] sm:$0xff]
        %v996 = vld [vmem:[#allocation7 + $0x10] sm:$0xff]
        %v997 = vld [vmem:[#allocation7 + $0x18] sm:$0xff]
        %v998 = vld [vmem:[#allocation7 + $0x20] sm:$0xff]
        %v999 = vld [vmem:[#allocation7 + $0x28] sm:$0xff]
        %v1000 = vld [vmem:[#allocation7 + $0x30] sm:$0xff]
        %v1001 = vld [vmem:[#allocation7 + $0x38] sm:$0xff]
        %v1002 = vld [vmem:[#allocation7 + $0x40] sm:$0xff]
        %v1003 = vld [vmem:[#allocation7 + $0x48] sm:$0xff]
        %v1004 = vld [vmem:[#allocation7 + $0x50] sm:$0xff]
        %v1005 = vld [vmem:[#allocation7 + $0x58] sm:$0xff]
        %v1006 = vld [vmem:[#allocation7 + $0x60] sm:$0xff]
        %v1007 = vld [vmem:[#allocation7 + $0x68] sm:$0xff]
        %v1008 = vld [vmem:[#allocation7 + $0x70] sm:$0xff]
        %v1009 = vld [vmem:[#allocation7 + $0x78] sm:$0xff]
        %v1010 = vld [vmem:[#allocation7 + $0x80] sm:$0xff]
        %v1011 = vld [vmem:[#allocation7 + $0x88] sm:$0xff]
        %v1012 = vld [vmem:[#allocation7 + $0x90] sm:$0xff]
        %v1013 = vld [vmem:[#allocation7 + $0x98] sm:$0xff]
        %v1014 = vld [vmem:[#allocation7 + $0xa0] sm:$0xff]
        %v1015 = vld [vmem:[#allocation7 + $0xa8] sm:$0xff]
        %v1016 = vld [vmem:[#allocation7 + $0xb0] sm:$0xff]
        %v1017 = vld [vmem:[#allocation7 + $0xb8] sm:$0xff]
        %v1018 = vld [vmem:[#allocation7 + $0xc0] sm:$0xff]
        %v1019 = vld [vmem:[#allocation7 + $0xc8] sm:$0xff]
        %v1020 = vld [vmem:[#allocation7 + $0xd0] sm:$0xff]
        %v1021 = vld [vmem:[#allocation7 + $0xd8] sm:$0xff]
        %v1022 = vld [vmem:[#allocation7 + $0xe0] sm:$0xff]
        %v1023 = vld [vmem:[#allocation7 + $0xe8] sm:$0xff]
        %v1024 = vld [vmem:[#allocation7 + $0xf0] sm:$0xff]
        %v1025 = vld [vmem:[#allocation7 + $0xf8] sm:$0xff]
        %v1026 = vld [vmem:[%s4] sm:$0x3]
        %v1028 = vlaneseq
        %v1029 = vshrl.u32 %v1028, 7
        %v1030 = vsub.s32 0, %v1029
        %v1031 = vrot.slane %v1026, %v1030
        %v1032 = vlaneseq
        %v1033 = vshrl.u32 %v1032, 7
        %v1034 = vsub.s32 1, %v1033
        %v1035 = vrot.slane %v1026, %v1034
        %v1070 = vunpack.c.l.b16 %v994
        %v1071 = vunpack.c.h.b16 %v994
        %v1072 = vunpack.c.l.b16 %v995
        %v1073 = vunpack.c.h.b16 %v995
        %v1074 = vunpack.c.l.b16 %v996
        %v1075 = vunpack.c.h.b16 %v996
        %v1076 = vunpack.c.l.b16 %v997
        %v1077 = vunpack.c.h.b16 %v997
        %v1078 = vunpack.c.l.b16 %v998
        %v1079 = vunpack.c.h.b16 %v998
        %v1080 = vunpack.c.l.b16 %v999
        %v1081 = vunpack.c.h.b16 %v999
        %v1082 = vunpack.c.l.b16 %v1000
        %v1083 = vunpack.c.h.b16 %v1000
        %v1084 = vunpack.c.l.b16 %v1001
        %v1085 = vunpack.c.h.b16 %v1001
        %v1086 = vunpack.c.l.b16 %v1002
        %v1087 = vunpack.c.h.b16 %v1002
        %v1088 = vunpack.c.l.b16 %v1003
        %v1089 = vunpack.c.h.b16 %v1003
        %v1090 = vunpack.c.l.b16 %v1004
        %v1091 = vunpack.c.h.b16 %v1004
        %v1092 = vunpack.c.l.b16 %v1005
        %v1093 = vunpack.c.h.b16 %v1005
        %v1094 = vunpack.c.l.b16 %v1006
        %v1095 = vunpack.c.h.b16 %v1006
        %v1096 = vunpack.c.l.b16 %v1007
        %v1097 = vunpack.c.h.b16 %v1007
        %v1098 = vunpack.c.l.b16 %v1008
        %v1099 = vunpack.c.h.b16 %v1008
        %v1100 = vunpack.c.l.b16 %v1009
        %v1101 = vunpack.c.h.b16 %v1009
        %v1102 = vunpack.c.l.b16 %v1010
        %v1103 = vunpack.c.h.b16 %v1010
        %v1104 = vunpack.c.l.b16 %v1011
        %v1105 = vunpack.c.h.b16 %v1011
        %v1106 = vunpack.c.l.b16 %v1012
        %v1107 = vunpack.c.h.b16 %v1012
        %v1108 = vunpack.c.l.b16 %v1013
        %v1109 = vunpack.c.h.b16 %v1013
        %v1110 = vunpack.c.l.b16 %v1014
        %v1111 = vunpack.c.h.b16 %v1014
        %v1112 = vunpack.c.l.b16 %v1015
        %v1113 = vunpack.c.h.b16 %v1015
        %v1114 = vunpack.c.l.b16 %v1016
        %v1115 = vunpack.c.h.b16 %v1016
        %v1116 = vunpack.c.l.b16 %v1017
        %v1117 = vunpack.c.h.b16 %v1017
        %v1118 = vunpack.c.l.b16 %v1018
        %v1119 = vunpack.c.h.b16 %v1018
        %v1120 = vunpack.c.l.b16 %v1019
        %v1121 = vunpack.c.h.b16 %v1019
        %v1122 = vunpack.c.l.b16 %v1020
        %v1123 = vunpack.c.h.b16 %v1020
        %v1124 = vunpack.c.l.b16 %v1021
        %v1125 = vunpack.c.h.b16 %v1021
        %v1126 = vunpack.c.l.b16 %v1022
        %v1127 = vunpack.c.h.b16 %v1022
        %v1128 = vunpack.c.l.b16 %v1023
        %v1129 = vunpack.c.h.b16 %v1023
        %v1130 = vunpack.c.l.b16 %v1024
        %v1131 = vunpack.c.h.b16 %v1024
        %v1132 = vunpack.c.l.b16 %v1025
        %v1133 = vunpack.c.h.b16 %v1025
        %v1134 = vpack.c.b16 %v1072, %v1070
        %v1135 = vpack.c.b16 %v1073, %v1071
        %v1136 = vpack.c.b16 %v1076, %v1074
        %v1137 = vpack.c.b16 %v1077, %v1075
        %v1138 = vpack.c.b16 %v1080, %v1078
        %v1139 = vpack.c.b16 %v1081, %v1079
        %v1140 = vpack.c.b16 %v1084, %v1082
        %v1141 = vpack.c.b16 %v1085, %v1083
        %v1142 = vpack.c.b16 %v1088, %v1086
        %v1143 = vpack.c.b16 %v1089, %v1087
        %v1144 = vpack.c.b16 %v1092, %v1090
        %v1145 = vpack.c.b16 %v1093, %v1091
        %v1146 = vpack.c.b16 %v1096, %v1094
        %v1147 = vpack.c.b16 %v1097, %v1095
        %v1148 = vpack.c.b16 %v1100, %v1098
        %v1149 = vpack.c.b16 %v1101, %v1099
        %v1150 = vpack.c.b16 %v1104, %v1102
        %v1151 = vpack.c.b16 %v1105, %v1103
        %v1152 = vpack.c.b16 %v1108, %v1106
        %v1153 = vpack.c.b16 %v1109, %v1107
        %v1154 = vpack.c.b16 %v1112, %v1110
        %v1155 = vpack.c.b16 %v1113, %v1111
        %v1156 = vpack.c.b16 %v1116, %v1114
        %v1157 = vpack.c.b16 %v1117, %v1115
        %v1158 = vpack.c.b16 %v1120, %v1118
        %v1159 = vpack.c.b16 %v1121, %v1119
        %v1160 = vpack.c.b16 %v1124, %v1122
        %v1161 = vpack.c.b16 %v1125, %v1123
        %v1162 = vpack.c.b16 %v1128, %v1126
        %v1163 = vpack.c.b16 %v1129, %v1127
        %v1164 = vpack.c.b16 %v1132, %v1130
        %v1165 = vpack.c.b16 %v1133, %v1131
        %1198 = vmatprep.subr.bf16.mxu0 %v1149
        %1199 = vmatpush1.bf16.msra.mxu0 %v1148
        %1200 = vmatprep.subr.bf16.mxu0 %v1147
        %1201 = vmatpush1.bf16.msra.mxu0 %v1146
        %1202 = vmatprep.subr.bf16.mxu0 %v1145
        %1203 = vmatpush1.bf16.msra.mxu0 %v1144
        %1204 = vmatprep.subr.bf16.mxu0 %v1143
        %1205 = vmatpush1.bf16.msra.mxu0 %v1142
        %1206 = vmatprep.subr.bf16.mxu0 %v1141
        %1207 = vmatpush1.bf16.msra.mxu0 %v1140
        %1208 = vmatprep.subr.bf16.mxu0 %v1139
        %1209 = vmatpush1.bf16.msra.mxu0 %v1138
        %1210 = vmatprep.subr.bf16.mxu0 %v1137
        %1211 = vmatpush1.bf16.msra.mxu0 %v1136
        %1212 = vmatprep.subr.bf16.mxu0 %v1135
        %1213 = vmatpush1.bf16.msra.mxu0 %v1134
        %1214 = vmatprep.subr.bf16.mxu0 %v1165
        %1215 = vmatpush2.bf16.msra.mxu0 %v1164
        %1216 = vmatprep.subr.bf16.mxu0 %v1163
        %1217 = vmatpush2.bf16.msra.mxu0 %v1162
        %1218 = vmatprep.subr.bf16.mxu0 %v1161
        %1219 = vmatpush2.bf16.msra.mxu0 %v1160
        %1220 = vmatprep.subr.bf16.mxu0 %v1159
        %1221 = vmatpush2.bf16.msra.mxu0 %v1158
        %1222 = vmatprep.subr.bf16.mxu0 %v1157
        %1223 = vmatpush2.bf16.msra.mxu0 %v1156
        %1224 = vmatprep.subr.bf16.mxu0 %v1155
        %1225 = vmatpush2.bf16.msra.mxu0 %v1154
        %1226 = vmatprep.subr.bf16.mxu0 %v1153
        %1227 = vmatpush2.bf16.msra.mxu0 %v1152
        %1228 = vmatprep.subr.bf16.mxu0 %v1151
        %1229 = vmatpush2.bf16.msra.mxu0 %v1150
        %1230 = vmatprep.mubr.bf16.mxu0 %v963
        %1231 = vmatmul.mubr.bf16.gmra.mxu0 %v962
        %v1232 = vpop.f32.mrf.mxu0
        %v1233 = vadd.f32 %v1031, %v1232
        %v1234 = vpop.f32.mrf.mxu0
        %v1235 = vadd.f32 %v1035, %v1234
        %v1236 = vpop.f32.mrf.mxu0
        %v1237 = vadd.f32 %v1031, %v1236
        %v1238 = vpop.f32.mrf.mxu0
        %v1239 = vadd.f32 %v1035, %v1238
        %1240 = vmatprep.mubr.bf16.mxu0 %v965
        %1241 = vmatmul.mubr.bf16.gmra.mxu0 %v964
        %v1242 = vpop.f32.mrf.mxu0
        %v1243 = vadd.f32 %v1031, %v1242
        %v1244 = vpop.f32.mrf.mxu0
        %v1245 = vadd.f32 %v1035, %v1244
        %v1246 = vpop.f32.mrf.mxu0
        %v1247 = vadd.f32 %v1031, %v1246
        %v1248 = vpop.f32.mrf.mxu0
        %v1249 = vadd.f32 %v1035, %v1248
        %1250 = vmatprep.mubr.bf16.mxu0 %v967
        %1251 = vmatmul.mubr.bf16.gmra.mxu0 %v966
        %v1252 = vpop.f32.mrf.mxu0
        %v1253 = vadd.f32 %v1031, %v1252
        %v1254 = vpop.f32.mrf.mxu0
        %v1255 = vadd.f32 %v1035, %v1254
        %v1256 = vpop.f32.mrf.mxu0
        %v1257 = vadd.f32 %v1031, %v1256
        %v1258 = vpop.f32.mrf.mxu0
        %v1259 = vadd.f32 %v1035, %v1258
        %1260 = vmatprep.mubr.bf16.mxu0 %v969
        %1261 = vmatmul.mubr.bf16.gmra.mxu0 %v968
        %v1262 = vpop.f32.mrf.mxu0
        %v1263 = vadd.f32 %v1031, %v1262
        %v1264 = vpop.f32.mrf.mxu0
        %v1265 = vadd.f32 %v1035, %v1264
        %v1266 = vpop.f32.mrf.mxu0
        %v1267 = vadd.f32 %v1031, %v1266
        %v1268 = vpop.f32.mrf.mxu0
        %v1269 = vadd.f32 %v1035, %v1268
        %1270 = vmatprep.mubr.bf16.mxu0 %v971
        %1271 = vmatmul.mubr.bf16.gmra.mxu0 %v970
        %v1272 = vpop.f32.mrf.mxu0
        %v1273 = vadd.f32 %v1031, %v1272
        %v1274 = vpop.f32.mrf.mxu0
        %v1275 = vadd.f32 %v1035, %v1274
        %v1276 = vpop.f32.mrf.mxu0
        %v1277 = vadd.f32 %v1031, %v1276
        %v1278 = vpop.f32.mrf.mxu0
        %v1279 = vadd.f32 %v1035, %v1278
        %1280 = vmatprep.mubr.bf16.mxu0 %v973
        %1281 = vmatmul.mubr.bf16.gmra.mxu0 %v972
        %v1282 = vpop.f32.mrf.mxu0
        %v1283 = vadd.f32 %v1031, %v1282
        %v1284 = vpop.f32.mrf.mxu0
        %v1285 = vadd.f32 %v1035, %v1284
        %v1286 = vpop.f32.mrf.mxu0
        %v1287 = vadd.f32 %v1031, %v1286
        %v1288 = vpop.f32.mrf.mxu0
        %v1289 = vadd.f32 %v1035, %v1288
        %1290 = vmatprep.mubr.bf16.mxu0 %v975
        %1291 = vmatmul.mubr.bf16.gmra.mxu0 %v974
        %v1292 = vpop.f32.mrf.mxu0
        %v1293 = vadd.f32 %v1031, %v1292
        %v1294 = vpop.f32.mrf.mxu0
        %v1295 = vadd.f32 %v1035, %v1294
        %v1296 = vpop.f32.mrf.mxu0
        %v1297 = vadd.f32 %v1031, %v1296
        %v1298 = vpop.f32.mrf.mxu0
        %v1299 = vadd.f32 %v1035, %v1298
        %1300 = vmatprep.mubr.bf16.mxu0 %v977
        %1301 = vmatmul.mubr.bf16.gmra.mxu0 %v976
        %v1302 = vpop.f32.mrf.mxu0
        %v1303 = vadd.f32 %v1031, %v1302
        %v1304 = vpop.f32.mrf.mxu0
        %v1305 = vadd.f32 %v1035, %v1304
        %v1306 = vpop.f32.mrf.mxu0
        %v1307 = vadd.f32 %v1031, %v1306
        %v1308 = vpop.f32.mrf.mxu0
        %v1309 = vadd.f32 %v1035, %v1308
        %1310 = vmatprep.mubr.bf16.mxu0 %v979
        %1311 = vmatmul.mubr.bf16.gmra.mxu0 %v978
        %v1312 = vpop.f32.mrf.mxu0
        %v1313 = vadd.f32 %v1031, %v1312
        %v1314 = vpop.f32.mrf.mxu0
        %v1315 = vadd.f32 %v1035, %v1314
        %v1316 = vpop.f32.mrf.mxu0
        %v1317 = vadd.f32 %v1031, %v1316
        %v1318 = vpop.f32.mrf.mxu0
        %v1319 = vadd.f32 %v1035, %v1318
        %1320 = vmatprep.mubr.bf16.mxu0 %v981
        %1321 = vmatmul.mubr.bf16.gmra.mxu0 %v980
        %v1322 = vpop.f32.mrf.mxu0
        %v1323 = vadd.f32 %v1031, %v1322
        %v1324 = vpop.f32.mrf.mxu0
        %v1325 = vadd.f32 %v1035, %v1324
        %v1326 = vpop.f32.mrf.mxu0
        %v1327 = vadd.f32 %v1031, %v1326
        %v1328 = vpop.f32.mrf.mxu0
        %v1329 = vadd.f32 %v1035, %v1328
        %1330 = vmatprep.mubr.bf16.mxu0 %v983
        %1331 = vmatmul.mubr.bf16.gmra.mxu0 %v982
        %v1332 = vpop.f32.mrf.mxu0
        %v1333 = vadd.f32 %v1031, %v1332
        %v1334 = vpop.f32.mrf.mxu0
        %v1335 = vadd.f32 %v1035, %v1334
        %v1336 = vpop.f32.mrf.mxu0
        %v1337 = vadd.f32 %v1031, %v1336
        %v1338 = vpop.f32.mrf.mxu0
        %v1339 = vadd.f32 %v1035, %v1338
        %1340 = vmatprep.mubr.bf16.mxu0 %v985
        %1341 = vmatmul.mubr.bf16.gmra.mxu0 %v984
        %v1342 = vpop.f32.mrf.mxu0
        %v1343 = vadd.f32 %v1031, %v1342
        %v1344 = vpop.f32.mrf.mxu0
        %v1345 = vadd.f32 %v1035, %v1344
        %v1346 = vpop.f32.mrf.mxu0
        %v1347 = vadd.f32 %v1031, %v1346
        %v1348 = vpop.f32.mrf.mxu0
        %v1349 = vadd.f32 %v1035, %v1348
        %1350 = vmatprep.mubr.bf16.mxu0 %v987
        %1351 = vmatmul.mubr.bf16.gmra.mxu0 %v986
        %v1352 = vpop.f32.mrf.mxu0
        %v1353 = vadd.f32 %v1031, %v1352
        %v1354 = vpop.f32.mrf.mxu0
        %v1355 = vadd.f32 %v1035, %v1354
        %v1356 = vpop.f32.mrf.mxu0
        %v1357 = vadd.f32 %v1031, %v1356
        %v1358 = vpop.f32.mrf.mxu0
        %v1359 = vadd.f32 %v1035, %v1358
        %1360 = vmatprep.mubr.bf16.mxu0 %v989
        %1361 = vmatmul.mubr.bf16.gmra.mxu0 %v988
        %v1362 = vpop.f32.mrf.mxu0
        %v1363 = vadd.f32 %v1031, %v1362
        %v1364 = vpop.f32.mrf.mxu0
        %v1365 = vadd.f32 %v1035, %v1364
        %v1366 = vpop.f32.mrf.mxu0
        %v1367 = vadd.f32 %v1031, %v1366
        %v1368 = vpop.f32.mrf.mxu0
        %v1369 = vadd.f32 %v1035, %v1368
        %1370 = vmatprep.mubr.bf16.mxu0 %v991
        %1371 = vmatmul.mubr.bf16.gmra.mxu0 %v990
        %v1372 = vpop.f32.mrf.mxu0
        %v1373 = vadd.f32 %v1031, %v1372
        %v1374 = vpop.f32.mrf.mxu0
        %v1375 = vadd.f32 %v1035, %v1374
        %v1376 = vpop.f32.mrf.mxu0
        %v1377 = vadd.f32 %v1031, %v1376
        %v1378 = vpop.f32.mrf.mxu0
        %v1379 = vadd.f32 %v1035, %v1378
        %1380 = vmatprep.mubr.bf16.mxu0 %v993
        %1381 = vmatmul.mubr.bf16.gmra.mxu0 %v992
        %v1382 = vpop.f32.mrf.mxu0
        %v1383 = vadd.f32 %v1031, %v1382
        %v1384 = vpop.f32.mrf.mxu0
        %v1385 = vadd.f32 %v1035, %v1384
        %v1386 = vpop.f32.mrf.mxu0
        %v1387 = vadd.f32 %v1031, %v1386
        %v1388 = vpop.f32.mrf.mxu0
        %v1389 = vadd.f32 %v1035, %v1388
        %1390 = vdwg.mxu0
        %v1391 = vmax.f32 %v1233, 0.0
        %v1392 = vmax.f32 %v1235, 0.0
        %v1393 = vmax.f32 %v1237, 0.0
        %v1394 = vmax.f32 %v1239, 0.0
        %v1395 = vmax.f32 %v1243, 0.0
        %v1396 = vmax.f32 %v1245, 0.0
        %v1397 = vmax.f32 %v1247, 0.0
        %v1398 = vmax.f32 %v1249, 0.0
        %v1399 = vmax.f32 %v1253, 0.0
        %v1400 = vmax.f32 %v1255, 0.0
        %v1401 = vmax.f32 %v1257, 0.0
        %v1402 = vmax.f32 %v1259, 0.0
        %v1403 = vmax.f32 %v1263, 0.0
        %v1404 = vmax.f32 %v1265, 0.0
        %v1405 = vmax.f32 %v1267, 0.0
        %v1406 = vmax.f32 %v1269, 0.0
        %v1407 = vmax.f32 %v1273, 0.0
        %v1408 = vmax.f32 %v1275, 0.0
        %v1409 = vmax.f32 %v1277, 0.0
        %v1410 = vmax.f32 %v1279, 0.0
        %v1411 = vmax.f32 %v1283, 0.0
        %v1412 = vmax.f32 %v1285, 0.0
        %v1413 = vmax.f32 %v1287, 0.0
        %v1414 = vmax.f32 %v1289, 0.0
        %v1415 = vmax.f32 %v1293, 0.0
        %v1416 = vmax.f32 %v1295, 0.0
        %v1417 = vmax.f32 %v1297, 0.0
        %v1418 = vmax.f32 %v1299, 0.0
        %v1419 = vmax.f32 %v1303, 0.0
        %v1420 = vmax.f32 %v1305, 0.0
        %v1421 = vmax.f32 %v1307, 0.0
        %v1422 = vmax.f32 %v1309, 0.0
        %v1423 = vmax.f32 %v1313, 0.0
        %v1424 = vmax.f32 %v1315, 0.0
        %v1425 = vmax.f32 %v1317, 0.0
        %v1426 = vmax.f32 %v1319, 0.0
        %v1427 = vmax.f32 %v1323, 0.0
        %v1428 = vmax.f32 %v1325, 0.0
        %v1429 = vmax.f32 %v1327, 0.0
        %v1430 = vmax.f32 %v1329, 0.0
        %v1431 = vmax.f32 %v1333, 0.0
        %v1432 = vmax.f32 %v1335, 0.0
        %v1433 = vmax.f32 %v1337, 0.0
        %v1434 = vmax.f32 %v1339, 0.0
        %v1435 = vmax.f32 %v1343, 0.0
        %v1436 = vmax.f32 %v1345, 0.0
        %v1437 = vmax.f32 %v1347, 0.0
        %v1438 = vmax.f32 %v1349, 0.0
        %v1439 = vmax.f32 %v1353, 0.0
        %v1440 = vmax.f32 %v1355, 0.0
        %v1441 = vmax.f32 %v1357, 0.0
        %v1442 = vmax.f32 %v1359, 0.0
        %v1443 = vmax.f32 %v1363, 0.0
        %v1444 = vmax.f32 %v1365, 0.0
        %v1445 = vmax.f32 %v1367, 0.0
        %v1446 = vmax.f32 %v1369, 0.0
        %v1447 = vmax.f32 %v1373, 0.0
        %v1448 = vmax.f32 %v1375, 0.0
        %v1449 = vmax.f32 %v1377, 0.0
        %v1450 = vmax.f32 %v1379, 0.0
        %v1451 = vmax.f32 %v1383, 0.0
        %v1452 = vmax.f32 %v1385, 0.0
        %v1453 = vmax.f32 %v1387, 0.0
        %v1454 = vmax.f32 %v1389, 0.0
        %v1455 = vpack.c.bf16 %v1393, %v1391
        %v1456 = vpack.c.bf16 %v1394, %v1392
        %v1457 = vpack.c.bf16 %v1397, %v1395
        %v1458 = vpack.c.bf16 %v1398, %v1396
        %v1459 = vpack.c.bf16 %v1401, %v1399
        %v1460 = vpack.c.bf16 %v1402, %v1400
        %v1461 = vpack.c.bf16 %v1405, %v1403
        %v1462 = vpack.c.bf16 %v1406, %v1404
        %v1463 = vpack.c.bf16 %v1409, %v1407
        %v1464 = vpack.c.bf16 %v1410, %v1408
        %v1465 = vpack.c.bf16 %v1413, %v1411
        %v1466 = vpack.c.bf16 %v1414, %v1412
        %v1467 = vpack.c.bf16 %v1417, %v1415
        %v1468 = vpack.c.bf16 %v1418, %v1416
        %v1469 = vpack.c.bf16 %v1421, %v1419
        %v1470 = vpack.c.bf16 %v1422, %v1420
        %v1471 = vpack.c.bf16 %v1425, %v1423
        %v1472 = vpack.c.bf16 %v1426, %v1424
        %v1473 = vpack.c.bf16 %v1429, %v1427
        %v1474 = vpack.c.bf16 %v1430, %v1428
        %v1475 = vpack.c.bf16 %v1433, %v1431
        %v1476 = vpack.c.bf16 %v1434, %v1432
        %v1477 = vpack.c.bf16 %v1437, %v1435
        %v1478 = vpack.c.bf16 %v1438, %v1436
        %v1479 = vpack.c.bf16 %v1441, %v1439
        %v1480 = vpack.c.bf16 %v1442, %v1440
        %v1481 = vpack.c.bf16 %v1445, %v1443
        %v1482 = vpack.c.bf16 %v1446, %v1444
        %v1483 = vpack.c.bf16 %v1449, %v1447
        %v1484 = vpack.c.bf16 %v1450, %v1448
        %v1485 = vpack.c.bf16 %v1453, %v1451
        %v1486 = vpack.c.bf16 %v1454, %v1452
        %v1487 = vld [vmem:[#allocation8] sm:$0xff]
        %v1488 = vld [vmem:[#allocation8 + $0x8] sm:$0xff]
        %v1489 = vld [vmem:[#allocation8 + $0x10] sm:$0xff]
        %v1490 = vld [vmem:[#allocation8 + $0x18] sm:$0xff]
        %v1491 = vld [vmem:[#allocation8 + $0x20] sm:$0xff]
        %v1492 = vld [vmem:[#allocation8 + $0x28] sm:$0xff]
        %v1493 = vld [vmem:[#allocation8 + $0x30] sm:$0xff]
        %v1494 = vld [vmem:[#allocation8 + $0x38] sm:$0xff]
        %v1495 = vld [vmem:[#allocation8 + $0x40] sm:$0xff]
        %v1496 = vld [vmem:[#allocation8 + $0x48] sm:$0xff]
        %v1497 = vld [vmem:[#allocation8 + $0x50] sm:$0xff]
        %v1498 = vld [vmem:[#allocation8 + $0x58] sm:$0xff]
        %v1499 = vld [vmem:[#allocation8 + $0x60] sm:$0xff]
        %v1500 = vld [vmem:[#allocation8 + $0x68] sm:$0xff]
        %v1501 = vld [vmem:[#allocation8 + $0x70] sm:$0xff]
        %v1502 = vld [vmem:[#allocation8 + $0x78] sm:$0xff]
        %v1503 = vld [vmem:[#allocation8 + $0x80] sm:$0xff]
        %v1504 = vld [vmem:[#allocation8 + $0x88] sm:$0xff]
        %v1505 = vld [vmem:[#allocation8 + $0x90] sm:$0xff]
        %v1506 = vld [vmem:[#allocation8 + $0x98] sm:$0xff]
        %v1507 = vld [vmem:[#allocation8 + $0xa0] sm:$0xff]
        %v1508 = vld [vmem:[#allocation8 + $0xa8] sm:$0xff]
        %v1509 = vld [vmem:[#allocation8 + $0xb0] sm:$0xff]
        %v1510 = vld [vmem:[#allocation8 + $0xb8] sm:$0xff]
        %v1511 = vld [vmem:[#allocation8 + $0xc0] sm:$0xff]
        %v1512 = vld [vmem:[#allocation8 + $0xc8] sm:$0xff]
        %v1513 = vld [vmem:[#allocation8 + $0xd0] sm:$0xff]
        %v1514 = vld [vmem:[#allocation8 + $0xd8] sm:$0xff]
        %v1515 = vld [vmem:[#allocation8 + $0xe0] sm:$0xff]
        %v1516 = vld [vmem:[#allocation8 + $0xe8] sm:$0xff]
        %v1517 = vld [vmem:[#allocation8 + $0xf0] sm:$0xff]
        %v1518 = vld [vmem:[#allocation8 + $0xf8] sm:$0xff]
        %v1519 = vld [vmem:[%s6] sm:$0x3]
        %v1521 = vlaneseq
        %v1522 = vshrl.u32 %v1521, 7
        %v1523 = vsub.s32 0, %v1522
        %v1524 = vrot.slane %v1519, %v1523
        %v1525 = vlaneseq
        %v1526 = vshrl.u32 %v1525, 7
        %v1527 = vsub.s32 1, %v1526
        %v1528 = vrot.slane %v1519, %v1527
        %v1563 = vunpack.c.l.b16 %v1487
        %v1564 = vunpack.c.h.b16 %v1487
        %v1565 = vunpack.c.l.b16 %v1488
        %v1566 = vunpack.c.h.b16 %v1488
        %v1567 = vunpack.c.l.b16 %v1489
        %v1568 = vunpack.c.h.b16 %v1489
        %v1569 = vunpack.c.l.b16 %v1490
        %v1570 = vunpack.c.h.b16 %v1490
        %v1571 = vunpack.c.l.b16 %v1491
        %v1572 = vunpack.c.h.b16 %v1491
        %v1573 = vunpack.c.l.b16 %v1492
        %v1574 = vunpack.c.h.b16 %v1492
        %v1575 = vunpack.c.l.b16 %v1493
        %v1576 = vunpack.c.h.b16 %v1493
        %v1577 = vunpack.c.l.b16 %v1494
        %v1578 = vunpack.c.h.b16 %v1494
        %v1579 = vunpack.c.l.b16 %v1495
        %v1580 = vunpack.c.h.b16 %v1495
        %v1581 = vunpack.c.l.b16 %v1496
        %v1582 = vunpack.c.h.b16 %v1496
        %v1583 = vunpack.c.l.b16 %v1497
        %v1584 = vunpack.c.h.b16 %v1497
        %v1585 = vunpack.c.l.b16 %v1498
        %v1586 = vunpack.c.h.b16 %v1498
        %v1587 = vunpack.c.l.b16 %v1499
        %v1588 = vunpack.c.h.b16 %v1499
        %v1589 = vunpack.c.l.b16 %v1500
        %v1590 = vunpack.c.h.b16 %v1500
        %v1591 = vunpack.c.l.b16 %v1501
        %v1592 = vunpack.c.h.b16 %v1501
        %v1593 = vunpack.c.l.b16 %v1502
        %v1594 = vunpack.c.h.b16 %v1502
        %v1595 = vunpack.c.l.b16 %v1503
        %v1596 = vunpack.c.h.b16 %v1503
        %v1597 = vunpack.c.l.b16 %v1504
        %v1598 = vunpack.c.h.b16 %v1504
        %v1599 = vunpack.c.l.b16 %v1505
        %v1600 = vunpack.c.h.b16 %v1505
        %v1601 = vunpack.c.l.b16 %v1506
        %v1602 = vunpack.c.h.b16 %v1506
        %v1603 = vunpack.c.l.b16 %v1507
        %v1604 = vunpack.c.h.b16 %v1507
        %v1605 = vunpack.c.l.b16 %v1508
        %v1606 = vunpack.c.h.b16 %v1508
        %v1607 = vunpack.c.l.b16 %v1509
        %v1608 = vunpack.c.h.b16 %v1509
        %v1609 = vunpack.c.l.b16 %v1510
        %v1610 = vunpack.c.h.b16 %v1510
        %v1611 = vunpack.c.l.b16 %v1511
        %v1612 = vunpack.c.h.b16 %v1511
        %v1613 = vunpack.c.l.b16 %v1512
        %v1614 = vunpack.c.h.b16 %v1512
        %v1615 = vunpack.c.l.b16 %v1513
        %v1616 = vunpack.c.h.b16 %v1513
        %v1617 = vunpack.c.l.b16 %v1514
        %v1618 = vunpack.c.h.b16 %v1514
        %v1619 = vunpack.c.l.b16 %v1515
        %v1620 = vunpack.c.h.b16 %v1515
        %v1621 = vunpack.c.l.b16 %v1516
        %v1622 = vunpack.c.h.b16 %v1516
        %v1623 = vunpack.c.l.b16 %v1517
        %v1624 = vunpack.c.h.b16 %v1517
        %v1625 = vunpack.c.l.b16 %v1518
        %v1626 = vunpack.c.h.b16 %v1518
        %v1627 = vpack.c.b16 %v1565, %v1563
        %v1628 = vpack.c.b16 %v1566, %v1564
        %v1629 = vpack.c.b16 %v1569, %v1567
        %v1630 = vpack.c.b16 %v1570, %v1568
        %v1631 = vpack.c.b16 %v1573, %v1571
        %v1632 = vpack.c.b16 %v1574, %v1572
        %v1633 = vpack.c.b16 %v1577, %v1575
        %v1634 = vpack.c.b16 %v1578, %v1576
        %v1635 = vpack.c.b16 %v1581, %v1579
        %v1636 = vpack.c.b16 %v1582, %v1580
        %v1637 = vpack.c.b16 %v1585, %v1583
        %v1638 = vpack.c.b16 %v1586, %v1584
        %v1639 = vpack.c.b16 %v1589, %v1587
        %v1640 = vpack.c.b16 %v1590, %v1588
        %v1641 = vpack.c.b16 %v1593, %v1591
        %v1642 = vpack.c.b16 %v1594, %v1592
        %v1643 = vpack.c.b16 %v1597, %v1595
        %v1644 = vpack.c.b16 %v1598, %v1596
        %v1645 = vpack.c.b16 %v1601, %v1599
        %v1646 = vpack.c.b16 %v1602, %v1600
        %v1647 = vpack.c.b16 %v1605, %v1603
        %v1648 = vpack.c.b16 %v1606, %v1604
        %v1649 = vpack.c.b16 %v1609, %v1607
        %v1650 = vpack.c.b16 %v1610, %v1608
        %v1651 = vpack.c.b16 %v1613, %v1611
        %v1652 = vpack.c.b16 %v1614, %v1612
        %v1653 = vpack.c.b16 %v1617, %v1615
        %v1654 = vpack.c.b16 %v1618, %v1616
        %v1655 = vpack.c.b16 %v1621, %v1619
        %v1656 = vpack.c.b16 %v1622, %v1620
        %v1657 = vpack.c.b16 %v1625, %v1623
        %v1658 = vpack.c.b16 %v1626, %v1624
        %1691 = vmatprep.subr.bf16.mxu0 %v1642
        %1692 = vmatpush1.bf16.msra.mxu0 %v1641
        %1693 = vmatprep.subr.bf16.mxu0 %v1640
        %1694 = vmatpush1.bf16.msra.mxu0 %v1639
        %1695 = vmatprep.subr.bf16.mxu0 %v1638
        %1696 = vmatpush1.bf16.msra.mxu0 %v1637
        %1697 = vmatprep.subr.bf16.mxu0 %v1636
        %1698 = vmatpush1.bf16.msra.mxu0 %v1635
        %1699 = vmatprep.subr.bf16.mxu0 %v1634
        %1700 = vmatpush1.bf16.msra.mxu0 %v1633
        %1701 = vmatprep.subr.bf16.mxu0 %v1632
        %1702 = vmatpush1.bf16.msra.mxu0 %v1631
        %1703 = vmatprep.subr.bf16.mxu0 %v1630
        %1704 = vmatpush1.bf16.msra.mxu0 %v1629
        %1705 = vmatprep.subr.bf16.mxu0 %v1628
        %1706 = vmatpush1.bf16.msra.mxu0 %v1627
        %1707 = vmatprep.subr.bf16.mxu0 %v1658
        %1708 = vmatpush2.bf16.msra.mxu0 %v1657
        %1709 = vmatprep.subr.bf16.mxu0 %v1656
        %1710 = vmatpush2.bf16.msra.mxu0 %v1655
        %1711 = vmatprep.subr.bf16.mxu0 %v1654
        %1712 = vmatpush2.bf16.msra.mxu0 %v1653
        %1713 = vmatprep.subr.bf16.mxu0 %v1652
        %1714 = vmatpush2.bf16.msra.mxu0 %v1651
        %1715 = vmatprep.subr.bf16.mxu0 %v1650
        %1716 = vmatpush2.bf16.msra.mxu0 %v1649
        %1717 = vmatprep.subr.bf16.mxu0 %v1648
        %1718 = vmatpush2.bf16.msra.mxu0 %v1647
        %1719 = vmatprep.subr.bf16.mxu0 %v1646
        %1720 = vmatpush2.bf16.msra.mxu0 %v1645
        %1721 = vmatprep.subr.bf16.mxu0 %v1644
        %1722 = vmatpush2.bf16.msra.mxu0 %v1643
        %1723 = vmatprep.mubr.bf16.mxu0 %v1456
        %1724 = vmatmul.mubr.bf16.gmra.mxu0 %v1455
        %v1725 = vpop.f32.mrf.mxu0
        %v1726 = vadd.f32 %v1524, %v1725
        %v1727 = vpop.f32.mrf.mxu0
        %v1728 = vadd.f32 %v1528, %v1727
        %v1729 = vpop.f32.mrf.mxu0
        %v1730 = vadd.f32 %v1524, %v1729
        %v1731 = vpop.f32.mrf.mxu0
        %v1732 = vadd.f32 %v1528, %v1731
        %1733 = vmatprep.mubr.bf16.mxu0 %v1458
        %1734 = vmatmul.mubr.bf16.gmra.mxu0 %v1457
        %v1735 = vpop.f32.mrf.mxu0
        %v1736 = vadd.f32 %v1524, %v1735
        %v1737 = vpop.f32.mrf.mxu0
        %v1738 = vadd.f32 %v1528, %v1737
        %v1739 = vpop.f32.mrf.mxu0
        %v1740 = vadd.f32 %v1524, %v1739
        %v1741 = vpop.f32.mrf.mxu0
        %v1742 = vadd.f32 %v1528, %v1741
        %1743 = vmatprep.mubr.bf16.mxu0 %v1460
        %1744 = vmatmul.mubr.bf16.gmra.mxu0 %v1459
        %v1745 = vpop.f32.mrf.mxu0
        %v1746 = vadd.f32 %v1524, %v1745
        %v1747 = vpop.f32.mrf.mxu0
        %v1748 = vadd.f32 %v1528, %v1747
        %v1749 = vpop.f32.mrf.mxu0
        %v1750 = vadd.f32 %v1524, %v1749
        %v1751 = vpop.f32.mrf.mxu0
        %v1752 = vadd.f32 %v1528, %v1751
        %1753 = vmatprep.mubr.bf16.mxu0 %v1462
        %1754 = vmatmul.mubr.bf16.gmra.mxu0 %v1461
        %v1755 = vpop.f32.mrf.mxu0
        %v1756 = vadd.f32 %v1524, %v1755
        %v1757 = vpop.f32.mrf.mxu0
        %v1758 = vadd.f32 %v1528, %v1757
        %v1759 = vpop.f32.mrf.mxu0
        %v1760 = vadd.f32 %v1524, %v1759
        %v1761 = vpop.f32.mrf.mxu0
        %v1762 = vadd.f32 %v1528, %v1761
        %1763 = vmatprep.mubr.bf16.mxu0 %v1464
        %1764 = vmatmul.mubr.bf16.gmra.mxu0 %v1463
        %v1765 = vpop.f32.mrf.mxu0
        %v1766 = vadd.f32 %v1524, %v1765
        %v1767 = vpop.f32.mrf.mxu0
        %v1768 = vadd.f32 %v1528, %v1767
        %v1769 = vpop.f32.mrf.mxu0
        %v1770 = vadd.f32 %v1524, %v1769
        %v1771 = vpop.f32.mrf.mxu0
        %v1772 = vadd.f32 %v1528, %v1771
        %1773 = vmatprep.mubr.bf16.mxu0 %v1466
        %1774 = vmatmul.mubr.bf16.gmra.mxu0 %v1465
        %v1775 = vpop.f32.mrf.mxu0
        %v1776 = vadd.f32 %v1524, %v1775
        %v1777 = vpop.f32.mrf.mxu0
        %v1778 = vadd.f32 %v1528, %v1777
        %v1779 = vpop.f32.mrf.mxu0
        %v1780 = vadd.f32 %v1524, %v1779
        %v1781 = vpop.f32.mrf.mxu0
        %v1782 = vadd.f32 %v1528, %v1781
        %1783 = vmatprep.mubr.bf16.mxu0 %v1468
        %1784 = vmatmul.mubr.bf16.gmra.mxu0 %v1467
        %v1785 = vpop.f32.mrf.mxu0
        %v1786 = vadd.f32 %v1524, %v1785
        %v1787 = vpop.f32.mrf.mxu0
        %v1788 = vadd.f32 %v1528, %v1787
        %v1789 = vpop.f32.mrf.mxu0
        %v1790 = vadd.f32 %v1524, %v1789
        %v1791 = vpop.f32.mrf.mxu0
        %v1792 = vadd.f32 %v1528, %v1791
        %1793 = vmatprep.mubr.bf16.mxu0 %v1470
        %1794 = vmatmul.mubr.bf16.gmra.mxu0 %v1469
        %v1795 = vpop.f32.mrf.mxu0
        %v1796 = vadd.f32 %v1524, %v1795
        %v1797 = vpop.f32.mrf.mxu0
        %v1798 = vadd.f32 %v1528, %v1797
        %v1799 = vpop.f32.mrf.mxu0
        %v1800 = vadd.f32 %v1524, %v1799
        %v1801 = vpop.f32.mrf.mxu0
        %v1802 = vadd.f32 %v1528, %v1801
        %1803 = vmatprep.mubr.bf16.mxu0 %v1472
        %1804 = vmatmul.mubr.bf16.gmra.mxu0 %v1471
        %v1805 = vpop.f32.mrf.mxu0
        %v1806 = vadd.f32 %v1524, %v1805
        %v1807 = vpop.f32.mrf.mxu0
        %v1808 = vadd.f32 %v1528, %v1807
        %v1809 = vpop.f32.mrf.mxu0
        %v1810 = vadd.f32 %v1524, %v1809
        %v1811 = vpop.f32.mrf.mxu0
        %v1812 = vadd.f32 %v1528, %v1811
        %1813 = vmatprep.mubr.bf16.mxu0 %v1474
        %1814 = vmatmul.mubr.bf16.gmra.mxu0 %v1473
        %v1815 = vpop.f32.mrf.mxu0
        %v1816 = vadd.f32 %v1524, %v1815
        %v1817 = vpop.f32.mrf.mxu0
        %v1818 = vadd.f32 %v1528, %v1817
        %v1819 = vpop.f32.mrf.mxu0
        %v1820 = vadd.f32 %v1524, %v1819
        %v1821 = vpop.f32.mrf.mxu0
        %v1822 = vadd.f32 %v1528, %v1821
        %1823 = vmatprep.mubr.bf16.mxu0 %v1476
        %1824 = vmatmul.mubr.bf16.gmra.mxu0 %v1475
        %v1825 = vpop.f32.mrf.mxu0
        %v1826 = vadd.f32 %v1524, %v1825
        %v1827 = vpop.f32.mrf.mxu0
        %v1828 = vadd.f32 %v1528, %v1827
        %v1829 = vpop.f32.mrf.mxu0
        %v1830 = vadd.f32 %v1524, %v1829
        %v1831 = vpop.f32.mrf.mxu0
        %v1832 = vadd.f32 %v1528, %v1831
        %1833 = vmatprep.mubr.bf16.mxu0 %v1478
        %1834 = vmatmul.mubr.bf16.gmra.mxu0 %v1477
        %v1835 = vpop.f32.mrf.mxu0
        %v1836 = vadd.f32 %v1524, %v1835
        %v1837 = vpop.f32.mrf.mxu0
        %v1838 = vadd.f32 %v1528, %v1837
        %v1839 = vpop.f32.mrf.mxu0
        %v1840 = vadd.f32 %v1524, %v1839
        %v1841 = vpop.f32.mrf.mxu0
        %v1842 = vadd.f32 %v1528, %v1841
        %1843 = vmatprep.mubr.bf16.mxu0 %v1480
        %1844 = vmatmul.mubr.bf16.gmra.mxu0 %v1479
        %v1845 = vpop.f32.mrf.mxu0
        %v1846 = vadd.f32 %v1524, %v1845
        %v1847 = vpop.f32.mrf.mxu0
        %v1848 = vadd.f32 %v1528, %v1847
        %v1849 = vpop.f32.mrf.mxu0
        %v1850 = vadd.f32 %v1524, %v1849
        %v1851 = vpop.f32.mrf.mxu0
        %v1852 = vadd.f32 %v1528, %v1851
        %1853 = vmatprep.mubr.bf16.mxu0 %v1482
        %1854 = vmatmul.mubr.bf16.gmra.mxu0 %v1481
        %v1855 = vpop.f32.mrf.mxu0
        %v1856 = vadd.f32 %v1524, %v1855
        %v1857 = vpop.f32.mrf.mxu0
        %v1858 = vadd.f32 %v1528, %v1857
        %v1859 = vpop.f32.mrf.mxu0
        %v1860 = vadd.f32 %v1524, %v1859
        %v1861 = vpop.f32.mrf.mxu0
        %v1862 = vadd.f32 %v1528, %v1861
        %1863 = vmatprep.mubr.bf16.mxu0 %v1484
        %1864 = vmatmul.mubr.bf16.gmra.mxu0 %v1483
        %v1865 = vpop.f32.mrf.mxu0
        %v1866 = vadd.f32 %v1524, %v1865
        %v1867 = vpop.f32.mrf.mxu0
        %v1868 = vadd.f32 %v1528, %v1867
        %v1869 = vpop.f32.mrf.mxu0
        %v1870 = vadd.f32 %v1524, %v1869
        %v1871 = vpop.f32.mrf.mxu0
        %v1872 = vadd.f32 %v1528, %v1871
        %1873 = vmatprep.mubr.bf16.mxu0 %v1486
        %1874 = vmatmul.mubr.bf16.gmra.mxu0 %v1485
        %v1875 = vpop.f32.mrf.mxu0
        %v1876 = vadd.f32 %v1524, %v1875
        %v1877 = vpop.f32.mrf.mxu0
        %v1878 = vadd.f32 %v1528, %v1877
        %v1879 = vpop.f32.mrf.mxu0
        %v1880 = vadd.f32 %v1524, %v1879
        %v1881 = vpop.f32.mrf.mxu0
        %v1882 = vadd.f32 %v1528, %v1881
        %1883 = vdwg.mxu0
        %v1884 = vmax.f32 %v1726, 0.0
        %v1885 = vmax.f32 %v1728, 0.0
        %v1886 = vmax.f32 %v1730, 0.0
        %v1887 = vmax.f32 %v1732, 0.0
        %v1888 = vmax.f32 %v1736, 0.0
        %v1889 = vmax.f32 %v1738, 0.0
        %v1890 = vmax.f32 %v1740, 0.0
        %v1891 = vmax.f32 %v1742, 0.0
        %v1892 = vmax.f32 %v1746, 0.0
        %v1893 = vmax.f32 %v1748, 0.0
        %v1894 = vmax.f32 %v1750, 0.0
        %v1895 = vmax.f32 %v1752, 0.0
        %v1896 = vmax.f32 %v1756, 0.0
        %v1897 = vmax.f32 %v1758, 0.0
        %v1898 = vmax.f32 %v1760, 0.0
        %v1899 = vmax.f32 %v1762, 0.0
        %v1900 = vmax.f32 %v1766, 0.0
        %v1901 = vmax.f32 %v1768, 0.0
        %v1902 = vmax.f32 %v1770, 0.0
        %v1903 = vmax.f32 %v1772, 0.0
        %v1904 = vmax.f32 %v1776, 0.0
        %v1905 = vmax.f32 %v1778, 0.0
        %v1906 = vmax.f32 %v1780, 0.0
        %v1907 = vmax.f32 %v1782, 0.0
        %v1908 = vmax.f32 %v1786, 0.0
        %v1909 = vmax.f32 %v1788, 0.0
        %v1910 = vmax.f32 %v1790, 0.0
        %v1911 = vmax.f32 %v1792, 0.0
        %v1912 = vmax.f32 %v1796, 0.0
        %v1913 = vmax.f32 %v1798, 0.0
        %v1914 = vmax.f32 %v1800, 0.0
        %v1915 = vmax.f32 %v1802, 0.0
        %v1916 = vmax.f32 %v1806, 0.0
        %v1917 = vmax.f32 %v1808, 0.0
        %v1918 = vmax.f32 %v1810, 0.0
        %v1919 = vmax.f32 %v1812, 0.0
        %v1920 = vmax.f32 %v1816, 0.0
        %v1921 = vmax.f32 %v1818, 0.0
        %v1922 = vmax.f32 %v1820, 0.0
        %v1923 = vmax.f32 %v1822, 0.0
        %v1924 = vmax.f32 %v1826, 0.0
        %v1925 = vmax.f32 %v1828, 0.0
        %v1926 = vmax.f32 %v1830, 0.0
        %v1927 = vmax.f32 %v1832, 0.0
        %v1928 = vmax.f32 %v1836, 0.0
        %v1929 = vmax.f32 %v1838, 0.0
        %v1930 = vmax.f32 %v1840, 0.0
        %v1931 = vmax.f32 %v1842, 0.0
        %v1932 = vmax.f32 %v1846, 0.0
        %v1933 = vmax.f32 %v1848, 0.0
        %v1934 = vmax.f32 %v1850, 0.0
        %v1935 = vmax.f32 %v1852, 0.0
        %v1936 = vmax.f32 %v1856, 0.0
        %v1937 = vmax.f32 %v1858, 0.0
        %v1938 = vmax.f32 %v1860, 0.0
        %v1939 = vmax.f32 %v1862, 0.0
        %v1940 = vmax.f32 %v1866, 0.0
        %v1941 = vmax.f32 %v1868, 0.0
        %v1942 = vmax.f32 %v1870, 0.0
        %v1943 = vmax.f32 %v1872, 0.0
        %v1944 = vmax.f32 %v1876, 0.0
        %v1945 = vmax.f32 %v1878, 0.0
        %v1946 = vmax.f32 %v1880, 0.0
        %v1947 = vmax.f32 %v1882, 0.0
        %v1948 = vadd.f32 %v898, %v1884
        %v1949 = vadd.f32 %v899, %v1885
        %v1950 = vadd.f32 %v900, %v1886
        %v1951 = vadd.f32 %v901, %v1887
        %v1952 = vadd.f32 %v902, %v1888
        %v1953 = vadd.f32 %v903, %v1889
        %v1954 = vadd.f32 %v904, %v1890
        %v1955 = vadd.f32 %v905, %v1891
        %v1956 = vadd.f32 %v906, %v1892
        %v1957 = vadd.f32 %v907, %v1893
        %v1958 = vadd.f32 %v908, %v1894
        %v1959 = vadd.f32 %v909, %v1895
        %v1960 = vadd.f32 %v910, %v1896
        %v1961 = vadd.f32 %v911, %v1897
        %v1962 = vadd.f32 %v912, %v1898
        %v1963 = vadd.f32 %v913, %v1899
        %v1964 = vadd.f32 %v914, %v1900
        %v1965 = vadd.f32 %v915, %v1901
        %v1966 = vadd.f32 %v916, %v1902
        %v1967 = vadd.f32 %v917, %v1903
        %v1968 = vadd.f32 %v918, %v1904
        %v1969 = vadd.f32 %v919, %v1905
        %v1970 = vadd.f32 %v920, %v1906
        %v1971 = vadd.f32 %v921, %v1907
        %v1972 = vadd.f32 %v922, %v1908
        %v1973 = vadd.f32 %v923, %v1909
        %v1974 = vadd.f32 %v924, %v1910
        %v1975 = vadd.f32 %v925, %v1911
        %v1976 = vadd.f32 %v926, %v1912
        %v1977 = vadd.f32 %v927, %v1913
        %v1978 = vadd.f32 %v928, %v1914
        %v1979 = vadd.f32 %v929, %v1915
        %v1980 = vadd.f32 %v930, %v1916
        %v1981 = vadd.f32 %v931, %v1917
        %v1982 = vadd.f32 %v932, %v1918
        %v1983 = vadd.f32 %v933, %v1919
        %v1984 = vadd.f32 %v934, %v1920
        %v1985 = vadd.f32 %v935, %v1921
        %v1986 = vadd.f32 %v936, %v1922
        %v1987 = vadd.f32 %v937, %v1923
        %v1988 = vadd.f32 %v938, %v1924
        %v1989 = vadd.f32 %v939, %v1925
        %v1990 = vadd.f32 %v940, %v1926
        %v1991 = vadd.f32 %v941, %v1927
        %v1992 = vadd.f32 %v942, %v1928
        %v1993 = vadd.f32 %v943, %v1929
        %v1994 = vadd.f32 %v944, %v1930
        %v1995 = vadd.f32 %v945, %v1931
        %v1996 = vadd.f32 %v946, %v1932
        %v1997 = vadd.f32 %v947, %v1933
        %v1998 = vadd.f32 %v948, %v1934
        %v1999 = vadd.f32 %v949, %v1935
        %v2000 = vadd.f32 %v950, %v1936
        %v2001 = vadd.f32 %v951, %v1937
        %v2002 = vadd.f32 %v952, %v1938
        %v2003 = vadd.f32 %v953, %v1939
        %v2004 = vadd.f32 %v954, %v1940
        %v2005 = vadd.f32 %v955, %v1941
        %v2006 = vadd.f32 %v956, %v1942
        %v2007 = vadd.f32 %v957, %v1943
        %v2008 = vadd.f32 %v958, %v1944
        %v2009 = vadd.f32 %v959, %v1945
        %v2010 = vadd.f32 %v960, %v1946
        %v2011 = vadd.f32 %v961, %v1947
        %v2012 = vpack.c.bf16 %v1950, %v1948
        %v2013 = vpack.c.bf16 %v1951, %v1949
        %v2014 = vpack.c.bf16 %v1954, %v1952
        %v2015 = vpack.c.bf16 %v1955, %v1953
        %v2016 = vpack.c.bf16 %v1958, %v1956
        %v2017 = vpack.c.bf16 %v1959, %v1957
        %v2018 = vpack.c.bf16 %v1962, %v1960
        %v2019 = vpack.c.bf16 %v1963, %v1961
        %v2020 = vpack.c.bf16 %v1966, %v1964
        %v2021 = vpack.c.bf16 %v1967, %v1965
        %v2022 = vpack.c.bf16 %v1970, %v1968
        %v2023 = vpack.c.bf16 %v1971, %v1969
        %v2024 = vpack.c.bf16 %v1974, %v1972
        %v2025 = vpack.c.bf16 %v1975, %v1973
        %v2026 = vpack.c.bf16 %v1978, %v1976
        %v2027 = vpack.c.bf16 %v1979, %v1977
        %v2028 = vpack.c.bf16 %v1982, %v1980
        %v2029 = vpack.c.bf16 %v1983, %v1981
        %v2030 = vpack.c.bf16 %v1986, %v1984
        %v2031 = vpack.c.bf16 %v1987, %v1985
        %v2032 = vpack.c.bf16 %v1990, %v1988
        %v2033 = vpack.c.bf16 %v1991, %v1989
        %v2034 = vpack.c.bf16 %v1994, %v1992
        %v2035 = vpack.c.bf16 %v1995, %v1993
        %v2036 = vpack.c.bf16 %v1998, %v1996
        %v2037 = vpack.c.bf16 %v1999, %v1997
        %v2038 = vpack.c.bf16 %v2002, %v2000
        %v2039 = vpack.c.bf16 %v2003, %v2001
        %v2040 = vpack.c.bf16 %v2006, %v2004
        %v2041 = vpack.c.bf16 %v2007, %v2005
        %v2042 = vpack.c.bf16 %v2010, %v2008
        %v2043 = vpack.c.bf16 %v2011, %v2009
        %v2044 = vld [vmem:[#allocation10] sm:$0xff]
        %v2045 = vld [vmem:[#allocation10 + $0x8] sm:$0xff]
        %v2046 = vld [vmem:[#allocation10 + $0x10] sm:$0xff]
        %v2047 = vld [vmem:[#allocation10 + $0x18] sm:$0xff]
        %v2048 = vld [vmem:[#allocation10 + $0x20] sm:$0xff]
        %v2049 = vld [vmem:[#allocation10 + $0x28] sm:$0xff]
        %v2050 = vld [vmem:[#allocation10 + $0x30] sm:$0xff]
        %v2051 = vld [vmem:[#allocation10 + $0x38] sm:$0xff]
        %v2052 = vld [vmem:[#allocation10 + $0x40] sm:$0xff]
        %v2053 = vld [vmem:[#allocation10 + $0x48] sm:$0xff]
        %v2054 = vld [vmem:[#allocation10 + $0x50] sm:$0xff]
        %v2055 = vld [vmem:[#allocation10 + $0x58] sm:$0xff]
        %v2056 = vld [vmem:[#allocation10 + $0x60] sm:$0xff]
        %v2057 = vld [vmem:[#allocation10 + $0x68] sm:$0xff]
        %v2058 = vld [vmem:[#allocation10 + $0x70] sm:$0xff]
        %v2059 = vld [vmem:[#allocation10 + $0x78] sm:$0xff]
        %v2060 = vld [vmem:[#allocation10 + $0x80] sm:$0xff]
        %v2061 = vld [vmem:[#allocation10 + $0x88] sm:$0xff]
        %v2062 = vld [vmem:[#allocation10 + $0x90] sm:$0xff]
        %v2063 = vld [vmem:[#allocation10 + $0x98] sm:$0xff]
        %v2064 = vld [vmem:[#allocation10 + $0xa0] sm:$0xff]
        %v2065 = vld [vmem:[#allocation10 + $0xa8] sm:$0xff]
        %v2066 = vld [vmem:[#allocation10 + $0xb0] sm:$0xff]
        %v2067 = vld [vmem:[#allocation10 + $0xb8] sm:$0xff]
        %v2068 = vld [vmem:[#allocation10 + $0xc0] sm:$0xff]
        %v2069 = vld [vmem:[#allocation10 + $0xc8] sm:$0xff]
        %v2070 = vld [vmem:[#allocation10 + $0xd0] sm:$0xff]
        %v2071 = vld [vmem:[#allocation10 + $0xd8] sm:$0xff]
        %v2072 = vld [vmem:[#allocation10 + $0xe0] sm:$0xff]
        %v2073 = vld [vmem:[#allocation10 + $0xe8] sm:$0xff]
        %v2074 = vld [vmem:[#allocation10 + $0xf0] sm:$0xff]
        %v2075 = vld [vmem:[#allocation10 + $0xf8] sm:$0xff]
        %v2076 = vld [vmem:[%s8] sm:$0x3]
        %v2078 = vlaneseq
        %v2079 = vshrl.u32 %v2078, 7
        %v2080 = vsub.s32 0, %v2079
        %v2081 = vrot.slane %v2076, %v2080
        %v2082 = vlaneseq
        %v2083 = vshrl.u32 %v2082, 7
        %v2084 = vsub.s32 1, %v2083
        %v2085 = vrot.slane %v2076, %v2084
        %v2120 = vunpack.c.l.b16 %v2044
        %v2121 = vunpack.c.h.b16 %v2044
        %v2122 = vunpack.c.l.b16 %v2045
        %v2123 = vunpack.c.h.b16 %v2045
        %v2124 = vunpack.c.l.b16 %v2046
        %v2125 = vunpack.c.h.b16 %v2046
        %v2126 = vunpack.c.l.b16 %v2047
        %v2127 = vunpack.c.h.b16 %v2047
        %v2128 = vunpack.c.l.b16 %v2048
        %v2129 = vunpack.c.h.b16 %v2048
        %v2130 = vunpack.c.l.b16 %v2049
        %v2131 = vunpack.c.h.b16 %v2049
        %v2132 = vunpack.c.l.b16 %v2050
        %v2133 = vunpack.c.h.b16 %v2050
        %v2134 = vunpack.c.l.b16 %v2051
        %v2135 = vunpack.c.h.b16 %v2051
        %v2136 = vunpack.c.l.b16 %v2052
        %v2137 = vunpack.c.h.b16 %v2052
        %v2138 = vunpack.c.l.b16 %v2053
        %v2139 = vunpack.c.h.b16 %v2053
        %v2140 = vunpack.c.l.b16 %v2054
        %v2141 = vunpack.c.h.b16 %v2054
        %v2142 = vunpack.c.l.b16 %v2055
        %v2143 = vunpack.c.h.b16 %v2055
        %v2144 = vunpack.c.l.b16 %v2056
        %v2145 = vunpack.c.h.b16 %v2056
        %v2146 = vunpack.c.l.b16 %v2057
        %v2147 = vunpack.c.h.b16 %v2057
        %v2148 = vunpack.c.l.b16 %v2058
        %v2149 = vunpack.c.h.b16 %v2058
        %v2150 = vunpack.c.l.b16 %v2059
        %v2151 = vunpack.c.h.b16 %v2059
        %v2152 = vunpack.c.l.b16 %v2060
        %v2153 = vunpack.c.h.b16 %v2060
        %v2154 = vunpack.c.l.b16 %v2061
        %v2155 = vunpack.c.h.b16 %v2061
        %v2156 = vunpack.c.l.b16 %v2062
        %v2157 = vunpack.c.h.b16 %v2062
        %v2158 = vunpack.c.l.b16 %v2063
        %v2159 = vunpack.c.h.b16 %v2063
        %v2160 = vunpack.c.l.b16 %v2064
        %v2161 = vunpack.c.h.b16 %v2064
        %v2162 = vunpack.c.l.b16 %v2065
        %v2163 = vunpack.c.h.b16 %v2065
        %v2164 = vunpack.c.l.b16 %v2066
        %v2165 = vunpack.c.h.b16 %v2066
        %v2166 = vunpack.c.l.b16 %v2067
        %v2167 = vunpack.c.h.b16 %v2067
        %v2168 = vunpack.c.l.b16 %v2068
        %v2169 = vunpack.c.h.b16 %v2068
        %v2170 = vunpack.c.l.b16 %v2069
        %v2171 = vunpack.c.h.b16 %v2069
        %v2172 = vunpack.c.l.b16 %v2070
        %v2173 = vunpack.c.h.b16 %v2070
        %v2174 = vunpack.c.l.b16 %v2071
        %v2175 = vunpack.c.h.b16 %v2071
        %v2176 = vunpack.c.l.b16 %v2072
        %v2177 = vunpack.c.h.b16 %v2072
        %v2178 = vunpack.c.l.b16 %v2073
        %v2179 = vunpack.c.h.b16 %v2073
        %v2180 = vunpack.c.l.b16 %v2074
        %v2181 = vunpack.c.h.b16 %v2074
        %v2182 = vunpack.c.l.b16 %v2075
        %v2183 = vunpack.c.h.b16 %v2075
        %v2184 = vpack.c.b16 %v2122, %v2120
        %v2185 = vpack.c.b16 %v2123, %v2121
        %v2186 = vpack.c.b16 %v2126, %v2124
        %v2187 = vpack.c.b16 %v2127, %v2125
        %v2188 = vpack.c.b16 %v2130, %v2128
        %v2189 = vpack.c.b16 %v2131, %v2129
        %v2190 = vpack.c.b16 %v2134, %v2132
        %v2191 = vpack.c.b16 %v2135, %v2133
        %v2192 = vpack.c.b16 %v2138, %v2136
        %v2193 = vpack.c.b16 %v2139, %v2137
        %v2194 = vpack.c.b16 %v2142, %v2140
        %v2195 = vpack.c.b16 %v2143, %v2141
        %v2196 = vpack.c.b16 %v2146, %v2144
        %v2197 = vpack.c.b16 %v2147, %v2145
        %v2198 = vpack.c.b16 %v2150, %v2148
        %v2199 = vpack.c.b16 %v2151, %v2149
        %v2200 = vpack.c.b16 %v2154, %v2152
        %v2201 = vpack.c.b16 %v2155, %v2153
        %v2202 = vpack.c.b16 %v2158, %v2156
        %v2203 = vpack.c.b16 %v2159, %v2157
        %v2204 = vpack.c.b16 %v2162, %v2160
        %v2205 = vpack.c.b16 %v2163, %v2161
        %v2206 = vpack.c.b16 %v2166, %v2164
        %v2207 = vpack.c.b16 %v2167, %v2165
        %v2208 = vpack.c.b16 %v2170, %v2168
        %v2209 = vpack.c.b16 %v2171, %v2169
        %v2210 = vpack.c.b16 %v2174, %v2172
        %v2211 = vpack.c.b16 %v2175, %v2173
        %v2212 = vpack.c.b16 %v2178, %v2176
        %v2213 = vpack.c.b16 %v2179, %v2177
        %v2214 = vpack.c.b16 %v2182, %v2180
        %v2215 = vpack.c.b16 %v2183, %v2181
        %2248 = vmatprep.subr.bf16.mxu0 %v2199
        %2249 = vmatpush1.bf16.msra.mxu0 %v2198
        %2250 = vmatprep.subr.bf16.mxu0 %v2197
        %2251 = vmatpush1.bf16.msra.mxu0 %v2196
        %2252 = vmatprep.subr.bf16.mxu0 %v2195
        %2253 = vmatpush1.bf16.msra.mxu0 %v2194
        %2254 = vmatprep.subr.bf16.mxu0 %v2193
        %2255 = vmatpush1.bf16.msra.mxu0 %v2192
        %2256 = vmatprep.subr.bf16.mxu0 %v2191
        %2257 = vmatpush1.bf16.msra.mxu0 %v2190
        %2258 = vmatprep.subr.bf16.mxu0 %v2189
        %2259 = vmatpush1.bf16.msra.mxu0 %v2188
        %2260 = vmatprep.subr.bf16.mxu0 %v2187
        %2261 = vmatpush1.bf16.msra.mxu0 %v2186
        %2262 = vmatprep.subr.bf16.mxu0 %v2185
        %2263 = vmatpush1.bf16.msra.mxu0 %v2184
        %2264 = vmatprep.subr.bf16.mxu0 %v2215
        %2265 = vmatpush2.bf16.msra.mxu0 %v2214
        %2266 = vmatprep.subr.bf16.mxu0 %v2213
        %2267 = vmatpush2.bf16.msra.mxu0 %v2212
        %2268 = vmatprep.subr.bf16.mxu0 %v2211
        %2269 = vmatpush2.bf16.msra.mxu0 %v2210
        %2270 = vmatprep.subr.bf16.mxu0 %v2209
        %2271 = vmatpush2.bf16.msra.mxu0 %v2208
        %2272 = vmatprep.subr.bf16.mxu0 %v2207
        %2273 = vmatpush2.bf16.msra.mxu0 %v2206
        %2274 = vmatprep.subr.bf16.mxu0 %v2205
        %2275 = vmatpush2.bf16.msra.mxu0 %v2204
        %2276 = vmatprep.subr.bf16.mxu0 %v2203
        %2277 = vmatpush2.bf16.msra.mxu0 %v2202
        %2278 = vmatprep.subr.bf16.mxu0 %v2201
        %2279 = vmatpush2.bf16.msra.mxu0 %v2200
        %2280 = vmatprep.mubr.bf16.mxu0 %v2013
        %2281 = vmatmul.mubr.bf16.gmra.mxu0 %v2012
        %v2282 = vpop.f32.mrf.mxu0
        %v2283 = vadd.f32 %v2081, %v2282
        %v2284 = vpop.f32.mrf.mxu0
        %v2285 = vadd.f32 %v2085, %v2284
        %v2286 = vpop.f32.mrf.mxu0
        %v2287 = vadd.f32 %v2081, %v2286
        %v2288 = vpop.f32.mrf.mxu0
        %v2289 = vadd.f32 %v2085, %v2288
        %2290 = vmatprep.mubr.bf16.mxu0 %v2015
        %2291 = vmatmul.mubr.bf16.gmra.mxu0 %v2014
        %v2292 = vpop.f32.mrf.mxu0
        %v2293 = vadd.f32 %v2081, %v2292
        %v2294 = vpop.f32.mrf.mxu0
        %v2295 = vadd.f32 %v2085, %v2294
        %v2296 = vpop.f32.mrf.mxu0
        %v2297 = vadd.f32 %v2081, %v2296
        %v2298 = vpop.f32.mrf.mxu0
        %v2299 = vadd.f32 %v2085, %v2298
        %2300 = vmatprep.mubr.bf16.mxu0 %v2017
        %2301 = vmatmul.mubr.bf16.gmra.mxu0 %v2016
        %v2302 = vpop.f32.mrf.mxu0
        %v2303 = vadd.f32 %v2081, %v2302
        %v2304 = vpop.f32.mrf.mxu0
        %v2305 = vadd.f32 %v2085, %v2304
        %v2306 = vpop.f32.mrf.mxu0
        %v2307 = vadd.f32 %v2081, %v2306
        %v2308 = vpop.f32.mrf.mxu0
        %v2309 = vadd.f32 %v2085, %v2308
        %2310 = vmatprep.mubr.bf16.mxu0 %v2019
        %2311 = vmatmul.mubr.bf16.gmra.mxu0 %v2018
        %v2312 = vpop.f32.mrf.mxu0
        %v2313 = vadd.f32 %v2081, %v2312
        %v2314 = vpop.f32.mrf.mxu0
        %v2315 = vadd.f32 %v2085, %v2314
        %v2316 = vpop.f32.mrf.mxu0
        %v2317 = vadd.f32 %v2081, %v2316
        %v2318 = vpop.f32.mrf.mxu0
        %v2319 = vadd.f32 %v2085, %v2318
        %2320 = vmatprep.mubr.bf16.mxu0 %v2021
        %2321 = vmatmul.mubr.bf16.gmra.mxu0 %v2020
        %v2322 = vpop.f32.mrf.mxu0
        %v2323 = vadd.f32 %v2081, %v2322
        %v2324 = vpop.f32.mrf.mxu0
        %v2325 = vadd.f32 %v2085, %v2324
        %v2326 = vpop.f32.mrf.mxu0
        %v2327 = vadd.f32 %v2081, %v2326
        %v2328 = vpop.f32.mrf.mxu0
        %v2329 = vadd.f32 %v2085, %v2328
        %2330 = vmatprep.mubr.bf16.mxu0 %v2023
        %2331 = vmatmul.mubr.bf16.gmra.mxu0 %v2022
        %v2332 = vpop.f32.mrf.mxu0
        %v2333 = vadd.f32 %v2081, %v2332
        %v2334 = vpop.f32.mrf.mxu0
        %v2335 = vadd.f32 %v2085, %v2334
        %v2336 = vpop.f32.mrf.mxu0
        %v2337 = vadd.f32 %v2081, %v2336
        %v2338 = vpop.f32.mrf.mxu0
        %v2339 = vadd.f32 %v2085, %v2338
        %2340 = vmatprep.mubr.bf16.mxu0 %v2025
        %2341 = vmatmul.mubr.bf16.gmra.mxu0 %v2024
        %v2342 = vpop.f32.mrf.mxu0
        %v2343 = vadd.f32 %v2081, %v2342
        %v2344 = vpop.f32.mrf.mxu0
        %v2345 = vadd.f32 %v2085, %v2344
        %v2346 = vpop.f32.mrf.mxu0
        %v2347 = vadd.f32 %v2081, %v2346
        %v2348 = vpop.f32.mrf.mxu0
        %v2349 = vadd.f32 %v2085, %v2348
        %2350 = vmatprep.mubr.bf16.mxu0 %v2027
        %2351 = vmatmul.mubr.bf16.gmra.mxu0 %v2026
        %v2352 = vpop.f32.mrf.mxu0
        %v2353 = vadd.f32 %v2081, %v2352
        %v2354 = vpop.f32.mrf.mxu0
        %v2355 = vadd.f32 %v2085, %v2354
        %v2356 = vpop.f32.mrf.mxu0
        %v2357 = vadd.f32 %v2081, %v2356
        %v2358 = vpop.f32.mrf.mxu0
        %v2359 = vadd.f32 %v2085, %v2358
        %2360 = vmatprep.mubr.bf16.mxu0 %v2029
        %2361 = vmatmul.mubr.bf16.gmra.mxu0 %v2028
        %v2362 = vpop.f32.mrf.mxu0
        %v2363 = vadd.f32 %v2081, %v2362
        %v2364 = vpop.f32.mrf.mxu0
        %v2365 = vadd.f32 %v2085, %v2364
        %v2366 = vpop.f32.mrf.mxu0
        %v2367 = vadd.f32 %v2081, %v2366
        %v2368 = vpop.f32.mrf.mxu0
        %v2369 = vadd.f32 %v2085, %v2368
        %2370 = vmatprep.mubr.bf16.mxu0 %v2031
        %2371 = vmatmul.mubr.bf16.gmra.mxu0 %v2030
        %v2372 = vpop.f32.mrf.mxu0
        %v2373 = vadd.f32 %v2081, %v2372
        %v2374 = vpop.f32.mrf.mxu0
        %v2375 = vadd.f32 %v2085, %v2374
        %v2376 = vpop.f32.mrf.mxu0
        %v2377 = vadd.f32 %v2081, %v2376
        %v2378 = vpop.f32.mrf.mxu0
        %v2379 = vadd.f32 %v2085, %v2378
        %2380 = vmatprep.mubr.bf16.mxu0 %v2033
        %2381 = vmatmul.mubr.bf16.gmra.mxu0 %v2032
        %v2382 = vpop.f32.mrf.mxu0
        %v2383 = vadd.f32 %v2081, %v2382
        %v2384 = vpop.f32.mrf.mxu0
        %v2385 = vadd.f32 %v2085, %v2384
        %v2386 = vpop.f32.mrf.mxu0
        %v2387 = vadd.f32 %v2081, %v2386
        %v2388 = vpop.f32.mrf.mxu0
        %v2389 = vadd.f32 %v2085, %v2388
        %2390 = vmatprep.mubr.bf16.mxu0 %v2035
        %2391 = vmatmul.mubr.bf16.gmra.mxu0 %v2034
        %v2392 = vpop.f32.mrf.mxu0
        %v2393 = vadd.f32 %v2081, %v2392
        %v2394 = vpop.f32.mrf.mxu0
        %v2395 = vadd.f32 %v2085, %v2394
        %v2396 = vpop.f32.mrf.mxu0
        %v2397 = vadd.f32 %v2081, %v2396
        %v2398 = vpop.f32.mrf.mxu0
        %v2399 = vadd.f32 %v2085, %v2398
        %2400 = vmatprep.mubr.bf16.mxu0 %v2037
        %2401 = vmatmul.mubr.bf16.gmra.mxu0 %v2036
        %v2402 = vpop.f32.mrf.mxu0
        %v2403 = vadd.f32 %v2081, %v2402
        %v2404 = vpop.f32.mrf.mxu0
        %v2405 = vadd.f32 %v2085, %v2404
        %v2406 = vpop.f32.mrf.mxu0
        %v2407 = vadd.f32 %v2081, %v2406
        %v2408 = vpop.f32.mrf.mxu0
        %v2409 = vadd.f32 %v2085, %v2408
        %2410 = vmatprep.mubr.bf16.mxu0 %v2039
        %2411 = vmatmul.mubr.bf16.gmra.mxu0 %v2038
        %v2412 = vpop.f32.mrf.mxu0
        %v2413 = vadd.f32 %v2081, %v2412
        %v2414 = vpop.f32.mrf.mxu0
        %v2415 = vadd.f32 %v2085, %v2414
        %v2416 = vpop.f32.mrf.mxu0
        %v2417 = vadd.f32 %v2081, %v2416
        %v2418 = vpop.f32.mrf.mxu0
        %v2419 = vadd.f32 %v2085, %v2418
        %2420 = vmatprep.mubr.bf16.mxu0 %v2041
        %2421 = vmatmul.mubr.bf16.gmra.mxu0 %v2040
        %v2422 = vpop.f32.mrf.mxu0
        %v2423 = vadd.f32 %v2081, %v2422
        %v2424 = vpop.f32.mrf.mxu0
        %v2425 = vadd.f32 %v2085, %v2424
        %v2426 = vpop.f32.mrf.mxu0
        %v2427 = vadd.f32 %v2081, %v2426
        %v2428 = vpop.f32.mrf.mxu0
        %v2429 = vadd.f32 %v2085, %v2428
        %2430 = vmatprep.mubr.bf16.mxu0 %v2043
        %2431 = vmatmul.mubr.bf16.gmra.mxu0 %v2042
        %v2432 = vpop.f32.mrf.mxu0
        %v2433 = vadd.f32 %v2081, %v2432
        %v2434 = vpop.f32.mrf.mxu0
        %v2435 = vadd.f32 %v2085, %v2434
        %v2436 = vpop.f32.mrf.mxu0
        %v2437 = vadd.f32 %v2081, %v2436
        %v2438 = vpop.f32.mrf.mxu0
        %v2439 = vadd.f32 %v2085, %v2438
        %2440 = vdwg.mxu0
        %v2441 = vmax.f32 %v2283, 0.0
        %v2442 = vmax.f32 %v2285, 0.0
        %v2443 = vmax.f32 %v2287, 0.0
        %v2444 = vmax.f32 %v2289, 0.0
        %v2445 = vmax.f32 %v2293, 0.0
        %v2446 = vmax.f32 %v2295, 0.0
        %v2447 = vmax.f32 %v2297, 0.0
        %v2448 = vmax.f32 %v2299, 0.0
        %v2449 = vmax.f32 %v2303, 0.0
        %v2450 = vmax.f32 %v2305, 0.0
        %v2451 = vmax.f32 %v2307, 0.0
        %v2452 = vmax.f32 %v2309, 0.0
        %v2453 = vmax.f32 %v2313, 0.0
        %v2454 = vmax.f32 %v2315, 0.0
        %v2455 = vmax.f32 %v2317, 0.0
        %v2456 = vmax.f32 %v2319, 0.0
        %v2457 = vmax.f32 %v2323, 0.0
        %v2458 = vmax.f32 %v2325, 0.0
        %v2459 = vmax.f32 %v2327, 0.0
        %v2460 = vmax.f32 %v2329, 0.0
        %v2461 = vmax.f32 %v2333, 0.0
        %v2462 = vmax.f32 %v2335, 0.0
        %v2463 = vmax.f32 %v2337, 0.0
        %v2464 = vmax.f32 %v2339, 0.0
        %v2465 = vmax.f32 %v2343, 0.0
        %v2466 = vmax.f32 %v2345, 0.0
        %v2467 = vmax.f32 %v2347, 0.0
        %v2468 = vmax.f32 %v2349, 0.0
        %v2469 = vmax.f32 %v2353, 0.0
        %v2470 = vmax.f32 %v2355, 0.0
        %v2471 = vmax.f32 %v2357, 0.0
        %v2472 = vmax.f32 %v2359, 0.0
        %v2473 = vmax.f32 %v2363, 0.0
        %v2474 = vmax.f32 %v2365, 0.0
        %v2475 = vmax.f32 %v2367, 0.0
        %v2476 = vmax.f32 %v2369, 0.0
        %v2477 = vmax.f32 %v2373, 0.0
        %v2478 = vmax.f32 %v2375, 0.0
        %v2479 = vmax.f32 %v2377, 0.0
        %v2480 = vmax.f32 %v2379, 0.0
        %v2481 = vmax.f32 %v2383, 0.0
        %v2482 = vmax.f32 %v2385, 0.0
        %v2483 = vmax.f32 %v2387, 0.0
        %v2484 = vmax.f32 %v2389, 0.0
        %v2485 = vmax.f32 %v2393, 0.0
        %v2486 = vmax.f32 %v2395, 0.0
        %v2487 = vmax.f32 %v2397, 0.0
        %v2488 = vmax.f32 %v2399, 0.0
        %v2489 = vmax.f32 %v2403, 0.0
        %v2490 = vmax.f32 %v2405, 0.0
        %v2491 = vmax.f32 %v2407, 0.0
        %v2492 = vmax.f32 %v2409, 0.0
        %v2493 = vmax.f32 %v2413, 0.0
        %v2494 = vmax.f32 %v2415, 0.0
        %v2495 = vmax.f32 %v2417, 0.0
        %v2496 = vmax.f32 %v2419, 0.0
        %v2497 = vmax.f32 %v2423, 0.0
        %v2498 = vmax.f32 %v2425, 0.0
        %v2499 = vmax.f32 %v2427, 0.0
        %v2500 = vmax.f32 %v2429, 0.0
        %v2501 = vmax.f32 %v2433, 0.0
        %v2502 = vmax.f32 %v2435, 0.0
        %v2503 = vmax.f32 %v2437, 0.0
        %v2504 = vmax.f32 %v2439, 0.0
        %v2505 = vpack.c.bf16 %v2443, %v2441
        %v2506 = vpack.c.bf16 %v2444, %v2442
        %v2507 = vpack.c.bf16 %v2447, %v2445
        %v2508 = vpack.c.bf16 %v2448, %v2446
        %v2509 = vpack.c.bf16 %v2451, %v2449
        %v2510 = vpack.c.bf16 %v2452, %v2450
        %v2511 = vpack.c.bf16 %v2455, %v2453
        %v2512 = vpack.c.bf16 %v2456, %v2454
        %v2513 = vpack.c.bf16 %v2459, %v2457
        %v2514 = vpack.c.bf16 %v2460, %v2458
        %v2515 = vpack.c.bf16 %v2463, %v2461
        %v2516 = vpack.c.bf16 %v2464, %v2462
        %v2517 = vpack.c.bf16 %v2467, %v2465
        %v2518 = vpack.c.bf16 %v2468, %v2466
        %v2519 = vpack.c.bf16 %v2471, %v2469
        %v2520 = vpack.c.bf16 %v2472, %v2470
        %v2521 = vpack.c.bf16 %v2475, %v2473
        %v2522 = vpack.c.bf16 %v2476, %v2474
        %v2523 = vpack.c.bf16 %v2479, %v2477
        %v2524 = vpack.c.bf16 %v2480, %v2478
        %v2525 = vpack.c.bf16 %v2483, %v2481
        %v2526 = vpack.c.bf16 %v2484, %v2482
        %v2527 = vpack.c.bf16 %v2487, %v2485
        %v2528 = vpack.c.bf16 %v2488, %v2486
        %v2529 = vpack.c.bf16 %v2491, %v2489
        %v2530 = vpack.c.bf16 %v2492, %v2490
        %v2531 = vpack.c.bf16 %v2495, %v2493
        %v2532 = vpack.c.bf16 %v2496, %v2494
        %v2533 = vpack.c.bf16 %v2499, %v2497
        %v2534 = vpack.c.bf16 %v2500, %v2498
        %v2535 = vpack.c.bf16 %v2503, %v2501
        %v2536 = vpack.c.bf16 %v2504, %v2502
        %v2537 = vld [vmem:[#allocation11] sm:$0xff]
        %v2538 = vld [vmem:[#allocation11 + $0x8] sm:$0xff]
        %v2539 = vld [vmem:[#allocation11 + $0x10] sm:$0xff]
        %v2540 = vld [vmem:[#allocation11 + $0x18] sm:$0xff]
        %v2541 = vld [vmem:[#allocation11 + $0x20] sm:$0xff]
        %v2542 = vld [vmem:[#allocation11 + $0x28] sm:$0xff]
        %v2543 = vld [vmem:[#allocation11 + $0x30] sm:$0xff]
        %v2544 = vld [vmem:[#allocation11 + $0x38] sm:$0xff]
        %v2545 = vld [vmem:[#allocation11 + $0x40] sm:$0xff]
        %v2546 = vld [vmem:[#allocation11 + $0x48] sm:$0xff]
        %v2547 = vld [vmem:[#allocation11 + $0x50] sm:$0xff]
        %v2548 = vld [vmem:[#allocation11 + $0x58] sm:$0xff]
        %v2549 = vld [vmem:[#allocation11 + $0x60] sm:$0xff]
        %v2550 = vld [vmem:[#allocation11 + $0x68] sm:$0xff]
        %v2551 = vld [vmem:[#allocation11 + $0x70] sm:$0xff]
        %v2552 = vld [vmem:[#allocation11 + $0x78] sm:$0xff]
        %v2553 = vld [vmem:[#allocation11 + $0x80] sm:$0xff]
        %v2554 = vld [vmem:[#allocation11 + $0x88] sm:$0xff]
        %v2555 = vld [vmem:[#allocation11 + $0x90] sm:$0xff]
        %v2556 = vld [vmem:[#allocation11 + $0x98] sm:$0xff]
        %v2557 = vld [vmem:[#allocation11 + $0xa0] sm:$0xff]
        %v2558 = vld [vmem:[#allocation11 + $0xa8] sm:$0xff]
        %v2559 = vld [vmem:[#allocation11 + $0xb0] sm:$0xff]
        %v2560 = vld [vmem:[#allocation11 + $0xb8] sm:$0xff]
        %v2561 = vld [vmem:[#allocation11 + $0xc0] sm:$0xff]
        %v2562 = vld [vmem:[#allocation11 + $0xc8] sm:$0xff]
        %v2563 = vld [vmem:[#allocation11 + $0xd0] sm:$0xff]
        %v2564 = vld [vmem:[#allocation11 + $0xd8] sm:$0xff]
        %v2565 = vld [vmem:[#allocation11 + $0xe0] sm:$0xff]
        %v2566 = vld [vmem:[#allocation11 + $0xe8] sm:$0xff]
        %v2567 = vld [vmem:[#allocation11 + $0xf0] sm:$0xff]
        %v2568 = vld [vmem:[#allocation11 + $0xf8] sm:$0xff]
        %v2569 = vld [vmem:[%s10] sm:$0x3]
        %v2571 = vlaneseq
        %v2572 = vshrl.u32 %v2571, 7
        %v2573 = vsub.s32 0, %v2572
        %v2574 = vrot.slane %v2569, %v2573
        %v2575 = vlaneseq
        %v2576 = vshrl.u32 %v2575, 7
        %v2577 = vsub.s32 1, %v2576
        %v2578 = vrot.slane %v2569, %v2577
        %v2613 = vunpack.c.l.b16 %v2537
        %v2614 = vunpack.c.h.b16 %v2537
        %v2615 = vunpack.c.l.b16 %v2538
        %v2616 = vunpack.c.h.b16 %v2538
        %v2617 = vunpack.c.l.b16 %v2539
        %v2618 = vunpack.c.h.b16 %v2539
        %v2619 = vunpack.c.l.b16 %v2540
        %v2620 = vunpack.c.h.b16 %v2540
        %v2621 = vunpack.c.l.b16 %v2541
        %v2622 = vunpack.c.h.b16 %v2541
        %v2623 = vunpack.c.l.b16 %v2542
        %v2624 = vunpack.c.h.b16 %v2542
        %v2625 = vunpack.c.l.b16 %v2543
        %v2626 = vunpack.c.h.b16 %v2543
        %v2627 = vunpack.c.l.b16 %v2544
        %v2628 = vunpack.c.h.b16 %v2544
        %v2629 = vunpack.c.l.b16 %v2545
        %v2630 = vunpack.c.h.b16 %v2545
        %v2631 = vunpack.c.l.b16 %v2546
        %v2632 = vunpack.c.h.b16 %v2546
        %v2633 = vunpack.c.l.b16 %v2547
        %v2634 = vunpack.c.h.b16 %v2547
        %v2635 = vunpack.c.l.b16 %v2548
        %v2636 = vunpack.c.h.b16 %v2548
        %v2637 = vunpack.c.l.b16 %v2549
        %v2638 = vunpack.c.h.b16 %v2549
        %v2639 = vunpack.c.l.b16 %v2550
        %v2640 = vunpack.c.h.b16 %v2550
        %v2641 = vunpack.c.l.b16 %v2551
        %v2642 = vunpack.c.h.b16 %v2551
        %v2643 = vunpack.c.l.b16 %v2552
        %v2644 = vunpack.c.h.b16 %v2552
        %v2645 = vunpack.c.l.b16 %v2553
        %v2646 = vunpack.c.h.b16 %v2553
        %v2647 = vunpack.c.l.b16 %v2554
        %v2648 = vunpack.c.h.b16 %v2554
        %v2649 = vunpack.c.l.b16 %v2555
        %v2650 = vunpack.c.h.b16 %v2555
        %v2651 = vunpack.c.l.b16 %v2556
        %v2652 = vunpack.c.h.b16 %v2556
        %v2653 = vunpack.c.l.b16 %v2557
        %v2654 = vunpack.c.h.b16 %v2557
        %v2655 = vunpack.c.l.b16 %v2558
        %v2656 = vunpack.c.h.b16 %v2558
        %v2657 = vunpack.c.l.b16 %v2559
        %v2658 = vunpack.c.h.b16 %v2559
        %v2659 = vunpack.c.l.b16 %v2560
        %v2660 = vunpack.c.h.b16 %v2560
        %v2661 = vunpack.c.l.b16 %v2561
        %v2662 = vunpack.c.h.b16 %v2561
        %v2663 = vunpack.c.l.b16 %v2562
        %v2664 = vunpack.c.h.b16 %v2562
        %v2665 = vunpack.c.l.b16 %v2563
        %v2666 = vunpack.c.h.b16 %v2563
        %v2667 = vunpack.c.l.b16 %v2564
        %v2668 = vunpack.c.h.b16 %v2564
        %v2669 = vunpack.c.l.b16 %v2565
        %v2670 = vunpack.c.h.b16 %v2565
        %v2671 = vunpack.c.l.b16 %v2566
        %v2672 = vunpack.c.h.b16 %v2566
        %v2673 = vunpack.c.l.b16 %v2567
        %v2674 = vunpack.c.h.b16 %v2567
        %v2675 = vunpack.c.l.b16 %v2568
        %v2676 = vunpack.c.h.b16 %v2568
        %v2677 = vpack.c.b16 %v2615, %v2613
        %v2678 = vpack.c.b16 %v2616, %v2614
        %v2679 = vpack.c.b16 %v2619, %v2617
        %v2680 = vpack.c.b16 %v2620, %v2618
        %v2681 = vpack.c.b16 %v2623, %v2621
        %v2682 = vpack.c.b16 %v2624, %v2622
        %v2683 = vpack.c.b16 %v2627, %v2625
        %v2684 = vpack.c.b16 %v2628, %v2626
        %v2685 = vpack.c.b16 %v2631, %v2629
        %v2686 = vpack.c.b16 %v2632, %v2630
        %v2687 = vpack.c.b16 %v2635, %v2633
        %v2688 = vpack.c.b16 %v2636, %v2634
        %v2689 = vpack.c.b16 %v2639, %v2637
        %v2690 = vpack.c.b16 %v2640, %v2638
        %v2691 = vpack.c.b16 %v2643, %v2641
        %v2692 = vpack.c.b16 %v2644, %v2642
        %v2693 = vpack.c.b16 %v2647, %v2645
        %v2694 = vpack.c.b16 %v2648, %v2646
        %v2695 = vpack.c.b16 %v2651, %v2649
        %v2696 = vpack.c.b16 %v2652, %v2650
        %v2697 = vpack.c.b16 %v2655, %v2653
        %v2698 = vpack.c.b16 %v2656, %v2654
        %v2699 = vpack.c.b16 %v2659, %v2657
        %v2700 = vpack.c.b16 %v2660, %v2658
        %v2701 = vpack.c.b16 %v2663, %v2661
        %v2702 = vpack.c.b16 %v2664, %v2662
        %v2703 = vpack.c.b16 %v2667, %v2665
        %v2704 = vpack.c.b16 %v2668, %v2666
        %v2705 = vpack.c.b16 %v2671, %v2669
        %v2706 = vpack.c.b16 %v2672, %v2670
        %v2707 = vpack.c.b16 %v2675, %v2673
        %v2708 = vpack.c.b16 %v2676, %v2674
        %2741 = vmatprep.subr.bf16.mxu0 %v2692
        %2742 = vmatpush1.bf16.msra.mxu0 %v2691
        %2743 = vmatprep.subr.bf16.mxu0 %v2690
        %2744 = vmatpush1.bf16.msra.mxu0 %v2689
        %2745 = vmatprep.subr.bf16.mxu0 %v2688
        %2746 = vmatpush1.bf16.msra.mxu0 %v2687
        %2747 = vmatprep.subr.bf16.mxu0 %v2686
        %2748 = vmatpush1.bf16.msra.mxu0 %v2685
        %2749 = vmatprep.subr.bf16.mxu0 %v2684
        %2750 = vmatpush1.bf16.msra.mxu0 %v2683
        %2751 = vmatprep.subr.bf16.mxu0 %v2682
        %2752 = vmatpush1.bf16.msra.mxu0 %v2681
        %2753 = vmatprep.subr.bf16.mxu0 %v2680
        %2754 = vmatpush1.bf16.msra.mxu0 %v2679
        %2755 = vmatprep.subr.bf16.mxu0 %v2678
        %2756 = vmatpush1.bf16.msra.mxu0 %v2677
        %2757 = vmatprep.subr.bf16.mxu0 %v2708
        %2758 = vmatpush2.bf16.msra.mxu0 %v2707
        %2759 = vmatprep.subr.bf16.mxu0 %v2706
        %2760 = vmatpush2.bf16.msra.mxu0 %v2705
        %2761 = vmatprep.subr.bf16.mxu0 %v2704
        %2762 = vmatpush2.bf16.msra.mxu0 %v2703
        %2763 = vmatprep.subr.bf16.mxu0 %v2702
        %2764 = vmatpush2.bf16.msra.mxu0 %v2701
        %2765 = vmatprep.subr.bf16.mxu0 %v2700
        %2766 = vmatpush2.bf16.msra.mxu0 %v2699
        %2767 = vmatprep.subr.bf16.mxu0 %v2698
        %2768 = vmatpush2.bf16.msra.mxu0 %v2697
        %2769 = vmatprep.subr.bf16.mxu0 %v2696
        %2770 = vmatpush2.bf16.msra.mxu0 %v2695
        %2771 = vmatprep.subr.bf16.mxu0 %v2694
        %2772 = vmatpush2.bf16.msra.mxu0 %v2693
        %2773 = vmatprep.mubr.bf16.mxu0 %v2506
        %2774 = vmatmul.mubr.bf16.gmra.mxu0 %v2505
        %v2775 = vpop.f32.mrf.mxu0
        %v2776 = vadd.f32 %v2574, %v2775
        %v2777 = vpop.f32.mrf.mxu0
        %v2778 = vadd.f32 %v2578, %v2777
        %v2779 = vpop.f32.mrf.mxu0
        %v2780 = vadd.f32 %v2574, %v2779
        %v2781 = vpop.f32.mrf.mxu0
        %v2782 = vadd.f32 %v2578, %v2781
        %2783 = vmatprep.mubr.bf16.mxu0 %v2508
        %2784 = vmatmul.mubr.bf16.gmra.mxu0 %v2507
        %v2785 = vpop.f32.mrf.mxu0
        %v2786 = vadd.f32 %v2574, %v2785
        %v2787 = vpop.f32.mrf.mxu0
        %v2788 = vadd.f32 %v2578, %v2787
        %v2789 = vpop.f32.mrf.mxu0
        %v2790 = vadd.f32 %v2574, %v2789
        %v2791 = vpop.f32.mrf.mxu0
        %v2792 = vadd.f32 %v2578, %v2791
        %2793 = vmatprep.mubr.bf16.mxu0 %v2510
        %2794 = vmatmul.mubr.bf16.gmra.mxu0 %v2509
        %v2795 = vpop.f32.mrf.mxu0
        %v2796 = vadd.f32 %v2574, %v2795
        %v2797 = vpop.f32.mrf.mxu0
        %v2798 = vadd.f32 %v2578, %v2797
        %v2799 = vpop.f32.mrf.mxu0
        %v2800 = vadd.f32 %v2574, %v2799
        %v2801 = vpop.f32.mrf.mxu0
        %v2802 = vadd.f32 %v2578, %v2801
        %2803 = vmatprep.mubr.bf16.mxu0 %v2512
        %2804 = vmatmul.mubr.bf16.gmra.mxu0 %v2511
        %v2805 = vpop.f32.mrf.mxu0
        %v2806 = vadd.f32 %v2574, %v2805
        %v2807 = vpop.f32.mrf.mxu0
        %v2808 = vadd.f32 %v2578, %v2807
        %v2809 = vpop.f32.mrf.mxu0
        %v2810 = vadd.f32 %v2574, %v2809
        %v2811 = vpop.f32.mrf.mxu0
        %v2812 = vadd.f32 %v2578, %v2811
        %2813 = vmatprep.mubr.bf16.mxu0 %v2514
        %2814 = vmatmul.mubr.bf16.gmra.mxu0 %v2513
        %v2815 = vpop.f32.mrf.mxu0
        %v2816 = vadd.f32 %v2574, %v2815
        %v2817 = vpop.f32.mrf.mxu0
        %v2818 = vadd.f32 %v2578, %v2817
        %v2819 = vpop.f32.mrf.mxu0
        %v2820 = vadd.f32 %v2574, %v2819
        %v2821 = vpop.f32.mrf.mxu0
        %v2822 = vadd.f32 %v2578, %v2821
        %2823 = vmatprep.mubr.bf16.mxu0 %v2516
        %2824 = vmatmul.mubr.bf16.gmra.mxu0 %v2515
        %v2825 = vpop.f32.mrf.mxu0
        %v2826 = vadd.f32 %v2574, %v2825
        %v2827 = vpop.f32.mrf.mxu0
        %v2828 = vadd.f32 %v2578, %v2827
        %v2829 = vpop.f32.mrf.mxu0
        %v2830 = vadd.f32 %v2574, %v2829
        %v2831 = vpop.f32.mrf.mxu0
        %v2832 = vadd.f32 %v2578, %v2831
        %2833 = vmatprep.mubr.bf16.mxu0 %v2518
        %2834 = vmatmul.mubr.bf16.gmra.mxu0 %v2517
        %v2835 = vpop.f32.mrf.mxu0
        %v2836 = vadd.f32 %v2574, %v2835
        %v2837 = vpop.f32.mrf.mxu0
        %v2838 = vadd.f32 %v2578, %v2837
        %v2839 = vpop.f32.mrf.mxu0
        %v2840 = vadd.f32 %v2574, %v2839
        %v2841 = vpop.f32.mrf.mxu0
        %v2842 = vadd.f32 %v2578, %v2841
        %2843 = vmatprep.mubr.bf16.mxu0 %v2520
        %2844 = vmatmul.mubr.bf16.gmra.mxu0 %v2519
        %v2845 = vpop.f32.mrf.mxu0
        %v2846 = vadd.f32 %v2574, %v2845
        %v2847 = vpop.f32.mrf.mxu0
        %v2848 = vadd.f32 %v2578, %v2847
        %v2849 = vpop.f32.mrf.mxu0
        %v2850 = vadd.f32 %v2574, %v2849
        %v2851 = vpop.f32.mrf.mxu0
        %v2852 = vadd.f32 %v2578, %v2851
        %2853 = vmatprep.mubr.bf16.mxu0 %v2522
        %2854 = vmatmul.mubr.bf16.gmra.mxu0 %v2521
        %v2855 = vpop.f32.mrf.mxu0
        %v2856 = vadd.f32 %v2574, %v2855
        %v2857 = vpop.f32.mrf.mxu0
        %v2858 = vadd.f32 %v2578, %v2857
        %v2859 = vpop.f32.mrf.mxu0
        %v2860 = vadd.f32 %v2574, %v2859
        %v2861 = vpop.f32.mrf.mxu0
        %v2862 = vadd.f32 %v2578, %v2861
        %2863 = vmatprep.mubr.bf16.mxu0 %v2524
        %2864 = vmatmul.mubr.bf16.gmra.mxu0 %v2523
        %v2865 = vpop.f32.mrf.mxu0
        %v2866 = vadd.f32 %v2574, %v2865
        %v2867 = vpop.f32.mrf.mxu0
        %v2868 = vadd.f32 %v2578, %v2867
        %v2869 = vpop.f32.mrf.mxu0
        %v2870 = vadd.f32 %v2574, %v2869
        %v2871 = vpop.f32.mrf.mxu0
        %v2872 = vadd.f32 %v2578, %v2871
        %2873 = vmatprep.mubr.bf16.mxu0 %v2526
        %2874 = vmatmul.mubr.bf16.gmra.mxu0 %v2525
        %v2875 = vpop.f32.mrf.mxu0
        %v2876 = vadd.f32 %v2574, %v2875
        %v2877 = vpop.f32.mrf.mxu0
        %v2878 = vadd.f32 %v2578, %v2877
        %v2879 = vpop.f32.mrf.mxu0
        %v2880 = vadd.f32 %v2574, %v2879
        %v2881 = vpop.f32.mrf.mxu0
        %v2882 = vadd.f32 %v2578, %v2881
        %2883 = vmatprep.mubr.bf16.mxu0 %v2528
        %2884 = vmatmul.mubr.bf16.gmra.mxu0 %v2527
        %v2885 = vpop.f32.mrf.mxu0
        %v2886 = vadd.f32 %v2574, %v2885
        %v2887 = vpop.f32.mrf.mxu0
        %v2888 = vadd.f32 %v2578, %v2887
        %v2889 = vpop.f32.mrf.mxu0
        %v2890 = vadd.f32 %v2574, %v2889
        %v2891 = vpop.f32.mrf.mxu0
        %v2892 = vadd.f32 %v2578, %v2891
        %2893 = vmatprep.mubr.bf16.mxu0 %v2530
        %2894 = vmatmul.mubr.bf16.gmra.mxu0 %v2529
        %v2895 = vpop.f32.mrf.mxu0
        %v2896 = vadd.f32 %v2574, %v2895
        %v2897 = vpop.f32.mrf.mxu0
        %v2898 = vadd.f32 %v2578, %v2897
        %v2899 = vpop.f32.mrf.mxu0
        %v2900 = vadd.f32 %v2574, %v2899
        %v2901 = vpop.f32.mrf.mxu0
        %v2902 = vadd.f32 %v2578, %v2901
        %2903 = vmatprep.mubr.bf16.mxu0 %v2532
        %2904 = vmatmul.mubr.bf16.gmra.mxu0 %v2531
        %v2905 = vpop.f32.mrf.mxu0
        %v2906 = vadd.f32 %v2574, %v2905
        %v2907 = vpop.f32.mrf.mxu0
        %v2908 = vadd.f32 %v2578, %v2907
        %v2909 = vpop.f32.mrf.mxu0
        %v2910 = vadd.f32 %v2574, %v2909
        %v2911 = vpop.f32.mrf.mxu0
        %v2912 = vadd.f32 %v2578, %v2911
        %2913 = vmatprep.mubr.bf16.mxu0 %v2534
        %2914 = vmatmul.mubr.bf16.gmra.mxu0 %v2533
        %v2915 = vpop.f32.mrf.mxu0
        %v2916 = vadd.f32 %v2574, %v2915
        %v2917 = vpop.f32.mrf.mxu0
        %v2918 = vadd.f32 %v2578, %v2917
        %v2919 = vpop.f32.mrf.mxu0
        %v2920 = vadd.f32 %v2574, %v2919
        %v2921 = vpop.f32.mrf.mxu0
        %v2922 = vadd.f32 %v2578, %v2921
        %2923 = vmatprep.mubr.bf16.mxu0 %v2536
        %2924 = vmatmul.mubr.bf16.gmra.mxu0 %v2535
        %v2925 = vpop.f32.mrf.mxu0
        %v2926 = vadd.f32 %v2574, %v2925
        %v2927 = vpop.f32.mrf.mxu0
        %v2928 = vadd.f32 %v2578, %v2927
        %v2929 = vpop.f32.mrf.mxu0
        %v2930 = vadd.f32 %v2574, %v2929
        %v2931 = vpop.f32.mrf.mxu0
        %v2932 = vadd.f32 %v2578, %v2931
        %2933 = vdwg.mxu0
        %v2934 = vmax.f32 %v2776, 0.0
        %v2935 = vmax.f32 %v2778, 0.0
        %v2936 = vmax.f32 %v2780, 0.0
        %v2937 = vmax.f32 %v2782, 0.0
        %v2938 = vmax.f32 %v2786, 0.0
        %v2939 = vmax.f32 %v2788, 0.0
        %v2940 = vmax.f32 %v2790, 0.0
        %v2941 = vmax.f32 %v2792, 0.0
        %v2942 = vmax.f32 %v2796, 0.0
        %v2943 = vmax.f32 %v2798, 0.0
        %v2944 = vmax.f32 %v2800, 0.0
        %v2945 = vmax.f32 %v2802, 0.0
        %v2946 = vmax.f32 %v2806, 0.0
        %v2947 = vmax.f32 %v2808, 0.0
        %v2948 = vmax.f32 %v2810, 0.0
        %v2949 = vmax.f32 %v2812, 0.0
        %v2950 = vmax.f32 %v2816, 0.0
        %v2951 = vmax.f32 %v2818, 0.0
        %v2952 = vmax.f32 %v2820, 0.0
        %v2953 = vmax.f32 %v2822, 0.0
        %v2954 = vmax.f32 %v2826, 0.0
        %v2955 = vmax.f32 %v2828, 0.0
        %v2956 = vmax.f32 %v2830, 0.0
        %v2957 = vmax.f32 %v2832, 0.0
        %v2958 = vmax.f32 %v2836, 0.0
        %v2959 = vmax.f32 %v2838, 0.0
        %v2960 = vmax.f32 %v2840, 0.0
        %v2961 = vmax.f32 %v2842, 0.0
        %v2962 = vmax.f32 %v2846, 0.0
        %v2963 = vmax.f32 %v2848, 0.0
        %v2964 = vmax.f32 %v2850, 0.0
        %v2965 = vmax.f32 %v2852, 0.0
        %v2966 = vmax.f32 %v2856, 0.0
        %v2967 = vmax.f32 %v2858, 0.0
        %v2968 = vmax.f32 %v2860, 0.0
        %v2969 = vmax.f32 %v2862, 0.0
        %v2970 = vmax.f32 %v2866, 0.0
        %v2971 = vmax.f32 %v2868, 0.0
        %v2972 = vmax.f32 %v2870, 0.0
        %v2973 = vmax.f32 %v2872, 0.0
        %v2974 = vmax.f32 %v2876, 0.0
        %v2975 = vmax.f32 %v2878, 0.0
        %v2976 = vmax.f32 %v2880, 0.0
        %v2977 = vmax.f32 %v2882, 0.0
        %v2978 = vmax.f32 %v2886, 0.0
        %v2979 = vmax.f32 %v2888, 0.0
        %v2980 = vmax.f32 %v2890, 0.0
        %v2981 = vmax.f32 %v2892, 0.0
        %v2982 = vmax.f32 %v2896, 0.0
        %v2983 = vmax.f32 %v2898, 0.0
        %v2984 = vmax.f32 %v2900, 0.0
        %v2985 = vmax.f32 %v2902, 0.0
        %v2986 = vmax.f32 %v2906, 0.0
        %v2987 = vmax.f32 %v2908, 0.0
        %v2988 = vmax.f32 %v2910, 0.0
        %v2989 = vmax.f32 %v2912, 0.0
        %v2990 = vmax.f32 %v2916, 0.0
        %v2991 = vmax.f32 %v2918, 0.0
        %v2992 = vmax.f32 %v2920, 0.0
        %v2993 = vmax.f32 %v2922, 0.0
        %v2994 = vmax.f32 %v2926, 0.0
        %v2995 = vmax.f32 %v2928, 0.0
        %v2996 = vmax.f32 %v2930, 0.0
        %v2997 = vmax.f32 %v2932, 0.0
        %v2998 = vadd.f32 %v1948, %v2934
        %v2999 = vadd.f32 %v1949, %v2935
        %v3000 = vadd.f32 %v1950, %v2936
        %v3001 = vadd.f32 %v1951, %v2937
        %v3002 = vadd.f32 %v1952, %v2938
        %v3003 = vadd.f32 %v1953, %v2939
        %v3004 = vadd.f32 %v1954, %v2940
        %v3005 = vadd.f32 %v1955, %v2941
        %v3006 = vadd.f32 %v1956, %v2942
        %v3007 = vadd.f32 %v1957, %v2943
        %v3008 = vadd.f32 %v1958, %v2944
        %v3009 = vadd.f32 %v1959, %v2945
        %v3010 = vadd.f32 %v1960, %v2946
        %v3011 = vadd.f32 %v1961, %v2947
        %v3012 = vadd.f32 %v1962, %v2948
        %v3013 = vadd.f32 %v1963, %v2949
        %v3014 = vadd.f32 %v1964, %v2950
        %v3015 = vadd.f32 %v1965, %v2951
        %v3016 = vadd.f32 %v1966, %v2952
        %v3017 = vadd.f32 %v1967, %v2953
        %v3018 = vadd.f32 %v1968, %v2954
        %v3019 = vadd.f32 %v1969, %v2955
        %v3020 = vadd.f32 %v1970, %v2956
        %v3021 = vadd.f32 %v1971, %v2957
        %v3022 = vadd.f32 %v1972, %v2958
        %v3023 = vadd.f32 %v1973, %v2959
        %v3024 = vadd.f32 %v1974, %v2960
        %v3025 = vadd.f32 %v1975, %v2961
        %v3026 = vadd.f32 %v1976, %v2962
        %v3027 = vadd.f32 %v1977, %v2963
        %v3028 = vadd.f32 %v1978, %v2964
        %v3029 = vadd.f32 %v1979, %v2965
        %v3030 = vadd.f32 %v1980, %v2966
        %v3031 = vadd.f32 %v1981, %v2967
        %v3032 = vadd.f32 %v1982, %v2968
        %v3033 = vadd.f32 %v1983, %v2969
        %v3034 = vadd.f32 %v1984, %v2970
        %v3035 = vadd.f32 %v1985, %v2971
        %v3036 = vadd.f32 %v1986, %v2972
        %v3037 = vadd.f32 %v1987, %v2973
        %v3038 = vadd.f32 %v1988, %v2974
        %v3039 = vadd.f32 %v1989, %v2975
        %v3040 = vadd.f32 %v1990, %v2976
        %v3041 = vadd.f32 %v1991, %v2977
        %v3042 = vadd.f32 %v1992, %v2978
        %v3043 = vadd.f32 %v1993, %v2979
        %v3044 = vadd.f32 %v1994, %v2980
        %v3045 = vadd.f32 %v1995, %v2981
        %v3046 = vadd.f32 %v1996, %v2982
        %v3047 = vadd.f32 %v1997, %v2983
        %v3048 = vadd.f32 %v1998, %v2984
        %v3049 = vadd.f32 %v1999, %v2985
        %v3050 = vadd.f32 %v2000, %v2986
        %v3051 = vadd.f32 %v2001, %v2987
        %v3052 = vadd.f32 %v2002, %v2988
        %v3053 = vadd.f32 %v2003, %v2989
        %v3054 = vadd.f32 %v2004, %v2990
        %v3055 = vadd.f32 %v2005, %v2991
        %v3056 = vadd.f32 %v2006, %v2992
        %v3057 = vadd.f32 %v2007, %v2993
        %v3058 = vadd.f32 %v2008, %v2994
        %v3059 = vadd.f32 %v2009, %v2995
        %v3060 = vadd.f32 %v2010, %v2996
        %v3061 = vadd.f32 %v2011, %v2997
        %v3062 = vpack.c.bf16 %v3000, %v2998
        %v3063 = vpack.c.bf16 %v3001, %v2999
        %v3064 = vpack.c.bf16 %v3004, %v3002
        %v3065 = vpack.c.bf16 %v3005, %v3003
        %v3066 = vpack.c.bf16 %v3008, %v3006
        %v3067 = vpack.c.bf16 %v3009, %v3007
        %v3068 = vpack.c.bf16 %v3012, %v3010
        %v3069 = vpack.c.bf16 %v3013, %v3011
        %v3070 = vpack.c.bf16 %v3016, %v3014
        %v3071 = vpack.c.bf16 %v3017, %v3015
        %v3072 = vpack.c.bf16 %v3020, %v3018
        %v3073 = vpack.c.bf16 %v3021, %v3019
        %v3074 = vpack.c.bf16 %v3024, %v3022
        %v3075 = vpack.c.bf16 %v3025, %v3023
        %v3076 = vpack.c.bf16 %v3028, %v3026
        %v3077 = vpack.c.bf16 %v3029, %v3027
        %v3078 = vpack.c.bf16 %v3032, %v3030
        %v3079 = vpack.c.bf16 %v3033, %v3031
        %v3080 = vpack.c.bf16 %v3036, %v3034
        %v3081 = vpack.c.bf16 %v3037, %v3035
        %v3082 = vpack.c.bf16 %v3040, %v3038
        %v3083 = vpack.c.bf16 %v3041, %v3039
        %v3084 = vpack.c.bf16 %v3044, %v3042
        %v3085 = vpack.c.bf16 %v3045, %v3043
        %v3086 = vpack.c.bf16 %v3048, %v3046
        %v3087 = vpack.c.bf16 %v3049, %v3047
        %v3088 = vpack.c.bf16 %v3052, %v3050
        %v3089 = vpack.c.bf16 %v3053, %v3051
        %v3090 = vpack.c.bf16 %v3056, %v3054
        %v3091 = vpack.c.bf16 %v3057, %v3055
        %v3092 = vpack.c.bf16 %v3060, %v3058
        %v3093 = vpack.c.bf16 %v3061, %v3059
        %v3094 = vld [vmem:[#allocation13] sm:$0xf]
        %v3095 = vld [vmem:[#allocation13 + $0x4] sm:$0xf]
        %v3096 = vld [vmem:[#allocation13 + $0x8] sm:$0xf]
        %v3097 = vld [vmem:[#allocation13 + $0xc] sm:$0xf]
        %v3098 = vld [vmem:[#allocation13 + $0x10] sm:$0xf]
        %v3099 = vld [vmem:[#allocation13 + $0x14] sm:$0xf]
        %v3100 = vld [vmem:[#allocation13 + $0x18] sm:$0xf]
        %v3101 = vld [vmem:[#allocation13 + $0x1c] sm:$0xf]
        %v3102 = vld [vmem:[#allocation13 + $0x20] sm:$0xf]
        %v3103 = vld [vmem:[#allocation13 + $0x24] sm:$0xf]
        %v3104 = vld [vmem:[#allocation13 + $0x28] sm:$0xf]
        %v3105 = vld [vmem:[#allocation13 + $0x2c] sm:$0xf]
        %v3106 = vld [vmem:[#allocation13 + $0x30] sm:$0xf]
        %v3107 = vld [vmem:[#allocation13 + $0x34] sm:$0xf]
        %v3108 = vld [vmem:[#allocation13 + $0x38] sm:$0xf]
        %v3109 = vld [vmem:[#allocation13 + $0x3c] sm:$0xf]
        %v3110 = vld [vmem:[#allocation13 + $0x40] sm:$0xf]
        %v3111 = vld [vmem:[#allocation13 + $0x44] sm:$0xf]
        %v3112 = vld [vmem:[#allocation13 + $0x48] sm:$0xf]
        %v3113 = vld [vmem:[#allocation13 + $0x4c] sm:$0xf]
        %v3114 = vld [vmem:[#allocation13 + $0x50] sm:$0xf]
        %v3115 = vld [vmem:[#allocation13 + $0x54] sm:$0xf]
        %v3116 = vld [vmem:[#allocation13 + $0x58] sm:$0xf]
        %v3117 = vld [vmem:[#allocation13 + $0x5c] sm:$0xf]
        %v3118 = vld [vmem:[#allocation13 + $0x60] sm:$0xf]
        %v3119 = vld [vmem:[#allocation13 + $0x64] sm:$0xf]
        %v3120 = vld [vmem:[#allocation13 + $0x68] sm:$0xf]
        %v3121 = vld [vmem:[#allocation13 + $0x6c] sm:$0xf]
        %v3122 = vld [vmem:[#allocation13 + $0x70] sm:$0xf]
        %v3123 = vld [vmem:[#allocation13 + $0x74] sm:$0xf]
        %v3124 = vld [vmem:[#allocation13 + $0x78] sm:$0xf]
        %v3125 = vld [vmem:[#allocation13 + $0x7c] sm:$0xf]
        %v3126 = vld [vmem:[%s12] sm:$0x1]
        %v3128 = vlaneseq
        %v3129 = vshrl.u32 %v3128, 7
        %v3130 = vsub.s32 0, %v3129
        %v3131 = vrot.slane %v3126, %v3130
        %v3165 = vunpack.c.l.b16 %v3094
        %v3166 = vunpack.c.l.b16 %v3095
        %v3167 = vunpack.c.l.b16 %v3096
        %v3168 = vunpack.c.l.b16 %v3097
        %v3169 = vunpack.c.l.b16 %v3098
        %v3170 = vunpack.c.l.b16 %v3099
        %v3171 = vunpack.c.l.b16 %v3100
        %v3172 = vunpack.c.l.b16 %v3101
        %v3173 = vunpack.c.l.b16 %v3102
        %v3174 = vunpack.c.l.b16 %v3103
        %v3175 = vunpack.c.l.b16 %v3104
        %v3176 = vunpack.c.l.b16 %v3105
        %v3177 = vunpack.c.l.b16 %v3106
        %v3178 = vunpack.c.l.b16 %v3107
        %v3179 = vunpack.c.l.b16 %v3108
        %v3180 = vunpack.c.l.b16 %v3109
        %v3181 = vunpack.c.l.b16 %v3110
        %v3182 = vunpack.c.l.b16 %v3111
        %v3183 = vunpack.c.l.b16 %v3112
        %v3184 = vunpack.c.l.b16 %v3113
        %v3185 = vunpack.c.l.b16 %v3114
        %v3186 = vunpack.c.l.b16 %v3115
        %v3187 = vunpack.c.l.b16 %v3116
        %v3188 = vunpack.c.l.b16 %v3117
        %v3189 = vunpack.c.l.b16 %v3118
        %v3190 = vunpack.c.l.b16 %v3119
        %v3191 = vunpack.c.l.b16 %v3120
        %v3192 = vunpack.c.l.b16 %v3121
        %v3193 = vunpack.c.l.b16 %v3122
        %v3194 = vunpack.c.l.b16 %v3123
        %v3195 = vunpack.c.l.b16 %v3124
        %v3196 = vunpack.c.l.b16 %v3125
        %v3197 = vpack.c.b16 %v3166, %v3165
        %v3198 = vpack.c.b16 %v3168, %v3167
        %v3199 = vpack.c.b16 %v3170, %v3169
        %v3200 = vpack.c.b16 %v3172, %v3171
        %v3201 = vpack.c.b16 %v3174, %v3173
        %v3202 = vpack.c.b16 %v3176, %v3175
        %v3203 = vpack.c.b16 %v3178, %v3177
        %v3204 = vpack.c.b16 %v3180, %v3179
        %v3205 = vpack.c.b16 %v3182, %v3181
        %v3206 = vpack.c.b16 %v3184, %v3183
        %v3207 = vpack.c.b16 %v3186, %v3185
        %v3208 = vpack.c.b16 %v3188, %v3187
        %v3209 = vpack.c.b16 %v3190, %v3189
        %v3210 = vpack.c.b16 %v3192, %v3191
        %v3211 = vpack.c.b16 %v3194, %v3193
        %v3212 = vpack.c.b16 %v3196, %v3195
        %3229 = vmatprep.subr.bf16.mxu0 0
        %3230 = vmatpush1.bf16.msra.mxu0 %v3204
        %3231 = vmatprep.subr.bf16.mxu0 0
        %3232 = vmatpush1.bf16.msra.mxu0 %v3203
        %3233 = vmatprep.subr.bf16.mxu0 0
        %3234 = vmatpush1.bf16.msra.mxu0 %v3202
        %3235 = vmatprep.subr.bf16.mxu0 0
        %3236 = vmatpush1.bf16.msra.mxu0 %v3201
        %3237 = vmatprep.subr.bf16.mxu0 0
        %3238 = vmatpush1.bf16.msra.mxu0 %v3200
        %3239 = vmatprep.subr.bf16.mxu0 0
        %3240 = vmatpush1.bf16.msra.mxu0 %v3199
        %3241 = vmatprep.subr.bf16.mxu0 0
        %3242 = vmatpush1.bf16.msra.mxu0 %v3198
        %3243 = vmatprep.subr.bf16.mxu0 0
        %3244 = vmatpush1.bf16.msra.mxu0 %v3197
        %3245 = vmatprep.subr.bf16.mxu0 0
        %3246 = vmatpush2.bf16.msra.mxu0 %v3212
        %3247 = vmatprep.subr.bf16.mxu0 0
        %3248 = vmatpush2.bf16.msra.mxu0 %v3211
        %3249 = vmatprep.subr.bf16.mxu0 0
        %3250 = vmatpush2.bf16.msra.mxu0 %v3210
        %3251 = vmatprep.subr.bf16.mxu0 0
        %3252 = vmatpush2.bf16.msra.mxu0 %v3209
        %3253 = vmatprep.subr.bf16.mxu0 0
        %3254 = vmatpush2.bf16.msra.mxu0 %v3208
        %3255 = vmatprep.subr.bf16.mxu0 0
        %3256 = vmatpush2.bf16.msra.mxu0 %v3207
        %3257 = vmatprep.subr.bf16.mxu0 0
        %3258 = vmatpush2.bf16.msra.mxu0 %v3206
        %3259 = vmatprep.subr.bf16.mxu0 0
        %3260 = vmatpush2.bf16.msra.mxu0 %v3205
        %3261 = vmatprep.mubr.bf16.mxu0 %v3063
        %3262 = vmatmul.mubr.bf16.gmra.mxu0 %v3062
        %v3263 = vpop.f32.mrf.mxu0
        %v3264 = vadd.f32 %v3131, %v3263
        %v3265 = vpop.f32.mrf.mxu0
        %v3266 = vpop.f32.mrf.mxu0
        %v3267 = vadd.f32 %v3131, %v3266
        %v3268 = vpop.f32.mrf.mxu0
        %3269 = vmatprep.mubr.bf16.mxu0 %v3065
        %3270 = vmatmul.mubr.bf16.gmra.mxu0 %v3064
        %v3271 = vpop.f32.mrf.mxu0
        %v3272 = vadd.f32 %v3131, %v3271
        %v3273 = vpop.f32.mrf.mxu0
        %v3274 = vpop.f32.mrf.mxu0
        %v3275 = vadd.f32 %v3131, %v3274
        %v3276 = vpop.f32.mrf.mxu0
        %3277 = vmatprep.mubr.bf16.mxu0 %v3067
        %3278 = vmatmul.mubr.bf16.gmra.mxu0 %v3066
        %v3279 = vpop.f32.mrf.mxu0
        %v3280 = vadd.f32 %v3131, %v3279
        %v3281 = vpop.f32.mrf.mxu0
        %v3282 = vpop.f32.mrf.mxu0
        %v3283 = vadd.f32 %v3131, %v3282
        %v3284 = vpop.f32.mrf.mxu0
        %3285 = vmatprep.mubr.bf16.mxu0 %v3069
        %3286 = vmatmul.mubr.bf16.gmra.mxu0 %v3068
        %v3287 = vpop.f32.mrf.mxu0
        %v3288 = vadd.f32 %v3131, %v3287
        %v3289 = vpop.f32.mrf.mxu0
        %v3290 = vpop.f32.mrf.mxu0
        %v3291 = vadd.f32 %v3131, %v3290
        %v3292 = vpop.f32.mrf.mxu0
        %3293 = vmatprep.mubr.bf16.mxu0 %v3071
        %3294 = vmatmul.mubr.bf16.gmra.mxu0 %v3070
        %v3295 = vpop.f32.mrf.mxu0
        %v3296 = vadd.f32 %v3131, %v3295
        %v3297 = vpop.f32.mrf.mxu0
        %v3298 = vpop.f32.mrf.mxu0
        %v3299 = vadd.f32 %v3131, %v3298
        %v3300 = vpop.f32.mrf.mxu0
        %3301 = vmatprep.mubr.bf16.mxu0 %v3073
        %3302 = vmatmul.mubr.bf16.gmra.mxu0 %v3072
        %v3303 = vpop.f32.mrf.mxu0
        %v3304 = vadd.f32 %v3131, %v3303
        %v3305 = vpop.f32.mrf.mxu0
        %v3306 = vpop.f32.mrf.mxu0
        %v3307 = vadd.f32 %v3131, %v3306
        %v3308 = vpop.f32.mrf.mxu0
        %3309 = vmatprep.mubr.bf16.mxu0 %v3075
        %3310 = vmatmul.mubr.bf16.gmra.mxu0 %v3074
        %v3311 = vpop.f32.mrf.mxu0
        %v3312 = vadd.f32 %v3131, %v3311
        %v3313 = vpop.f32.mrf.mxu0
        %v3314 = vpop.f32.mrf.mxu0
        %v3315 = vadd.f32 %v3131, %v3314
        %v3316 = vpop.f32.mrf.mxu0
        %3317 = vmatprep.mubr.bf16.mxu0 %v3077
        %3318 = vmatmul.mubr.bf16.gmra.mxu0 %v3076
        %v3319 = vpop.f32.mrf.mxu0
        %v3320 = vadd.f32 %v3131, %v3319
        %v3321 = vpop.f32.mrf.mxu0
        %v3322 = vpop.f32.mrf.mxu0
        %v3323 = vadd.f32 %v3131, %v3322
        %v3324 = vpop.f32.mrf.mxu0
        %3325 = vmatprep.mubr.bf16.mxu0 %v3079
        %3326 = vmatmul.mubr.bf16.gmra.mxu0 %v3078
        %v3327 = vpop.f32.mrf.mxu0
        %v3328 = vadd.f32 %v3131, %v3327
        %v3329 = vpop.f32.mrf.mxu0
        %v3330 = vpop.f32.mrf.mxu0
        %v3331 = vadd.f32 %v3131, %v3330
        %v3332 = vpop.f32.mrf.mxu0
        %3333 = vmatprep.mubr.bf16.mxu0 %v3081
        %3334 = vmatmul.mubr.bf16.gmra.mxu0 %v3080
        %v3335 = vpop.f32.mrf.mxu0
        %v3336 = vadd.f32 %v3131, %v3335
        %v3337 = vpop.f32.mrf.mxu0
        %v3338 = vpop.f32.mrf.mxu0
        %v3339 = vadd.f32 %v3131, %v3338
        %v3340 = vpop.f32.mrf.mxu0
        %3341 = vmatprep.mubr.bf16.mxu0 %v3083
        %3342 = vmatmul.mubr.bf16.gmra.mxu0 %v3082
        %v3343 = vpop.f32.mrf.mxu0
        %v3344 = vadd.f32 %v3131, %v3343
        %v3345 = vpop.f32.mrf.mxu0
        %v3346 = vpop.f32.mrf.mxu0
        %v3347 = vadd.f32 %v3131, %v3346
        %v3348 = vpop.f32.mrf.mxu0
        %3349 = vmatprep.mubr.bf16.mxu0 %v3085
        %3350 = vmatmul.mubr.bf16.gmra.mxu0 %v3084
        %v3351 = vpop.f32.mrf.mxu0
        %v3352 = vadd.f32 %v3131, %v3351
        %v3353 = vpop.f32.mrf.mxu0
        %v3354 = vpop.f32.mrf.mxu0
        %v3355 = vadd.f32 %v3131, %v3354
        %v3356 = vpop.f32.mrf.mxu0
        %3357 = vmatprep.mubr.bf16.mxu0 %v3087
        %3358 = vmatmul.mubr.bf16.gmra.mxu0 %v3086
        %v3359 = vpop.f32.mrf.mxu0
        %v3360 = vadd.f32 %v3131, %v3359
        %v3361 = vpop.f32.mrf.mxu0
        %v3362 = vpop.f32.mrf.mxu0
        %v3363 = vadd.f32 %v3131, %v3362
        %v3364 = vpop.f32.mrf.mxu0
        %3365 = vmatprep.mubr.bf16.mxu0 %v3089
        %3366 = vmatmul.mubr.bf16.gmra.mxu0 %v3088
        %v3367 = vpop.f32.mrf.mxu0
        %v3368 = vadd.f32 %v3131, %v3367
        %v3369 = vpop.f32.mrf.mxu0
        %v3370 = vpop.f32.mrf.mxu0
        %v3371 = vadd.f32 %v3131, %v3370
        %v3372 = vpop.f32.mrf.mxu0
        %3373 = vmatprep.mubr.bf16.mxu0 %v3091
        %3374 = vmatmul.mubr.bf16.gmra.mxu0 %v3090
        %v3375 = vpop.f32.mrf.mxu0
        %v3376 = vadd.f32 %v3131, %v3375
        %v3377 = vpop.f32.mrf.mxu0
        %v3378 = vpop.f32.mrf.mxu0
        %v3379 = vadd.f32 %v3131, %v3378
        %v3380 = vpop.f32.mrf.mxu0
        %3381 = vmatprep.mubr.bf16.mxu0 %v3093
        %3382 = vmatmul.mubr.bf16.gmra.mxu0 %v3092
        %v3383 = vpop.f32.mrf.mxu0
        %v3384 = vadd.f32 %v3131, %v3383
        %v3385 = vpop.f32.mrf.mxu0
        %v3386 = vpop.f32.mrf.mxu0
        %v3387 = vadd.f32 %v3131, %v3386
        %v3388 = vpop.f32.mrf.mxu0
        %3389 = vdwg.mxu0
        %3390 = vst [vmem:[%s545] sm:$0xff] %v3264
        %3391 = vst [vmem:[%s545 + $0x8] sm:$0xff] %v3267
        %3392 = vst [vmem:[%s545 + $0x10] sm:$0xff] %v3272
        %3393 = vst [vmem:[%s545 + $0x18] sm:$0xff] %v3275
        %3394 = vst [vmem:[%s545 + $0x20] sm:$0xff] %v3280
        %3395 = vst [vmem:[%s545 + $0x28] sm:$0xff] %v3283
        %3396 = vst [vmem:[%s545 + $0x30] sm:$0xff] %v3288
        %3397 = vst [vmem:[%s545 + $0x38] sm:$0xff] %v3291
        %3398 = vst [vmem:[%s545 + $0x40] sm:$0xff] %v3296
        %3399 = vst [vmem:[%s545 + $0x48] sm:$0xff] %v3299
        %3400 = vst [vmem:[%s545 + $0x50] sm:$0xff] %v3304
        %3401 = vst [vmem:[%s545 + $0x58] sm:$0xff] %v3307
        %3402 = vst [vmem:[%s545 + $0x60] sm:$0xff] %v3312
        %3403 = vst [vmem:[%s545 + $0x68] sm:$0xff] %v3315
        %3404 = vst [vmem:[%s545 + $0x70] sm:$0xff] %v3320
        %3405 = vst [vmem:[%s545 + $0x78] sm:$0xff] %v3323
        %3406 = vst [vmem:[%s545 + $0x80] sm:$0xff] %v3328
        %3407 = vst [vmem:[%s545 + $0x88] sm:$0xff] %v3331
        %3408 = vst [vmem:[%s545 + $0x90] sm:$0xff] %v3336
        %3409 = vst [vmem:[%s545 + $0x98] sm:$0xff] %v3339
        %3410 = vst [vmem:[%s545 + $0xa0] sm:$0xff] %v3344
        %3411 = vst [vmem:[%s545 + $0xa8] sm:$0xff] %v3347
        %3412 = vst [vmem:[%s545 + $0xb0] sm:$0xff] %v3352
        %3413 = vst [vmem:[%s545 + $0xb8] sm:$0xff] %v3355
        %3414 = vst [vmem:[%s545 + $0xc0] sm:$0xff] %v3360
        %3415 = vst [vmem:[%s545 + $0xc8] sm:$0xff] %v3363
        %3416 = vst [vmem:[%s545 + $0xd0] sm:$0xff] %v3368
        %3417 = vst [vmem:[%s545 + $0xd8] sm:$0xff] %v3371
        %3418 = vst [vmem:[%s545 + $0xe0] sm:$0xff] %v3376
        %3419 = vst [vmem:[%s545 + $0xe8] sm:$0xff] %v3379
        %3420 = vst [vmem:[%s545 + $0xf0] sm:$0xff] %v3384
        %3421 = vst [vmem:[%s545 + $0xf8] sm:$0xff] %v3387
        %s3422 = sand.u32 %s319, 1
        %s3423 = scalar_lea.sflag [#allocation4], %s3422
        %s3424 = sand.u32 %s319, 1
        %s3425 = smul.addr %s3424, 256
        %s3426 = scalar_lea.vmem [#allocation14], %s3425
        // Predicated region
        $region101: #{tpu_custom_call.1} parent=71 // pred_check
          %p3427 = pneg %p329
        $region102: #{tpu_custom_call.1} parent=71 // pred_check_branch
          %3429 = sbr.rel (%p3427) target = $region104
        $region103: #{tpu_custom_call.1} parent=71 // pred_region
          %s3430 = smul.u32 32, %s33
          %s3432 = ssub.s32 4096, 4096
          %3433 = vsyncadd %s3423, %s3432
          %s3434 = smul.addr %s3430, 128
          %s3435 = scalar_lea.hbm %s13, %s3434
          %s3436 = sshll.u32 %s3426, 4
          %s3437 = int_to_ptr.vmem [resolvable:$true] %s3436
          %3442 = dma.vmem_to_hbm [thread:$0]  %s3437, 4096, %s3435, %s3423, 128, 128, 8
        $region104: #{tpu_custom_call.1} parent=71 // pred_fallthru
          _
      $region72: #{tpu_custom_call.1} parent=5 // pred_fallthru
        _
      %p3443 = scmp.le.s32.totalorder 2, %s28
      // Predicated region
      $region105: #{tpu_custom_call.1} parent=5 // pred_check
        %p3444 = pneg %p3443
      $region106: #{tpu_custom_call.1} parent=5 // pred_check_branch
        %3446 = sbr.rel (%p3444) target = $region108
      $region107: #{tpu_custom_call.1} parent=5 // pred_region
        %s3447 = ssub.s32 %s28, 2
        // Predicated region
        $region109: #{tpu_custom_call.1} parent=107 // pred_check
          %p3448 = pneg %p335
        $region110: #{tpu_custom_call.1} parent=107 // pred_check_branch
          %3450 = sbr.rel (%p3448) target = $region112
        $region111: #{tpu_custom_call.1} parent=107 // pred_region
          %s3451 = sand.u32 %s320, 1
          %s3452 = scalar_lea.sflag [#allocation4], %s3451
          %s3453 = sand.u32 %s320, 1
          %s3454 = smul.addr %s3453, 256
          %s3455 = scalar_lea.vmem [#allocation14], %s3454
          %3456 = dma.done %s3452, 4096
        $region112: #{tpu_custom_call.1} parent=107 // pred_fallthru
          _
      $region108: #{tpu_custom_call.1} parent=5 // pred_fallthru
        _
    $region6: #{tpu_custom_call.1} parent=1 // loop_footer
      %s32 = sadd.s32 1, %s28
    $region7: #{tpu_custom_call.1} parent=1 // loop_footer_branch
      %27 = sbr.rel target = $region3
    $region8: #{tpu_custom_call.1} parent=1 // loop_exit
      _
    %3457 = vsyncpa [#allocation3], 1
    %s3458 = scalar_lea.sflag [#allocation3], 1
    %3459 = vsyncpa %s3458, 1
    %3460 = vsyncpa [#allocation6], 1
    %3461 = vsyncpa [#allocation9], 1
    %3462 = vsyncpa [#allocation12], 1
    %3463 = vsyncpa [#allocation4], 1
    %s3464 = scalar_lea.sflag [#allocation4], 1
    %3465 = vsyncpa %s3464, 1

</llo_original>
